<compile_context>
chip_gen: v6e
topology: v6e:2x2x1
jax: 0.10.0
libtpu: 0.0.40
codegen_flags: <defaults>
</compile_context>

<pallas_src>
import functools

import numpy as np

import jax
import jax.numpy as jnp
from jax.experimental import pallas as pl
from jax.experimental.pallas import tpu as pltpu

EPS = 1e-5          # InstanceNorm3d default eps
NEG_SLOPE = 0.01    # LeakyReLU negative_slope
K = 3               # Conv3d kernel size; get_padding(3, s) == 1 for s in {1, 2}


# ---------------------------------------------------------------------------
# Pallas kernels
# ---------------------------------------------------------------------------

def _conv_tap_kernel(*refs, taps, n_planes, m_rows):
    """Implicit-GEMM Conv3d for one (sample, output depth-plane) grid step.

    refs = (*plane_refs, mask_ref, w_ref, y_ref, sum_ref, sumsq_ref)
      plane_refs[i] : (L, Cin)        f32  flattened padded input plane(s)
      mask_ref      : (m_rows, 1)     f32  1.0 on valid rows, 0.0 on W-pad rows
      w_ref         : (27, Cin, Cout) bf16 conv weights, tap-major
      y_ref         : (m_rows, Cout)  f32  un-normalised conv output (plane)
      sum_ref       : (1, Cout)       f32  running per-channel sum
      sumsq_ref     : (1, Cout)       f32  running per-channel sum of squares
    `taps` is a static list of (plane_index, row_offset) pairs, one per
    (kd, kh, kw) tap, matching the weight layout.
    """
    plane_refs = refs[:n_planes]
    mask_ref = refs[n_planes]
    w_ref = refs[n_planes + 1]
    y_ref = refs[n_planes + 2]
    sum_ref = refs[n_planes + 3]
    sumsq_ref = refs[n_planes + 4]

    acc = None
    for t, (plane_idx, offset) in enumerate(taps):
        patch = plane_refs[plane_idx][pl.ds(offset, m_rows), :]
        part = jnp.dot(patch.astype(jnp.bfloat16), w_ref[t],
                       preferred_element_type=jnp.float32)
        acc = part if acc is None else acc + part
    y_ref[...] = acc

    # Phase 1 of the two-phase instance norm: accumulate masked statistics
    # across the depth grid axis (this output block is revisited along it).
    @pl.when(pl.program_id(1) == 0)
    def _():
        sum_ref[...] = jnp.zeros_like(sum_ref)
        sumsq_ref[...] = jnp.zeros_like(sumsq_ref)

    masked = acc * mask_ref[...]
    sum_ref[...] += jnp.sum(masked, axis=0, keepdims=True)
    sumsq_ref[...] += jnp.sum(masked * acc, axis=0, keepdims=True)


def _norm_act_kernel(y_ref, scale_ref, bias_ref, o_ref, *, neg_slope):
    """Phase 2 of the instance norm: y * scale + bias, then LeakyReLU (f32)."""
    y = y_ref[...] * scale_ref[...] + bias_ref[...]
    o_ref[...] = jnp.where(y >= 0, y, neg_slope * y)


def _pool_classifier_kernel(x_ref, w_ref, b_ref, o_ref):
    """AdaptiveAvgPool3d((1,1,1)) + flatten + Linear, whole batch at once."""
    pooled = jnp.mean(x_ref[...], axis=1)                       # (N, C)
    o_ref[...] = jnp.dot(pooled, w_ref[...],
                         preferred_element_type=jnp.float32) + b_ref[...]


# ---------------------------------------------------------------------------
# ConvLayer wrapper (Conv3d + InstanceNorm3d + LeakyReLU)
# ---------------------------------------------------------------------------

def _plane_spec(plane_len, cin, kd, stride):
    # Block size 1 along D => the block index along D is an element index, so
    # the D-tap offset and the D-stride go straight into the index_map.
    return pl.BlockSpec((None, None, plane_len, cin),
                        lambda ni, di: (ni, di * stride + kd, 0, 0))


def conv_instnorm_lrelu(x, w5, gamma, beta, *, stride):
    """One ConvLayer.  x: (N, D, H, W, Cin) f32 -> (N, Do, Ho, Wo, Cout) f32."""
    n, d, h, w, cin = x.shape
    cout = w5.shape[-1]
    assert w5.shape[:3] == (K, K, K) and stride in (1, 2)
    do = (d - 1) // stride + 1            # k=3, pad=1
    ho = (h - 1) // stride + 1
    wo = (w - 1) // stride + 1
    dp, hp, wp = d + 2, h + 2, w + 2
    m_rows = (ho - 1) * wp + wo           # rows per plane incl. W-pad garbage

    # Host prep: zero-pad the halo once and flatten (H, W) -> one row-major
    # plane dim (free reshape).  No im2col: HBM holds ~1x the activation.
    xp = jnp.pad(x, ((0, 0), (1, 1), (1, 1), (1, 1), (0, 0)))
    xf = xp.reshape(n, dp, hp * wp, cin)

    if stride == 1:
        planes = [xf, xf, xf]             # one operand per D-tap kd
        plane_len = hp * wp
        plane_specs = [_plane_spec(plane_len, cin, kd, 1) for kd in range(K)]
        taps = [(kd, kh * wp + kw)
                for kd in range(K) for kh in range(K) for kw in range(K)]
    else:
        # stride 2: split the flat plane into its two W-parity phases (a
        # partition, not an expansion) so every tap is again contiguous.
        assert wp % 2 == 0
        x_even = xf[:, :, 0::2, :]
        x_odd = xf[:, :, 1::2, :]
        planes = [x_even, x_even, x_even, x_odd, x_odd, x_odd]
        plane_len = (hp * wp) // 2
        plane_specs = [_plane_spec(plane_len, cin, kd, 2)
                       for kd in (0, 1, 2, 0, 1, 2)]
        taps = [(3 * (kw % 2) + kd, kh * (wp // 2) + kw // 2)
                for kd in range(K) for kh in range(K) for kw in range(K)]

    # Output row j of a plane corresponds to (h, w) = (j // wp, j % wp);
    # rows with (j % wp) >= wo are interleaved W-padding garbage.
    mask = jnp.asarray(((np.arange(m_rows) % wp) < wo)
                       .astype(np.float32).reshape(m_rows, 1))

    wmat = w5.reshape(K * K * K, cin, cout).astype(jnp.bfloat16)

    grid = (n, do)
    y_raw, ssum, ssq = pl.pallas_call(
        functools.partial(_conv_tap_kernel, taps=taps,
                          n_planes=len(planes), m_rows=m_rows),
        grid=grid,
        in_specs=plane_specs + [
            pl.BlockSpec((m_rows, 1), lambda ni, di: (0, 0)),
            pl.BlockSpec((K * K * K, cin, cout), lambda ni, di: (0, 0, 0)),
        ],
        out_specs=[
            pl.BlockSpec((None, None, m_rows, cout),
                         lambda ni, di: (ni, di, 0, 0)),
            pl.BlockSpec((None, 1, cout), lambda ni, di: (ni, 0, 0)),
            pl.BlockSpec((None, 1, cout), lambda ni, di: (ni, 0, 0)),
        ],
        out_shape=[
            jax.ShapeDtypeStruct((n, do, m_rows, cout), jnp.float32),
            jax.ShapeDtypeStruct((n, 1, cout), jnp.float32),
            jax.ShapeDtypeStruct((n, 1, cout), jnp.float32),
        ],
        # Batch axis parallel (megacore); the depth axis carries the
        # instance-norm statistics accumulation -> keep it sequential.
        compiler_params=pltpu.CompilerParams(
            dimension_semantics=("parallel", "arbitrary")),
    )(*planes, mask, wmat)

    # Finalise the statistics (tiny (N, C) math) and fold the affine params
    # into a single scale/bias per (sample, channel).
    count = float(do * ho * wo)
    mean = ssum[:, 0, :] / count
    var = jnp.maximum(ssq[:, 0, :] / count - mean * mean, 0.0)
    rstd = jax.lax.rsqrt(var + EPS)
    scale = (gamma[None, :] * rstd).reshape(n, 1, cout)
    bias = (beta[None, :] - mean * gamma[None, :] * rstd).reshape(n, 1, cout)

    y_act = pl.pallas_call(
        functools.partial(_norm_act_kernel, neg_slope=NEG_SLOPE),
        grid=grid,
        in_specs=[
            pl.BlockSpec((None, None, m_rows, cout),
                         lambda ni, di: (ni, di, 0, 0)),
            pl.BlockSpec((None, 1, cout), lambda ni, di: (ni, 0, 0)),
            pl.BlockSpec((None, 1, cout), lambda ni, di: (ni, 0, 0)),
        ],
        out_specs=pl.BlockSpec((None, None, m_rows, cout),
                               lambda ni, di: (ni, di, 0, 0)),
        out_shape=jax.ShapeDtypeStruct((n, do, m_rows, cout), jnp.float32),
        compiler_params=pltpu.CompilerParams(
            dimension_semantics=("parallel", "parallel")),
    )(y_raw, scale, bias)

    # Drop the interleaved W-padding rows -> compact (N, Do, Ho, Wo, Cout).
    y_full = jnp.pad(y_act, ((0, 0), (0, 0), (0, ho * wp - m_rows), (0, 0)))
    return y_full.reshape(n, do, ho, wp, cout)[:, :, :, :wo, :]


def pool_classifier(x, wc, bc):
    n, d, h, w, c = x.shape
    xf = x.reshape(n, d * h * w, c)
    ncls = wc.shape[1]
    return pl.pallas_call(
        _pool_classifier_kernel,
        out_shape=jax.ShapeDtypeStruct((n, ncls), jnp.float32),
    )(xf, wc, bc.reshape(1, ncls))


# ---------------------------------------------------------------------------
# Full NNUNetEncoder forward (Pallas)
# ---------------------------------------------------------------------------

def nnunet_encoder_forward(params, strides_per_layer, image):
    x = image
    for layer, s in zip(params['layers'], strides_per_layer):
        x = conv_instnorm_lrelu(x, layer['w'], layer['g'], layer['b'],
                                stride=s)
    return pool_classifier(x, params['classifier']['w'],
                           params['classifier']['b'])


# ---------------------------------------------------------------------------
# Pure-JAX reference (for self-check)
# ---------------------------------------------------------------------------

def _ref_conv_layer(x, w5, gamma, beta, stride, matmul_dtype):
    y = jax.lax.conv_general_dilated(
        x.astype(matmul_dtype), w5.astype(matmul_dtype),
        window_strides=(stride,) * 3, padding=[(1, 1)] * 3,
        dimension_numbers=('NDHWC', 'DHWIO', 'NDHWC'),
        preferred_element_type=jnp.float32)
    mean = jnp.mean(y, axis=(1, 2, 3), keepdims=True)
    var = jnp.mean(jnp.square(y - mean), axis=(1, 2, 3), keepdims=True)
    y = (y - mean) * jax.lax.rsqrt(var + EPS) * gamma + beta
    return jnp.where(y >= 0, y, NEG_SLOPE * y)


def reference_forward(params, strides_per_layer, image,
                      matmul_dtype=jnp.float32):
    x = image
    for layer, s in zip(params['layers'], strides_per_layer):
        x = _ref_conv_layer(x, layer['w'], layer['g'], layer['b'], s,
                            matmul_dtype)
    pooled = jnp.mean(x, axis=(1, 2, 3))
    return pooled @ params['classifier']['w'] + params['classifier']['b']


# ---------------------------------------------------------------------------
# Deterministic parameter init
# ---------------------------------------------------------------------------

def init_params(key, in_ch, filters, strides, num_classes):
    """Layer plan implied by NNUNetEncoder(kernels=[3]*L, residual=False):
       input_block / downsamples / bottleneck are ConvBlocks, i.e. two
       ConvLayers each (stride s then stride 1)."""
    chans = [in_ch] + list(filters)
    layer_io, strides_per_layer = [], []
    for lvl in range(len(filters)):
        layer_io += [(chans[lvl], chans[lvl + 1]),
                     (chans[lvl + 1], chans[lvl + 1])]
        strides_per_layer += [strides[lvl], 1]

    keys = jax.random.split(key, 3 * len(layer_io) + 2)
    kit = iter(keys)
    layers = []
    for cin, cout in layer_io:
        fan_in = K * K * K * cin
        std = (2.0 / ((1.0 + NEG_SLOPE ** 2) * fan_in)) ** 0.5   # kaiming
        layers.append(dict(
            w=std * jax.random.normal(next(kit), (K, K, K, cin, cout),
                                      jnp.float32),
            g=1.0 + 0.1 * jax.random.normal(next(kit), (cout,), jnp.float32),
            b=0.1 * jax.random.normal(next(kit), (cout,), jnp.float32),
        ))
    wc = (1.0 / filters[-1] ** 0.5) * jax.random.normal(
        next(kit), (filters[-1], num_classes), jnp.float32)
    bc = 0.1 * jax.random.normal(next(kit), (num_classes,), jnp.float32)
    params = dict(layers=layers, classifier=dict(w=wc, b=bc))
    return params, strides_per_layer


# ---------------------------------------------------------------------------

if __name__ == "__main__":
    N = 2
    IN_CH = 4
    D = H = W = 16
    FILTERS = [32, 64, 128]
    STRIDES = [1, 2, 2]          # one stride per resolution level
    NUM_CLASSES = 5

    key = jax.random.PRNGKey(0)
    img_key, p_key = jax.random.split(key)
    image = jax.random.normal(img_key, (N, D, H, W, IN_CH), jnp.float32)

    params, strides_per_layer = init_params(p_key, IN_CH, FILTERS, STRIDES,
                                            NUM_CLASSES)

    out = nnunet_encoder_forward(params, strides_per_layer, image)
    out = jax.block_until_ready(out)
    assert out.shape == (N, NUM_CLASSES), out.shape

    # Tight check against a reference that matches the kernel's numerics
    # (bf16 MXU operands, f32 accumulation / epilogue).
    ref_matched = reference_forward(params, strides_per_layer, image,
                                    matmul_dtype=jnp.bfloat16)
    assert bool(jnp.allclose(out, ref_matched, rtol=2e-3, atol=2e-3)), (
        "Pallas output diverges from the bf16-matmul JAX reference")

    # Sanity check against the pure-f32 PyTorch-equivalent reference (the
    # only difference is bf16 rounding of the matmul operands).
    ref_f32 = reference_forward(params, strides_per_layer, image,
                                matmul_dtype=jnp.float32)
    assert bool(jnp.allclose(out, ref_f32, rtol=5e-2, atol=5e-2)), (
        "Pallas output diverges from the f32 JAX reference")

    print("KERNEL_OK")
</pallas_src>

<mosaic_0001>
module attributes {stable_mosaic.version = 11 : i64} {
  func.func @_conv_tap_kernel(%arg0: i32, %arg1: i32, %arg2: memref<1x1x324x4xf32, #tpu.memory_space<vmem>>, %arg3: memref<1x1x324x4xf32, #tpu.memory_space<vmem>>, %arg4: memref<1x1x324x4xf32, #tpu.memory_space<vmem>>, %arg5: memref<286x1xf32, #tpu.memory_space<vmem>>, %arg6: memref<27x4x32xbf16, #tpu.memory_space<vmem>>, %arg7: memref<1x1x286x32xf32, #tpu.memory_space<vmem>>, %arg8: memref<1x1x32xf32, #tpu.memory_space<vmem>>, %arg9: memref<1x1x32xf32, #tpu.memory_space<vmem>>) attributes {dimension_semantics = [#tpu.dimension_semantics<parallel>, #tpu.dimension_semantics<arbitrary>], iteration_bounds = array<i64: 2, 16>, scalar_prefetch = 0 : i64, scratch_operands = 0 : i64, tpu.core_type = #tpu.core_type<tc>, window_params = [{transform_indices = @transform_0, window_bounds = array<i64: 1, 1, 324, 4>}, {transform_indices = @transform_1, window_bounds = array<i64: 1, 1, 324, 4>}, {transform_indices = @transform_2, window_bounds = array<i64: 1, 1, 324, 4>}, {pipeline_mode = #tpu.pipeline_mode<synchronous>, transform_indices = @transform_3, window_bounds = array<i64: 286, 1>}, {pipeline_mode = #tpu.pipeline_mode<synchronous>, transform_indices = @transform_4, window_bounds = array<i64: 27, 4, 32>}, {transform_indices = @transform_5, window_bounds = array<i64: 1, 1, 286, 32>}, {transform_indices = @transform_6, window_bounds = array<i64: 1, 1, 32>}, {transform_indices = @transform_7, window_bounds = array<i64: 1, 1, 32>}]} {
    %c0 = arith.constant 0 : index
    %c0_0 = arith.constant 0 : index
    %c0_1 = arith.constant 0 : index
    %c0_2 = arith.constant 0 : index
    %0 = vector.load %arg2[%c0, %c0_0, %c0_1, %c0_2] : memref<1x1x324x4xf32, #tpu.memory_space<vmem>>, vector<1x1x286x4xf32>
    %1 = vector.shape_cast %0 : vector<1x1x286x4xf32> to vector<286x4xf32>
    %2 = arith.truncf %1 : vector<286x4xf32> to vector<286x4xbf16>
    %c0_3 = arith.constant 0 : index
    %c0_4 = arith.constant 0 : index
    %c0_5 = arith.constant 0 : index
    %3 = vector.load %arg6[%c0_3, %c0_4, %c0_5] : memref<27x4x32xbf16, #tpu.memory_space<vmem>>, vector<1x4x32xbf16>
    %4 = vector.shape_cast %3 : vector<1x4x32xbf16> to vector<4x32xbf16>
    %cst = arith.constant dense<0.000000e+00> : vector<286x32xf32>
    %5 = tpu.matmul %2, %4, %cst {dimension_numbers = #tpu.dot_dimension_numbers<[1], [0], [0], [1], [0, 0, 1, 1], [], []>} : vector<286x4xbf16>, vector<4x32xbf16>, vector<286x32xf32> -> vector<286x32xf32>
    %c0_6 = arith.constant 0 : index
    %c0_7 = arith.constant 0 : index
    %c1 = arith.constant 1 : index
    %c0_8 = arith.constant 0 : index
    %6 = vector.load %arg2[%c0_6, %c0_7, %c1, %c0_8] : memref<1x1x324x4xf32, #tpu.memory_space<vmem>>, vector<1x1x286x4xf32>
    %7 = vector.shape_cast %6 : vector<1x1x286x4xf32> to vector<286x4xf32>
    %8 = arith.truncf %7 : vector<286x4xf32> to vector<286x4xbf16>
    %c1_9 = arith.constant 1 : index
    %c0_10 = arith.constant 0 : index
    %c0_11 = arith.constant 0 : index
    %9 = vector.load %arg6[%c1_9, %c0_10, %c0_11] : memref<27x4x32xbf16, #tpu.memory_space<vmem>>, vector<1x4x32xbf16>
    %10 = vector.shape_cast %9 : vector<1x4x32xbf16> to vector<4x32xbf16>
    %cst_12 = arith.constant dense<0.000000e+00> : vector<286x32xf32>
    %11 = tpu.matmul %8, %10, %cst_12 {dimension_numbers = #tpu.dot_dimension_numbers<[1], [0], [0], [1], [0, 0, 1, 1], [], []>} : vector<286x4xbf16>, vector<4x32xbf16>, vector<286x32xf32> -> vector<286x32xf32>
    %12 = arith.addf %5, %11 : vector<286x32xf32>
    %c0_13 = arith.constant 0 : index
    %c0_14 = arith.constant 0 : index
    %c2 = arith.constant 2 : index
    %c0_15 = arith.constant 0 : index
    %13 = vector.load %arg2[%c0_13, %c0_14, %c2, %c0_15] : memref<1x1x324x4xf32, #tpu.memory_space<vmem>>, vector<1x1x286x4xf32>
    %14 = vector.shape_cast %13 : vector<1x1x286x4xf32> to vector<286x4xf32>
    %15 = arith.truncf %14 : vector<286x4xf32> to vector<286x4xbf16>
    %c2_16 = arith.constant 2 : index
    %c0_17 = arith.constant 0 : index
    %c0_18 = arith.constant 0 : index
    %16 = vector.load %arg6[%c2_16, %c0_17, %c0_18] : memref<27x4x32xbf16, #tpu.memory_space<vmem>>, vector<1x4x32xbf16>
    %17 = vector.shape_cast %16 : vector<1x4x32xbf16> to vector<4x32xbf16>
    %cst_19 = arith.constant dense<0.000000e+00> : vector<286x32xf32>
    %18 = tpu.matmul %15, %17, %cst_19 {dimension_numbers = #tpu.dot_dimension_numbers<[1], [0], [0], [1], [0, 0, 1, 1], [], []>} : vector<286x4xbf16>, vector<4x32xbf16>, vector<286x32xf32> -> vector<286x32xf32>
    %19 = arith.addf %12, %18 : vector<286x32xf32>
    %c0_20 = arith.constant 0 : index
    %c0_21 = arith.constant 0 : index
    %c18 = arith.constant 18 : index
    %c0_22 = arith.constant 0 : index
    %20 = vector.load %arg2[%c0_20, %c0_21, %c18, %c0_22] : memref<1x1x324x4xf32, #tpu.memory_space<vmem>>, vector<1x1x286x4xf32>
    %21 = vector.shape_cast %20 : vector<1x1x286x4xf32> to vector<286x4xf32>
    %22 = arith.truncf %21 : vector<286x4xf32> to vector<286x4xbf16>
    %c3 = arith.constant 3 : index
    %c0_23 = arith.constant 0 : index
    %c0_24 = arith.constant 0 : index
    %23 = vector.load %arg6[%c3, %c0_23, %c0_24] : memref<27x4x32xbf16, #tpu.memory_space<vmem>>, vector<1x4x32xbf16>
    %24 = vector.shape_cast %23 : vector<1x4x32xbf16> to vector<4x32xbf16>
    %cst_25 = arith.constant dense<0.000000e+00> : vector<286x32xf32>
    %25 = tpu.matmul %22, %24, %cst_25 {dimension_numbers = #tpu.dot_dimension_numbers<[1], [0], [0], [1], [0, 0, 1, 1], [], []>} : vector<286x4xbf16>, vector<4x32xbf16>, vector<286x32xf32> -> vector<286x32xf32>
    %26 = arith.addf %19, %25 : vector<286x32xf32>
    %c0_26 = arith.constant 0 : index
    %c0_27 = arith.constant 0 : index
    %c19 = arith.constant 19 : index
    %c0_28 = arith.constant 0 : index
    %27 = vector.load %arg2[%c0_26, %c0_27, %c19, %c0_28] : memref<1x1x324x4xf32, #tpu.memory_space<vmem>>, vector<1x1x286x4xf32>
    %28 = vector.shape_cast %27 : vector<1x1x286x4xf32> to vector<286x4xf32>
    %29 = arith.truncf %28 : vector<286x4xf32> to vector<286x4xbf16>
    %c4 = arith.constant 4 : index
    %c0_29 = arith.constant 0 : index
    %c0_30 = arith.constant 0 : index
    %30 = vector.load %arg6[%c4, %c0_29, %c0_30] : memref<27x4x32xbf16, #tpu.memory_space<vmem>>, vector<1x4x32xbf16>
    %31 = vector.shape_cast %30 : vector<1x4x32xbf16> to vector<4x32xbf16>
    %cst_31 = arith.constant dense<0.000000e+00> : vector<286x32xf32>
    %32 = tpu.matmul %29, %31, %cst_31 {dimension_numbers = #tpu.dot_dimension_numbers<[1], [0], [0], [1], [0, 0, 1, 1], [], []>} : vector<286x4xbf16>, vector<4x32xbf16>, vector<286x32xf32> -> vector<286x32xf32>
    %33 = arith.addf %26, %32 : vector<286x32xf32>
    %c0_32 = arith.constant 0 : index
    %c0_33 = arith.constant 0 : index
    %c20 = arith.constant 20 : index
    %c0_34 = arith.constant 0 : index
    %34 = vector.load %arg2[%c0_32, %c0_33, %c20, %c0_34] : memref<1x1x324x4xf32, #tpu.memory_space<vmem>>, vector<1x1x286x4xf32>
    %35 = vector.shape_cast %34 : vector<1x1x286x4xf32> to vector<286x4xf32>
    %36 = arith.truncf %35 : vector<286x4xf32> to vector<286x4xbf16>
    %c5 = arith.constant 5 : index
    %c0_35 = arith.constant 0 : index
    %c0_36 = arith.constant 0 : index
    %37 = vector.load %arg6[%c5, %c0_35, %c0_36] : memref<27x4x32xbf16, #tpu.memory_space<vmem>>, vector<1x4x32xbf16>
    %38 = vector.shape_cast %37 : vector<1x4x32xbf16> to vector<4x32xbf16>
    %cst_37 = arith.constant dense<0.000000e+00> : vector<286x32xf32>
    %39 = tpu.matmul %36, %38, %cst_37 {dimension_numbers = #tpu.dot_dimension_numbers<[1], [0], [0], [1], [0, 0, 1, 1], [], []>} : vector<286x4xbf16>, vector<4x32xbf16>, vector<286x32xf32> -> vector<286x32xf32>
    %40 = arith.addf %33, %39 : vector<286x32xf32>
    %c0_38 = arith.constant 0 : index
    %c0_39 = arith.constant 0 : index
    %c36 = arith.constant 36 : index
    %c0_40 = arith.constant 0 : index
    %41 = vector.load %arg2[%c0_38, %c0_39, %c36, %c0_40] : memref<1x1x324x4xf32, #tpu.memory_space<vmem>>, vector<1x1x286x4xf32>
    %42 = vector.shape_cast %41 : vector<1x1x286x4xf32> to vector<286x4xf32>
    %43 = arith.truncf %42 : vector<286x4xf32> to vector<286x4xbf16>
    %c6 = arith.constant 6 : index
    %c0_41 = arith.constant 0 : index
    %c0_42 = arith.constant 0 : index
    %44 = vector.load %arg6[%c6, %c0_41, %c0_42] : memref<27x4x32xbf16, #tpu.memory_space<vmem>>, vector<1x4x32xbf16>
    %45 = vector.shape_cast %44 : vector<1x4x32xbf16> to vector<4x32xbf16>
    %cst_43 = arith.constant dense<0.000000e+00> : vector<286x32xf32>
    %46 = tpu.matmul %43, %45, %cst_43 {dimension_numbers = #tpu.dot_dimension_numbers<[1], [0], [0], [1], [0, 0, 1, 1], [], []>} : vector<286x4xbf16>, vector<4x32xbf16>, vector<286x32xf32> -> vector<286x32xf32>
    %47 = arith.addf %40, %46 : vector<286x32xf32>
    %c0_44 = arith.constant 0 : index
    %c0_45 = arith.constant 0 : index
    %c37 = arith.constant 37 : index
    %c0_46 = arith.constant 0 : index
    %48 = vector.load %arg2[%c0_44, %c0_45, %c37, %c0_46] : memref<1x1x324x4xf32, #tpu.memory_space<vmem>>, vector<1x1x286x4xf32>
    %49 = vector.shape_cast %48 : vector<1x1x286x4xf32> to vector<286x4xf32>
    %50 = arith.truncf %49 : vector<286x4xf32> to vector<286x4xbf16>
    %c7 = arith.constant 7 : index
    %c0_47 = arith.constant 0 : index
    %c0_48 = arith.constant 0 : index
    %51 = vector.load %arg6[%c7, %c0_47, %c0_48] : memref<27x4x32xbf16, #tpu.memory_space<vmem>>, vector<1x4x32xbf16>
    %52 = vector.shape_cast %51 : vector<1x4x32xbf16> to vector<4x32xbf16>
    %cst_49 = arith.constant dense<0.000000e+00> : vector<286x32xf32>
    %53 = tpu.matmul %50, %52, %cst_49 {dimension_numbers = #tpu.dot_dimension_numbers<[1], [0], [0], [1], [0, 0, 1, 1], [], []>} : vector<286x4xbf16>, vector<4x32xbf16>, vector<286x32xf32> -> vector<286x32xf32>
    %54 = arith.addf %47, %53 : vector<286x32xf32>
    %c0_50 = arith.constant 0 : index
    %c0_51 = arith.constant 0 : index
    %c38 = arith.constant 38 : index
    %c0_52 = arith.constant 0 : index
    %55 = vector.load %arg2[%c0_50, %c0_51, %c38, %c0_52] : memref<1x1x324x4xf32, #tpu.memory_space<vmem>>, vector<1x1x286x4xf32>
    %56 = vector.shape_cast %55 : vector<1x1x286x4xf32> to vector<286x4xf32>
    %57 = arith.truncf %56 : vector<286x4xf32> to vector<286x4xbf16>
    %c8 = arith.constant 8 : index
    %c0_53 = arith.constant 0 : index
    %c0_54 = arith.constant 0 : index
    %58 = vector.load %arg6[%c8, %c0_53, %c0_54] : memref<27x4x32xbf16, #tpu.memory_space<vmem>>, vector<1x4x32xbf16>
    %59 = vector.shape_cast %58 : vector<1x4x32xbf16> to vector<4x32xbf16>
    %cst_55 = arith.constant dense<0.000000e+00> : vector<286x32xf32>
    %60 = tpu.matmul %57, %59, %cst_55 {dimension_numbers = #tpu.dot_dimension_numbers<[1], [0], [0], [1], [0, 0, 1, 1], [], []>} : vector<286x4xbf16>, vector<4x32xbf16>, vector<286x32xf32> -> vector<286x32xf32>
    %61 = arith.addf %54, %60 : vector<286x32xf32>
    %c0_56 = arith.constant 0 : index
    %c0_57 = arith.constant 0 : index
    %c0_58 = arith.constant 0 : index
    %c0_59 = arith.constant 0 : index
    %62 = vector.load %arg3[%c0_56, %c0_57, %c0_58, %c0_59] : memref<1x1x324x4xf32, #tpu.memory_space<vmem>>, vector<1x1x286x4xf32>
    %63 = vector.shape_cast %62 : vector<1x1x286x4xf32> to vector<286x4xf32>
    %64 = arith.truncf %63 : vector<286x4xf32> to vector<286x4xbf16>
    %c9 = arith.constant 9 : index
    %c0_60 = arith.constant 0 : index
    %c0_61 = arith.constant 0 : index
    %65 = vector.load %arg6[%c9, %c0_60, %c0_61] : memref<27x4x32xbf16, #tpu.memory_space<vmem>>, vector<1x4x32xbf16>
    %66 = vector.shape_cast %65 : vector<1x4x32xbf16> to vector<4x32xbf16>
    %cst_62 = arith.constant dense<0.000000e+00> : vector<286x32xf32>
    %67 = tpu.matmul %64, %66, %cst_62 {dimension_numbers = #tpu.dot_dimension_numbers<[1], [0], [0], [1], [0, 0, 1, 1], [], []>} : vector<286x4xbf16>, vector<4x32xbf16>, vector<286x32xf32> -> vector<286x32xf32>
    %68 = arith.addf %61, %67 : vector<286x32xf32>
    %c0_63 = arith.constant 0 : index
    %c0_64 = arith.constant 0 : index
    %c1_65 = arith.constant 1 : index
    %c0_66 = arith.constant 0 : index
    %69 = vector.load %arg3[%c0_63, %c0_64, %c1_65, %c0_66] : memref<1x1x324x4xf32, #tpu.memory_space<vmem>>, vector<1x1x286x4xf32>
    %70 = vector.shape_cast %69 : vector<1x1x286x4xf32> to vector<286x4xf32>
    %71 = arith.truncf %70 : vector<286x4xf32> to vector<286x4xbf16>
    %c10 = arith.constant 10 : index
    %c0_67 = arith.constant 0 : index
    %c0_68 = arith.constant 0 : index
    %72 = vector.load %arg6[%c10, %c0_67, %c0_68] : memref<27x4x32xbf16, #tpu.memory_space<vmem>>, vector<1x4x32xbf16>
    %73 = vector.shape_cast %72 : vector<1x4x32xbf16> to vector<4x32xbf16>
    %cst_69 = arith.constant dense<0.000000e+00> : vector<286x32xf32>
    %74 = tpu.matmul %71, %73, %cst_69 {dimension_numbers = #tpu.dot_dimension_numbers<[1], [0], [0], [1], [0, 0, 1, 1], [], []>} : vector<286x4xbf16>, vector<4x32xbf16>, vector<286x32xf32> -> vector<286x32xf32>
    %75 = arith.addf %68, %74 : vector<286x32xf32>
    %c0_70 = arith.constant 0 : index
    %c0_71 = arith.constant 0 : index
    %c2_72 = arith.constant 2 : index
    %c0_73 = arith.constant 0 : index
    %76 = vector.load %arg3[%c0_70, %c0_71, %c2_72, %c0_73] : memref<1x1x324x4xf32, #tpu.memory_space<vmem>>, vector<1x1x286x4xf32>
    %77 = vector.shape_cast %76 : vector<1x1x286x4xf32> to vector<286x4xf32>
    %78 = arith.truncf %77 : vector<286x4xf32> to vector<286x4xbf16>
    %c11 = arith.constant 11 : index
    %c0_74 = arith.constant 0 : index
    %c0_75 = arith.constant 0 : index
    %79 = vector.load %arg6[%c11, %c0_74, %c0_75] : memref<27x4x32xbf16, #tpu.memory_space<vmem>>, vector<1x4x32xbf16>
    %80 = vector.shape_cast %79 : vector<1x4x32xbf16> to vector<4x32xbf16>
    %cst_76 = arith.constant dense<0.000000e+00> : vector<286x32xf32>
    %81 = tpu.matmul %78, %80, %cst_76 {dimension_numbers = #tpu.dot_dimension_numbers<[1], [0], [0], [1], [0, 0, 1, 1], [], []>} : vector<286x4xbf16>, vector<4x32xbf16>, vector<286x32xf32> -> vector<286x32xf32>
    %82 = arith.addf %75, %81 : vector<286x32xf32>
    %c0_77 = arith.constant 0 : index
    %c0_78 = arith.constant 0 : index
    %c18_79 = arith.constant 18 : index
    %c0_80 = arith.constant 0 : index
    %83 = vector.load %arg3[%c0_77, %c0_78, %c18_79, %c0_80] : memref<1x1x324x4xf32, #tpu.memory_space<vmem>>, vector<1x1x286x4xf32>
    %84 = vector.shape_cast %83 : vector<1x1x286x4xf32> to vector<286x4xf32>
    %85 = arith.truncf %84 : vector<286x4xf32> to vector<286x4xbf16>
    %c12 = arith.constant 12 : index
    %c0_81 = arith.constant 0 : index
    %c0_82 = arith.constant 0 : index
    %86 = vector.load %arg6[%c12, %c0_81, %c0_82] : memref<27x4x32xbf16, #tpu.memory_space<vmem>>, vector<1x4x32xbf16>
    %87 = vector.shape_cast %86 : vector<1x4x32xbf16> to vector<4x32xbf16>
    %cst_83 = arith.constant dense<0.000000e+00> : vector<286x32xf32>
    %88 = tpu.matmul %85, %87, %cst_83 {dimension_numbers = #tpu.dot_dimension_numbers<[1], [0], [0], [1], [0, 0, 1, 1], [], []>} : vector<286x4xbf16>, vector<4x32xbf16>, vector<286x32xf32> -> vector<286x32xf32>
    %89 = arith.addf %82, %88 : vector<286x32xf32>
    %c0_84 = arith.constant 0 : index
    %c0_85 = arith.constant 0 : index
    %c19_86 = arith.constant 19 : index
    %c0_87 = arith.constant 0 : index
    %90 = vector.load %arg3[%c0_84, %c0_85, %c19_86, %c0_87] : memref<1x1x324x4xf32, #tpu.memory_space<vmem>>, vector<1x1x286x4xf32>
    %91 = vector.shape_cast %90 : vector<1x1x286x4xf32> to vector<286x4xf32>
    %92 = arith.truncf %91 : vector<286x4xf32> to vector<286x4xbf16>
    %c13 = arith.constant 13 : index
    %c0_88 = arith.constant 0 : index
    %c0_89 = arith.constant 0 : index
    %93 = vector.load %arg6[%c13, %c0_88, %c0_89] : memref<27x4x32xbf16, #tpu.memory_space<vmem>>, vector<1x4x32xbf16>
    %94 = vector.shape_cast %93 : vector<1x4x32xbf16> to vector<4x32xbf16>
    %cst_90 = arith.constant dense<0.000000e+00> : vector<286x32xf32>
    %95 = tpu.matmul %92, %94, %cst_90 {dimension_numbers = #tpu.dot_dimension_numbers<[1], [0], [0], [1], [0, 0, 1, 1], [], []>} : vector<286x4xbf16>, vector<4x32xbf16>, vector<286x32xf32> -> vector<286x32xf32>
    %96 = arith.addf %89, %95 : vector<286x32xf32>
    %c0_91 = arith.constant 0 : index
    %c0_92 = arith.constant 0 : index
    %c20_93 = arith.constant 20 : index
    %c0_94 = arith.constant 0 : index
    %97 = vector.load %arg3[%c0_91, %c0_92, %c20_93, %c0_94] : memref<1x1x324x4xf32, #tpu.memory_space<vmem>>, vector<1x1x286x4xf32>
    %98 = vector.shape_cast %97 : vector<1x1x286x4xf32> to vector<286x4xf32>
    %99 = arith.truncf %98 : vector<286x4xf32> to vector<286x4xbf16>
    %c14 = arith.constant 14 : index
    %c0_95 = arith.constant 0 : index
    %c0_96 = arith.constant 0 : index
    %100 = vector.load %arg6[%c14, %c0_95, %c0_96] : memref<27x4x32xbf16, #tpu.memory_space<vmem>>, vector<1x4x32xbf16>
    %101 = vector.shape_cast %100 : vector<1x4x32xbf16> to vector<4x32xbf16>
    %cst_97 = arith.constant dense<0.000000e+00> : vector<286x32xf32>
    %102 = tpu.matmul %99, %101, %cst_97 {dimension_numbers = #tpu.dot_dimension_numbers<[1], [0], [0], [1], [0, 0, 1, 1], [], []>} : vector<286x4xbf16>, vector<4x32xbf16>, vector<286x32xf32> -> vector<286x32xf32>
    %103 = arith.addf %96, %102 : vector<286x32xf32>
    %c0_98 = arith.constant 0 : index
    %c0_99 = arith.constant 0 : index
    %c36_100 = arith.constant 36 : index
    %c0_101 = arith.constant 0 : index
    %104 = vector.load %arg3[%c0_98, %c0_99, %c36_100, %c0_101] : memref<1x1x324x4xf32, #tpu.memory_space<vmem>>, vector<1x1x286x4xf32>
    %105 = vector.shape_cast %104 : vector<1x1x286x4xf32> to vector<286x4xf32>
    %106 = arith.truncf %105 : vector<286x4xf32> to vector<286x4xbf16>
    %c15 = arith.constant 15 : index
    %c0_102 = arith.constant 0 : index
    %c0_103 = arith.constant 0 : index
    %107 = vector.load %arg6[%c15, %c0_102, %c0_103] : memref<27x4x32xbf16, #tpu.memory_space<vmem>>, vector<1x4x32xbf16>
    %108 = vector.shape_cast %107 : vector<1x4x32xbf16> to vector<4x32xbf16>
    %cst_104 = arith.constant dense<0.000000e+00> : vector<286x32xf32>
    %109 = tpu.matmul %106, %108, %cst_104 {dimension_numbers = #tpu.dot_dimension_numbers<[1], [0], [0], [1], [0, 0, 1, 1], [], []>} : vector<286x4xbf16>, vector<4x32xbf16>, vector<286x32xf32> -> vector<286x32xf32>
    %110 = arith.addf %103, %109 : vector<286x32xf32>
    %c0_105 = arith.constant 0 : index
    %c0_106 = arith.constant 0 : index
    %c37_107 = arith.constant 37 : index
    %c0_108 = arith.constant 0 : index
    %111 = vector.load %arg3[%c0_105, %c0_106, %c37_107, %c0_108] : memref<1x1x324x4xf32, #tpu.memory_space<vmem>>, vector<1x1x286x4xf32>
    %112 = vector.shape_cast %111 : vector<1x1x286x4xf32> to vector<286x4xf32>
    %113 = arith.truncf %112 : vector<286x4xf32> to vector<286x4xbf16>
    %c16 = arith.constant 16 : index
    %c0_109 = arith.constant 0 : index
    %c0_110 = arith.constant 0 : index
    %114 = vector.load %arg6[%c16, %c0_109, %c0_110] : memref<27x4x32xbf16, #tpu.memory_space<vmem>>, vector<1x4x32xbf16>
    %115 = vector.shape_cast %114 : vector<1x4x32xbf16> to vector<4x32xbf16>
    %cst_111 = arith.constant dense<0.000000e+00> : vector<286x32xf32>
    %116 = tpu.matmul %113, %115, %cst_111 {dimension_numbers = #tpu.dot_dimension_numbers<[1], [0], [0], [1], [0, 0, 1, 1], [], []>} : vector<286x4xbf16>, vector<4x32xbf16>, vector<286x32xf32> -> vector<286x32xf32>
    %117 = arith.addf %110, %116 : vector<286x32xf32>
    %c0_112 = arith.constant 0 : index
    %c0_113 = arith.constant 0 : index
    %c38_114 = arith.constant 38 : index
    %c0_115 = arith.constant 0 : index
    %118 = vector.load %arg3[%c0_112, %c0_113, %c38_114, %c0_115] : memref<1x1x324x4xf32, #tpu.memory_space<vmem>>, vector<1x1x286x4xf32>
    %119 = vector.shape_cast %118 : vector<1x1x286x4xf32> to vector<286x4xf32>
    %120 = arith.truncf %119 : vector<286x4xf32> to vector<286x4xbf16>
    %c17 = arith.constant 17 : index
    %c0_116 = arith.constant 0 : index
    %c0_117 = arith.constant 0 : index
    %121 = vector.load %arg6[%c17, %c0_116, %c0_117] : memref<27x4x32xbf16, #tpu.memory_space<vmem>>, vector<1x4x32xbf16>
    %122 = vector.shape_cast %121 : vector<1x4x32xbf16> to vector<4x32xbf16>
    %cst_118 = arith.constant dense<0.000000e+00> : vector<286x32xf32>
    %123 = tpu.matmul %120, %122, %cst_118 {dimension_numbers = #tpu.dot_dimension_numbers<[1], [0], [0], [1], [0, 0, 1, 1], [], []>} : vector<286x4xbf16>, vector<4x32xbf16>, vector<286x32xf32> -> vector<286x32xf32>
    %124 = arith.addf %117, %123 : vector<286x32xf32>
    %c0_119 = arith.constant 0 : index
    %c0_120 = arith.constant 0 : index
    %c0_121 = arith.constant 0 : index
    %c0_122 = arith.constant 0 : index
    %125 = vector.load %arg4[%c0_119, %c0_120, %c0_121, %c0_122] : memref<1x1x324x4xf32, #tpu.memory_space<vmem>>, vector<1x1x286x4xf32>
    %126 = vector.shape_cast %125 : vector<1x1x286x4xf32> to vector<286x4xf32>
    %127 = arith.truncf %126 : vector<286x4xf32> to vector<286x4xbf16>
    %c18_123 = arith.constant 18 : index
    %c0_124 = arith.constant 0 : index
    %c0_125 = arith.constant 0 : index
    %128 = vector.load %arg6[%c18_123, %c0_124, %c0_125] : memref<27x4x32xbf16, #tpu.memory_space<vmem>>, vector<1x4x32xbf16>
    %129 = vector.shape_cast %128 : vector<1x4x32xbf16> to vector<4x32xbf16>
    %cst_126 = arith.constant dense<0.000000e+00> : vector<286x32xf32>
    %130 = tpu.matmul %127, %129, %cst_126 {dimension_numbers = #tpu.dot_dimension_numbers<[1], [0], [0], [1], [0, 0, 1, 1], [], []>} : vector<286x4xbf16>, vector<4x32xbf16>, vector<286x32xf32> -> vector<286x32xf32>
    %131 = arith.addf %124, %130 : vector<286x32xf32>
    %c0_127 = arith.constant 0 : index
    %c0_128 = arith.constant 0 : index
    %c1_129 = arith.constant 1 : index
    %c0_130 = arith.constant 0 : index
    %132 = vector.load %arg4[%c0_127, %c0_128, %c1_129, %c0_130] : memref<1x1x324x4xf32, #tpu.memory_space<vmem>>, vector<1x1x286x4xf32>
    %133 = vector.shape_cast %132 : vector<1x1x286x4xf32> to vector<286x4xf32>
    %134 = arith.truncf %133 : vector<286x4xf32> to vector<286x4xbf16>
    %c19_131 = arith.constant 19 : index
    %c0_132 = arith.constant 0 : index
    %c0_133 = arith.constant 0 : index
    %135 = vector.load %arg6[%c19_131, %c0_132, %c0_133] : memref<27x4x32xbf16, #tpu.memory_space<vmem>>, vector<1x4x32xbf16>
    %136 = vector.shape_cast %135 : vector<1x4x32xbf16> to vector<4x32xbf16>
    %cst_134 = arith.constant dense<0.000000e+00> : vector<286x32xf32>
    %137 = tpu.matmul %134, %136, %cst_134 {dimension_numbers = #tpu.dot_dimension_numbers<[1], [0], [0], [1], [0, 0, 1, 1], [], []>} : vector<286x4xbf16>, vector<4x32xbf16>, vector<286x32xf32> -> vector<286x32xf32>
    %138 = arith.addf %131, %137 : vector<286x32xf32>
    %c0_135 = arith.constant 0 : index
    %c0_136 = arith.constant 0 : index
    %c2_137 = arith.constant 2 : index
    %c0_138 = arith.constant 0 : index
    %139 = vector.load %arg4[%c0_135, %c0_136, %c2_137, %c0_138] : memref<1x1x324x4xf32, #tpu.memory_space<vmem>>, vector<1x1x286x4xf32>
    %140 = vector.shape_cast %139 : vector<1x1x286x4xf32> to vector<286x4xf32>
    %141 = arith.truncf %140 : vector<286x4xf32> to vector<286x4xbf16>
    %c20_139 = arith.constant 20 : index
    %c0_140 = arith.constant 0 : index
    %c0_141 = arith.constant 0 : index
    %142 = vector.load %arg6[%c20_139, %c0_140, %c0_141] : memref<27x4x32xbf16, #tpu.memory_space<vmem>>, vector<1x4x32xbf16>
    %143 = vector.shape_cast %142 : vector<1x4x32xbf16> to vector<4x32xbf16>
    %cst_142 = arith.constant dense<0.000000e+00> : vector<286x32xf32>
    %144 = tpu.matmul %141, %143, %cst_142 {dimension_numbers = #tpu.dot_dimension_numbers<[1], [0], [0], [1], [0, 0, 1, 1], [], []>} : vector<286x4xbf16>, vector<4x32xbf16>, vector<286x32xf32> -> vector<286x32xf32>
    %145 = arith.addf %138, %144 : vector<286x32xf32>
    %c0_143 = arith.constant 0 : index
    %c0_144 = arith.constant 0 : index
    %c18_145 = arith.constant 18 : index
    %c0_146 = arith.constant 0 : index
    %146 = vector.load %arg4[%c0_143, %c0_144, %c18_145, %c0_146] : memref<1x1x324x4xf32, #tpu.memory_space<vmem>>, vector<1x1x286x4xf32>
    %147 = vector.shape_cast %146 : vector<1x1x286x4xf32> to vector<286x4xf32>
    %148 = arith.truncf %147 : vector<286x4xf32> to vector<286x4xbf16>
    %c21 = arith.constant 21 : index
    %c0_147 = arith.constant 0 : index
    %c0_148 = arith.constant 0 : index
    %149 = vector.load %arg6[%c21, %c0_147, %c0_148] : memref<27x4x32xbf16, #tpu.memory_space<vmem>>, vector<1x4x32xbf16>
    %150 = vector.shape_cast %149 : vector<1x4x32xbf16> to vector<4x32xbf16>
    %cst_149 = arith.constant dense<0.000000e+00> : vector<286x32xf32>
    %151 = tpu.matmul %148, %150, %cst_149 {dimension_numbers = #tpu.dot_dimension_numbers<[1], [0], [0], [1], [0, 0, 1, 1], [], []>} : vector<286x4xbf16>, vector<4x32xbf16>, vector<286x32xf32> -> vector<286x32xf32>
    %152 = arith.addf %145, %151 : vector<286x32xf32>
    %c0_150 = arith.constant 0 : index
    %c0_151 = arith.constant 0 : index
    %c19_152 = arith.constant 19 : index
    %c0_153 = arith.constant 0 : index
    %153 = vector.load %arg4[%c0_150, %c0_151, %c19_152, %c0_153] : memref<1x1x324x4xf32, #tpu.memory_space<vmem>>, vector<1x1x286x4xf32>
    %154 = vector.shape_cast %153 : vector<1x1x286x4xf32> to vector<286x4xf32>
    %155 = arith.truncf %154 : vector<286x4xf32> to vector<286x4xbf16>
    %c22 = arith.constant 22 : index
    %c0_154 = arith.constant 0 : index
    %c0_155 = arith.constant 0 : index
    %156 = vector.load %arg6[%c22, %c0_154, %c0_155] : memref<27x4x32xbf16, #tpu.memory_space<vmem>>, vector<1x4x32xbf16>
    %157 = vector.shape_cast %156 : vector<1x4x32xbf16> to vector<4x32xbf16>
    %cst_156 = arith.constant dense<0.000000e+00> : vector<286x32xf32>
    %158 = tpu.matmul %155, %157, %cst_156 {dimension_numbers = #tpu.dot_dimension_numbers<[1], [0], [0], [1], [0, 0, 1, 1], [], []>} : vector<286x4xbf16>, vector<4x32xbf16>, vector<286x32xf32> -> vector<286x32xf32>
    %159 = arith.addf %152, %158 : vector<286x32xf32>
    %c0_157 = arith.constant 0 : index
    %c0_158 = arith.constant 0 : index
    %c20_159 = arith.constant 20 : index
    %c0_160 = arith.constant 0 : index
    %160 = vector.load %arg4[%c0_157, %c0_158, %c20_159, %c0_160] : memref<1x1x324x4xf32, #tpu.memory_space<vmem>>, vector<1x1x286x4xf32>
    %161 = vector.shape_cast %160 : vector<1x1x286x4xf32> to vector<286x4xf32>
    %162 = arith.truncf %161 : vector<286x4xf32> to vector<286x4xbf16>
    %c23 = arith.constant 23 : index
    %c0_161 = arith.constant 0 : index
    %c0_162 = arith.constant 0 : index
    %163 = vector.load %arg6[%c23, %c0_161, %c0_162] : memref<27x4x32xbf16, #tpu.memory_space<vmem>>, vector<1x4x32xbf16>
    %164 = vector.shape_cast %163 : vector<1x4x32xbf16> to vector<4x32xbf16>
    %cst_163 = arith.constant dense<0.000000e+00> : vector<286x32xf32>
    %165 = tpu.matmul %162, %164, %cst_163 {dimension_numbers = #tpu.dot_dimension_numbers<[1], [0], [0], [1], [0, 0, 1, 1], [], []>} : vector<286x4xbf16>, vector<4x32xbf16>, vector<286x32xf32> -> vector<286x32xf32>
    %166 = arith.addf %159, %165 : vector<286x32xf32>
    %c0_164 = arith.constant 0 : index
    %c0_165 = arith.constant 0 : index
    %c36_166 = arith.constant 36 : index
    %c0_167 = arith.constant 0 : index
    %167 = vector.load %arg4[%c0_164, %c0_165, %c36_166, %c0_167] : memref<1x1x324x4xf32, #tpu.memory_space<vmem>>, vector<1x1x286x4xf32>
    %168 = vector.shape_cast %167 : vector<1x1x286x4xf32> to vector<286x4xf32>
    %169 = arith.truncf %168 : vector<286x4xf32> to vector<286x4xbf16>
    %c24 = arith.constant 24 : index
    %c0_168 = arith.constant 0 : index
    %c0_169 = arith.constant 0 : index
    %170 = vector.load %arg6[%c24, %c0_168, %c0_169] : memref<27x4x32xbf16, #tpu.memory_space<vmem>>, vector<1x4x32xbf16>
    %171 = vector.shape_cast %170 : vector<1x4x32xbf16> to vector<4x32xbf16>
    %cst_170 = arith.constant dense<0.000000e+00> : vector<286x32xf32>
    %172 = tpu.matmul %169, %171, %cst_170 {dimension_numbers = #tpu.dot_dimension_numbers<[1], [0], [0], [1], [0, 0, 1, 1], [], []>} : vector<286x4xbf16>, vector<4x32xbf16>, vector<286x32xf32> -> vector<286x32xf32>
    %173 = arith.addf %166, %172 : vector<286x32xf32>
    %c0_171 = arith.constant 0 : index
    %c0_172 = arith.constant 0 : index
    %c37_173 = arith.constant 37 : index
    %c0_174 = arith.constant 0 : index
    %174 = vector.load %arg4[%c0_171, %c0_172, %c37_173, %c0_174] : memref<1x1x324x4xf32, #tpu.memory_space<vmem>>, vector<1x1x286x4xf32>
    %175 = vector.shape_cast %174 : vector<1x1x286x4xf32> to vector<286x4xf32>
    %176 = arith.truncf %175 : vector<286x4xf32> to vector<286x4xbf16>
    %c25 = arith.constant 25 : index
    %c0_175 = arith.constant 0 : index
    %c0_176 = arith.constant 0 : index
    %177 = vector.load %arg6[%c25, %c0_175, %c0_176] : memref<27x4x32xbf16, #tpu.memory_space<vmem>>, vector<1x4x32xbf16>
    %178 = vector.shape_cast %177 : vector<1x4x32xbf16> to vector<4x32xbf16>
    %cst_177 = arith.constant dense<0.000000e+00> : vector<286x32xf32>
    %179 = tpu.matmul %176, %178, %cst_177 {dimension_numbers = #tpu.dot_dimension_numbers<[1], [0], [0], [1], [0, 0, 1, 1], [], []>} : vector<286x4xbf16>, vector<4x32xbf16>, vector<286x32xf32> -> vector<286x32xf32>
    %180 = arith.addf %173, %179 : vector<286x32xf32>
    %c0_178 = arith.constant 0 : index
    %c0_179 = arith.constant 0 : index
    %c38_180 = arith.constant 38 : index
    %c0_181 = arith.constant 0 : index
    %181 = vector.load %arg4[%c0_178, %c0_179, %c38_180, %c0_181] : memref<1x1x324x4xf32, #tpu.memory_space<vmem>>, vector<1x1x286x4xf32>
    %182 = vector.shape_cast %181 : vector<1x1x286x4xf32> to vector<286x4xf32>
    %183 = arith.truncf %182 : vector<286x4xf32> to vector<286x4xbf16>
    %c26 = arith.constant 26 : index
    %c0_182 = arith.constant 0 : index
    %c0_183 = arith.constant 0 : index
    %184 = vector.load %arg6[%c26, %c0_182, %c0_183] : memref<27x4x32xbf16, #tpu.memory_space<vmem>>, vector<1x4x32xbf16>
    %185 = vector.shape_cast %184 : vector<1x4x32xbf16> to vector<4x32xbf16>
    %cst_184 = arith.constant dense<0.000000e+00> : vector<286x32xf32>
    %186 = tpu.matmul %183, %185, %cst_184 {dimension_numbers = #tpu.dot_dimension_numbers<[1], [0], [0], [1], [0, 0, 1, 1], [], []>} : vector<286x4xbf16>, vector<4x32xbf16>, vector<286x32xf32> -> vector<286x32xf32>
    %187 = arith.addf %180, %186 : vector<286x32xf32>
    %c0_185 = arith.constant 0 : index
    %c0_186 = arith.constant 0 : index
    %c0_187 = arith.constant 0 : index
    %c0_188 = arith.constant 0 : index
    %188 = vector.load %arg7[%c0_185, %c0_186, %c0_187, %c0_188] : memref<1x1x286x32xf32, #tpu.memory_space<vmem>>, vector<1x1x286x32xf32>
    %189 = vector.shape_cast %188 : vector<1x1x286x32xf32> to vector<286x32xf32>
    %190 = vector.shape_cast %187 : vector<286x32xf32> to vector<1x1x286x32xf32>
    tpu.vector_store %arg7[%c0_185, %c0_186, %c0_187, %c0_188], %190 {strides = array<i32>} : memref<1x1x286x32xf32, #tpu.memory_space<vmem>>, vector<1x1x286x32xf32>,
    %c0_i32 = arith.constant 0 : i32
    %191 = arith.cmpi eq, %arg1, %c0_i32 : i32
    %192 = arith.extui %191 : i1 to i32
    %c0_i32_189 = arith.constant 0 : i32
    %193 = arith.cmpi ne, %192, %c0_i32_189 : i32
    scf.if %193 {
      %cst_206 = arith.constant 0.000000e+00 : f32
      %214 = vector.broadcast %cst_206 : f32 to vector<1x32xf32>
      %c0_207 = arith.constant 0 : index
      %c0_208 = arith.constant 0 : index
      %c0_209 = arith.constant 0 : index
      %215 = vector.load %arg8[%c0_207, %c0_208, %c0_209] : memref<1x1x32xf32, #tpu.memory_space<vmem>>, vector<1x1x32xf32>
      %216 = vector.shape_cast %215 : vector<1x1x32xf32> to vector<1x32xf32>
      %217 = vector.shape_cast %214 : vector<1x32xf32> to vector<1x1x32xf32>
      tpu.vector_store %arg8[%c0_207, %c0_208, %c0_209], %217 {strides = array<i32>} : memref<1x1x32xf32, #tpu.memory_space<vmem>>, vector<1x1x32xf32>,
      %cst_210 = arith.constant 0.000000e+00 : f32
      %218 = vector.broadcast %cst_210 : f32 to vector<1x32xf32>
      %c0_211 = arith.constant 0 : index
      %c0_212 = arith.constant 0 : index
      %c0_213 = arith.constant 0 : index
      %219 = vector.load %arg9[%c0_211, %c0_212, %c0_213] : memref<1x1x32xf32, #tpu.memory_space<vmem>>, vector<1x1x32xf32>
      %220 = vector.shape_cast %219 : vector<1x1x32xf32> to vector<1x32xf32>
      %221 = vector.shape_cast %218 : vector<1x32xf32> to vector<1x1x32xf32>
      tpu.vector_store %arg9[%c0_211, %c0_212, %c0_213], %221 {strides = array<i32>} : memref<1x1x32xf32, #tpu.memory_space<vmem>>, vector<1x1x32xf32>,
    } else {
    }
    %c0_190 = arith.constant 0 : index
    %c0_191 = arith.constant 0 : index
    %194 = vector.load %arg5[%c0_190, %c0_191] : memref<286x1xf32, #tpu.memory_space<vmem>>, vector<286x1xf32>
    %195 = vector.broadcast %194 : vector<286x1xf32> to vector<286x32xf32>
    %196 = arith.mulf %187, %195 : vector<286x32xf32>
    %c0_192 = arith.constant 0 : index
    %c0_193 = arith.constant 0 : index
    %c0_194 = arith.constant 0 : index
    %197 = vector.load %arg8[%c0_192, %c0_193, %c0_194] : memref<1x1x32xf32, #tpu.memory_space<vmem>>, vector<1x1x32xf32>
    %198 = vector.shape_cast %197 : vector<1x1x32xf32> to vector<1x32xf32>
    %cst_195 = arith.constant dense<0.000000e+00> : vector<32xf32>
    %199 = vector.multi_reduction <add>, %196, %cst_195 [0] : vector<286x32xf32> to vector<32xf32>
    %200 = vector.shape_cast %199 : vector<32xf32> to vector<1x32xf32>
    %201 = arith.addf %198, %200 : vector<1x32xf32>
    %c0_196 = arith.constant 0 : index
    %c0_197 = arith.constant 0 : index
    %c0_198 = arith.constant 0 : index
    %202 = vector.load %arg8[%c0_196, %c0_197, %c0_198] : memref<1x1x32xf32, #tpu.memory_space<vmem>>, vector<1x1x32xf32>
    %203 = vector.shape_cast %202 : vector<1x1x32xf32> to vector<1x32xf32>
    %204 = vector.shape_cast %201 : vector<1x32xf32> to vector<1x1x32xf32>
    tpu.vector_store %arg8[%c0_196, %c0_197, %c0_198], %204 {strides = array<i32>} : memref<1x1x32xf32, #tpu.memory_space<vmem>>, vector<1x1x32xf32>,
    %c0_199 = arith.constant 0 : index
    %c0_200 = arith.constant 0 : index
    %c0_201 = arith.constant 0 : index
    %205 = vector.load %arg9[%c0_199, %c0_200, %c0_201] : memref<1x1x32xf32, #tpu.memory_space<vmem>>, vector<1x1x32xf32>
    %206 = vector.shape_cast %205 : vector<1x1x32xf32> to vector<1x32xf32>
    %207 = arith.mulf %196, %187 : vector<286x32xf32>
    %cst_202 = arith.constant dense<0.000000e+00> : vector<32xf32>
    %208 = vector.multi_reduction <add>, %207, %cst_202 [0] : vector<286x32xf32> to vector<32xf32>
    %209 = vector.shape_cast %208 : vector<32xf32> to vector<1x32xf32>
    %210 = arith.addf %206, %209 : vector<1x32xf32>
    %c0_203 = arith.constant 0 : index
    %c0_204 = arith.constant 0 : index
    %c0_205 = arith.constant 0 : index
    %211 = vector.load %arg9[%c0_203, %c0_204, %c0_205] : memref<1x1x32xf32, #tpu.memory_space<vmem>>, vector<1x1x32xf32>
    %212 = vector.shape_cast %211 : vector<1x1x32xf32> to vector<1x32xf32>
    %213 = vector.shape_cast %210 : vector<1x32xf32> to vector<1x1x32xf32>
    tpu.vector_store %arg9[%c0_203, %c0_204, %c0_205], %213 {strides = array<i32>} : memref<1x1x32xf32, #tpu.memory_space<vmem>>, vector<1x1x32xf32>,
    return
  }
  func.func @transform_0(%arg0: i32, %arg1: i32) -> (i32, i32, i32, i32) {
    %c1_i32 = arith.constant 1 : i32
    %0 = arith.muli %arg1, %c1_i32 : i32
    %c0_i32 = arith.constant 0 : i32
    %1 = arith.addi %0, %c0_i32 : i32
    %c0_i32_0 = arith.constant 0 : i32
    %c0_i32_1 = arith.constant 0 : i32
    %c0_i32_2 = arith.constant 0 : i32
    return %arg0, %1, %c0_i32_0, %c0_i32_1 : i32, i32, i32, i32
  }
  func.func @transform_1(%arg0: i32, %arg1: i32) -> (i32, i32, i32, i32) {
    %c1_i32 = arith.constant 1 : i32
    %0 = arith.muli %arg1, %c1_i32 : i32
    %c1_i32_0 = arith.constant 1 : i32
    %1 = arith.addi %0, %c1_i32_0 : i32
    %c0_i32 = arith.constant 0 : i32
    %c0_i32_1 = arith.constant 0 : i32
    %c0_i32_2 = arith.constant 0 : i32
    return %arg0, %1, %c0_i32, %c0_i32_1 : i32, i32, i32, i32
  }
  func.func @transform_2(%arg0: i32, %arg1: i32) -> (i32, i32, i32, i32) {
    %c1_i32 = arith.constant 1 : i32
    %0 = arith.muli %arg1, %c1_i32 : i32
    %c2_i32 = arith.constant 2 : i32
    %1 = arith.addi %0, %c2_i32 : i32
    %c0_i32 = arith.constant 0 : i32
    %c0_i32_0 = arith.constant 0 : i32
    %c0_i32_1 = arith.constant 0 : i32
    return %arg0, %1, %c0_i32, %c0_i32_0 : i32, i32, i32, i32
  }
  func.func @transform_3(%arg0: i32, %arg1: i32) -> (i32, i32) {
    %c0_i32 = arith.constant 0 : i32
    %c0_i32_0 = arith.constant 0 : i32
    %c0_i32_1 = arith.constant 0 : i32
    return %c0_i32, %c0_i32_0 : i32, i32
  }
  func.func @transform_4(%arg0: i32, %arg1: i32) -> (i32, i32, i32) {
    %c0_i32 = arith.constant 0 : i32
    %c0_i32_0 = arith.constant 0 : i32
    %c0_i32_1 = arith.constant 0 : i32
    %c0_i32_2 = arith.constant 0 : i32
    return %c0_i32, %c0_i32_0, %c0_i32_1 : i32, i32, i32
  }
  func.func @transform_5(%arg0: i32, %arg1: i32) -> (i32, i32, i32, i32) {
    %c0_i32 = arith.constant 0 : i32
    %c0_i32_0 = arith.constant 0 : i32
    %c0_i32_1 = arith.constant 0 : i32
    return %arg0, %arg1, %c0_i32, %c0_i32_0 : i32, i32, i32, i32
  }
  func.func @transform_6(%arg0: i32, %arg1: i32) -> (i32, i32, i32) {
    %c0_i32 = arith.constant 0 : i32
    %c0_i32_0 = arith.constant 0 : i32
    %c0_i32_1 = arith.constant 0 : i32
    return %arg0, %c0_i32, %c0_i32_0 : i32, i32, i32
  }
  func.func @transform_7(%arg0: i32, %arg1: i32) -> (i32, i32, i32) {
    %c0_i32 = arith.constant 0 : i32
    %c0_i32_0 = arith.constant 0 : i32
    %c0_i32_1 = arith.constant 0 : i32
    return %arg0, %c0_i32, %c0_i32_0 : i32, i32, i32
  }
}

</mosaic_0001>

<llo_original>
// kernel: tpu_custom_call.1
$region0: #{tpu_custom_call.1}
  #allocation0 [shape = 'u32[]', space=smem, size = 0x4, offset = 0x4, fixed_abs, tag = 'smem constant byte address 0x4 - core index']
  #allocation1 [shape = 'u32[144,128]{1,0:T(1,128)}', space=vmem, size = 0x12000, scoped, tag = 'internal scratch']
  %s0 = inlined_call_operand.vmem [shape: f32[2,18,324,4], index: 0, kind: input, shape index: {}]
  %s1 = inlined_call_operand.vmem [shape: f32[2,18,324,4], index: 1, kind: input, shape index: {}]
  %s2 = inlined_call_operand.vmem [shape: f32[2,18,324,4], index: 2, kind: input, shape index: {}]
  %s3 = inlined_call_operand.vmem [shape: f32[286,1], index: 3, kind: input, shape index: {}]
  %s4 = inlined_call_operand.vmem [shape: bf16[27,4,32], index: 4, kind: input, shape index: {}]
  %s5 = inlined_call_operand.vmem [shape: f32[2,16,286,32], index: 5, kind: output, shape index: {0}]
  %s6 = inlined_call_operand.hbm [shape: f32[2,1,32], index: 6, kind: output, shape index: {1}]
  %s7 = inlined_call_operand.hbm [shape: f32[2,1,32], index: 7, kind: output, shape index: {2}]
  %8 = xla_tuple %s5, %s6, %s7
  %s9 = sld [smem:[#allocation0]]
  $region73: #{tpu_custom_call.1} parent=0
    _
  %s11 = ssub.s32 1, %s9
  %s12 = scalar_select 0, %s11, %s9
  $region1: #{tpu_custom_call.1} parent=0
    #allocation2 [shape = 'u8[1024]{0}', space=vmem, size = 0x400, scoped, tag = 'output window, operand 1']
    #allocation3 [shape = 's32[2]{0}', space=sflag, size = 0x8, scoped, tag = 'scoped memory for tpu_custom_call.1']
    #allocation4 [shape = 'u8[1024]{0}', space=vmem, size = 0x400, scoped, tag = 'output window, operand 2']
    #allocation5 [shape = 's32[2]{0}', space=sflag, size = 0x8, scoped, tag = 'scoped memory for tpu_custom_call.1']
    %13 = vsyncpa [#allocation3], 0
    %s14 = scalar_lea.sflag [#allocation3], 1
    %15 = vsyncpa %s14, 0
    %16 = vsyncpa [#allocation5], 0
    %s17 = scalar_lea.sflag [#allocation5], 1
    %18 = vsyncpa %s17, 0
    loop: start=0, step=1, limit=34
    $region2: #{tpu_custom_call.1} parent=1 // loop_pre_header
      _
    $region3: #{tpu_custom_call.1} parent=1 // loop_header
      %s20 = sphi 0, %s24
      %p21 = scmp.ge.s32.totalorder %s20, 34
      %s27 = sphi 0, %s39
      %s28 = sphi 0, %s35
      %s29 = sphi 0, %s27
      %s30 = sphi 0, %s28
      %s31 = sphi 0, %s29
      %s32 = sphi 0, %s30
      %s44 = sphi 0, %s46
      %s47 = sphi 0, %s44
      %s48 = sphi 0, %s47
      %s64 = sphi 0, %s48
      %s74 = sphi 0, %s76
      %s77 = sphi 0, %s74
      %s78 = sphi 0, %s77
      %s94 = sphi 0, %s78
      %s104 = sphi 0, %s106
      %s107 = sphi 0, %s104
      %s108 = sphi 0, %s107
      %s124 = sphi 0, %s108
      %s128 = sphi 0, %s128
      %s130 = sphi 0, %s128
      %s131 = sphi 0, %s130
      %s145 = sphi 0, %s131
      %s149 = sphi 0, %s149
      %s151 = sphi 0, %s149
      %s152 = sphi 0, %s151
      %s166 = sphi 0, %s152
      %s174 = sphi 0, %s176
      %s177 = sphi 0, %s174
      %s178 = sphi 0, %s177
      %s194 = sphi 0, %s178
      %s200 = sphi 0, %s202
      %s203 = sphi 0, %s200
      %s204 = sphi 0, %s203
      %s220 = sphi 0, %s204
      %s226 = sphi 0, %s228
      %s229 = sphi 0, %s226
      %s230 = sphi 0, %s229
      %s246 = sphi 0, %s230
    $region4: #{tpu_custom_call.1} parent=1 // loop_header_branch
      %23 = sbr.rel (%p21) target = $region8
    $region5: #{tpu_custom_call.1} parent=1 // loop_body
      %s25 = ssub.s32 %s20, 1
      %s26 = ssub.s32 %s20, 2
      %s33 = sadd.s32 1, %s28
      %p34 = scmp.ge.s32.totalorder %s33, 16
      %s35 = scalar_select %p34, 0, %s33
      %s36 = sadd.s32 1, %s27
      %s37 = scalar_select %p34, %s36, %s27
      %p38 = scmp.ge.s32.totalorder %s37, 2
      %s39 = scalar_select %p38, 0, %s37
      %s40 = ssub.s32 %s27, %s39
      %s41 = ssub.s32 %s28, %s35
      %s42 = sor.u32 %s40, %s41
      %p43 = scmp.eq.s32.totalorder %s42, 0
      %s45 = sadd.s32 %s44, 1
      %s46 = scalar_select %p43, %s44, %s45
      %p49 = pneg %p43
      %p50 = scmp.eq.s32.totalorder %s20, 31
      %p51 = por %p49, %p50
      %p52 = scmp.ne.s32.totalorder %s44, %s47
      %p53 = scmp.eq.s32.totalorder %s20, 0
      %p54 = por %p52, %p53
      %p55 = scmp.ne.s32.totalorder %s44, %s47
      %p56 = scmp.eq.s32.totalorder %s25, 31
      %p57 = por %p55, %p56
      %p58 = scmp.ne.s32.totalorder %s47, %s48
      %p59 = scmp.eq.s32.totalorder %s25, 0
      %p60 = por %p58, %p59
      %p61 = scmp.ne.s32.totalorder %s47, %s48
      %p62 = scmp.eq.s32.totalorder %s26, 31
      %p63 = por %p61, %p62
      %p65 = scmp.ne.s32.totalorder %s48, %s64
      %p66 = scmp.eq.s32.totalorder %s26, 0
      %p67 = por %p65, %p66
      %s68 = sadd.s32 %s28, 1
      %s69 = sadd.s32 %s35, 1
      %s70 = ssub.s32 %s27, %s39
      %s71 = ssub.s32 %s68, %s69
      %s72 = sor.u32 %s70, %s71
      %p73 = scmp.eq.s32.totalorder %s72, 0
      %s75 = sadd.s32 %s74, 1
      %s76 = scalar_select %p73, %s74, %s75
      %p79 = pneg %p73
      %p80 = scmp.eq.s32.totalorder %s20, 31
      %p81 = por %p79, %p80
      %p82 = scmp.ne.s32.totalorder %s74, %s77
      %p83 = scmp.eq.s32.totalorder %s20, 0
      %p84 = por %p82, %p83
      %p85 = scmp.ne.s32.totalorder %s74, %s77
      %p86 = scmp.eq.s32.totalorder %s25, 31
      %p87 = por %p85, %p86
      %p88 = scmp.ne.s32.totalorder %s77, %s78
      %p89 = scmp.eq.s32.totalorder %s25, 0
      %p90 = por %p88, %p89
      %p91 = scmp.ne.s32.totalorder %s77, %s78
      %p92 = scmp.eq.s32.totalorder %s26, 31
      %p93 = por %p91, %p92
      %p95 = scmp.ne.s32.totalorder %s78, %s94
      %p96 = scmp.eq.s32.totalorder %s26, 0
      %p97 = por %p95, %p96
      %s98 = sadd.s32 %s28, 2
      %s99 = sadd.s32 %s35, 2
      %s100 = ssub.s32 %s27, %s39
      %s101 = ssub.s32 %s98, %s99
      %s102 = sor.u32 %s100, %s101
      %p103 = scmp.eq.s32.totalorder %s102, 0
      %s105 = sadd.s32 %s104, 1
      %s106 = scalar_select %p103, %s104, %s105
      %p109 = pneg %p103
      %p110 = scmp.eq.s32.totalorder %s20, 31
      %p111 = por %p109, %p110
      %p112 = scmp.ne.s32.totalorder %s104, %s107
      %p113 = scmp.eq.s32.totalorder %s20, 0
      %p114 = por %p112, %p113
      %p115 = scmp.ne.s32.totalorder %s104, %s107
      %p116 = scmp.eq.s32.totalorder %s25, 31
      %p117 = por %p115, %p116
      %p118 = scmp.ne.s32.totalorder %s107, %s108
      %p119 = scmp.eq.s32.totalorder %s25, 0
      %p120 = por %p118, %p119
      %p121 = scmp.ne.s32.totalorder %s107, %s108
      %p122 = scmp.eq.s32.totalorder %s26, 31
      %p123 = por %p121, %p122
      %p125 = scmp.ne.s32.totalorder %s108, %s124
      %p126 = scmp.eq.s32.totalorder %s26, 0
      %p127 = por %p125, %p126
      %s129 = sadd.s32 %s128, 1
      %p132 = scmp.eq.s32.totalorder %s20, 31
      %p133 = scmp.ne.s32.totalorder %s128, %s130
      %p134 = scmp.eq.s32.totalorder %s20, 0
      %p135 = por %p133, %p134
      %p136 = scmp.ne.s32.totalorder %s128, %s130
      %p137 = scmp.eq.s32.totalorder %s25, 31
      %p138 = por %p136, %p137
      %p139 = scmp.ne.s32.totalorder %s130, %s131
      %p140 = scmp.eq.s32.totalorder %s25, 0
      %p141 = por %p139, %p140
      %p142 = scmp.ne.s32.totalorder %s130, %s131
      %p143 = scmp.eq.s32.totalorder %s26, 31
      %p144 = por %p142, %p143
      %p146 = scmp.ne.s32.totalorder %s131, %s145
      %p147 = scmp.eq.s32.totalorder %s26, 0
      %p148 = por %p146, %p147
      %s150 = sadd.s32 %s149, 1
      %p153 = scmp.eq.s32.totalorder %s20, 31
      %p154 = scmp.ne.s32.totalorder %s149, %s151
      %p155 = scmp.eq.s32.totalorder %s20, 0
      %p156 = por %p154, %p155
      %p157 = scmp.ne.s32.totalorder %s149, %s151
      %p158 = scmp.eq.s32.totalorder %s25, 31
      %p159 = por %p157, %p158
      %p160 = scmp.ne.s32.totalorder %s151, %s152
      %p161 = scmp.eq.s32.totalorder %s25, 0
      %p162 = por %p160, %p161
      %p163 = scmp.ne.s32.totalorder %s151, %s152
      %p164 = scmp.eq.s32.totalorder %s26, 31
      %p165 = por %p163, %p164
      %p167 = scmp.ne.s32.totalorder %s152, %s166
      %p168 = scmp.eq.s32.totalorder %s26, 0
      %p169 = por %p167, %p168
      %s170 = ssub.s32 %s27, %s39
      %s171 = ssub.s32 %s28, %s35
      %s172 = sor.u32 %s170, %s171
      %p173 = scmp.eq.s32.totalorder %s172, 0
      %s175 = sadd.s32 %s174, 1
      %s176 = scalar_select %p173, %s174, %s175
      %p179 = pneg %p173
      %p180 = scmp.eq.s32.totalorder %s20, 31
      %p181 = por %p179, %p180
      %p182 = scmp.ne.s32.totalorder %s174, %s177
      %p183 = scmp.eq.s32.totalorder %s20, 0
      %p184 = por %p182, %p183
      %p185 = scmp.ne.s32.totalorder %s174, %s177
      %p186 = scmp.eq.s32.totalorder %s25, 31
      %p187 = por %p185, %p186
      %p188 = scmp.ne.s32.totalorder %s177, %s178
      %p189 = scmp.eq.s32.totalorder %s25, 0
      %p190 = por %p188, %p189
      %p191 = scmp.ne.s32.totalorder %s177, %s178
      %p192 = scmp.eq.s32.totalorder %s26, 31
      %p193 = por %p191, %p192
      %p195 = scmp.ne.s32.totalorder %s178, %s194
      %p196 = scmp.eq.s32.totalorder %s26, 0
      %p197 = por %p195, %p196
      %s198 = ssub.s32 %s27, %s39
      %p199 = scmp.eq.s32.totalorder %s198, 0
      %s201 = sadd.s32 %s200, 1
      %s202 = scalar_select %p199, %s200, %s201
      %p205 = pneg %p199
      %p206 = scmp.eq.s32.totalorder %s20, 31
      %p207 = por %p205, %p206
      %p208 = scmp.ne.s32.totalorder %s200, %s203
      %p209 = scmp.eq.s32.totalorder %s20, 0
      %p210 = por %p208, %p209
      %p211 = scmp.ne.s32.totalorder %s200, %s203
      %p212 = scmp.eq.s32.totalorder %s25, 31
      %p213 = por %p211, %p212
      %p214 = scmp.ne.s32.totalorder %s203, %s204
      %p215 = scmp.eq.s32.totalorder %s25, 0
      %p216 = por %p214, %p215
      %p217 = scmp.ne.s32.totalorder %s203, %s204
      %p218 = scmp.eq.s32.totalorder %s26, 31
      %p219 = por %p217, %p218
      %p221 = scmp.ne.s32.totalorder %s204, %s220
      %p222 = scmp.eq.s32.totalorder %s26, 0
      %p223 = por %p221, %p222
      %s224 = ssub.s32 %s27, %s39
      %p225 = scmp.eq.s32.totalorder %s224, 0
      %s227 = sadd.s32 %s226, 1
      %s228 = scalar_select %p225, %s226, %s227
      %p231 = pneg %p225
      %p232 = scmp.eq.s32.totalorder %s20, 31
      %p233 = por %p231, %p232
      %p234 = scmp.ne.s32.totalorder %s226, %s229
      %p235 = scmp.eq.s32.totalorder %s20, 0
      %p236 = por %p234, %p235
      %p237 = scmp.ne.s32.totalorder %s226, %s229
      %p238 = scmp.eq.s32.totalorder %s25, 31
      %p239 = por %p237, %p238
      %p240 = scmp.ne.s32.totalorder %s229, %s230
      %p241 = scmp.eq.s32.totalorder %s25, 0
      %p242 = por %p240, %p241
      %p243 = scmp.ne.s32.totalorder %s229, %s230
      %p244 = scmp.eq.s32.totalorder %s26, 31
      %p245 = por %p243, %p244
      %p247 = scmp.ne.s32.totalorder %s230, %s246
      %p248 = scmp.eq.s32.totalorder %s26, 0
      %p249 = por %p247, %p248
      %p250 = scmp.le.s32.totalorder 1, %s20
      %p251 = scmp.lt.s32.totalorder %s20, 33
      %p252 = pnand %p250, %p251
      %p253 = pneg %p252
      // Predicated region
      $region9: #{tpu_custom_call.1} parent=5 // pred_check
        _
      $region10: #{tpu_custom_call.1} parent=5 // pred_check_branch
        %255 = sbr.rel (%p252) target = $region12
      $region11: #{tpu_custom_call.1} parent=5 // pred_region
        %s256 = ssub.s32 %s20, 1
        // Predicated region
        $region13: #{tpu_custom_call.1} parent=11 // pred_check
          %p257 = pneg %p141
        $region14: #{tpu_custom_call.1} parent=11 // pred_check_branch
          %259 = sbr.rel (%p257) target = $region16
        $region15: #{tpu_custom_call.1} parent=11 // pred_region
          _
        $region16: #{tpu_custom_call.1} parent=11 // pred_fallthru
          _
        // Predicated region
        $region17: #{tpu_custom_call.1} parent=11 // pred_check
          %p260 = pneg %p162
        $region18: #{tpu_custom_call.1} parent=11 // pred_check_branch
          %262 = sbr.rel (%p260) target = $region20
        $region19: #{tpu_custom_call.1} parent=11 // pred_region
          _
        $region20: #{tpu_custom_call.1} parent=11 // pred_fallthru
          _
      $region12: #{tpu_custom_call.1} parent=5 // pred_fallthru
        _
      %p263 = scmp.lt.s32.totalorder %s20, 32
      // Predicated region
      $region21: #{tpu_custom_call.1} parent=5 // pred_check
        %p264 = pneg %p263
      $region22: #{tpu_custom_call.1} parent=5 // pred_check_branch
        %266 = sbr.rel (%p264) target = $region24
      $region23: #{tpu_custom_call.1} parent=5 // pred_region
        // Predicated region
        $region25: #{tpu_custom_call.1} parent=23 // pred_check
          %p267 = pneg %p54
        $region26: #{tpu_custom_call.1} parent=23 // pred_check_branch
          %269 = sbr.rel (%p267) target = $region28
        $region27: #{tpu_custom_call.1} parent=23 // pred_region
          %p270 = scmp.lt.s32.totalorder %s27, 1
          %s271 = scalar_select %p270, %s27, 1
          %p272 = scmp.lt.s32.totalorder %s28, 17
          %s273 = scalar_select %p272, %s28, 17
          %s274 = smul.addr %s273, 41
          %s275 = smul.addr %s271, 738
          %s276 = sadd.s32 %s274, %s275
          %s277 = smul.addr %s276, 8
          %s278 = scalar_lea.vmem %s0, %s277
        $region28: #{tpu_custom_call.1} parent=23 // pred_fallthru
          _
        // Predicated region
        $region29: #{tpu_custom_call.1} parent=23 // pred_check
          %p279 = pneg %p84
        $region30: #{tpu_custom_call.1} parent=23 // pred_check_branch
          %281 = sbr.rel (%p279) target = $region32
        $region31: #{tpu_custom_call.1} parent=23 // pred_region
          %s282 = sadd.s32 %s28, 1
          %p283 = scmp.lt.s32.totalorder %s27, 1
          %s284 = scalar_select %p283, %s27, 1
          %p285 = scmp.lt.s32.totalorder %s282, 17
          %s286 = scalar_select %p285, %s282, 17
          %s287 = smul.addr %s286, 41
          %s288 = smul.addr %s284, 738
          %s289 = sadd.s32 %s287, %s288
          %s290 = smul.addr %s289, 8
          %s291 = scalar_lea.vmem %s1, %s290
          %s292 = sadd.s32 %s28, 1
        $region32: #{tpu_custom_call.1} parent=23 // pred_fallthru
          _
        // Predicated region
        $region33: #{tpu_custom_call.1} parent=23 // pred_check
          %p293 = pneg %p114
        $region34: #{tpu_custom_call.1} parent=23 // pred_check_branch
          %295 = sbr.rel (%p293) target = $region36
        $region35: #{tpu_custom_call.1} parent=23 // pred_region
          %s296 = sadd.s32 %s28, 2
          %p297 = scmp.lt.s32.totalorder %s27, 1
          %s298 = scalar_select %p297, %s27, 1
          %p299 = scmp.lt.s32.totalorder %s296, 17
          %s300 = scalar_select %p299, %s296, 17
          %s301 = smul.addr %s300, 41
          %s302 = smul.addr %s298, 738
          %s303 = sadd.s32 %s301, %s302
          %s304 = smul.addr %s303, 8
          %s305 = scalar_lea.vmem %s2, %s304
          %s306 = sadd.s32 %s28, 2
        $region36: #{tpu_custom_call.1} parent=23 // pred_fallthru
          _
      $region24: #{tpu_custom_call.1} parent=5 // pred_fallthru
        _
      %p307 = scmp.le.s32.totalorder 1, %s20
      %p308 = scmp.lt.s32.totalorder %s20, 33
      %p309 = pnand %p307, %p308
      %p310 = pneg %p309
      // Predicated region
      $region37: #{tpu_custom_call.1} parent=5 // pred_check
        _
      $region38: #{tpu_custom_call.1} parent=5 // pred_check_branch
        %312 = sbr.rel (%p309) target = $region40
      $region39: #{tpu_custom_call.1} parent=5 // pred_region
        %s313 = ssub.s32 %s20, 1
        %p314 = scmp.lt.s32.totalorder %s29, 1
        %s315 = scalar_select %p314, %s29, 1
        %p316 = scmp.lt.s32.totalorder %s30, 17
        %s317 = scalar_select %p316, %s30, 17
        %s318 = smul.addr %s317, 41
        %s319 = smul.addr %s315, 738
        %s320 = sadd.s32 %s318, %s319
        %s321 = smul.addr %s320, 8
        %s322 = scalar_lea.vmem %s0, %s321
        %p323 = pneg %p60
        %p324 = pneg %p57
        %s325 = sadd.s32 %s30, 1
        %p326 = scmp.lt.s32.totalorder %s29, 1
        %s327 = scalar_select %p326, %s29, 1
        %p328 = scmp.lt.s32.totalorder %s325, 17
        %s329 = scalar_select %p328, %s325, 17
        %s330 = smul.addr %s329, 41
        %s331 = smul.addr %s327, 738
        %s332 = sadd.s32 %s330, %s331
        %s333 = smul.addr %s332, 8
        %s334 = scalar_lea.vmem %s1, %s333
        %p335 = pneg %p90
        %p336 = pneg %p87
        %s337 = sadd.s32 %s30, 2
        %p338 = scmp.lt.s32.totalorder %s29, 1
        %s339 = scalar_select %p338, %s29, 1
        %p340 = scmp.lt.s32.totalorder %s337, 17
        %s341 = scalar_select %p340, %s337, 17
        %s342 = smul.addr %s341, 41
        %s343 = smul.addr %s339, 738
        %s344 = sadd.s32 %s342, %s343
        %s345 = smul.addr %s344, 8
        %s346 = scalar_lea.vmem %s2, %s345
        %p347 = pneg %p120
        %p348 = pneg %p117
        %p349 = pneg %p141
        %p350 = pneg %p138
        %p351 = pneg %p162
        %p352 = pneg %p159
        %p353 = pneg %p190
        %p354 = pneg %p187
        %p355 = scmp.lt.s32.totalorder %s29, 1
        %s356 = scalar_select %p355, %s29, 1
        %p357 = scmp.lt.s32.totalorder %s30, 15
        %s358 = scalar_select %p357, %s30, 15
        %s359 = smul.addr %s358, 36
        %s360 = smul.addr %s356, 576
        %s361 = sadd.s32 %s359, %s360
        %s362 = smul.addr %s361, 8
        %s363 = scalar_lea.vmem %s5, %s362
        %p364 = pneg %p216
        %p365 = pneg %p213
        %s366 = sand.u32 %s203, 1
        %s367 = scalar_lea.sflag [#allocation3], %s366
        %s368 = sand.u32 %s203, 1
        %s369 = scalar_lea.vmem [#allocation2], %s368
        %p370 = pneg %p242
        %p371 = pneg %p239
        %s372 = sand.u32 %s229, 1
        %s373 = scalar_lea.sflag [#allocation5], %s372
        %s374 = sand.u32 %s229, 1
        %s375 = scalar_lea.vmem [#allocation4], %s374
        %p376 = scmp.lt.s32.totalorder %s29, 1
        %s377 = scalar_select %p376, %s29, 1
        %p378 = scmp.lt.s32.totalorder %s30, 17
        %s379 = scalar_select %p378, %s30, 17
        %s380 = smul.addr %s379, 41
        %s381 = smul.addr %s377, 738
        %s382 = sadd.s32 %s380, %s381
        %s383 = smul.addr %s382, 8
        %s384 = scalar_lea.vmem %s0, %s383
        %s385 = sadd.s32 %s30, 1
        %p386 = scmp.lt.s32.totalorder %s29, 1
        %s387 = scalar_select %p386, %s29, 1
        %p388 = scmp.lt.s32.totalorder %s385, 17
        %s389 = scalar_select %p388, %s385, 17
        %s390 = smul.addr %s389, 41
        %s391 = smul.addr %s387, 738
        %s392 = sadd.s32 %s390, %s391
        %s393 = smul.addr %s392, 8
        %s394 = scalar_lea.vmem %s1, %s393
        %s395 = sadd.s32 %s30, 1
        %s396 = sadd.s32 %s30, 2
        %p397 = scmp.lt.s32.totalorder %s29, 1
        %s398 = scalar_select %p397, %s29, 1
        %p399 = scmp.lt.s32.totalorder %s396, 17
        %s400 = scalar_select %p399, %s396, 17
        %s401 = smul.addr %s400, 41
        %s402 = smul.addr %s398, 738
        %s403 = sadd.s32 %s401, %s402
        %s404 = smul.addr %s403, 8
        %s405 = scalar_lea.vmem %s2, %s404
        %s406 = sadd.s32 %s30, 2
        %p407 = scmp.lt.s32.totalorder %s29, 1
        %s408 = scalar_select %p407, %s29, 1
        %p409 = scmp.lt.s32.totalorder %s30, 15
        %s410 = scalar_select %p409, %s30, 15
        %s411 = smul.addr %s410, 36
        %s412 = smul.addr %s408, 576
        %s413 = sadd.s32 %s411, %s412
        %s414 = smul.addr %s413, 8
        %s415 = scalar_lea.vmem %s5, %s414
        %v417 = vld [vmem:[%s384] sm:$0xff]
        %v418 = vld [vmem:[%s384 + $0x8] sm:$0xff]
        %v419 = vld [vmem:[%s384 + $0x10] sm:$0xff]
        %v420 = vld [vmem:[%s384 + $0x18] sm:$0xff]
        %v421 = vld [vmem:[%s384 + $0x20] sm:$0xff]
        %v422 = vld [vmem:[%s384 + $0x28] sm:$0xff]
        %v423 = vld [vmem:[%s384 + $0x30] sm:$0xff]
        %v424 = vld [vmem:[%s384 + $0x38] sm:$0xff]
        %v425 = vld [vmem:[%s384 + $0x40] sm:$0xff]
        %v426 = vld [vmem:[%s384 + $0x48] sm:$0xff]
        %v427 = vld [vmem:[%s384 + $0x50] sm:$0xff]
        %v428 = vld [vmem:[%s384 + $0x58] sm:$0xff]
        %v429 = vld [vmem:[%s384 + $0x60] sm:$0xff]
        %v430 = vld [vmem:[%s384 + $0x68] sm:$0xff]
        %v431 = vld [vmem:[%s384 + $0x70] sm:$0xff]
        %v432 = vld [vmem:[%s384 + $0x78] sm:$0xff]
        %v433 = vld [vmem:[%s384 + $0x80] sm:$0xff]
        %v434 = vld [vmem:[%s384 + $0x88] sm:$0xff]
        %v435 = vld [vmem:[%s384 + $0x90] sm:$0xff]
        %v436 = vld [vmem:[%s384 + $0x98] sm:$0xff]
        %v437 = vld [vmem:[%s384 + $0xa0] sm:$0xff]
        %v438 = vld [vmem:[%s384 + $0xa8] sm:$0xff]
        %v439 = vld [vmem:[%s384 + $0xb0] sm:$0xff]
        %v440 = vld [vmem:[%s384 + $0xb8] sm:$0xff]
        %v441 = vld [vmem:[%s384 + $0xc0] sm:$0xff]
        %v442 = vld [vmem:[%s384 + $0xc8] sm:$0xff]
        %v443 = vld [vmem:[%s384 + $0xd0] sm:$0xff]
        %v444 = vld [vmem:[%s384 + $0xd8] sm:$0xff]
        %v445 = vld [vmem:[%s384 + $0xe0] sm:$0xff]
        %v446 = vld [vmem:[%s384 + $0xe8] sm:$0xff]
        %v447 = vld [vmem:[%s384 + $0xf0] sm:$0xff]
        %v448 = vld [vmem:[%s384 + $0xf8] sm:$0xff]
        %v449 = vld [vmem:[%s384 + $0x100] sm:$0xff]
        %v450 = vld [vmem:[%s384 + $0x108] sm:$0xff]
        %v451 = vld [vmem:[%s384 + $0x110] sm:$0xff]
        %v452 = vld [vmem:[%s384 + $0x118] sm:$0x3f]
        %v453 = vpack.c.bf16 %v418, %v417
        %v454 = vpack.c.bf16 %v420, %v419
        %v455 = vpack.c.bf16 %v422, %v421
        %v456 = vpack.c.bf16 %v424, %v423
        %v457 = vpack.c.bf16 %v426, %v425
        %v458 = vpack.c.bf16 %v428, %v427
        %v459 = vpack.c.bf16 %v430, %v429
        %v460 = vpack.c.bf16 %v432, %v431
        %v461 = vpack.c.bf16 %v434, %v433
        %v462 = vpack.c.bf16 %v436, %v435
        %v463 = vpack.c.bf16 %v438, %v437
        %v464 = vpack.c.bf16 %v440, %v439
        %v465 = vpack.c.bf16 %v442, %v441
        %v466 = vpack.c.bf16 %v444, %v443
        %v467 = vpack.c.bf16 %v446, %v445
        %v468 = vpack.c.bf16 %v448, %v447
        %v469 = vpack.c.bf16 %v450, %v449
        %v470 = vpack.c.bf16 %v452, %v451
        %v471 = vld [vmem:[%s4] sm:$0x3]
        %v472 = vld [vmem:[%s384 + $0x1] sm:$0xff]
        %v473 = vld [vmem:[%s384 + $0x9] sm:$0xff]
        %v474 = vld [vmem:[%s384 + $0x11] sm:$0xff]
        %v475 = vld [vmem:[%s384 + $0x19] sm:$0xff]
        %v476 = vld [vmem:[%s384 + $0x21] sm:$0xff]
        %v477 = vld [vmem:[%s384 + $0x29] sm:$0xff]
        %v478 = vld [vmem:[%s384 + $0x31] sm:$0xff]
        %v479 = vld [vmem:[%s384 + $0x39] sm:$0xff]
        %v480 = vld [vmem:[%s384 + $0x41] sm:$0xff]
        %v481 = vld [vmem:[%s384 + $0x49] sm:$0xff]
        %v482 = vld [vmem:[%s384 + $0x51] sm:$0xff]
        %v483 = vld [vmem:[%s384 + $0x59] sm:$0xff]
        %v484 = vld [vmem:[%s384 + $0x61] sm:$0xff]
        %v485 = vld [vmem:[%s384 + $0x69] sm:$0xff]
        %v486 = vld [vmem:[%s384 + $0x71] sm:$0xff]
        %v487 = vld [vmem:[%s384 + $0x79] sm:$0xff]
        %v488 = vld [vmem:[%s384 + $0x81] sm:$0xff]
        %v489 = vld [vmem:[%s384 + $0x89] sm:$0xff]
        %v490 = vld [vmem:[%s384 + $0x91] sm:$0xff]
        %v491 = vld [vmem:[%s384 + $0x99] sm:$0xff]
        %v492 = vld [vmem:[%s384 + $0xa1] sm:$0xff]
        %v493 = vld [vmem:[%s384 + $0xa9] sm:$0xff]
        %v494 = vld [vmem:[%s384 + $0xb1] sm:$0xff]
        %v495 = vld [vmem:[%s384 + $0xb9] sm:$0xff]
        %v496 = vld [vmem:[%s384 + $0xc1] sm:$0xff]
        %v497 = vld [vmem:[%s384 + $0xc9] sm:$0xff]
        %v498 = vld [vmem:[%s384 + $0xd1] sm:$0xff]
        %v499 = vld [vmem:[%s384 + $0xd9] sm:$0xff]
        %v500 = vld [vmem:[%s384 + $0xe1] sm:$0xff]
        %v501 = vld [vmem:[%s384 + $0xe9] sm:$0xff]
        %v502 = vld [vmem:[%s384 + $0xf1] sm:$0xff]
        %v503 = vld [vmem:[%s384 + $0xf9] sm:$0xff]
        %v504 = vld [vmem:[%s384 + $0x101] sm:$0xff]
        %v505 = vld [vmem:[%s384 + $0x109] sm:$0xff]
        %v506 = vld [vmem:[%s384 + $0x111] sm:$0xff]
        %v507 = vld [vmem:[%s384 + $0x119] sm:$0x3f]
        %v508 = vpack.c.bf16 %v473, %v472
        %v509 = vpack.c.bf16 %v475, %v474
        %v510 = vpack.c.bf16 %v477, %v476
        %v511 = vpack.c.bf16 %v479, %v478
        %v512 = vpack.c.bf16 %v481, %v480
        %v513 = vpack.c.bf16 %v483, %v482
        %v514 = vpack.c.bf16 %v485, %v484
        %v515 = vpack.c.bf16 %v487, %v486
        %v516 = vpack.c.bf16 %v489, %v488
        %v517 = vpack.c.bf16 %v491, %v490
        %v518 = vpack.c.bf16 %v493, %v492
        %v519 = vpack.c.bf16 %v495, %v494
        %v520 = vpack.c.bf16 %v497, %v496
        %v521 = vpack.c.bf16 %v499, %v498
        %v522 = vpack.c.bf16 %v501, %v500
        %v523 = vpack.c.bf16 %v503, %v502
        %v524 = vpack.c.bf16 %v505, %v504
        %v525 = vpack.c.bf16 %v507, %v506
        %s526 = scalar_lea.vmem %s4, 2
        %v527 = vld [vmem:[%s526] sm:$0x3]
        %vm528 = vcmask 31744
        %v530 = vsel %vm528, %v508, 0
        %v533 = vsel %vm528, %v509, 0
        %v536 = vsel %vm528, %v510, 0
        %v539 = vsel %vm528, %v511, 0
        %v542 = vsel %vm528, %v512, 0
        %v545 = vsel %vm528, %v513, 0
        %v548 = vsel %vm528, %v514, 0
        %v551 = vsel %vm528, %v515, 0
        %v554 = vsel %vm528, %v516, 0
        %v557 = vsel %vm528, %v517, 0
        %v560 = vsel %vm528, %v518, 0
        %v563 = vsel %vm528, %v519, 0
        %v566 = vsel %vm528, %v520, 0
        %v569 = vsel %vm528, %v521, 0
        %v572 = vsel %vm528, %v522, 0
        %v575 = vsel %vm528, %v523, 0
        %v578 = vsel %vm528, %v524, 0
        %v581 = vsel %vm528, %v525, 0
        %vm583 = vcmask 1041408
        %v585 = vsel %vm583, %v527, 0
        %587 = vmatprep.subr.bf16.mxu0 0
        %588 = vmatpush1.bf16.msra.mxu0 0
        %589 = vmatprep.subr.bf16.mxu0 0
        %590 = vmatpush1.bf16.msra.mxu0 0
        %591 = vmatprep.subr.bf16.mxu0 0
        %592 = vmatpush1.bf16.msra.mxu0 0
        %593 = vmatprep.subr.bf16.mxu0 0
        %594 = vmatpush1.bf16.msra.mxu0 0
        %595 = vmatprep.subr.bf16.mxu0 0
        %596 = vmatpush1.bf16.msra.mxu0 0
        %597 = vmatprep.subr.bf16.mxu0 0
        %598 = vmatpush1.bf16.msra.mxu0 0
        %599 = vmatprep.subr.bf16.mxu0 0
        %600 = vmatpush1.bf16.msra.mxu0 0
        %601 = vmatprep.subr.bf16.mxu0 0
        %602 = vmatpush1.bf16.msra.mxu0 %v585
        %603 = vmatprep.subr.bf16.mxu0 0
        %604 = vmatpush2.bf16.msra.mxu0 0
        %605 = vmatprep.subr.bf16.mxu0 0
        %606 = vmatpush2.bf16.msra.mxu0 0
        %607 = vmatprep.subr.bf16.mxu0 0
        %608 = vmatpush2.bf16.msra.mxu0 0
        %609 = vmatprep.subr.bf16.mxu0 0
        %610 = vmatpush2.bf16.msra.mxu0 0
        %611 = vmatprep.subr.bf16.mxu0 0
        %612 = vmatpush2.bf16.msra.mxu0 0
        %613 = vmatprep.subr.bf16.mxu0 0
        %614 = vmatpush2.bf16.msra.mxu0 0
        %615 = vmatprep.subr.bf16.mxu0 0
        %616 = vmatpush2.bf16.msra.mxu0 0
        %617 = vmatprep.subr.bf16.mxu0 0
        %618 = vmatpush2.bf16.msra.mxu0 0
        %619 = vmatprep.mubr.bf16.mxu0 0
        %620 = vmatmul.mubr.bf16.gmra.mxu0 %v530
        %v621 = vpop.f32.mrf.mxu0
        %v622 = vadd.f32 0.0, %v621
        %v623 = vpop.f32.mrf.mxu0
        %v624 = vpop.f32.mrf.mxu0
        %v625 = vadd.f32 0.0, %v624
        %v626 = vpop.f32.mrf.mxu0
        %627 = vmatprep.mubr.bf16.mxu0 0
        %628 = vmatmul.mubr.bf16.gmra.mxu0 %v533
        %v629 = vpop.f32.mrf.mxu0
        %v630 = vadd.f32 0.0, %v629
        %v631 = vpop.f32.mrf.mxu0
        %v632 = vpop.f32.mrf.mxu0
        %v633 = vadd.f32 0.0, %v632
        %v634 = vpop.f32.mrf.mxu0
        %635 = vmatprep.mubr.bf16.mxu0 0
        %636 = vmatmul.mubr.bf16.gmra.mxu0 %v536
        %v637 = vpop.f32.mrf.mxu0
        %v638 = vadd.f32 0.0, %v637
        %v639 = vpop.f32.mrf.mxu0
        %v640 = vpop.f32.mrf.mxu0
        %v641 = vadd.f32 0.0, %v640
        %v642 = vpop.f32.mrf.mxu0
        %643 = vmatprep.mubr.bf16.mxu0 0
        %644 = vmatmul.mubr.bf16.gmra.mxu0 %v539
        %v645 = vpop.f32.mrf.mxu0
        %v646 = vadd.f32 0.0, %v645
        %v647 = vpop.f32.mrf.mxu0
        %v648 = vpop.f32.mrf.mxu0
        %v649 = vadd.f32 0.0, %v648
        %v650 = vpop.f32.mrf.mxu0
        %651 = vmatprep.mubr.bf16.mxu0 0
        %652 = vmatmul.mubr.bf16.gmra.mxu0 %v542
        %v653 = vpop.f32.mrf.mxu0
        %v654 = vadd.f32 0.0, %v653
        %v655 = vpop.f32.mrf.mxu0
        %v656 = vpop.f32.mrf.mxu0
        %v657 = vadd.f32 0.0, %v656
        %v658 = vpop.f32.mrf.mxu0
        %659 = vmatprep.mubr.bf16.mxu0 0
        %660 = vmatmul.mubr.bf16.gmra.mxu0 %v545
        %v661 = vpop.f32.mrf.mxu0
        %v662 = vadd.f32 0.0, %v661
        %v663 = vpop.f32.mrf.mxu0
        %v664 = vpop.f32.mrf.mxu0
        %v665 = vadd.f32 0.0, %v664
        %v666 = vpop.f32.mrf.mxu0
        %667 = vmatprep.mubr.bf16.mxu0 0
        %668 = vmatmul.mubr.bf16.gmra.mxu0 %v548
        %v669 = vpop.f32.mrf.mxu0
        %v670 = vadd.f32 0.0, %v669
        %v671 = vpop.f32.mrf.mxu0
        %v672 = vpop.f32.mrf.mxu0
        %v673 = vadd.f32 0.0, %v672
        %v674 = vpop.f32.mrf.mxu0
        %675 = vmatprep.mubr.bf16.mxu0 0
        %676 = vmatmul.mubr.bf16.gmra.mxu0 %v551
        %v677 = vpop.f32.mrf.mxu0
        %v678 = vadd.f32 0.0, %v677
        %v679 = vpop.f32.mrf.mxu0
        %v680 = vpop.f32.mrf.mxu0
        %v681 = vadd.f32 0.0, %v680
        %v682 = vpop.f32.mrf.mxu0
        %683 = vmatprep.mubr.bf16.mxu0 0
        %684 = vmatmul.mubr.bf16.gmra.mxu0 %v554
        %v685 = vpop.f32.mrf.mxu0
        %v686 = vadd.f32 0.0, %v685
        %v687 = vpop.f32.mrf.mxu0
        %v688 = vpop.f32.mrf.mxu0
        %v689 = vadd.f32 0.0, %v688
        %v690 = vpop.f32.mrf.mxu0
        %691 = vmatprep.mubr.bf16.mxu0 0
        %692 = vmatmul.mubr.bf16.gmra.mxu0 %v557
        %v693 = vpop.f32.mrf.mxu0
        %v694 = vadd.f32 0.0, %v693
        %v695 = vpop.f32.mrf.mxu0
        %v696 = vpop.f32.mrf.mxu0
        %v697 = vadd.f32 0.0, %v696
        %v698 = vpop.f32.mrf.mxu0
        %699 = vmatprep.mubr.bf16.mxu0 0
        %700 = vmatmul.mubr.bf16.gmra.mxu0 %v560
        %v701 = vpop.f32.mrf.mxu0
        %v702 = vadd.f32 0.0, %v701
        %v703 = vpop.f32.mrf.mxu0
        %v704 = vpop.f32.mrf.mxu0
        %v705 = vadd.f32 0.0, %v704
        %v706 = vpop.f32.mrf.mxu0
        %707 = vmatprep.mubr.bf16.mxu0 0
        %708 = vmatmul.mubr.bf16.gmra.mxu0 %v563
        %v709 = vpop.f32.mrf.mxu0
        %v710 = vadd.f32 0.0, %v709
        %v711 = vpop.f32.mrf.mxu0
        %v712 = vpop.f32.mrf.mxu0
        %v713 = vadd.f32 0.0, %v712
        %v714 = vpop.f32.mrf.mxu0
        %715 = vmatprep.mubr.bf16.mxu0 0
        %716 = vmatmul.mubr.bf16.gmra.mxu0 %v566
        %v717 = vpop.f32.mrf.mxu0
        %v718 = vadd.f32 0.0, %v717
        %v719 = vpop.f32.mrf.mxu0
        %v720 = vpop.f32.mrf.mxu0
        %v721 = vadd.f32 0.0, %v720
        %v722 = vpop.f32.mrf.mxu0
        %723 = vmatprep.mubr.bf16.mxu0 0
        %724 = vmatmul.mubr.bf16.gmra.mxu0 %v569
        %v725 = vpop.f32.mrf.mxu0
        %v726 = vadd.f32 0.0, %v725
        %v727 = vpop.f32.mrf.mxu0
        %v728 = vpop.f32.mrf.mxu0
        %v729 = vadd.f32 0.0, %v728
        %v730 = vpop.f32.mrf.mxu0
        %731 = vmatprep.mubr.bf16.mxu0 0
        %732 = vmatmul.mubr.bf16.gmra.mxu0 %v572
        %v733 = vpop.f32.mrf.mxu0
        %v734 = vadd.f32 0.0, %v733
        %v735 = vpop.f32.mrf.mxu0
        %v736 = vpop.f32.mrf.mxu0
        %v737 = vadd.f32 0.0, %v736
        %v738 = vpop.f32.mrf.mxu0
        %739 = vmatprep.mubr.bf16.mxu0 0
        %740 = vmatmul.mubr.bf16.gmra.mxu0 %v575
        %v741 = vpop.f32.mrf.mxu0
        %v742 = vadd.f32 0.0, %v741
        %v743 = vpop.f32.mrf.mxu0
        %v744 = vpop.f32.mrf.mxu0
        %v745 = vadd.f32 0.0, %v744
        %v746 = vpop.f32.mrf.mxu0
        %747 = vmatprep.mubr.bf16.mxu0 0
        %748 = vmatmul.mubr.bf16.gmra.mxu0 %v578
        %v749 = vpop.f32.mrf.mxu0
        %v750 = vadd.f32 0.0, %v749
        %v751 = vpop.f32.mrf.mxu0
        %v752 = vpop.f32.mrf.mxu0
        %v753 = vadd.f32 0.0, %v752
        %v754 = vpop.f32.mrf.mxu0
        %755 = vmatprep.mubr.bf16.mxu0 0
        %756 = vmatmul.mubr.bf16.gmra.mxu0 %v581
        %v757 = vpop.f32.mrf.mxu0
        %v758 = vadd.f32 0.0, %v757
        %v759 = vpop.f32.mrf.mxu0
        %v760 = vpop.f32.mrf.mxu0
        %v761 = vadd.f32 0.0, %v760
        %v762 = vpop.f32.mrf.mxu0
        %763 = vdwg.mxu0
        %v765 = vsel %vm528, %v453, 0
        %v768 = vsel %vm528, %v454, 0
        %v771 = vsel %vm528, %v455, 0
        %v774 = vsel %vm528, %v456, 0
        %v777 = vsel %vm528, %v457, 0
        %v780 = vsel %vm528, %v458, 0
        %v783 = vsel %vm528, %v459, 0
        %v786 = vsel %vm528, %v460, 0
        %v789 = vsel %vm528, %v461, 0
        %v792 = vsel %vm528, %v462, 0
        %v795 = vsel %vm528, %v463, 0
        %v798 = vsel %vm528, %v464, 0
        %v801 = vsel %vm528, %v465, 0
        %v804 = vsel %vm528, %v466, 0
        %v807 = vsel %vm528, %v467, 0
        %v810 = vsel %vm528, %v468, 0
        %v813 = vsel %vm528, %v469, 0
        %v816 = vsel %vm528, %v470, 0
        %v819 = vsel %vm583, %v471, 0
        %821 = vmatprep.subr.bf16.mxu0 0
        %822 = vmatpush1.bf16.msra.mxu0 0
        %823 = vmatprep.subr.bf16.mxu0 0
        %824 = vmatpush1.bf16.msra.mxu0 0
        %825 = vmatprep.subr.bf16.mxu0 0
        %826 = vmatpush1.bf16.msra.mxu0 0
        %827 = vmatprep.subr.bf16.mxu0 0
        %828 = vmatpush1.bf16.msra.mxu0 0
        %829 = vmatprep.subr.bf16.mxu0 0
        %830 = vmatpush1.bf16.msra.mxu0 0
        %831 = vmatprep.subr.bf16.mxu0 0
        %832 = vmatpush1.bf16.msra.mxu0 0
        %833 = vmatprep.subr.bf16.mxu0 0
        %834 = vmatpush1.bf16.msra.mxu0 0
        %835 = vmatprep.subr.bf16.mxu0 0
        %836 = vmatpush1.bf16.msra.mxu0 %v819
        %837 = vmatprep.subr.bf16.mxu0 0
        %838 = vmatpush2.bf16.msra.mxu0 0
        %839 = vmatprep.subr.bf16.mxu0 0
        %840 = vmatpush2.bf16.msra.mxu0 0
        %841 = vmatprep.subr.bf16.mxu0 0
        %842 = vmatpush2.bf16.msra.mxu0 0
        %843 = vmatprep.subr.bf16.mxu0 0
        %844 = vmatpush2.bf16.msra.mxu0 0
        %845 = vmatprep.subr.bf16.mxu0 0
        %846 = vmatpush2.bf16.msra.mxu0 0
        %847 = vmatprep.subr.bf16.mxu0 0
        %848 = vmatpush2.bf16.msra.mxu0 0
        %849 = vmatprep.subr.bf16.mxu0 0
        %850 = vmatpush2.bf16.msra.mxu0 0
        %851 = vmatprep.subr.bf16.mxu0 0
        %852 = vmatpush2.bf16.msra.mxu0 0
        %853 = vmatprep.mubr.bf16.mxu0 0
        %854 = vmatmul.mubr.bf16.gmra.mxu0 %v765
        %v855 = vpop.f32.mrf.mxu0
        %v856 = vadd.f32 %v622, %v855
        %v857 = vpop.f32.mrf.mxu0
        %v858 = vpop.f32.mrf.mxu0
        %v859 = vadd.f32 %v625, %v858
        %v860 = vpop.f32.mrf.mxu0
        %861 = vmatprep.mubr.bf16.mxu0 0
        %862 = vmatmul.mubr.bf16.gmra.mxu0 %v768
        %v863 = vpop.f32.mrf.mxu0
        %v864 = vadd.f32 %v630, %v863
        %v865 = vpop.f32.mrf.mxu0
        %v866 = vpop.f32.mrf.mxu0
        %v867 = vadd.f32 %v633, %v866
        %v868 = vpop.f32.mrf.mxu0
        %869 = vmatprep.mubr.bf16.mxu0 0
        %870 = vmatmul.mubr.bf16.gmra.mxu0 %v771
        %v871 = vpop.f32.mrf.mxu0
        %v872 = vadd.f32 %v638, %v871
        %v873 = vpop.f32.mrf.mxu0
        %v874 = vpop.f32.mrf.mxu0
        %v875 = vadd.f32 %v641, %v874
        %v876 = vpop.f32.mrf.mxu0
        %877 = vmatprep.mubr.bf16.mxu0 0
        %878 = vmatmul.mubr.bf16.gmra.mxu0 %v774
        %v879 = vpop.f32.mrf.mxu0
        %v880 = vadd.f32 %v646, %v879
        %v881 = vpop.f32.mrf.mxu0
        %v882 = vpop.f32.mrf.mxu0
        %v883 = vadd.f32 %v649, %v882
        %v884 = vpop.f32.mrf.mxu0
        %885 = vmatprep.mubr.bf16.mxu0 0
        %886 = vmatmul.mubr.bf16.gmra.mxu0 %v777
        %v887 = vpop.f32.mrf.mxu0
        %v888 = vadd.f32 %v654, %v887
        %v889 = vpop.f32.mrf.mxu0
        %v890 = vpop.f32.mrf.mxu0
        %v891 = vadd.f32 %v657, %v890
        %v892 = vpop.f32.mrf.mxu0
        %893 = vmatprep.mubr.bf16.mxu0 0
        %894 = vmatmul.mubr.bf16.gmra.mxu0 %v780
        %v895 = vpop.f32.mrf.mxu0
        %v896 = vadd.f32 %v662, %v895
        %v897 = vpop.f32.mrf.mxu0
        %v898 = vpop.f32.mrf.mxu0
        %v899 = vadd.f32 %v665, %v898
        %v900 = vpop.f32.mrf.mxu0
        %901 = vmatprep.mubr.bf16.mxu0 0
        %902 = vmatmul.mubr.bf16.gmra.mxu0 %v783
        %v903 = vpop.f32.mrf.mxu0
        %v904 = vadd.f32 %v670, %v903
        %v905 = vpop.f32.mrf.mxu0
        %v906 = vpop.f32.mrf.mxu0
        %v907 = vadd.f32 %v673, %v906
        %v908 = vpop.f32.mrf.mxu0
        %909 = vmatprep.mubr.bf16.mxu0 0
        %910 = vmatmul.mubr.bf16.gmra.mxu0 %v786
        %v911 = vpop.f32.mrf.mxu0
        %v912 = vadd.f32 %v678, %v911
        %v913 = vpop.f32.mrf.mxu0
        %v914 = vpop.f32.mrf.mxu0
        %v915 = vadd.f32 %v681, %v914
        %v916 = vpop.f32.mrf.mxu0
        %917 = vmatprep.mubr.bf16.mxu0 0
        %918 = vmatmul.mubr.bf16.gmra.mxu0 %v789
        %v919 = vpop.f32.mrf.mxu0
        %v920 = vadd.f32 %v686, %v919
        %v921 = vpop.f32.mrf.mxu0
        %v922 = vpop.f32.mrf.mxu0
        %v923 = vadd.f32 %v689, %v922
        %v924 = vpop.f32.mrf.mxu0
        %925 = vmatprep.mubr.bf16.mxu0 0
        %926 = vmatmul.mubr.bf16.gmra.mxu0 %v792
        %v927 = vpop.f32.mrf.mxu0
        %v928 = vadd.f32 %v694, %v927
        %v929 = vpop.f32.mrf.mxu0
        %v930 = vpop.f32.mrf.mxu0
        %v931 = vadd.f32 %v697, %v930
        %v932 = vpop.f32.mrf.mxu0
        %933 = vmatprep.mubr.bf16.mxu0 0
        %934 = vmatmul.mubr.bf16.gmra.mxu0 %v795
        %v935 = vpop.f32.mrf.mxu0
        %v936 = vadd.f32 %v702, %v935
        %v937 = vpop.f32.mrf.mxu0
        %v938 = vpop.f32.mrf.mxu0
        %v939 = vadd.f32 %v705, %v938
        %v940 = vpop.f32.mrf.mxu0
        %941 = vmatprep.mubr.bf16.mxu0 0
        %942 = vmatmul.mubr.bf16.gmra.mxu0 %v798
        %v943 = vpop.f32.mrf.mxu0
        %v944 = vadd.f32 %v710, %v943
        %v945 = vpop.f32.mrf.mxu0
        %v946 = vpop.f32.mrf.mxu0
        %v947 = vadd.f32 %v713, %v946
        %v948 = vpop.f32.mrf.mxu0
        %949 = vmatprep.mubr.bf16.mxu0 0
        %950 = vmatmul.mubr.bf16.gmra.mxu0 %v801
        %v951 = vpop.f32.mrf.mxu0
        %v952 = vadd.f32 %v718, %v951
        %v953 = vpop.f32.mrf.mxu0
        %v954 = vpop.f32.mrf.mxu0
        %v955 = vadd.f32 %v721, %v954
        %v956 = vpop.f32.mrf.mxu0
        %957 = vmatprep.mubr.bf16.mxu0 0
        %958 = vmatmul.mubr.bf16.gmra.mxu0 %v804
        %v959 = vpop.f32.mrf.mxu0
        %v960 = vadd.f32 %v726, %v959
        %v961 = vpop.f32.mrf.mxu0
        %v962 = vpop.f32.mrf.mxu0
        %v963 = vadd.f32 %v729, %v962
        %v964 = vpop.f32.mrf.mxu0
        %965 = vmatprep.mubr.bf16.mxu0 0
        %966 = vmatmul.mubr.bf16.gmra.mxu0 %v807
        %v967 = vpop.f32.mrf.mxu0
        %v968 = vadd.f32 %v734, %v967
        %v969 = vpop.f32.mrf.mxu0
        %v970 = vpop.f32.mrf.mxu0
        %v971 = vadd.f32 %v737, %v970
        %v972 = vpop.f32.mrf.mxu0
        %973 = vmatprep.mubr.bf16.mxu0 0
        %974 = vmatmul.mubr.bf16.gmra.mxu0 %v810
        %v975 = vpop.f32.mrf.mxu0
        %v976 = vadd.f32 %v742, %v975
        %v977 = vpop.f32.mrf.mxu0
        %v978 = vpop.f32.mrf.mxu0
        %v979 = vadd.f32 %v745, %v978
        %v980 = vpop.f32.mrf.mxu0
        %981 = vmatprep.mubr.bf16.mxu0 0
        %982 = vmatmul.mubr.bf16.gmra.mxu0 %v813
        %v983 = vpop.f32.mrf.mxu0
        %v984 = vadd.f32 %v750, %v983
        %v985 = vpop.f32.mrf.mxu0
        %v986 = vpop.f32.mrf.mxu0
        %v987 = vadd.f32 %v753, %v986
        %v988 = vpop.f32.mrf.mxu0
        %989 = vmatprep.mubr.bf16.mxu0 0
        %990 = vmatmul.mubr.bf16.gmra.mxu0 %v816
        %v991 = vpop.f32.mrf.mxu0
        %v992 = vadd.f32 %v758, %v991
        %v993 = vpop.f32.mrf.mxu0
        %v994 = vpop.f32.mrf.mxu0
        %v995 = vadd.f32 %v761, %v994
        %v996 = vpop.f32.mrf.mxu0
        %997 = vdwg.mxu0
        %v998 = vld [vmem:[%s384 + $0x2] sm:$0xff]
        %v999 = vld [vmem:[%s384 + $0xa] sm:$0xff]
        %v1000 = vld [vmem:[%s384 + $0x12] sm:$0xff]
        %v1001 = vld [vmem:[%s384 + $0x1a] sm:$0xff]
        %v1002 = vld [vmem:[%s384 + $0x22] sm:$0xff]
        %v1003 = vld [vmem:[%s384 + $0x2a] sm:$0xff]
        %v1004 = vld [vmem:[%s384 + $0x32] sm:$0xff]
        %v1005 = vld [vmem:[%s384 + $0x3a] sm:$0xff]
        %v1006 = vld [vmem:[%s384 + $0x42] sm:$0xff]
        %v1007 = vld [vmem:[%s384 + $0x4a] sm:$0xff]
        %v1008 = vld [vmem:[%s384 + $0x52] sm:$0xff]
        %v1009 = vld [vmem:[%s384 + $0x5a] sm:$0xff]
        %v1010 = vld [vmem:[%s384 + $0x62] sm:$0xff]
        %v1011 = vld [vmem:[%s384 + $0x6a] sm:$0xff]
        %v1012 = vld [vmem:[%s384 + $0x72] sm:$0xff]
        %v1013 = vld [vmem:[%s384 + $0x7a] sm:$0xff]
        %v1014 = vld [vmem:[%s384 + $0x82] sm:$0xff]
        %v1015 = vld [vmem:[%s384 + $0x8a] sm:$0xff]
        %v1016 = vld [vmem:[%s384 + $0x92] sm:$0xff]
        %v1017 = vld [vmem:[%s384 + $0x9a] sm:$0xff]
        %v1018 = vld [vmem:[%s384 + $0xa2] sm:$0xff]
        %v1019 = vld [vmem:[%s384 + $0xaa] sm:$0xff]
        %v1020 = vld [vmem:[%s384 + $0xb2] sm:$0xff]
        %v1021 = vld [vmem:[%s384 + $0xba] sm:$0xff]
        %v1022 = vld [vmem:[%s384 + $0xc2] sm:$0xff]
        %v1023 = vld [vmem:[%s384 + $0xca] sm:$0xff]
        %v1024 = vld [vmem:[%s384 + $0xd2] sm:$0xff]
        %v1025 = vld [vmem:[%s384 + $0xda] sm:$0xff]
        %v1026 = vld [vmem:[%s384 + $0xe2] sm:$0xff]
        %v1027 = vld [vmem:[%s384 + $0xea] sm:$0xff]
        %v1028 = vld [vmem:[%s384 + $0xf2] sm:$0xff]
        %v1029 = vld [vmem:[%s384 + $0xfa] sm:$0xff]
        %v1030 = vld [vmem:[%s384 + $0x102] sm:$0xff]
        %v1031 = vld [vmem:[%s384 + $0x10a] sm:$0xff]
        %v1032 = vld [vmem:[%s384 + $0x112] sm:$0xff]
        %v1033 = vld [vmem:[%s384 + $0x11a] sm:$0x3f]
        %v1034 = vpack.c.bf16 %v999, %v998
        %v1035 = vpack.c.bf16 %v1001, %v1000
        %v1036 = vpack.c.bf16 %v1003, %v1002
        %v1037 = vpack.c.bf16 %v1005, %v1004
        %v1038 = vpack.c.bf16 %v1007, %v1006
        %v1039 = vpack.c.bf16 %v1009, %v1008
        %v1040 = vpack.c.bf16 %v1011, %v1010
        %v1041 = vpack.c.bf16 %v1013, %v1012
        %v1042 = vpack.c.bf16 %v1015, %v1014
        %v1043 = vpack.c.bf16 %v1017, %v1016
        %v1044 = vpack.c.bf16 %v1019, %v1018
        %v1045 = vpack.c.bf16 %v1021, %v1020
        %v1046 = vpack.c.bf16 %v1023, %v1022
        %v1047 = vpack.c.bf16 %v1025, %v1024
        %v1048 = vpack.c.bf16 %v1027, %v1026
        %v1049 = vpack.c.bf16 %v1029, %v1028
        %v1050 = vpack.c.bf16 %v1031, %v1030
        %v1051 = vpack.c.bf16 %v1033, %v1032
        %s1052 = scalar_lea.vmem %s4, 4
        %v1053 = vld [vmem:[%s1052] sm:$0x3]
        %v1055 = vsel %vm528, %v1034, 0
        %v1058 = vsel %vm528, %v1035, 0
        %v1061 = vsel %vm528, %v1036, 0
        %v1064 = vsel %vm528, %v1037, 0
        %v1067 = vsel %vm528, %v1038, 0
        %v1070 = vsel %vm528, %v1039, 0
        %v1073 = vsel %vm528, %v1040, 0
        %v1076 = vsel %vm528, %v1041, 0
        %v1079 = vsel %vm528, %v1042, 0
        %v1082 = vsel %vm528, %v1043, 0
        %v1085 = vsel %vm528, %v1044, 0
        %v1088 = vsel %vm528, %v1045, 0
        %v1091 = vsel %vm528, %v1046, 0
        %v1094 = vsel %vm528, %v1047, 0
        %v1097 = vsel %vm528, %v1048, 0
        %v1100 = vsel %vm528, %v1049, 0
        %v1103 = vsel %vm528, %v1050, 0
        %v1106 = vsel %vm528, %v1051, 0
        %v1109 = vsel %vm583, %v1053, 0
        %1111 = vmatprep.subr.bf16.mxu0 0
        %1112 = vmatpush1.bf16.msra.mxu0 0
        %1113 = vmatprep.subr.bf16.mxu0 0
        %1114 = vmatpush1.bf16.msra.mxu0 0
        %1115 = vmatprep.subr.bf16.mxu0 0
        %1116 = vmatpush1.bf16.msra.mxu0 0
        %1117 = vmatprep.subr.bf16.mxu0 0
        %1118 = vmatpush1.bf16.msra.mxu0 0
        %1119 = vmatprep.subr.bf16.mxu0 0
        %1120 = vmatpush1.bf16.msra.mxu0 0
        %1121 = vmatprep.subr.bf16.mxu0 0
        %1122 = vmatpush1.bf16.msra.mxu0 0
        %1123 = vmatprep.subr.bf16.mxu0 0
        %1124 = vmatpush1.bf16.msra.mxu0 0
        %1125 = vmatprep.subr.bf16.mxu0 0
        %1126 = vmatpush1.bf16.msra.mxu0 %v1109
        %1127 = vmatprep.subr.bf16.mxu0 0
        %1128 = vmatpush2.bf16.msra.mxu0 0
        %1129 = vmatprep.subr.bf16.mxu0 0
        %1130 = vmatpush2.bf16.msra.mxu0 0
        %1131 = vmatprep.subr.bf16.mxu0 0
        %1132 = vmatpush2.bf16.msra.mxu0 0
        %1133 = vmatprep.subr.bf16.mxu0 0
        %1134 = vmatpush2.bf16.msra.mxu0 0
        %1135 = vmatprep.subr.bf16.mxu0 0
        %1136 = vmatpush2.bf16.msra.mxu0 0
        %1137 = vmatprep.subr.bf16.mxu0 0
        %1138 = vmatpush2.bf16.msra.mxu0 0
        %1139 = vmatprep.subr.bf16.mxu0 0
        %1140 = vmatpush2.bf16.msra.mxu0 0
        %1141 = vmatprep.subr.bf16.mxu0 0
        %1142 = vmatpush2.bf16.msra.mxu0 0
        %1143 = vmatprep.mubr.bf16.mxu0 0
        %1144 = vmatmul.mubr.bf16.gmra.mxu0 %v1055
        %v1145 = vpop.f32.mrf.mxu0
        %v1146 = vadd.f32 0.0, %v1145
        %v1147 = vpop.f32.mrf.mxu0
        %v1148 = vpop.f32.mrf.mxu0
        %v1149 = vadd.f32 0.0, %v1148
        %v1150 = vpop.f32.mrf.mxu0
        %1151 = vmatprep.mubr.bf16.mxu0 0
        %1152 = vmatmul.mubr.bf16.gmra.mxu0 %v1058
        %v1153 = vpop.f32.mrf.mxu0
        %v1154 = vadd.f32 0.0, %v1153
        %v1155 = vpop.f32.mrf.mxu0
        %v1156 = vpop.f32.mrf.mxu0
        %v1157 = vadd.f32 0.0, %v1156
        %v1158 = vpop.f32.mrf.mxu0
        %1159 = vmatprep.mubr.bf16.mxu0 0
        %1160 = vmatmul.mubr.bf16.gmra.mxu0 %v1061
        %v1161 = vpop.f32.mrf.mxu0
        %v1162 = vadd.f32 0.0, %v1161
        %v1163 = vpop.f32.mrf.mxu0
        %v1164 = vpop.f32.mrf.mxu0
        %v1165 = vadd.f32 0.0, %v1164
        %v1166 = vpop.f32.mrf.mxu0
        %1167 = vmatprep.mubr.bf16.mxu0 0
        %1168 = vmatmul.mubr.bf16.gmra.mxu0 %v1064
        %v1169 = vpop.f32.mrf.mxu0
        %v1170 = vadd.f32 0.0, %v1169
        %v1171 = vpop.f32.mrf.mxu0
        %v1172 = vpop.f32.mrf.mxu0
        %v1173 = vadd.f32 0.0, %v1172
        %v1174 = vpop.f32.mrf.mxu0
        %1175 = vmatprep.mubr.bf16.mxu0 0
        %1176 = vmatmul.mubr.bf16.gmra.mxu0 %v1067
        %v1177 = vpop.f32.mrf.mxu0
        %v1178 = vadd.f32 0.0, %v1177
        %v1179 = vpop.f32.mrf.mxu0
        %v1180 = vpop.f32.mrf.mxu0
        %v1181 = vadd.f32 0.0, %v1180
        %v1182 = vpop.f32.mrf.mxu0
        %1183 = vmatprep.mubr.bf16.mxu0 0
        %1184 = vmatmul.mubr.bf16.gmra.mxu0 %v1070
        %v1185 = vpop.f32.mrf.mxu0
        %v1186 = vadd.f32 0.0, %v1185
        %v1187 = vpop.f32.mrf.mxu0
        %v1188 = vpop.f32.mrf.mxu0
        %v1189 = vadd.f32 0.0, %v1188
        %v1190 = vpop.f32.mrf.mxu0
        %1191 = vmatprep.mubr.bf16.mxu0 0
        %1192 = vmatmul.mubr.bf16.gmra.mxu0 %v1073
        %v1193 = vpop.f32.mrf.mxu0
        %v1194 = vadd.f32 0.0, %v1193
        %v1195 = vpop.f32.mrf.mxu0
        %v1196 = vpop.f32.mrf.mxu0
        %v1197 = vadd.f32 0.0, %v1196
        %v1198 = vpop.f32.mrf.mxu0
        %1199 = vmatprep.mubr.bf16.mxu0 0
        %1200 = vmatmul.mubr.bf16.gmra.mxu0 %v1076
        %v1201 = vpop.f32.mrf.mxu0
        %v1202 = vadd.f32 0.0, %v1201
        %v1203 = vpop.f32.mrf.mxu0
        %v1204 = vpop.f32.mrf.mxu0
        %v1205 = vadd.f32 0.0, %v1204
        %v1206 = vpop.f32.mrf.mxu0
        %1207 = vmatprep.mubr.bf16.mxu0 0
        %1208 = vmatmul.mubr.bf16.gmra.mxu0 %v1079
        %v1209 = vpop.f32.mrf.mxu0
        %v1210 = vadd.f32 0.0, %v1209
        %v1211 = vpop.f32.mrf.mxu0
        %v1212 = vpop.f32.mrf.mxu0
        %v1213 = vadd.f32 0.0, %v1212
        %v1214 = vpop.f32.mrf.mxu0
        %1215 = vmatprep.mubr.bf16.mxu0 0
        %1216 = vmatmul.mubr.bf16.gmra.mxu0 %v1082
        %v1217 = vpop.f32.mrf.mxu0
        %v1218 = vadd.f32 0.0, %v1217
        %v1219 = vpop.f32.mrf.mxu0
        %v1220 = vpop.f32.mrf.mxu0
        %v1221 = vadd.f32 0.0, %v1220
        %v1222 = vpop.f32.mrf.mxu0
        %1223 = vmatprep.mubr.bf16.mxu0 0
        %1224 = vmatmul.mubr.bf16.gmra.mxu0 %v1085
        %v1225 = vpop.f32.mrf.mxu0
        %v1226 = vadd.f32 0.0, %v1225
        %v1227 = vpop.f32.mrf.mxu0
        %v1228 = vpop.f32.mrf.mxu0
        %v1229 = vadd.f32 0.0, %v1228
        %v1230 = vpop.f32.mrf.mxu0
        %1231 = vmatprep.mubr.bf16.mxu0 0
        %1232 = vmatmul.mubr.bf16.gmra.mxu0 %v1088
        %v1233 = vpop.f32.mrf.mxu0
        %v1234 = vadd.f32 0.0, %v1233
        %v1235 = vpop.f32.mrf.mxu0
        %v1236 = vpop.f32.mrf.mxu0
        %v1237 = vadd.f32 0.0, %v1236
        %v1238 = vpop.f32.mrf.mxu0
        %1239 = vmatprep.mubr.bf16.mxu0 0
        %1240 = vmatmul.mubr.bf16.gmra.mxu0 %v1091
        %v1241 = vpop.f32.mrf.mxu0
        %v1242 = vadd.f32 0.0, %v1241
        %v1243 = vpop.f32.mrf.mxu0
        %v1244 = vpop.f32.mrf.mxu0
        %v1245 = vadd.f32 0.0, %v1244
        %v1246 = vpop.f32.mrf.mxu0
        %1247 = vmatprep.mubr.bf16.mxu0 0
        %1248 = vmatmul.mubr.bf16.gmra.mxu0 %v1094
        %v1249 = vpop.f32.mrf.mxu0
        %v1250 = vadd.f32 0.0, %v1249
        %v1251 = vpop.f32.mrf.mxu0
        %v1252 = vpop.f32.mrf.mxu0
        %v1253 = vadd.f32 0.0, %v1252
        %v1254 = vpop.f32.mrf.mxu0
        %1255 = vmatprep.mubr.bf16.mxu0 0
        %1256 = vmatmul.mubr.bf16.gmra.mxu0 %v1097
        %v1257 = vpop.f32.mrf.mxu0
        %v1258 = vadd.f32 0.0, %v1257
        %v1259 = vpop.f32.mrf.mxu0
        %v1260 = vpop.f32.mrf.mxu0
        %v1261 = vadd.f32 0.0, %v1260
        %v1262 = vpop.f32.mrf.mxu0
        %1263 = vmatprep.mubr.bf16.mxu0 0
        %1264 = vmatmul.mubr.bf16.gmra.mxu0 %v1100
        %v1265 = vpop.f32.mrf.mxu0
        %v1266 = vadd.f32 0.0, %v1265
        %v1267 = vpop.f32.mrf.mxu0
        %v1268 = vpop.f32.mrf.mxu0
        %v1269 = vadd.f32 0.0, %v1268
        %v1270 = vpop.f32.mrf.mxu0
        %1271 = vmatprep.mubr.bf16.mxu0 0
        %1272 = vmatmul.mubr.bf16.gmra.mxu0 %v1103
        %v1273 = vpop.f32.mrf.mxu0
        %v1274 = vadd.f32 0.0, %v1273
        %v1275 = vpop.f32.mrf.mxu0
        %v1276 = vpop.f32.mrf.mxu0
        %v1277 = vadd.f32 0.0, %v1276
        %v1278 = vpop.f32.mrf.mxu0
        %1279 = vmatprep.mubr.bf16.mxu0 0
        %1280 = vmatmul.mubr.bf16.gmra.mxu0 %v1106
        %v1281 = vpop.f32.mrf.mxu0
        %v1282 = vadd.f32 0.0, %v1281
        %v1283 = vpop.f32.mrf.mxu0
        %v1284 = vpop.f32.mrf.mxu0
        %v1285 = vadd.f32 0.0, %v1284
        %v1286 = vpop.f32.mrf.mxu0
        %1287 = vdwg.mxu0
        %v1288 = vadd.f32 %v856, %v1146
        %v1289 = vadd.f32 %v859, %v1149
        %v1290 = vadd.f32 %v864, %v1154
        %v1291 = vadd.f32 %v867, %v1157
        %v1292 = vadd.f32 %v872, %v1162
        %v1293 = vadd.f32 %v875, %v1165
        %v1294 = vadd.f32 %v880, %v1170
        %v1295 = vadd.f32 %v883, %v1173
        %v1296 = vadd.f32 %v888, %v1178
        %v1297 = vadd.f32 %v891, %v1181
        %v1298 = vadd.f32 %v896, %v1186
        %v1299 = vadd.f32 %v899, %v1189
        %v1300 = vadd.f32 %v904, %v1194
        %v1301 = vadd.f32 %v907, %v1197
        %v1302 = vadd.f32 %v912, %v1202
        %v1303 = vadd.f32 %v915, %v1205
        %v1304 = vadd.f32 %v920, %v1210
        %v1305 = vadd.f32 %v923, %v1213
        %v1306 = vadd.f32 %v928, %v1218
        %v1307 = vadd.f32 %v931, %v1221
        %v1308 = vadd.f32 %v936, %v1226
        %v1309 = vadd.f32 %v939, %v1229
        %v1310 = vadd.f32 %v944, %v1234
        %v1311 = vadd.f32 %v947, %v1237
        %v1312 = vadd.f32 %v952, %v1242
        %v1313 = vadd.f32 %v955, %v1245
        %v1314 = vadd.f32 %v960, %v1250
        %v1315 = vadd.f32 %v963, %v1253
        %v1316 = vadd.f32 %v968, %v1258
        %v1317 = vadd.f32 %v971, %v1261
        %v1318 = vadd.f32 %v976, %v1266
        %v1319 = vadd.f32 %v979, %v1269
        %v1320 = vadd.f32 %v984, %v1274
        %v1321 = vadd.f32 %v987, %v1277
        %v1322 = vadd.f32 %v992, %v1282
        %v1323 = vadd.f32 %v995, %v1285
        %v1324 = vld [vmem:[%s384 + $0x12] sm:$0xff]
        %v1325 = vld [vmem:[%s384 + $0x1a] sm:$0xff]
        %v1326 = vld [vmem:[%s384 + $0x22] sm:$0xff]
        %v1327 = vld [vmem:[%s384 + $0x2a] sm:$0xff]
        %v1328 = vld [vmem:[%s384 + $0x32] sm:$0xff]
        %v1329 = vld [vmem:[%s384 + $0x3a] sm:$0xff]
        %v1330 = vld [vmem:[%s384 + $0x42] sm:$0xff]
        %v1331 = vld [vmem:[%s384 + $0x4a] sm:$0xff]
        %v1332 = vld [vmem:[%s384 + $0x52] sm:$0xff]
        %v1333 = vld [vmem:[%s384 + $0x5a] sm:$0xff]
        %v1334 = vld [vmem:[%s384 + $0x62] sm:$0xff]
        %v1335 = vld [vmem:[%s384 + $0x6a] sm:$0xff]
        %v1336 = vld [vmem:[%s384 + $0x72] sm:$0xff]
        %v1337 = vld [vmem:[%s384 + $0x7a] sm:$0xff]
        %v1338 = vld [vmem:[%s384 + $0x82] sm:$0xff]
        %v1339 = vld [vmem:[%s384 + $0x8a] sm:$0xff]
        %v1340 = vld [vmem:[%s384 + $0x92] sm:$0xff]
        %v1341 = vld [vmem:[%s384 + $0x9a] sm:$0xff]
        %v1342 = vld [vmem:[%s384 + $0xa2] sm:$0xff]
        %v1343 = vld [vmem:[%s384 + $0xaa] sm:$0xff]
        %v1344 = vld [vmem:[%s384 + $0xb2] sm:$0xff]
        %v1345 = vld [vmem:[%s384 + $0xba] sm:$0xff]
        %v1346 = vld [vmem:[%s384 + $0xc2] sm:$0xff]
        %v1347 = vld [vmem:[%s384 + $0xca] sm:$0xff]
        %v1348 = vld [vmem:[%s384 + $0xd2] sm:$0xff]
        %v1349 = vld [vmem:[%s384 + $0xda] sm:$0xff]
        %v1350 = vld [vmem:[%s384 + $0xe2] sm:$0xff]
        %v1351 = vld [vmem:[%s384 + $0xea] sm:$0xff]
        %v1352 = vld [vmem:[%s384 + $0xf2] sm:$0xff]
        %v1353 = vld [vmem:[%s384 + $0xfa] sm:$0xff]
        %v1354 = vld [vmem:[%s384 + $0x102] sm:$0xff]
        %v1355 = vld [vmem:[%s384 + $0x10a] sm:$0xff]
        %v1356 = vld [vmem:[%s384 + $0x112] sm:$0xff]
        %v1357 = vld [vmem:[%s384 + $0x11a] sm:$0xff]
        %v1358 = vld [vmem:[%s384 + $0x122] sm:$0xff]
        %v1359 = vld [vmem:[%s384 + $0x12a] sm:$0x3f]
        %v1360 = vpack.c.bf16 %v1325, %v1324
        %v1361 = vpack.c.bf16 %v1327, %v1326
        %v1362 = vpack.c.bf16 %v1329, %v1328
        %v1363 = vpack.c.bf16 %v1331, %v1330
        %v1364 = vpack.c.bf16 %v1333, %v1332
        %v1365 = vpack.c.bf16 %v1335, %v1334
        %v1366 = vpack.c.bf16 %v1337, %v1336
        %v1367 = vpack.c.bf16 %v1339, %v1338
        %v1368 = vpack.c.bf16 %v1341, %v1340
        %v1369 = vpack.c.bf16 %v1343, %v1342
        %v1370 = vpack.c.bf16 %v1345, %v1344
        %v1371 = vpack.c.bf16 %v1347, %v1346
        %v1372 = vpack.c.bf16 %v1349, %v1348
        %v1373 = vpack.c.bf16 %v1351, %v1350
        %v1374 = vpack.c.bf16 %v1353, %v1352
        %v1375 = vpack.c.bf16 %v1355, %v1354
        %v1376 = vpack.c.bf16 %v1357, %v1356
        %v1377 = vpack.c.bf16 %v1359, %v1358
        %s1378 = scalar_lea.vmem %s4, 6
        %v1379 = vld [vmem:[%s1378] sm:$0x3]
        %v1381 = vsel %vm528, %v1360, 0
        %v1384 = vsel %vm528, %v1361, 0
        %v1387 = vsel %vm528, %v1362, 0
        %v1390 = vsel %vm528, %v1363, 0
        %v1393 = vsel %vm528, %v1364, 0
        %v1396 = vsel %vm528, %v1365, 0
        %v1399 = vsel %vm528, %v1366, 0
        %v1402 = vsel %vm528, %v1367, 0
        %v1405 = vsel %vm528, %v1368, 0
        %v1408 = vsel %vm528, %v1369, 0
        %v1411 = vsel %vm528, %v1370, 0
        %v1414 = vsel %vm528, %v1371, 0
        %v1417 = vsel %vm528, %v1372, 0
        %v1420 = vsel %vm528, %v1373, 0
        %v1423 = vsel %vm528, %v1374, 0
        %v1426 = vsel %vm528, %v1375, 0
        %v1429 = vsel %vm528, %v1376, 0
        %v1432 = vsel %vm528, %v1377, 0
        %v1435 = vsel %vm583, %v1379, 0
        %1437 = vmatprep.subr.bf16.mxu0 0
        %1438 = vmatpush1.bf16.msra.mxu0 0
        %1439 = vmatprep.subr.bf16.mxu0 0
        %1440 = vmatpush1.bf16.msra.mxu0 0
        %1441 = vmatprep.subr.bf16.mxu0 0
        %1442 = vmatpush1.bf16.msra.mxu0 0
        %1443 = vmatprep.subr.bf16.mxu0 0
        %1444 = vmatpush1.bf16.msra.mxu0 0
        %1445 = vmatprep.subr.bf16.mxu0 0
        %1446 = vmatpush1.bf16.msra.mxu0 0
        %1447 = vmatprep.subr.bf16.mxu0 0
        %1448 = vmatpush1.bf16.msra.mxu0 0
        %1449 = vmatprep.subr.bf16.mxu0 0
        %1450 = vmatpush1.bf16.msra.mxu0 0
        %1451 = vmatprep.subr.bf16.mxu0 0
        %1452 = vmatpush1.bf16.msra.mxu0 %v1435
        %1453 = vmatprep.subr.bf16.mxu0 0
        %1454 = vmatpush2.bf16.msra.mxu0 0
        %1455 = vmatprep.subr.bf16.mxu0 0
        %1456 = vmatpush2.bf16.msra.mxu0 0
        %1457 = vmatprep.subr.bf16.mxu0 0
        %1458 = vmatpush2.bf16.msra.mxu0 0
        %1459 = vmatprep.subr.bf16.mxu0 0
        %1460 = vmatpush2.bf16.msra.mxu0 0
        %1461 = vmatprep.subr.bf16.mxu0 0
        %1462 = vmatpush2.bf16.msra.mxu0 0
        %1463 = vmatprep.subr.bf16.mxu0 0
        %1464 = vmatpush2.bf16.msra.mxu0 0
        %1465 = vmatprep.subr.bf16.mxu0 0
        %1466 = vmatpush2.bf16.msra.mxu0 0
        %1467 = vmatprep.subr.bf16.mxu0 0
        %1468 = vmatpush2.bf16.msra.mxu0 0
        %1469 = vmatprep.mubr.bf16.mxu0 0
        %1470 = vmatmul.mubr.bf16.gmra.mxu0 %v1381
        %v1471 = vpop.f32.mrf.mxu0
        %v1472 = vadd.f32 0.0, %v1471
        %v1473 = vpop.f32.mrf.mxu0
        %v1474 = vpop.f32.mrf.mxu0
        %v1475 = vadd.f32 0.0, %v1474
        %v1476 = vpop.f32.mrf.mxu0
        %1477 = vmatprep.mubr.bf16.mxu0 0
        %1478 = vmatmul.mubr.bf16.gmra.mxu0 %v1384
        %v1479 = vpop.f32.mrf.mxu0
        %v1480 = vadd.f32 0.0, %v1479
        %v1481 = vpop.f32.mrf.mxu0
        %v1482 = vpop.f32.mrf.mxu0
        %v1483 = vadd.f32 0.0, %v1482
        %v1484 = vpop.f32.mrf.mxu0
        %1485 = vmatprep.mubr.bf16.mxu0 0
        %1486 = vmatmul.mubr.bf16.gmra.mxu0 %v1387
        %v1487 = vpop.f32.mrf.mxu0
        %v1488 = vadd.f32 0.0, %v1487
        %v1489 = vpop.f32.mrf.mxu0
        %v1490 = vpop.f32.mrf.mxu0
        %v1491 = vadd.f32 0.0, %v1490
        %v1492 = vpop.f32.mrf.mxu0
        %1493 = vmatprep.mubr.bf16.mxu0 0
        %1494 = vmatmul.mubr.bf16.gmra.mxu0 %v1390
        %v1495 = vpop.f32.mrf.mxu0
        %v1496 = vadd.f32 0.0, %v1495
        %v1497 = vpop.f32.mrf.mxu0
        %v1498 = vpop.f32.mrf.mxu0
        %v1499 = vadd.f32 0.0, %v1498
        %v1500 = vpop.f32.mrf.mxu0
        %1501 = vmatprep.mubr.bf16.mxu0 0
        %1502 = vmatmul.mubr.bf16.gmra.mxu0 %v1393
        %v1503 = vpop.f32.mrf.mxu0
        %v1504 = vadd.f32 0.0, %v1503
        %v1505 = vpop.f32.mrf.mxu0
        %v1506 = vpop.f32.mrf.mxu0
        %v1507 = vadd.f32 0.0, %v1506
        %v1508 = vpop.f32.mrf.mxu0
        %1509 = vmatprep.mubr.bf16.mxu0 0
        %1510 = vmatmul.mubr.bf16.gmra.mxu0 %v1396
        %v1511 = vpop.f32.mrf.mxu0
        %v1512 = vadd.f32 0.0, %v1511
        %v1513 = vpop.f32.mrf.mxu0
        %v1514 = vpop.f32.mrf.mxu0
        %v1515 = vadd.f32 0.0, %v1514
        %v1516 = vpop.f32.mrf.mxu0
        %1517 = vmatprep.mubr.bf16.mxu0 0
        %1518 = vmatmul.mubr.bf16.gmra.mxu0 %v1399
        %v1519 = vpop.f32.mrf.mxu0
        %v1520 = vadd.f32 0.0, %v1519
        %v1521 = vpop.f32.mrf.mxu0
        %v1522 = vpop.f32.mrf.mxu0
        %v1523 = vadd.f32 0.0, %v1522
        %v1524 = vpop.f32.mrf.mxu0
        %1525 = vmatprep.mubr.bf16.mxu0 0
        %1526 = vmatmul.mubr.bf16.gmra.mxu0 %v1402
        %v1527 = vpop.f32.mrf.mxu0
        %v1528 = vadd.f32 0.0, %v1527
        %v1529 = vpop.f32.mrf.mxu0
        %v1530 = vpop.f32.mrf.mxu0
        %v1531 = vadd.f32 0.0, %v1530
        %v1532 = vpop.f32.mrf.mxu0
        %1533 = vmatprep.mubr.bf16.mxu0 0
        %1534 = vmatmul.mubr.bf16.gmra.mxu0 %v1405
        %v1535 = vpop.f32.mrf.mxu0
        %v1536 = vadd.f32 0.0, %v1535
        %v1537 = vpop.f32.mrf.mxu0
        %v1538 = vpop.f32.mrf.mxu0
        %v1539 = vadd.f32 0.0, %v1538
        %v1540 = vpop.f32.mrf.mxu0
        %1541 = vmatprep.mubr.bf16.mxu0 0
        %1542 = vmatmul.mubr.bf16.gmra.mxu0 %v1408
        %v1543 = vpop.f32.mrf.mxu0
        %v1544 = vadd.f32 0.0, %v1543
        %v1545 = vpop.f32.mrf.mxu0
        %v1546 = vpop.f32.mrf.mxu0
        %v1547 = vadd.f32 0.0, %v1546
        %v1548 = vpop.f32.mrf.mxu0
        %1549 = vmatprep.mubr.bf16.mxu0 0
        %1550 = vmatmul.mubr.bf16.gmra.mxu0 %v1411
        %v1551 = vpop.f32.mrf.mxu0
        %v1552 = vadd.f32 0.0, %v1551
        %v1553 = vpop.f32.mrf.mxu0
        %v1554 = vpop.f32.mrf.mxu0
        %v1555 = vadd.f32 0.0, %v1554
        %v1556 = vpop.f32.mrf.mxu0
        %1557 = vmatprep.mubr.bf16.mxu0 0
        %1558 = vmatmul.mubr.bf16.gmra.mxu0 %v1414
        %v1559 = vpop.f32.mrf.mxu0
        %v1560 = vadd.f32 0.0, %v1559
        %v1561 = vpop.f32.mrf.mxu0
        %v1562 = vpop.f32.mrf.mxu0
        %v1563 = vadd.f32 0.0, %v1562
        %v1564 = vpop.f32.mrf.mxu0
        %1565 = vmatprep.mubr.bf16.mxu0 0
        %1566 = vmatmul.mubr.bf16.gmra.mxu0 %v1417
        %v1567 = vpop.f32.mrf.mxu0
        %v1568 = vadd.f32 0.0, %v1567
        %v1569 = vpop.f32.mrf.mxu0
        %v1570 = vpop.f32.mrf.mxu0
        %v1571 = vadd.f32 0.0, %v1570
        %v1572 = vpop.f32.mrf.mxu0
        %1573 = vmatprep.mubr.bf16.mxu0 0
        %1574 = vmatmul.mubr.bf16.gmra.mxu0 %v1420
        %v1575 = vpop.f32.mrf.mxu0
        %v1576 = vadd.f32 0.0, %v1575
        %v1577 = vpop.f32.mrf.mxu0
        %v1578 = vpop.f32.mrf.mxu0
        %v1579 = vadd.f32 0.0, %v1578
        %v1580 = vpop.f32.mrf.mxu0
        %1581 = vmatprep.mubr.bf16.mxu0 0
        %1582 = vmatmul.mubr.bf16.gmra.mxu0 %v1423
        %v1583 = vpop.f32.mrf.mxu0
        %v1584 = vadd.f32 0.0, %v1583
        %v1585 = vpop.f32.mrf.mxu0
        %v1586 = vpop.f32.mrf.mxu0
        %v1587 = vadd.f32 0.0, %v1586
        %v1588 = vpop.f32.mrf.mxu0
        %1589 = vmatprep.mubr.bf16.mxu0 0
        %1590 = vmatmul.mubr.bf16.gmra.mxu0 %v1426
        %v1591 = vpop.f32.mrf.mxu0
        %v1592 = vadd.f32 0.0, %v1591
        %v1593 = vpop.f32.mrf.mxu0
        %v1594 = vpop.f32.mrf.mxu0
        %v1595 = vadd.f32 0.0, %v1594
        %v1596 = vpop.f32.mrf.mxu0
        %1597 = vmatprep.mubr.bf16.mxu0 0
        %1598 = vmatmul.mubr.bf16.gmra.mxu0 %v1429
        %v1599 = vpop.f32.mrf.mxu0
        %v1600 = vadd.f32 0.0, %v1599
        %v1601 = vpop.f32.mrf.mxu0
        %v1602 = vpop.f32.mrf.mxu0
        %v1603 = vadd.f32 0.0, %v1602
        %v1604 = vpop.f32.mrf.mxu0
        %1605 = vmatprep.mubr.bf16.mxu0 0
        %1606 = vmatmul.mubr.bf16.gmra.mxu0 %v1432
        %v1607 = vpop.f32.mrf.mxu0
        %v1608 = vadd.f32 0.0, %v1607
        %v1609 = vpop.f32.mrf.mxu0
        %v1610 = vpop.f32.mrf.mxu0
        %v1611 = vadd.f32 0.0, %v1610
        %v1612 = vpop.f32.mrf.mxu0
        %1613 = vdwg.mxu0
        %v1614 = vadd.f32 %v1288, %v1472
        %v1615 = vadd.f32 %v1289, %v1475
        %v1616 = vadd.f32 %v1290, %v1480
        %v1617 = vadd.f32 %v1291, %v1483
        %v1618 = vadd.f32 %v1292, %v1488
        %v1619 = vadd.f32 %v1293, %v1491
        %v1620 = vadd.f32 %v1294, %v1496
        %v1621 = vadd.f32 %v1295, %v1499
        %v1622 = vadd.f32 %v1296, %v1504
        %v1623 = vadd.f32 %v1297, %v1507
        %v1624 = vadd.f32 %v1298, %v1512
        %v1625 = vadd.f32 %v1299, %v1515
        %v1626 = vadd.f32 %v1300, %v1520
        %v1627 = vadd.f32 %v1301, %v1523
        %v1628 = vadd.f32 %v1302, %v1528
        %v1629 = vadd.f32 %v1303, %v1531
        %v1630 = vadd.f32 %v1304, %v1536
        %v1631 = vadd.f32 %v1305, %v1539
        %v1632 = vadd.f32 %v1306, %v1544
        %v1633 = vadd.f32 %v1307, %v1547
        %v1634 = vadd.f32 %v1308, %v1552
        %v1635 = vadd.f32 %v1309, %v1555
        %v1636 = vadd.f32 %v1310, %v1560
        %v1637 = vadd.f32 %v1311, %v1563
        %v1638 = vadd.f32 %v1312, %v1568
        %v1639 = vadd.f32 %v1313, %v1571
        %v1640 = vadd.f32 %v1314, %v1576
        %v1641 = vadd.f32 %v1315, %v1579
        %v1642 = vadd.f32 %v1316, %v1584
        %v1643 = vadd.f32 %v1317, %v1587
        %v1644 = vadd.f32 %v1318, %v1592
        %v1645 = vadd.f32 %v1319, %v1595
        %v1646 = vadd.f32 %v1320, %v1600
        %v1647 = vadd.f32 %v1321, %v1603
        %v1648 = vadd.f32 %v1322, %v1608
        %v1649 = vadd.f32 %v1323, %v1611
        %v1650 = vld [vmem:[%s384 + $0x13] sm:$0xff]
        %v1651 = vld [vmem:[%s384 + $0x1b] sm:$0xff]
        %v1652 = vld [vmem:[%s384 + $0x23] sm:$0xff]
        %v1653 = vld [vmem:[%s384 + $0x2b] sm:$0xff]
        %v1654 = vld [vmem:[%s384 + $0x33] sm:$0xff]
        %v1655 = vld [vmem:[%s384 + $0x3b] sm:$0xff]
        %v1656 = vld [vmem:[%s384 + $0x43] sm:$0xff]
        %v1657 = vld [vmem:[%s384 + $0x4b] sm:$0xff]
        %v1658 = vld [vmem:[%s384 + $0x53] sm:$0xff]
        %v1659 = vld [vmem:[%s384 + $0x5b] sm:$0xff]
        %v1660 = vld [vmem:[%s384 + $0x63] sm:$0xff]
        %v1661 = vld [vmem:[%s384 + $0x6b] sm:$0xff]
        %v1662 = vld [vmem:[%s384 + $0x73] sm:$0xff]
        %v1663 = vld [vmem:[%s384 + $0x7b] sm:$0xff]
        %v1664 = vld [vmem:[%s384 + $0x83] sm:$0xff]
        %v1665 = vld [vmem:[%s384 + $0x8b] sm:$0xff]
        %v1666 = vld [vmem:[%s384 + $0x93] sm:$0xff]
        %v1667 = vld [vmem:[%s384 + $0x9b] sm:$0xff]
        %v1668 = vld [vmem:[%s384 + $0xa3] sm:$0xff]
        %v1669 = vld [vmem:[%s384 + $0xab] sm:$0xff]
        %v1670 = vld [vmem:[%s384 + $0xb3] sm:$0xff]
        %v1671 = vld [vmem:[%s384 + $0xbb] sm:$0xff]
        %v1672 = vld [vmem:[%s384 + $0xc3] sm:$0xff]
        %v1673 = vld [vmem:[%s384 + $0xcb] sm:$0xff]
        %v1674 = vld [vmem:[%s384 + $0xd3] sm:$0xff]
        %v1675 = vld [vmem:[%s384 + $0xdb] sm:$0xff]
        %v1676 = vld [vmem:[%s384 + $0xe3] sm:$0xff]
        %v1677 = vld [vmem:[%s384 + $0xeb] sm:$0xff]
        %v1678 = vld [vmem:[%s384 + $0xf3] sm:$0xff]
        %v1679 = vld [vmem:[%s384 + $0xfb] sm:$0xff]
        %v1680 = vld [vmem:[%s384 + $0x103] sm:$0xff]
        %v1681 = vld [vmem:[%s384 + $0x10b] sm:$0xff]
        %v1682 = vld [vmem:[%s384 + $0x113] sm:$0xff]
        %v1683 = vld [vmem:[%s384 + $0x11b] sm:$0xff]
        %v1684 = vld [vmem:[%s384 + $0x123] sm:$0xff]
        %v1685 = vld [vmem:[%s384 + $0x12b] sm:$0x3f]
        %v1686 = vpack.c.bf16 %v1651, %v1650
        %v1687 = vpack.c.bf16 %v1653, %v1652
        %v1688 = vpack.c.bf16 %v1655, %v1654
        %v1689 = vpack.c.bf16 %v1657, %v1656
        %v1690 = vpack.c.bf16 %v1659, %v1658
        %v1691 = vpack.c.bf16 %v1661, %v1660
        %v1692 = vpack.c.bf16 %v1663, %v1662
        %v1693 = vpack.c.bf16 %v1665, %v1664
        %v1694 = vpack.c.bf16 %v1667, %v1666
        %v1695 = vpack.c.bf16 %v1669, %v1668
        %v1696 = vpack.c.bf16 %v1671, %v1670
        %v1697 = vpack.c.bf16 %v1673, %v1672
        %v1698 = vpack.c.bf16 %v1675, %v1674
        %v1699 = vpack.c.bf16 %v1677, %v1676
        %v1700 = vpack.c.bf16 %v1679, %v1678
        %v1701 = vpack.c.bf16 %v1681, %v1680
        %v1702 = vpack.c.bf16 %v1683, %v1682
        %v1703 = vpack.c.bf16 %v1685, %v1684
        %s1704 = scalar_lea.vmem %s4, 8
        %v1705 = vld [vmem:[%s1704] sm:$0x3]
        %v1707 = vsel %vm528, %v1686, 0
        %v1710 = vsel %vm528, %v1687, 0
        %v1713 = vsel %vm528, %v1688, 0
        %v1716 = vsel %vm528, %v1689, 0
        %v1719 = vsel %vm528, %v1690, 0
        %v1722 = vsel %vm528, %v1691, 0
        %v1725 = vsel %vm528, %v1692, 0
        %v1728 = vsel %vm528, %v1693, 0
        %v1731 = vsel %vm528, %v1694, 0
        %v1734 = vsel %vm528, %v1695, 0
        %v1737 = vsel %vm528, %v1696, 0
        %v1740 = vsel %vm528, %v1697, 0
        %v1743 = vsel %vm528, %v1698, 0
        %v1746 = vsel %vm528, %v1699, 0
        %v1749 = vsel %vm528, %v1700, 0
        %v1752 = vsel %vm528, %v1701, 0
        %v1755 = vsel %vm528, %v1702, 0
        %v1758 = vsel %vm528, %v1703, 0
        %v1761 = vsel %vm583, %v1705, 0
        %1763 = vmatprep.subr.bf16.mxu0 0
        %1764 = vmatpush1.bf16.msra.mxu0 0
        %1765 = vmatprep.subr.bf16.mxu0 0
        %1766 = vmatpush1.bf16.msra.mxu0 0
        %1767 = vmatprep.subr.bf16.mxu0 0
        %1768 = vmatpush1.bf16.msra.mxu0 0
        %1769 = vmatprep.subr.bf16.mxu0 0
        %1770 = vmatpush1.bf16.msra.mxu0 0
        %1771 = vmatprep.subr.bf16.mxu0 0
        %1772 = vmatpush1.bf16.msra.mxu0 0
        %1773 = vmatprep.subr.bf16.mxu0 0
        %1774 = vmatpush1.bf16.msra.mxu0 0
        %1775 = vmatprep.subr.bf16.mxu0 0
        %1776 = vmatpush1.bf16.msra.mxu0 0
        %1777 = vmatprep.subr.bf16.mxu0 0
        %1778 = vmatpush1.bf16.msra.mxu0 %v1761
        %1779 = vmatprep.subr.bf16.mxu0 0
        %1780 = vmatpush2.bf16.msra.mxu0 0
        %1781 = vmatprep.subr.bf16.mxu0 0
        %1782 = vmatpush2.bf16.msra.mxu0 0
        %1783 = vmatprep.subr.bf16.mxu0 0
        %1784 = vmatpush2.bf16.msra.mxu0 0
        %1785 = vmatprep.subr.bf16.mxu0 0
        %1786 = vmatpush2.bf16.msra.mxu0 0
        %1787 = vmatprep.subr.bf16.mxu0 0
        %1788 = vmatpush2.bf16.msra.mxu0 0
        %1789 = vmatprep.subr.bf16.mxu0 0
        %1790 = vmatpush2.bf16.msra.mxu0 0
        %1791 = vmatprep.subr.bf16.mxu0 0
        %1792 = vmatpush2.bf16.msra.mxu0 0
        %1793 = vmatprep.subr.bf16.mxu0 0
        %1794 = vmatpush2.bf16.msra.mxu0 0
        %1795 = vmatprep.mubr.bf16.mxu0 0
        %1796 = vmatmul.mubr.bf16.gmra.mxu0 %v1707
        %v1797 = vpop.f32.mrf.mxu0
        %v1798 = vadd.f32 0.0, %v1797
        %v1799 = vpop.f32.mrf.mxu0
        %v1800 = vpop.f32.mrf.mxu0
        %v1801 = vadd.f32 0.0, %v1800
        %v1802 = vpop.f32.mrf.mxu0
        %1803 = vmatprep.mubr.bf16.mxu0 0
        %1804 = vmatmul.mubr.bf16.gmra.mxu0 %v1710
        %v1805 = vpop.f32.mrf.mxu0
        %v1806 = vadd.f32 0.0, %v1805
        %v1807 = vpop.f32.mrf.mxu0
        %v1808 = vpop.f32.mrf.mxu0
        %v1809 = vadd.f32 0.0, %v1808
        %v1810 = vpop.f32.mrf.mxu0
        %1811 = vmatprep.mubr.bf16.mxu0 0
        %1812 = vmatmul.mubr.bf16.gmra.mxu0 %v1713
        %v1813 = vpop.f32.mrf.mxu0
        %v1814 = vadd.f32 0.0, %v1813
        %v1815 = vpop.f32.mrf.mxu0
        %v1816 = vpop.f32.mrf.mxu0
        %v1817 = vadd.f32 0.0, %v1816
        %v1818 = vpop.f32.mrf.mxu0
        %1819 = vmatprep.mubr.bf16.mxu0 0
        %1820 = vmatmul.mubr.bf16.gmra.mxu0 %v1716
        %v1821 = vpop.f32.mrf.mxu0
        %v1822 = vadd.f32 0.0, %v1821
        %v1823 = vpop.f32.mrf.mxu0
        %v1824 = vpop.f32.mrf.mxu0
        %v1825 = vadd.f32 0.0, %v1824
        %v1826 = vpop.f32.mrf.mxu0
        %1827 = vmatprep.mubr.bf16.mxu0 0
        %1828 = vmatmul.mubr.bf16.gmra.mxu0 %v1719
        %v1829 = vpop.f32.mrf.mxu0
        %v1830 = vadd.f32 0.0, %v1829
        %v1831 = vpop.f32.mrf.mxu0
        %v1832 = vpop.f32.mrf.mxu0
        %v1833 = vadd.f32 0.0, %v1832
        %v1834 = vpop.f32.mrf.mxu0
        %1835 = vmatprep.mubr.bf16.mxu0 0
        %1836 = vmatmul.mubr.bf16.gmra.mxu0 %v1722
        %v1837 = vpop.f32.mrf.mxu0
        %v1838 = vadd.f32 0.0, %v1837
        %v1839 = vpop.f32.mrf.mxu0
        %v1840 = vpop.f32.mrf.mxu0
        %v1841 = vadd.f32 0.0, %v1840
        %v1842 = vpop.f32.mrf.mxu0
        %1843 = vmatprep.mubr.bf16.mxu0 0
        %1844 = vmatmul.mubr.bf16.gmra.mxu0 %v1725
        %v1845 = vpop.f32.mrf.mxu0
        %v1846 = vadd.f32 0.0, %v1845
        %v1847 = vpop.f32.mrf.mxu0
        %v1848 = vpop.f32.mrf.mxu0
        %v1849 = vadd.f32 0.0, %v1848
        %v1850 = vpop.f32.mrf.mxu0
        %1851 = vmatprep.mubr.bf16.mxu0 0
        %1852 = vmatmul.mubr.bf16.gmra.mxu0 %v1728
        %v1853 = vpop.f32.mrf.mxu0
        %v1854 = vadd.f32 0.0, %v1853
        %v1855 = vpop.f32.mrf.mxu0
        %v1856 = vpop.f32.mrf.mxu0
        %v1857 = vadd.f32 0.0, %v1856
        %v1858 = vpop.f32.mrf.mxu0
        %1859 = vmatprep.mubr.bf16.mxu0 0
        %1860 = vmatmul.mubr.bf16.gmra.mxu0 %v1731
        %v1861 = vpop.f32.mrf.mxu0
        %v1862 = vadd.f32 0.0, %v1861
        %v1863 = vpop.f32.mrf.mxu0
        %v1864 = vpop.f32.mrf.mxu0
        %v1865 = vadd.f32 0.0, %v1864
        %v1866 = vpop.f32.mrf.mxu0
        %1867 = vmatprep.mubr.bf16.mxu0 0
        %1868 = vmatmul.mubr.bf16.gmra.mxu0 %v1734
        %v1869 = vpop.f32.mrf.mxu0
        %v1870 = vadd.f32 0.0, %v1869
        %v1871 = vpop.f32.mrf.mxu0
        %v1872 = vpop.f32.mrf.mxu0
        %v1873 = vadd.f32 0.0, %v1872
        %v1874 = vpop.f32.mrf.mxu0
        %1875 = vmatprep.mubr.bf16.mxu0 0
        %1876 = vmatmul.mubr.bf16.gmra.mxu0 %v1737
        %v1877 = vpop.f32.mrf.mxu0
        %v1878 = vadd.f32 0.0, %v1877
        %v1879 = vpop.f32.mrf.mxu0
        %v1880 = vpop.f32.mrf.mxu0
        %v1881 = vadd.f32 0.0, %v1880
        %v1882 = vpop.f32.mrf.mxu0
        %1883 = vmatprep.mubr.bf16.mxu0 0
        %1884 = vmatmul.mubr.bf16.gmra.mxu0 %v1740
        %v1885 = vpop.f32.mrf.mxu0
        %v1886 = vadd.f32 0.0, %v1885
        %v1887 = vpop.f32.mrf.mxu0
        %v1888 = vpop.f32.mrf.mxu0
        %v1889 = vadd.f32 0.0, %v1888
        %v1890 = vpop.f32.mrf.mxu0
        %1891 = vmatprep.mubr.bf16.mxu0 0
        %1892 = vmatmul.mubr.bf16.gmra.mxu0 %v1743
        %v1893 = vpop.f32.mrf.mxu0
        %v1894 = vadd.f32 0.0, %v1893
        %v1895 = vpop.f32.mrf.mxu0
        %v1896 = vpop.f32.mrf.mxu0
        %v1897 = vadd.f32 0.0, %v1896
        %v1898 = vpop.f32.mrf.mxu0
        %1899 = vmatprep.mubr.bf16.mxu0 0
        %1900 = vmatmul.mubr.bf16.gmra.mxu0 %v1746
        %v1901 = vpop.f32.mrf.mxu0
        %v1902 = vadd.f32 0.0, %v1901
        %v1903 = vpop.f32.mrf.mxu0
        %v1904 = vpop.f32.mrf.mxu0
        %v1905 = vadd.f32 0.0, %v1904
        %v1906 = vpop.f32.mrf.mxu0
        %1907 = vmatprep.mubr.bf16.mxu0 0
        %1908 = vmatmul.mubr.bf16.gmra.mxu0 %v1749
        %v1909 = vpop.f32.mrf.mxu0
        %v1910 = vadd.f32 0.0, %v1909
        %v1911 = vpop.f32.mrf.mxu0
        %v1912 = vpop.f32.mrf.mxu0
        %v1913 = vadd.f32 0.0, %v1912
        %v1914 = vpop.f32.mrf.mxu0
        %1915 = vmatprep.mubr.bf16.mxu0 0
        %1916 = vmatmul.mubr.bf16.gmra.mxu0 %v1752
        %v1917 = vpop.f32.mrf.mxu0
        %v1918 = vadd.f32 0.0, %v1917
        %v1919 = vpop.f32.mrf.mxu0
        %v1920 = vpop.f32.mrf.mxu0
        %v1921 = vadd.f32 0.0, %v1920
        %v1922 = vpop.f32.mrf.mxu0
        %1923 = vmatprep.mubr.bf16.mxu0 0
        %1924 = vmatmul.mubr.bf16.gmra.mxu0 %v1755
        %v1925 = vpop.f32.mrf.mxu0
        %v1926 = vadd.f32 0.0, %v1925
        %v1927 = vpop.f32.mrf.mxu0
        %v1928 = vpop.f32.mrf.mxu0
        %v1929 = vadd.f32 0.0, %v1928
        %v1930 = vpop.f32.mrf.mxu0
        %1931 = vmatprep.mubr.bf16.mxu0 0
        %1932 = vmatmul.mubr.bf16.gmra.mxu0 %v1758
        %v1933 = vpop.f32.mrf.mxu0
        %v1934 = vadd.f32 0.0, %v1933
        %v1935 = vpop.f32.mrf.mxu0
        %v1936 = vpop.f32.mrf.mxu0
        %v1937 = vadd.f32 0.0, %v1936
        %v1938 = vpop.f32.mrf.mxu0
        %1939 = vdwg.mxu0
        %v1940 = vadd.f32 %v1614, %v1798
        %v1941 = vadd.f32 %v1615, %v1801
        %v1942 = vadd.f32 %v1616, %v1806
        %v1943 = vadd.f32 %v1617, %v1809
        %v1944 = vadd.f32 %v1618, %v1814
        %v1945 = vadd.f32 %v1619, %v1817
        %v1946 = vadd.f32 %v1620, %v1822
        %v1947 = vadd.f32 %v1621, %v1825
        %v1948 = vadd.f32 %v1622, %v1830
        %v1949 = vadd.f32 %v1623, %v1833
        %v1950 = vadd.f32 %v1624, %v1838
        %v1951 = vadd.f32 %v1625, %v1841
        %v1952 = vadd.f32 %v1626, %v1846
        %v1953 = vadd.f32 %v1627, %v1849
        %v1954 = vadd.f32 %v1628, %v1854
        %v1955 = vadd.f32 %v1629, %v1857
        %v1956 = vadd.f32 %v1630, %v1862
        %v1957 = vadd.f32 %v1631, %v1865
        %v1958 = vadd.f32 %v1632, %v1870
        %v1959 = vadd.f32 %v1633, %v1873
        %v1960 = vadd.f32 %v1634, %v1878
        %v1961 = vadd.f32 %v1635, %v1881
        %v1962 = vadd.f32 %v1636, %v1886
        %v1963 = vadd.f32 %v1637, %v1889
        %v1964 = vadd.f32 %v1638, %v1894
        %v1965 = vadd.f32 %v1639, %v1897
        %v1966 = vadd.f32 %v1640, %v1902
        %v1967 = vadd.f32 %v1641, %v1905
        %v1968 = vadd.f32 %v1642, %v1910
        %v1969 = vadd.f32 %v1643, %v1913
        %v1970 = vadd.f32 %v1644, %v1918
        %v1971 = vadd.f32 %v1645, %v1921
        %v1972 = vadd.f32 %v1646, %v1926
        %v1973 = vadd.f32 %v1647, %v1929
        %v1974 = vadd.f32 %v1648, %v1934
        %v1975 = vadd.f32 %v1649, %v1937
        %v1976 = vld [vmem:[%s384 + $0x14] sm:$0xff]
        %v1977 = vld [vmem:[%s384 + $0x1c] sm:$0xff]
        %v1978 = vld [vmem:[%s384 + $0x24] sm:$0xff]
        %v1979 = vld [vmem:[%s384 + $0x2c] sm:$0xff]
        %v1980 = vld [vmem:[%s384 + $0x34] sm:$0xff]
        %v1981 = vld [vmem:[%s384 + $0x3c] sm:$0xff]
        %v1982 = vld [vmem:[%s384 + $0x44] sm:$0xff]
        %v1983 = vld [vmem:[%s384 + $0x4c] sm:$0xff]
        %v1984 = vld [vmem:[%s384 + $0x54] sm:$0xff]
        %v1985 = vld [vmem:[%s384 + $0x5c] sm:$0xff]
        %v1986 = vld [vmem:[%s384 + $0x64] sm:$0xff]
        %v1987 = vld [vmem:[%s384 + $0x6c] sm:$0xff]
        %v1988 = vld [vmem:[%s384 + $0x74] sm:$0xff]
        %v1989 = vld [vmem:[%s384 + $0x7c] sm:$0xff]
        %v1990 = vld [vmem:[%s384 + $0x84] sm:$0xff]
        %v1991 = vld [vmem:[%s384 + $0x8c] sm:$0xff]
        %v1992 = vld [vmem:[%s384 + $0x94] sm:$0xff]
        %v1993 = vld [vmem:[%s384 + $0x9c] sm:$0xff]
        %v1994 = vld [vmem:[%s384 + $0xa4] sm:$0xff]
        %v1995 = vld [vmem:[%s384 + $0xac] sm:$0xff]
        %v1996 = vld [vmem:[%s384 + $0xb4] sm:$0xff]
        %v1997 = vld [vmem:[%s384 + $0xbc] sm:$0xff]
        %v1998 = vld [vmem:[%s384 + $0xc4] sm:$0xff]
        %v1999 = vld [vmem:[%s384 + $0xcc] sm:$0xff]
        %v2000 = vld [vmem:[%s384 + $0xd4] sm:$0xff]
        %v2001 = vld [vmem:[%s384 + $0xdc] sm:$0xff]
        %v2002 = vld [vmem:[%s384 + $0xe4] sm:$0xff]
        %v2003 = vld [vmem:[%s384 + $0xec] sm:$0xff]
        %v2004 = vld [vmem:[%s384 + $0xf4] sm:$0xff]
        %v2005 = vld [vmem:[%s384 + $0xfc] sm:$0xff]
        %v2006 = vld [vmem:[%s384 + $0x104] sm:$0xff]
        %v2007 = vld [vmem:[%s384 + $0x10c] sm:$0xff]
        %v2008 = vld [vmem:[%s384 + $0x114] sm:$0xff]
        %v2009 = vld [vmem:[%s384 + $0x11c] sm:$0xff]
        %v2010 = vld [vmem:[%s384 + $0x124] sm:$0xff]
        %v2011 = vld [vmem:[%s384 + $0x12c] sm:$0x3f]
        %v2012 = vpack.c.bf16 %v1977, %v1976
        %v2013 = vpack.c.bf16 %v1979, %v1978
        %v2014 = vpack.c.bf16 %v1981, %v1980
        %v2015 = vpack.c.bf16 %v1983, %v1982
        %v2016 = vpack.c.bf16 %v1985, %v1984
        %v2017 = vpack.c.bf16 %v1987, %v1986
        %v2018 = vpack.c.bf16 %v1989, %v1988
        %v2019 = vpack.c.bf16 %v1991, %v1990
        %v2020 = vpack.c.bf16 %v1993, %v1992
        %v2021 = vpack.c.bf16 %v1995, %v1994
        %v2022 = vpack.c.bf16 %v1997, %v1996
        %v2023 = vpack.c.bf16 %v1999, %v1998
        %v2024 = vpack.c.bf16 %v2001, %v2000
        %v2025 = vpack.c.bf16 %v2003, %v2002
        %v2026 = vpack.c.bf16 %v2005, %v2004
        %v2027 = vpack.c.bf16 %v2007, %v2006
        %v2028 = vpack.c.bf16 %v2009, %v2008
        %v2029 = vpack.c.bf16 %v2011, %v2010
        %s2030 = scalar_lea.vmem %s4, 10
        %v2031 = vld [vmem:[%s2030] sm:$0x3]
        %v2033 = vsel %vm528, %v2012, 0
        %v2036 = vsel %vm528, %v2013, 0
        %v2039 = vsel %vm528, %v2014, 0
        %v2042 = vsel %vm528, %v2015, 0
        %v2045 = vsel %vm528, %v2016, 0
        %v2048 = vsel %vm528, %v2017, 0
        %v2051 = vsel %vm528, %v2018, 0
        %v2054 = vsel %vm528, %v2019, 0
        %v2057 = vsel %vm528, %v2020, 0
        %v2060 = vsel %vm528, %v2021, 0
        %v2063 = vsel %vm528, %v2022, 0
        %v2066 = vsel %vm528, %v2023, 0
        %v2069 = vsel %vm528, %v2024, 0
        %v2072 = vsel %vm528, %v2025, 0
        %v2075 = vsel %vm528, %v2026, 0
        %v2078 = vsel %vm528, %v2027, 0
        %v2081 = vsel %vm528, %v2028, 0
        %v2084 = vsel %vm528, %v2029, 0
        %v2087 = vsel %vm583, %v2031, 0
        %2089 = vmatprep.subr.bf16.mxu0 0
        %2090 = vmatpush1.bf16.msra.mxu0 0
        %2091 = vmatprep.subr.bf16.mxu0 0
        %2092 = vmatpush1.bf16.msra.mxu0 0
        %2093 = vmatprep.subr.bf16.mxu0 0
        %2094 = vmatpush1.bf16.msra.mxu0 0
        %2095 = vmatprep.subr.bf16.mxu0 0
        %2096 = vmatpush1.bf16.msra.mxu0 0
        %2097 = vmatprep.subr.bf16.mxu0 0
        %2098 = vmatpush1.bf16.msra.mxu0 0
        %2099 = vmatprep.subr.bf16.mxu0 0
        %2100 = vmatpush1.bf16.msra.mxu0 0
        %2101 = vmatprep.subr.bf16.mxu0 0
        %2102 = vmatpush1.bf16.msra.mxu0 0
        %2103 = vmatprep.subr.bf16.mxu0 0
        %2104 = vmatpush1.bf16.msra.mxu0 %v2087
        %2105 = vmatprep.subr.bf16.mxu0 0
        %2106 = vmatpush2.bf16.msra.mxu0 0
        %2107 = vmatprep.subr.bf16.mxu0 0
        %2108 = vmatpush2.bf16.msra.mxu0 0
        %2109 = vmatprep.subr.bf16.mxu0 0
        %2110 = vmatpush2.bf16.msra.mxu0 0
        %2111 = vmatprep.subr.bf16.mxu0 0
        %2112 = vmatpush2.bf16.msra.mxu0 0
        %2113 = vmatprep.subr.bf16.mxu0 0
        %2114 = vmatpush2.bf16.msra.mxu0 0
        %2115 = vmatprep.subr.bf16.mxu0 0
        %2116 = vmatpush2.bf16.msra.mxu0 0
        %2117 = vmatprep.subr.bf16.mxu0 0
        %2118 = vmatpush2.bf16.msra.mxu0 0
        %2119 = vmatprep.subr.bf16.mxu0 0
        %2120 = vmatpush2.bf16.msra.mxu0 0
        %2121 = vmatprep.mubr.bf16.mxu0 0
        %2122 = vmatmul.mubr.bf16.gmra.mxu0 %v2033
        %v2123 = vpop.f32.mrf.mxu0
        %v2124 = vadd.f32 0.0, %v2123
        %v2125 = vpop.f32.mrf.mxu0
        %v2126 = vpop.f32.mrf.mxu0
        %v2127 = vadd.f32 0.0, %v2126
        %v2128 = vpop.f32.mrf.mxu0
        %2129 = vmatprep.mubr.bf16.mxu0 0
        %2130 = vmatmul.mubr.bf16.gmra.mxu0 %v2036
        %v2131 = vpop.f32.mrf.mxu0
        %v2132 = vadd.f32 0.0, %v2131
        %v2133 = vpop.f32.mrf.mxu0
        %v2134 = vpop.f32.mrf.mxu0
        %v2135 = vadd.f32 0.0, %v2134
        %v2136 = vpop.f32.mrf.mxu0
        %2137 = vmatprep.mubr.bf16.mxu0 0
        %2138 = vmatmul.mubr.bf16.gmra.mxu0 %v2039
        %v2139 = vpop.f32.mrf.mxu0
        %v2140 = vadd.f32 0.0, %v2139
        %v2141 = vpop.f32.mrf.mxu0
        %v2142 = vpop.f32.mrf.mxu0
        %v2143 = vadd.f32 0.0, %v2142
        %v2144 = vpop.f32.mrf.mxu0
        %2145 = vmatprep.mubr.bf16.mxu0 0
        %2146 = vmatmul.mubr.bf16.gmra.mxu0 %v2042
        %v2147 = vpop.f32.mrf.mxu0
        %v2148 = vadd.f32 0.0, %v2147
        %v2149 = vpop.f32.mrf.mxu0
        %v2150 = vpop.f32.mrf.mxu0
        %v2151 = vadd.f32 0.0, %v2150
        %v2152 = vpop.f32.mrf.mxu0
        %2153 = vmatprep.mubr.bf16.mxu0 0
        %2154 = vmatmul.mubr.bf16.gmra.mxu0 %v2045
        %v2155 = vpop.f32.mrf.mxu0
        %v2156 = vadd.f32 0.0, %v2155
        %v2157 = vpop.f32.mrf.mxu0
        %v2158 = vpop.f32.mrf.mxu0
        %v2159 = vadd.f32 0.0, %v2158
        %v2160 = vpop.f32.mrf.mxu0
        %2161 = vmatprep.mubr.bf16.mxu0 0
        %2162 = vmatmul.mubr.bf16.gmra.mxu0 %v2048
        %v2163 = vpop.f32.mrf.mxu0
        %v2164 = vadd.f32 0.0, %v2163
        %v2165 = vpop.f32.mrf.mxu0
        %v2166 = vpop.f32.mrf.mxu0
        %v2167 = vadd.f32 0.0, %v2166
        %v2168 = vpop.f32.mrf.mxu0
        %2169 = vmatprep.mubr.bf16.mxu0 0
        %2170 = vmatmul.mubr.bf16.gmra.mxu0 %v2051
        %v2171 = vpop.f32.mrf.mxu0
        %v2172 = vadd.f32 0.0, %v2171
        %v2173 = vpop.f32.mrf.mxu0
        %v2174 = vpop.f32.mrf.mxu0
        %v2175 = vadd.f32 0.0, %v2174
        %v2176 = vpop.f32.mrf.mxu0
        %2177 = vmatprep.mubr.bf16.mxu0 0
        %2178 = vmatmul.mubr.bf16.gmra.mxu0 %v2054
        %v2179 = vpop.f32.mrf.mxu0
        %v2180 = vadd.f32 0.0, %v2179
        %v2181 = vpop.f32.mrf.mxu0
        %v2182 = vpop.f32.mrf.mxu0
        %v2183 = vadd.f32 0.0, %v2182
        %v2184 = vpop.f32.mrf.mxu0
        %2185 = vmatprep.mubr.bf16.mxu0 0
        %2186 = vmatmul.mubr.bf16.gmra.mxu0 %v2057
        %v2187 = vpop.f32.mrf.mxu0
        %v2188 = vadd.f32 0.0, %v2187
        %v2189 = vpop.f32.mrf.mxu0
        %v2190 = vpop.f32.mrf.mxu0
        %v2191 = vadd.f32 0.0, %v2190
        %v2192 = vpop.f32.mrf.mxu0
        %2193 = vmatprep.mubr.bf16.mxu0 0
        %2194 = vmatmul.mubr.bf16.gmra.mxu0 %v2060
        %v2195 = vpop.f32.mrf.mxu0
        %v2196 = vadd.f32 0.0, %v2195
        %v2197 = vpop.f32.mrf.mxu0
        %v2198 = vpop.f32.mrf.mxu0
        %v2199 = vadd.f32 0.0, %v2198
        %v2200 = vpop.f32.mrf.mxu0
        %2201 = vmatprep.mubr.bf16.mxu0 0
        %2202 = vmatmul.mubr.bf16.gmra.mxu0 %v2063
        %v2203 = vpop.f32.mrf.mxu0
        %v2204 = vadd.f32 0.0, %v2203
        %v2205 = vpop.f32.mrf.mxu0
        %v2206 = vpop.f32.mrf.mxu0
        %v2207 = vadd.f32 0.0, %v2206
        %v2208 = vpop.f32.mrf.mxu0
        %2209 = vmatprep.mubr.bf16.mxu0 0
        %2210 = vmatmul.mubr.bf16.gmra.mxu0 %v2066
        %v2211 = vpop.f32.mrf.mxu0
        %v2212 = vadd.f32 0.0, %v2211
        %v2213 = vpop.f32.mrf.mxu0
        %v2214 = vpop.f32.mrf.mxu0
        %v2215 = vadd.f32 0.0, %v2214
        %v2216 = vpop.f32.mrf.mxu0
        %2217 = vmatprep.mubr.bf16.mxu0 0
        %2218 = vmatmul.mubr.bf16.gmra.mxu0 %v2069
        %v2219 = vpop.f32.mrf.mxu0
        %v2220 = vadd.f32 0.0, %v2219
        %v2221 = vpop.f32.mrf.mxu0
        %v2222 = vpop.f32.mrf.mxu0
        %v2223 = vadd.f32 0.0, %v2222
        %v2224 = vpop.f32.mrf.mxu0
        %2225 = vmatprep.mubr.bf16.mxu0 0
        %2226 = vmatmul.mubr.bf16.gmra.mxu0 %v2072
        %v2227 = vpop.f32.mrf.mxu0
        %v2228 = vadd.f32 0.0, %v2227
        %v2229 = vpop.f32.mrf.mxu0
        %v2230 = vpop.f32.mrf.mxu0
        %v2231 = vadd.f32 0.0, %v2230
        %v2232 = vpop.f32.mrf.mxu0
        %2233 = vmatprep.mubr.bf16.mxu0 0
        %2234 = vmatmul.mubr.bf16.gmra.mxu0 %v2075
        %v2235 = vpop.f32.mrf.mxu0
        %v2236 = vadd.f32 0.0, %v2235
        %v2237 = vpop.f32.mrf.mxu0
        %v2238 = vpop.f32.mrf.mxu0
        %v2239 = vadd.f32 0.0, %v2238
        %v2240 = vpop.f32.mrf.mxu0
        %2241 = vmatprep.mubr.bf16.mxu0 0
        %2242 = vmatmul.mubr.bf16.gmra.mxu0 %v2078
        %v2243 = vpop.f32.mrf.mxu0
        %v2244 = vadd.f32 0.0, %v2243
        %v2245 = vpop.f32.mrf.mxu0
        %v2246 = vpop.f32.mrf.mxu0
        %v2247 = vadd.f32 0.0, %v2246
        %v2248 = vpop.f32.mrf.mxu0
        %2249 = vmatprep.mubr.bf16.mxu0 0
        %2250 = vmatmul.mubr.bf16.gmra.mxu0 %v2081
        %v2251 = vpop.f32.mrf.mxu0
        %v2252 = vadd.f32 0.0, %v2251
        %v2253 = vpop.f32.mrf.mxu0
        %v2254 = vpop.f32.mrf.mxu0
        %v2255 = vadd.f32 0.0, %v2254
        %v2256 = vpop.f32.mrf.mxu0
        %2257 = vmatprep.mubr.bf16.mxu0 0
        %2258 = vmatmul.mubr.bf16.gmra.mxu0 %v2084
        %v2259 = vpop.f32.mrf.mxu0
        %v2260 = vadd.f32 0.0, %v2259
        %v2261 = vpop.f32.mrf.mxu0
        %v2262 = vpop.f32.mrf.mxu0
        %v2263 = vadd.f32 0.0, %v2262
        %v2264 = vpop.f32.mrf.mxu0
        %2265 = vdwg.mxu0
        %v2266 = vadd.f32 %v1940, %v2124
        %v2267 = vadd.f32 %v1941, %v2127
        %v2268 = vadd.f32 %v1942, %v2132
        %v2269 = vadd.f32 %v1943, %v2135
        %v2270 = vadd.f32 %v1944, %v2140
        %v2271 = vadd.f32 %v1945, %v2143
        %v2272 = vadd.f32 %v1946, %v2148
        %v2273 = vadd.f32 %v1947, %v2151
        %v2274 = vadd.f32 %v1948, %v2156
        %v2275 = vadd.f32 %v1949, %v2159
        %v2276 = vadd.f32 %v1950, %v2164
        %v2277 = vadd.f32 %v1951, %v2167
        %v2278 = vadd.f32 %v1952, %v2172
        %v2279 = vadd.f32 %v1953, %v2175
        %v2280 = vadd.f32 %v1954, %v2180
        %v2281 = vadd.f32 %v1955, %v2183
        %v2282 = vadd.f32 %v1956, %v2188
        %v2283 = vadd.f32 %v1957, %v2191
        %v2284 = vadd.f32 %v1958, %v2196
        %v2285 = vadd.f32 %v1959, %v2199
        %v2286 = vadd.f32 %v1960, %v2204
        %v2287 = vadd.f32 %v1961, %v2207
        %v2288 = vadd.f32 %v1962, %v2212
        %v2289 = vadd.f32 %v1963, %v2215
        %v2290 = vadd.f32 %v1964, %v2220
        %v2291 = vadd.f32 %v1965, %v2223
        %v2292 = vadd.f32 %v1966, %v2228
        %v2293 = vadd.f32 %v1967, %v2231
        %v2294 = vadd.f32 %v1968, %v2236
        %v2295 = vadd.f32 %v1969, %v2239
        %v2296 = vadd.f32 %v1970, %v2244
        %v2297 = vadd.f32 %v1971, %v2247
        %v2298 = vadd.f32 %v1972, %v2252
        %v2299 = vadd.f32 %v1973, %v2255
        %v2300 = vadd.f32 %v1974, %v2260
        %v2301 = vadd.f32 %v1975, %v2263
        %v2302 = vld [vmem:[%s384 + $0x24] sm:$0xff]
        %v2303 = vld [vmem:[%s384 + $0x2c] sm:$0xff]
        %v2304 = vld [vmem:[%s384 + $0x34] sm:$0xff]
        %v2305 = vld [vmem:[%s384 + $0x3c] sm:$0xff]
        %v2306 = vld [vmem:[%s384 + $0x44] sm:$0xff]
        %v2307 = vld [vmem:[%s384 + $0x4c] sm:$0xff]
        %v2308 = vld [vmem:[%s384 + $0x54] sm:$0xff]
        %v2309 = vld [vmem:[%s384 + $0x5c] sm:$0xff]
        %v2310 = vld [vmem:[%s384 + $0x64] sm:$0xff]
        %v2311 = vld [vmem:[%s384 + $0x6c] sm:$0xff]
        %v2312 = vld [vmem:[%s384 + $0x74] sm:$0xff]
        %v2313 = vld [vmem:[%s384 + $0x7c] sm:$0xff]
        %v2314 = vld [vmem:[%s384 + $0x84] sm:$0xff]
        %v2315 = vld [vmem:[%s384 + $0x8c] sm:$0xff]
        %v2316 = vld [vmem:[%s384 + $0x94] sm:$0xff]
        %v2317 = vld [vmem:[%s384 + $0x9c] sm:$0xff]
        %v2318 = vld [vmem:[%s384 + $0xa4] sm:$0xff]
        %v2319 = vld [vmem:[%s384 + $0xac] sm:$0xff]
        %v2320 = vld [vmem:[%s384 + $0xb4] sm:$0xff]
        %v2321 = vld [vmem:[%s384 + $0xbc] sm:$0xff]
        %v2322 = vld [vmem:[%s384 + $0xc4] sm:$0xff]
        %v2323 = vld [vmem:[%s384 + $0xcc] sm:$0xff]
        %v2324 = vld [vmem:[%s384 + $0xd4] sm:$0xff]
        %v2325 = vld [vmem:[%s384 + $0xdc] sm:$0xff]
        %v2326 = vld [vmem:[%s384 + $0xe4] sm:$0xff]
        %v2327 = vld [vmem:[%s384 + $0xec] sm:$0xff]
        %v2328 = vld [vmem:[%s384 + $0xf4] sm:$0xff]
        %v2329 = vld [vmem:[%s384 + $0xfc] sm:$0xff]
        %v2330 = vld [vmem:[%s384 + $0x104] sm:$0xff]
        %v2331 = vld [vmem:[%s384 + $0x10c] sm:$0xff]
        %v2332 = vld [vmem:[%s384 + $0x114] sm:$0xff]
        %v2333 = vld [vmem:[%s384 + $0x11c] sm:$0xff]
        %v2334 = vld [vmem:[%s384 + $0x124] sm:$0xff]
        %v2335 = vld [vmem:[%s384 + $0x12c] sm:$0xff]
        %v2336 = vld [vmem:[%s384 + $0x134] sm:$0xff]
        %v2337 = vld [vmem:[%s384 + $0x13c] sm:$0x3f]
        %v2338 = vpack.c.bf16 %v2303, %v2302
        %v2339 = vpack.c.bf16 %v2305, %v2304
        %v2340 = vpack.c.bf16 %v2307, %v2306
        %v2341 = vpack.c.bf16 %v2309, %v2308
        %v2342 = vpack.c.bf16 %v2311, %v2310
        %v2343 = vpack.c.bf16 %v2313, %v2312
        %v2344 = vpack.c.bf16 %v2315, %v2314
        %v2345 = vpack.c.bf16 %v2317, %v2316
        %v2346 = vpack.c.bf16 %v2319, %v2318
        %v2347 = vpack.c.bf16 %v2321, %v2320
        %v2348 = vpack.c.bf16 %v2323, %v2322
        %v2349 = vpack.c.bf16 %v2325, %v2324
        %v2350 = vpack.c.bf16 %v2327, %v2326
        %v2351 = vpack.c.bf16 %v2329, %v2328
        %v2352 = vpack.c.bf16 %v2331, %v2330
        %v2353 = vpack.c.bf16 %v2333, %v2332
        %v2354 = vpack.c.bf16 %v2335, %v2334
        %v2355 = vpack.c.bf16 %v2337, %v2336
        %s2356 = scalar_lea.vmem %s4, 12
        %v2357 = vld [vmem:[%s2356] sm:$0x3]
        %v2359 = vsel %vm528, %v2338, 0
        %v2362 = vsel %vm528, %v2339, 0
        %v2365 = vsel %vm528, %v2340, 0
        %v2368 = vsel %vm528, %v2341, 0
        %v2371 = vsel %vm528, %v2342, 0
        %v2374 = vsel %vm528, %v2343, 0
        %v2377 = vsel %vm528, %v2344, 0
        %v2380 = vsel %vm528, %v2345, 0
        %v2383 = vsel %vm528, %v2346, 0
        %v2386 = vsel %vm528, %v2347, 0
        %v2389 = vsel %vm528, %v2348, 0
        %v2392 = vsel %vm528, %v2349, 0
        %v2395 = vsel %vm528, %v2350, 0
        %v2398 = vsel %vm528, %v2351, 0
        %v2401 = vsel %vm528, %v2352, 0
        %v2404 = vsel %vm528, %v2353, 0
        %v2407 = vsel %vm528, %v2354, 0
        %v2410 = vsel %vm528, %v2355, 0
        %v2413 = vsel %vm583, %v2357, 0
        %2415 = vmatprep.subr.bf16.mxu0 0
        %2416 = vmatpush1.bf16.msra.mxu0 0
        %2417 = vmatprep.subr.bf16.mxu0 0
        %2418 = vmatpush1.bf16.msra.mxu0 0
        %2419 = vmatprep.subr.bf16.mxu0 0
        %2420 = vmatpush1.bf16.msra.mxu0 0
        %2421 = vmatprep.subr.bf16.mxu0 0
        %2422 = vmatpush1.bf16.msra.mxu0 0
        %2423 = vmatprep.subr.bf16.mxu0 0
        %2424 = vmatpush1.bf16.msra.mxu0 0
        %2425 = vmatprep.subr.bf16.mxu0 0
        %2426 = vmatpush1.bf16.msra.mxu0 0
        %2427 = vmatprep.subr.bf16.mxu0 0
        %2428 = vmatpush1.bf16.msra.mxu0 0
        %2429 = vmatprep.subr.bf16.mxu0 0
        %2430 = vmatpush1.bf16.msra.mxu0 %v2413
        %2431 = vmatprep.subr.bf16.mxu0 0
        %2432 = vmatpush2.bf16.msra.mxu0 0
        %2433 = vmatprep.subr.bf16.mxu0 0
        %2434 = vmatpush2.bf16.msra.mxu0 0
        %2435 = vmatprep.subr.bf16.mxu0 0
        %2436 = vmatpush2.bf16.msra.mxu0 0
        %2437 = vmatprep.subr.bf16.mxu0 0
        %2438 = vmatpush2.bf16.msra.mxu0 0
        %2439 = vmatprep.subr.bf16.mxu0 0
        %2440 = vmatpush2.bf16.msra.mxu0 0
        %2441 = vmatprep.subr.bf16.mxu0 0
        %2442 = vmatpush2.bf16.msra.mxu0 0
        %2443 = vmatprep.subr.bf16.mxu0 0
        %2444 = vmatpush2.bf16.msra.mxu0 0
        %2445 = vmatprep.subr.bf16.mxu0 0
        %2446 = vmatpush2.bf16.msra.mxu0 0
        %2447 = vmatprep.mubr.bf16.mxu0 0
        %2448 = vmatmul.mubr.bf16.gmra.mxu0 %v2359
        %v2449 = vpop.f32.mrf.mxu0
        %v2450 = vadd.f32 0.0, %v2449
        %v2451 = vpop.f32.mrf.mxu0
        %v2452 = vpop.f32.mrf.mxu0
        %v2453 = vadd.f32 0.0, %v2452
        %v2454 = vpop.f32.mrf.mxu0
        %2455 = vmatprep.mubr.bf16.mxu0 0
        %2456 = vmatmul.mubr.bf16.gmra.mxu0 %v2362
        %v2457 = vpop.f32.mrf.mxu0
        %v2458 = vadd.f32 0.0, %v2457
        %v2459 = vpop.f32.mrf.mxu0
        %v2460 = vpop.f32.mrf.mxu0
        %v2461 = vadd.f32 0.0, %v2460
        %v2462 = vpop.f32.mrf.mxu0
        %2463 = vmatprep.mubr.bf16.mxu0 0
        %2464 = vmatmul.mubr.bf16.gmra.mxu0 %v2365
        %v2465 = vpop.f32.mrf.mxu0
        %v2466 = vadd.f32 0.0, %v2465
        %v2467 = vpop.f32.mrf.mxu0
        %v2468 = vpop.f32.mrf.mxu0
        %v2469 = vadd.f32 0.0, %v2468
        %v2470 = vpop.f32.mrf.mxu0
        %2471 = vmatprep.mubr.bf16.mxu0 0
        %2472 = vmatmul.mubr.bf16.gmra.mxu0 %v2368
        %v2473 = vpop.f32.mrf.mxu0
        %v2474 = vadd.f32 0.0, %v2473
        %v2475 = vpop.f32.mrf.mxu0
        %v2476 = vpop.f32.mrf.mxu0
        %v2477 = vadd.f32 0.0, %v2476
        %v2478 = vpop.f32.mrf.mxu0
        %2479 = vmatprep.mubr.bf16.mxu0 0
        %2480 = vmatmul.mubr.bf16.gmra.mxu0 %v2371
        %v2481 = vpop.f32.mrf.mxu0
        %v2482 = vadd.f32 0.0, %v2481
        %v2483 = vpop.f32.mrf.mxu0
        %v2484 = vpop.f32.mrf.mxu0
        %v2485 = vadd.f32 0.0, %v2484
        %v2486 = vpop.f32.mrf.mxu0
        %2487 = vmatprep.mubr.bf16.mxu0 0
        %2488 = vmatmul.mubr.bf16.gmra.mxu0 %v2374
        %v2489 = vpop.f32.mrf.mxu0
        %v2490 = vadd.f32 0.0, %v2489
        %v2491 = vpop.f32.mrf.mxu0
        %v2492 = vpop.f32.mrf.mxu0
        %v2493 = vadd.f32 0.0, %v2492
        %v2494 = vpop.f32.mrf.mxu0
        %2495 = vmatprep.mubr.bf16.mxu0 0
        %2496 = vmatmul.mubr.bf16.gmra.mxu0 %v2377
        %v2497 = vpop.f32.mrf.mxu0
        %v2498 = vadd.f32 0.0, %v2497
        %v2499 = vpop.f32.mrf.mxu0
        %v2500 = vpop.f32.mrf.mxu0
        %v2501 = vadd.f32 0.0, %v2500
        %v2502 = vpop.f32.mrf.mxu0
        %2503 = vmatprep.mubr.bf16.mxu0 0
        %2504 = vmatmul.mubr.bf16.gmra.mxu0 %v2380
        %v2505 = vpop.f32.mrf.mxu0
        %v2506 = vadd.f32 0.0, %v2505
        %v2507 = vpop.f32.mrf.mxu0
        %v2508 = vpop.f32.mrf.mxu0
        %v2509 = vadd.f32 0.0, %v2508
        %v2510 = vpop.f32.mrf.mxu0
        %2511 = vmatprep.mubr.bf16.mxu0 0
        %2512 = vmatmul.mubr.bf16.gmra.mxu0 %v2383
        %v2513 = vpop.f32.mrf.mxu0
        %v2514 = vadd.f32 0.0, %v2513
        %v2515 = vpop.f32.mrf.mxu0
        %v2516 = vpop.f32.mrf.mxu0
        %v2517 = vadd.f32 0.0, %v2516
        %v2518 = vpop.f32.mrf.mxu0
        %2519 = vmatprep.mubr.bf16.mxu0 0
        %2520 = vmatmul.mubr.bf16.gmra.mxu0 %v2386
        %v2521 = vpop.f32.mrf.mxu0
        %v2522 = vadd.f32 0.0, %v2521
        %v2523 = vpop.f32.mrf.mxu0
        %v2524 = vpop.f32.mrf.mxu0
        %v2525 = vadd.f32 0.0, %v2524
        %v2526 = vpop.f32.mrf.mxu0
        %2527 = vmatprep.mubr.bf16.mxu0 0
        %2528 = vmatmul.mubr.bf16.gmra.mxu0 %v2389
        %v2529 = vpop.f32.mrf.mxu0
        %v2530 = vadd.f32 0.0, %v2529
        %v2531 = vpop.f32.mrf.mxu0
        %v2532 = vpop.f32.mrf.mxu0
        %v2533 = vadd.f32 0.0, %v2532
        %v2534 = vpop.f32.mrf.mxu0
        %2535 = vmatprep.mubr.bf16.mxu0 0
        %2536 = vmatmul.mubr.bf16.gmra.mxu0 %v2392
        %v2537 = vpop.f32.mrf.mxu0
        %v2538 = vadd.f32 0.0, %v2537
        %v2539 = vpop.f32.mrf.mxu0
        %v2540 = vpop.f32.mrf.mxu0
        %v2541 = vadd.f32 0.0, %v2540
        %v2542 = vpop.f32.mrf.mxu0
        %2543 = vmatprep.mubr.bf16.mxu0 0
        %2544 = vmatmul.mubr.bf16.gmra.mxu0 %v2395
        %v2545 = vpop.f32.mrf.mxu0
        %v2546 = vadd.f32 0.0, %v2545
        %v2547 = vpop.f32.mrf.mxu0
        %v2548 = vpop.f32.mrf.mxu0
        %v2549 = vadd.f32 0.0, %v2548
        %v2550 = vpop.f32.mrf.mxu0
        %2551 = vmatprep.mubr.bf16.mxu0 0
        %2552 = vmatmul.mubr.bf16.gmra.mxu0 %v2398
        %v2553 = vpop.f32.mrf.mxu0
        %v2554 = vadd.f32 0.0, %v2553
        %v2555 = vpop.f32.mrf.mxu0
        %v2556 = vpop.f32.mrf.mxu0
        %v2557 = vadd.f32 0.0, %v2556
        %v2558 = vpop.f32.mrf.mxu0
        %2559 = vmatprep.mubr.bf16.mxu0 0
        %2560 = vmatmul.mubr.bf16.gmra.mxu0 %v2401
        %v2561 = vpop.f32.mrf.mxu0
        %v2562 = vadd.f32 0.0, %v2561
        %v2563 = vpop.f32.mrf.mxu0
        %v2564 = vpop.f32.mrf.mxu0
        %v2565 = vadd.f32 0.0, %v2564
        %v2566 = vpop.f32.mrf.mxu0
        %2567 = vmatprep.mubr.bf16.mxu0 0
        %2568 = vmatmul.mubr.bf16.gmra.mxu0 %v2404
        %v2569 = vpop.f32.mrf.mxu0
        %v2570 = vadd.f32 0.0, %v2569
        %v2571 = vpop.f32.mrf.mxu0
        %v2572 = vpop.f32.mrf.mxu0
        %v2573 = vadd.f32 0.0, %v2572
        %v2574 = vpop.f32.mrf.mxu0
        %2575 = vmatprep.mubr.bf16.mxu0 0
        %2576 = vmatmul.mubr.bf16.gmra.mxu0 %v2407
        %v2577 = vpop.f32.mrf.mxu0
        %v2578 = vadd.f32 0.0, %v2577
        %v2579 = vpop.f32.mrf.mxu0
        %v2580 = vpop.f32.mrf.mxu0
        %v2581 = vadd.f32 0.0, %v2580
        %v2582 = vpop.f32.mrf.mxu0
        %2583 = vmatprep.mubr.bf16.mxu0 0
        %2584 = vmatmul.mubr.bf16.gmra.mxu0 %v2410
        %v2585 = vpop.f32.mrf.mxu0
        %v2586 = vadd.f32 0.0, %v2585
        %v2587 = vpop.f32.mrf.mxu0
        %v2588 = vpop.f32.mrf.mxu0
        %v2589 = vadd.f32 0.0, %v2588
        %v2590 = vpop.f32.mrf.mxu0
        %2591 = vdwg.mxu0
        %v2592 = vadd.f32 %v2266, %v2450
        %v2593 = vadd.f32 %v2267, %v2453
        %v2594 = vadd.f32 %v2268, %v2458
        %v2595 = vadd.f32 %v2269, %v2461
        %v2596 = vadd.f32 %v2270, %v2466
        %v2597 = vadd.f32 %v2271, %v2469
        %v2598 = vadd.f32 %v2272, %v2474
        %v2599 = vadd.f32 %v2273, %v2477
        %v2600 = vadd.f32 %v2274, %v2482
        %v2601 = vadd.f32 %v2275, %v2485
        %v2602 = vadd.f32 %v2276, %v2490
        %v2603 = vadd.f32 %v2277, %v2493
        %v2604 = vadd.f32 %v2278, %v2498
        %v2605 = vadd.f32 %v2279, %v2501
        %v2606 = vadd.f32 %v2280, %v2506
        %v2607 = vadd.f32 %v2281, %v2509
        %v2608 = vadd.f32 %v2282, %v2514
        %v2609 = vadd.f32 %v2283, %v2517
        %v2610 = vadd.f32 %v2284, %v2522
        %v2611 = vadd.f32 %v2285, %v2525
        %v2612 = vadd.f32 %v2286, %v2530
        %v2613 = vadd.f32 %v2287, %v2533
        %v2614 = vadd.f32 %v2288, %v2538
        %v2615 = vadd.f32 %v2289, %v2541
        %v2616 = vadd.f32 %v2290, %v2546
        %v2617 = vadd.f32 %v2291, %v2549
        %v2618 = vadd.f32 %v2292, %v2554
        %v2619 = vadd.f32 %v2293, %v2557
        %v2620 = vadd.f32 %v2294, %v2562
        %v2621 = vadd.f32 %v2295, %v2565
        %v2622 = vadd.f32 %v2296, %v2570
        %v2623 = vadd.f32 %v2297, %v2573
        %v2624 = vadd.f32 %v2298, %v2578
        %v2625 = vadd.f32 %v2299, %v2581
        %v2626 = vadd.f32 %v2300, %v2586
        %v2627 = vadd.f32 %v2301, %v2589
        %v2628 = vld [vmem:[%s384 + $0x25] sm:$0xff]
        %v2629 = vld [vmem:[%s384 + $0x2d] sm:$0xff]
        %v2630 = vld [vmem:[%s384 + $0x35] sm:$0xff]
        %v2631 = vld [vmem:[%s384 + $0x3d] sm:$0xff]
        %v2632 = vld [vmem:[%s384 + $0x45] sm:$0xff]
        %v2633 = vld [vmem:[%s384 + $0x4d] sm:$0xff]
        %v2634 = vld [vmem:[%s384 + $0x55] sm:$0xff]
        %v2635 = vld [vmem:[%s384 + $0x5d] sm:$0xff]
        %v2636 = vld [vmem:[%s384 + $0x65] sm:$0xff]
        %v2637 = vld [vmem:[%s384 + $0x6d] sm:$0xff]
        %v2638 = vld [vmem:[%s384 + $0x75] sm:$0xff]
        %v2639 = vld [vmem:[%s384 + $0x7d] sm:$0xff]
        %v2640 = vld [vmem:[%s384 + $0x85] sm:$0xff]
        %v2641 = vld [vmem:[%s384 + $0x8d] sm:$0xff]
        %v2642 = vld [vmem:[%s384 + $0x95] sm:$0xff]
        %v2643 = vld [vmem:[%s384 + $0x9d] sm:$0xff]
        %v2644 = vld [vmem:[%s384 + $0xa5] sm:$0xff]
        %v2645 = vld [vmem:[%s384 + $0xad] sm:$0xff]
        %v2646 = vld [vmem:[%s384 + $0xb5] sm:$0xff]
        %v2647 = vld [vmem:[%s384 + $0xbd] sm:$0xff]
        %v2648 = vld [vmem:[%s384 + $0xc5] sm:$0xff]
        %v2649 = vld [vmem:[%s384 + $0xcd] sm:$0xff]
        %v2650 = vld [vmem:[%s384 + $0xd5] sm:$0xff]
        %v2651 = vld [vmem:[%s384 + $0xdd] sm:$0xff]
        %v2652 = vld [vmem:[%s384 + $0xe5] sm:$0xff]
        %v2653 = vld [vmem:[%s384 + $0xed] sm:$0xff]
        %v2654 = vld [vmem:[%s384 + $0xf5] sm:$0xff]
        %v2655 = vld [vmem:[%s384 + $0xfd] sm:$0xff]
        %v2656 = vld [vmem:[%s384 + $0x105] sm:$0xff]
        %v2657 = vld [vmem:[%s384 + $0x10d] sm:$0xff]
        %v2658 = vld [vmem:[%s384 + $0x115] sm:$0xff]
        %v2659 = vld [vmem:[%s384 + $0x11d] sm:$0xff]
        %v2660 = vld [vmem:[%s384 + $0x125] sm:$0xff]
        %v2661 = vld [vmem:[%s384 + $0x12d] sm:$0xff]
        %v2662 = vld [vmem:[%s384 + $0x135] sm:$0xff]
        %v2663 = vld [vmem:[%s384 + $0x13d] sm:$0x3f]
        %v2664 = vpack.c.bf16 %v2629, %v2628
        %v2665 = vpack.c.bf16 %v2631, %v2630
        %v2666 = vpack.c.bf16 %v2633, %v2632
        %v2667 = vpack.c.bf16 %v2635, %v2634
        %v2668 = vpack.c.bf16 %v2637, %v2636
        %v2669 = vpack.c.bf16 %v2639, %v2638
        %v2670 = vpack.c.bf16 %v2641, %v2640
        %v2671 = vpack.c.bf16 %v2643, %v2642
        %v2672 = vpack.c.bf16 %v2645, %v2644
        %v2673 = vpack.c.bf16 %v2647, %v2646
        %v2674 = vpack.c.bf16 %v2649, %v2648
        %v2675 = vpack.c.bf16 %v2651, %v2650
        %v2676 = vpack.c.bf16 %v2653, %v2652
        %v2677 = vpack.c.bf16 %v2655, %v2654
        %v2678 = vpack.c.bf16 %v2657, %v2656
        %v2679 = vpack.c.bf16 %v2659, %v2658
        %v2680 = vpack.c.bf16 %v2661, %v2660
        %v2681 = vpack.c.bf16 %v2663, %v2662
        %s2682 = scalar_lea.vmem %s4, 14
        %v2683 = vld [vmem:[%s2682] sm:$0x3]
        %v2685 = vsel %vm528, %v2664, 0
        %v2688 = vsel %vm528, %v2665, 0
        %v2691 = vsel %vm528, %v2666, 0
        %v2694 = vsel %vm528, %v2667, 0
        %v2697 = vsel %vm528, %v2668, 0
        %v2700 = vsel %vm528, %v2669, 0
        %v2703 = vsel %vm528, %v2670, 0
        %v2706 = vsel %vm528, %v2671, 0
        %v2709 = vsel %vm528, %v2672, 0
        %v2712 = vsel %vm528, %v2673, 0
        %v2715 = vsel %vm528, %v2674, 0
        %v2718 = vsel %vm528, %v2675, 0
        %v2721 = vsel %vm528, %v2676, 0
        %v2724 = vsel %vm528, %v2677, 0
        %v2727 = vsel %vm528, %v2678, 0
        %v2730 = vsel %vm528, %v2679, 0
        %v2733 = vsel %vm528, %v2680, 0
        %v2736 = vsel %vm528, %v2681, 0
        %v2739 = vsel %vm583, %v2683, 0
        %2741 = vmatprep.subr.bf16.mxu0 0
        %2742 = vmatpush1.bf16.msra.mxu0 0
        %2743 = vmatprep.subr.bf16.mxu0 0
        %2744 = vmatpush1.bf16.msra.mxu0 0
        %2745 = vmatprep.subr.bf16.mxu0 0
        %2746 = vmatpush1.bf16.msra.mxu0 0
        %2747 = vmatprep.subr.bf16.mxu0 0
        %2748 = vmatpush1.bf16.msra.mxu0 0
        %2749 = vmatprep.subr.bf16.mxu0 0
        %2750 = vmatpush1.bf16.msra.mxu0 0
        %2751 = vmatprep.subr.bf16.mxu0 0
        %2752 = vmatpush1.bf16.msra.mxu0 0
        %2753 = vmatprep.subr.bf16.mxu0 0
        %2754 = vmatpush1.bf16.msra.mxu0 0
        %2755 = vmatprep.subr.bf16.mxu0 0
        %2756 = vmatpush1.bf16.msra.mxu0 %v2739
        %2757 = vmatprep.subr.bf16.mxu0 0
        %2758 = vmatpush2.bf16.msra.mxu0 0
        %2759 = vmatprep.subr.bf16.mxu0 0
        %2760 = vmatpush2.bf16.msra.mxu0 0
        %2761 = vmatprep.subr.bf16.mxu0 0
        %2762 = vmatpush2.bf16.msra.mxu0 0
        %2763 = vmatprep.subr.bf16.mxu0 0
        %2764 = vmatpush2.bf16.msra.mxu0 0
        %2765 = vmatprep.subr.bf16.mxu0 0
        %2766 = vmatpush2.bf16.msra.mxu0 0
        %2767 = vmatprep.subr.bf16.mxu0 0
        %2768 = vmatpush2.bf16.msra.mxu0 0
        %2769 = vmatprep.subr.bf16.mxu0 0
        %2770 = vmatpush2.bf16.msra.mxu0 0
        %2771 = vmatprep.subr.bf16.mxu0 0
        %2772 = vmatpush2.bf16.msra.mxu0 0
        %2773 = vmatprep.mubr.bf16.mxu0 0
        %2774 = vmatmul.mubr.bf16.gmra.mxu0 %v2685
        %v2775 = vpop.f32.mrf.mxu0
        %v2776 = vadd.f32 0.0, %v2775
        %v2777 = vpop.f32.mrf.mxu0
        %v2778 = vpop.f32.mrf.mxu0
        %v2779 = vadd.f32 0.0, %v2778
        %v2780 = vpop.f32.mrf.mxu0
        %2781 = vmatprep.mubr.bf16.mxu0 0
        %2782 = vmatmul.mubr.bf16.gmra.mxu0 %v2688
        %v2783 = vpop.f32.mrf.mxu0
        %v2784 = vadd.f32 0.0, %v2783
        %v2785 = vpop.f32.mrf.mxu0
        %v2786 = vpop.f32.mrf.mxu0
        %v2787 = vadd.f32 0.0, %v2786
        %v2788 = vpop.f32.mrf.mxu0
        %2789 = vmatprep.mubr.bf16.mxu0 0
        %2790 = vmatmul.mubr.bf16.gmra.mxu0 %v2691
        %v2791 = vpop.f32.mrf.mxu0
        %v2792 = vadd.f32 0.0, %v2791
        %v2793 = vpop.f32.mrf.mxu0
        %v2794 = vpop.f32.mrf.mxu0
        %v2795 = vadd.f32 0.0, %v2794
        %v2796 = vpop.f32.mrf.mxu0
        %2797 = vmatprep.mubr.bf16.mxu0 0
        %2798 = vmatmul.mubr.bf16.gmra.mxu0 %v2694
        %v2799 = vpop.f32.mrf.mxu0
        %v2800 = vadd.f32 0.0, %v2799
        %v2801 = vpop.f32.mrf.mxu0
        %v2802 = vpop.f32.mrf.mxu0
        %v2803 = vadd.f32 0.0, %v2802
        %v2804 = vpop.f32.mrf.mxu0
        %2805 = vmatprep.mubr.bf16.mxu0 0
        %2806 = vmatmul.mubr.bf16.gmra.mxu0 %v2697
        %v2807 = vpop.f32.mrf.mxu0
        %v2808 = vadd.f32 0.0, %v2807
        %v2809 = vpop.f32.mrf.mxu0
        %v2810 = vpop.f32.mrf.mxu0
        %v2811 = vadd.f32 0.0, %v2810
        %v2812 = vpop.f32.mrf.mxu0
        %2813 = vmatprep.mubr.bf16.mxu0 0
        %2814 = vmatmul.mubr.bf16.gmra.mxu0 %v2700
        %v2815 = vpop.f32.mrf.mxu0
        %v2816 = vadd.f32 0.0, %v2815
        %v2817 = vpop.f32.mrf.mxu0
        %v2818 = vpop.f32.mrf.mxu0
        %v2819 = vadd.f32 0.0, %v2818
        %v2820 = vpop.f32.mrf.mxu0
        %2821 = vmatprep.mubr.bf16.mxu0 0
        %2822 = vmatmul.mubr.bf16.gmra.mxu0 %v2703
        %v2823 = vpop.f32.mrf.mxu0
        %v2824 = vadd.f32 0.0, %v2823
        %v2825 = vpop.f32.mrf.mxu0
        %v2826 = vpop.f32.mrf.mxu0
        %v2827 = vadd.f32 0.0, %v2826
        %v2828 = vpop.f32.mrf.mxu0
        %2829 = vmatprep.mubr.bf16.mxu0 0
        %2830 = vmatmul.mubr.bf16.gmra.mxu0 %v2706
        %v2831 = vpop.f32.mrf.mxu0
        %v2832 = vadd.f32 0.0, %v2831
        %v2833 = vpop.f32.mrf.mxu0
        %v2834 = vpop.f32.mrf.mxu0
        %v2835 = vadd.f32 0.0, %v2834
        %v2836 = vpop.f32.mrf.mxu0
        %2837 = vmatprep.mubr.bf16.mxu0 0
        %2838 = vmatmul.mubr.bf16.gmra.mxu0 %v2709
        %v2839 = vpop.f32.mrf.mxu0
        %v2840 = vadd.f32 0.0, %v2839
        %v2841 = vpop.f32.mrf.mxu0
        %v2842 = vpop.f32.mrf.mxu0
        %v2843 = vadd.f32 0.0, %v2842
        %v2844 = vpop.f32.mrf.mxu0
        %2845 = vmatprep.mubr.bf16.mxu0 0
        %2846 = vmatmul.mubr.bf16.gmra.mxu0 %v2712
        %v2847 = vpop.f32.mrf.mxu0
        %v2848 = vadd.f32 0.0, %v2847
        %v2849 = vpop.f32.mrf.mxu0
        %v2850 = vpop.f32.mrf.mxu0
        %v2851 = vadd.f32 0.0, %v2850
        %v2852 = vpop.f32.mrf.mxu0
        %2853 = vmatprep.mubr.bf16.mxu0 0
        %2854 = vmatmul.mubr.bf16.gmra.mxu0 %v2715
        %v2855 = vpop.f32.mrf.mxu0
        %v2856 = vadd.f32 0.0, %v2855
        %v2857 = vpop.f32.mrf.mxu0
        %v2858 = vpop.f32.mrf.mxu0
        %v2859 = vadd.f32 0.0, %v2858
        %v2860 = vpop.f32.mrf.mxu0
        %2861 = vmatprep.mubr.bf16.mxu0 0
        %2862 = vmatmul.mubr.bf16.gmra.mxu0 %v2718
        %v2863 = vpop.f32.mrf.mxu0
        %v2864 = vadd.f32 0.0, %v2863
        %v2865 = vpop.f32.mrf.mxu0
        %v2866 = vpop.f32.mrf.mxu0
        %v2867 = vadd.f32 0.0, %v2866
        %v2868 = vpop.f32.mrf.mxu0
        %2869 = vmatprep.mubr.bf16.mxu0 0
        %2870 = vmatmul.mubr.bf16.gmra.mxu0 %v2721
        %v2871 = vpop.f32.mrf.mxu0
        %v2872 = vadd.f32 0.0, %v2871
        %v2873 = vpop.f32.mrf.mxu0
        %v2874 = vpop.f32.mrf.mxu0
        %v2875 = vadd.f32 0.0, %v2874
        %v2876 = vpop.f32.mrf.mxu0
        %2877 = vmatprep.mubr.bf16.mxu0 0
        %2878 = vmatmul.mubr.bf16.gmra.mxu0 %v2724
        %v2879 = vpop.f32.mrf.mxu0
        %v2880 = vadd.f32 0.0, %v2879
        %v2881 = vpop.f32.mrf.mxu0
        %v2882 = vpop.f32.mrf.mxu0
        %v2883 = vadd.f32 0.0, %v2882
        %v2884 = vpop.f32.mrf.mxu0
        %2885 = vmatprep.mubr.bf16.mxu0 0
        %2886 = vmatmul.mubr.bf16.gmra.mxu0 %v2727
        %v2887 = vpop.f32.mrf.mxu0
        %v2888 = vadd.f32 0.0, %v2887
        %v2889 = vpop.f32.mrf.mxu0
        %v2890 = vpop.f32.mrf.mxu0
        %v2891 = vadd.f32 0.0, %v2890
        %v2892 = vpop.f32.mrf.mxu0
        %2893 = vmatprep.mubr.bf16.mxu0 0
        %2894 = vmatmul.mubr.bf16.gmra.mxu0 %v2730
        %v2895 = vpop.f32.mrf.mxu0
        %v2896 = vadd.f32 0.0, %v2895
        %v2897 = vpop.f32.mrf.mxu0
        %v2898 = vpop.f32.mrf.mxu0
        %v2899 = vadd.f32 0.0, %v2898
        %v2900 = vpop.f32.mrf.mxu0
        %2901 = vmatprep.mubr.bf16.mxu0 0
        %2902 = vmatmul.mubr.bf16.gmra.mxu0 %v2733
        %v2903 = vpop.f32.mrf.mxu0
        %v2904 = vadd.f32 0.0, %v2903
        %v2905 = vpop.f32.mrf.mxu0
        %v2906 = vpop.f32.mrf.mxu0
        %v2907 = vadd.f32 0.0, %v2906
        %v2908 = vpop.f32.mrf.mxu0
        %2909 = vmatprep.mubr.bf16.mxu0 0
        %2910 = vmatmul.mubr.bf16.gmra.mxu0 %v2736
        %v2911 = vpop.f32.mrf.mxu0
        %v2912 = vadd.f32 0.0, %v2911
        %v2913 = vpop.f32.mrf.mxu0
        %v2914 = vpop.f32.mrf.mxu0
        %v2915 = vadd.f32 0.0, %v2914
        %v2916 = vpop.f32.mrf.mxu0
        %2917 = vdwg.mxu0
        %v2918 = vadd.f32 %v2592, %v2776
        %v2919 = vadd.f32 %v2593, %v2779
        %v2920 = vadd.f32 %v2594, %v2784
        %v2921 = vadd.f32 %v2595, %v2787
        %v2922 = vadd.f32 %v2596, %v2792
        %v2923 = vadd.f32 %v2597, %v2795
        %v2924 = vadd.f32 %v2598, %v2800
        %v2925 = vadd.f32 %v2599, %v2803
        %v2926 = vadd.f32 %v2600, %v2808
        %v2927 = vadd.f32 %v2601, %v2811
        %v2928 = vadd.f32 %v2602, %v2816
        %v2929 = vadd.f32 %v2603, %v2819
        %v2930 = vadd.f32 %v2604, %v2824
        %v2931 = vadd.f32 %v2605, %v2827
        %v2932 = vadd.f32 %v2606, %v2832
        %v2933 = vadd.f32 %v2607, %v2835
        %v2934 = vadd.f32 %v2608, %v2840
        %v2935 = vadd.f32 %v2609, %v2843
        %v2936 = vadd.f32 %v2610, %v2848
        %v2937 = vadd.f32 %v2611, %v2851
        %v2938 = vadd.f32 %v2612, %v2856
        %v2939 = vadd.f32 %v2613, %v2859
        %v2940 = vadd.f32 %v2614, %v2864
        %v2941 = vadd.f32 %v2615, %v2867
        %v2942 = vadd.f32 %v2616, %v2872
        %v2943 = vadd.f32 %v2617, %v2875
        %v2944 = vadd.f32 %v2618, %v2880
        %v2945 = vadd.f32 %v2619, %v2883
        %v2946 = vadd.f32 %v2620, %v2888
        %v2947 = vadd.f32 %v2621, %v2891
        %v2948 = vadd.f32 %v2622, %v2896
        %v2949 = vadd.f32 %v2623, %v2899
        %v2950 = vadd.f32 %v2624, %v2904
        %v2951 = vadd.f32 %v2625, %v2907
        %v2952 = vadd.f32 %v2626, %v2912
        %v2953 = vadd.f32 %v2627, %v2915
        %v2954 = vld [vmem:[%s384 + $0x26] sm:$0xff]
        %v2955 = vld [vmem:[%s384 + $0x2e] sm:$0xff]
        %v2956 = vld [vmem:[%s384 + $0x36] sm:$0xff]
        %v2957 = vld [vmem:[%s384 + $0x3e] sm:$0xff]
        %v2958 = vld [vmem:[%s384 + $0x46] sm:$0xff]
        %v2959 = vld [vmem:[%s384 + $0x4e] sm:$0xff]
        %v2960 = vld [vmem:[%s384 + $0x56] sm:$0xff]
        %v2961 = vld [vmem:[%s384 + $0x5e] sm:$0xff]
        %v2962 = vld [vmem:[%s384 + $0x66] sm:$0xff]
        %v2963 = vld [vmem:[%s384 + $0x6e] sm:$0xff]
        %v2964 = vld [vmem:[%s384 + $0x76] sm:$0xff]
        %v2965 = vld [vmem:[%s384 + $0x7e] sm:$0xff]
        %v2966 = vld [vmem:[%s384 + $0x86] sm:$0xff]
        %v2967 = vld [vmem:[%s384 + $0x8e] sm:$0xff]
        %v2968 = vld [vmem:[%s384 + $0x96] sm:$0xff]
        %v2969 = vld [vmem:[%s384 + $0x9e] sm:$0xff]
        %v2970 = vld [vmem:[%s384 + $0xa6] sm:$0xff]
        %v2971 = vld [vmem:[%s384 + $0xae] sm:$0xff]
        %v2972 = vld [vmem:[%s384 + $0xb6] sm:$0xff]
        %v2973 = vld [vmem:[%s384 + $0xbe] sm:$0xff]
        %v2974 = vld [vmem:[%s384 + $0xc6] sm:$0xff]
        %v2975 = vld [vmem:[%s384 + $0xce] sm:$0xff]
        %v2976 = vld [vmem:[%s384 + $0xd6] sm:$0xff]
        %v2977 = vld [vmem:[%s384 + $0xde] sm:$0xff]
        %v2978 = vld [vmem:[%s384 + $0xe6] sm:$0xff]
        %v2979 = vld [vmem:[%s384 + $0xee] sm:$0xff]
        %v2980 = vld [vmem:[%s384 + $0xf6] sm:$0xff]
        %v2981 = vld [vmem:[%s384 + $0xfe] sm:$0xff]
        %v2982 = vld [vmem:[%s384 + $0x106] sm:$0xff]
        %v2983 = vld [vmem:[%s384 + $0x10e] sm:$0xff]
        %v2984 = vld [vmem:[%s384 + $0x116] sm:$0xff]
        %v2985 = vld [vmem:[%s384 + $0x11e] sm:$0xff]
        %v2986 = vld [vmem:[%s384 + $0x126] sm:$0xff]
        %v2987 = vld [vmem:[%s384 + $0x12e] sm:$0xff]
        %v2988 = vld [vmem:[%s384 + $0x136] sm:$0xff]
        %v2989 = vld [vmem:[%s384 + $0x13e] sm:$0x3f]
        %v2990 = vpack.c.bf16 %v2955, %v2954
        %v2991 = vpack.c.bf16 %v2957, %v2956
        %v2992 = vpack.c.bf16 %v2959, %v2958
        %v2993 = vpack.c.bf16 %v2961, %v2960
        %v2994 = vpack.c.bf16 %v2963, %v2962
        %v2995 = vpack.c.bf16 %v2965, %v2964
        %v2996 = vpack.c.bf16 %v2967, %v2966
        %v2997 = vpack.c.bf16 %v2969, %v2968
        %v2998 = vpack.c.bf16 %v2971, %v2970
        %v2999 = vpack.c.bf16 %v2973, %v2972
        %v3000 = vpack.c.bf16 %v2975, %v2974
        %v3001 = vpack.c.bf16 %v2977, %v2976
        %v3002 = vpack.c.bf16 %v2979, %v2978
        %v3003 = vpack.c.bf16 %v2981, %v2980
        %v3004 = vpack.c.bf16 %v2983, %v2982
        %v3005 = vpack.c.bf16 %v2985, %v2984
        %v3006 = vpack.c.bf16 %v2987, %v2986
        %v3007 = vpack.c.bf16 %v2989, %v2988
        %s3008 = scalar_lea.vmem %s4, 16
        %v3009 = vld [vmem:[%s3008] sm:$0x3]
        %v3011 = vsel %vm528, %v2990, 0
        %v3014 = vsel %vm528, %v2991, 0
        %v3017 = vsel %vm528, %v2992, 0
        %v3020 = vsel %vm528, %v2993, 0
        %v3023 = vsel %vm528, %v2994, 0
        %v3026 = vsel %vm528, %v2995, 0
        %v3029 = vsel %vm528, %v2996, 0
        %v3032 = vsel %vm528, %v2997, 0
        %v3035 = vsel %vm528, %v2998, 0
        %v3038 = vsel %vm528, %v2999, 0
        %v3041 = vsel %vm528, %v3000, 0
        %v3044 = vsel %vm528, %v3001, 0
        %v3047 = vsel %vm528, %v3002, 0
        %v3050 = vsel %vm528, %v3003, 0
        %v3053 = vsel %vm528, %v3004, 0
        %v3056 = vsel %vm528, %v3005, 0
        %v3059 = vsel %vm528, %v3006, 0
        %v3062 = vsel %vm528, %v3007, 0
        %v3065 = vsel %vm583, %v3009, 0
        %3067 = vmatprep.subr.bf16.mxu0 0
        %3068 = vmatpush1.bf16.msra.mxu0 0
        %3069 = vmatprep.subr.bf16.mxu0 0
        %3070 = vmatpush1.bf16.msra.mxu0 0
        %3071 = vmatprep.subr.bf16.mxu0 0
        %3072 = vmatpush1.bf16.msra.mxu0 0
        %3073 = vmatprep.subr.bf16.mxu0 0
        %3074 = vmatpush1.bf16.msra.mxu0 0
        %3075 = vmatprep.subr.bf16.mxu0 0
        %3076 = vmatpush1.bf16.msra.mxu0 0
        %3077 = vmatprep.subr.bf16.mxu0 0
        %3078 = vmatpush1.bf16.msra.mxu0 0
        %3079 = vmatprep.subr.bf16.mxu0 0
        %3080 = vmatpush1.bf16.msra.mxu0 0
        %3081 = vmatprep.subr.bf16.mxu0 0
        %3082 = vmatpush1.bf16.msra.mxu0 %v3065
        %3083 = vmatprep.subr.bf16.mxu0 0
        %3084 = vmatpush2.bf16.msra.mxu0 0
        %3085 = vmatprep.subr.bf16.mxu0 0
        %3086 = vmatpush2.bf16.msra.mxu0 0
        %3087 = vmatprep.subr.bf16.mxu0 0
        %3088 = vmatpush2.bf16.msra.mxu0 0
        %3089 = vmatprep.subr.bf16.mxu0 0
        %3090 = vmatpush2.bf16.msra.mxu0 0
        %3091 = vmatprep.subr.bf16.mxu0 0
        %3092 = vmatpush2.bf16.msra.mxu0 0
        %3093 = vmatprep.subr.bf16.mxu0 0
        %3094 = vmatpush2.bf16.msra.mxu0 0
        %3095 = vmatprep.subr.bf16.mxu0 0
        %3096 = vmatpush2.bf16.msra.mxu0 0
        %3097 = vmatprep.subr.bf16.mxu0 0
        %3098 = vmatpush2.bf16.msra.mxu0 0
        %3099 = vmatprep.mubr.bf16.mxu0 0
        %3100 = vmatmul.mubr.bf16.gmra.mxu0 %v3011
        %v3101 = vpop.f32.mrf.mxu0
        %v3102 = vadd.f32 0.0, %v3101
        %v3103 = vpop.f32.mrf.mxu0
        %v3104 = vpop.f32.mrf.mxu0
        %v3105 = vadd.f32 0.0, %v3104
        %v3106 = vpop.f32.mrf.mxu0
        %3107 = vmatprep.mubr.bf16.mxu0 0
        %3108 = vmatmul.mubr.bf16.gmra.mxu0 %v3014
        %v3109 = vpop.f32.mrf.mxu0
        %v3110 = vadd.f32 0.0, %v3109
        %v3111 = vpop.f32.mrf.mxu0
        %v3112 = vpop.f32.mrf.mxu0
        %v3113 = vadd.f32 0.0, %v3112
        %v3114 = vpop.f32.mrf.mxu0
        %3115 = vmatprep.mubr.bf16.mxu0 0
        %3116 = vmatmul.mubr.bf16.gmra.mxu0 %v3017
        %v3117 = vpop.f32.mrf.mxu0
        %v3118 = vadd.f32 0.0, %v3117
        %v3119 = vpop.f32.mrf.mxu0
        %v3120 = vpop.f32.mrf.mxu0
        %v3121 = vadd.f32 0.0, %v3120
        %v3122 = vpop.f32.mrf.mxu0
        %3123 = vmatprep.mubr.bf16.mxu0 0
        %3124 = vmatmul.mubr.bf16.gmra.mxu0 %v3020
        %v3125 = vpop.f32.mrf.mxu0
        %v3126 = vadd.f32 0.0, %v3125
        %v3127 = vpop.f32.mrf.mxu0
        %v3128 = vpop.f32.mrf.mxu0
        %v3129 = vadd.f32 0.0, %v3128
        %v3130 = vpop.f32.mrf.mxu0
        %3131 = vmatprep.mubr.bf16.mxu0 0
        %3132 = vmatmul.mubr.bf16.gmra.mxu0 %v3023
        %v3133 = vpop.f32.mrf.mxu0
        %v3134 = vadd.f32 0.0, %v3133
        %v3135 = vpop.f32.mrf.mxu0
        %v3136 = vpop.f32.mrf.mxu0
        %v3137 = vadd.f32 0.0, %v3136
        %v3138 = vpop.f32.mrf.mxu0
        %3139 = vmatprep.mubr.bf16.mxu0 0
        %3140 = vmatmul.mubr.bf16.gmra.mxu0 %v3026
        %v3141 = vpop.f32.mrf.mxu0
        %v3142 = vadd.f32 0.0, %v3141
        %v3143 = vpop.f32.mrf.mxu0
        %v3144 = vpop.f32.mrf.mxu0
        %v3145 = vadd.f32 0.0, %v3144
        %v3146 = vpop.f32.mrf.mxu0
        %3147 = vmatprep.mubr.bf16.mxu0 0
        %3148 = vmatmul.mubr.bf16.gmra.mxu0 %v3029
        %v3149 = vpop.f32.mrf.mxu0
        %v3150 = vadd.f32 0.0, %v3149
        %v3151 = vpop.f32.mrf.mxu0
        %v3152 = vpop.f32.mrf.mxu0
        %v3153 = vadd.f32 0.0, %v3152
        %v3154 = vpop.f32.mrf.mxu0
        %3155 = vmatprep.mubr.bf16.mxu0 0
        %3156 = vmatmul.mubr.bf16.gmra.mxu0 %v3032
        %v3157 = vpop.f32.mrf.mxu0
        %v3158 = vadd.f32 0.0, %v3157
        %v3159 = vpop.f32.mrf.mxu0
        %v3160 = vpop.f32.mrf.mxu0
        %v3161 = vadd.f32 0.0, %v3160
        %v3162 = vpop.f32.mrf.mxu0
        %3163 = vmatprep.mubr.bf16.mxu0 0
        %3164 = vmatmul.mubr.bf16.gmra.mxu0 %v3035
        %v3165 = vpop.f32.mrf.mxu0
        %v3166 = vadd.f32 0.0, %v3165
        %v3167 = vpop.f32.mrf.mxu0
        %v3168 = vpop.f32.mrf.mxu0
        %v3169 = vadd.f32 0.0, %v3168
        %v3170 = vpop.f32.mrf.mxu0
        %3171 = vmatprep.mubr.bf16.mxu0 0
        %3172 = vmatmul.mubr.bf16.gmra.mxu0 %v3038
        %v3173 = vpop.f32.mrf.mxu0
        %v3174 = vadd.f32 0.0, %v3173
        %v3175 = vpop.f32.mrf.mxu0
        %v3176 = vpop.f32.mrf.mxu0
        %v3177 = vadd.f32 0.0, %v3176
        %v3178 = vpop.f32.mrf.mxu0
        %3179 = vmatprep.mubr.bf16.mxu0 0
        %3180 = vmatmul.mubr.bf16.gmra.mxu0 %v3041
        %v3181 = vpop.f32.mrf.mxu0
        %v3182 = vadd.f32 0.0, %v3181
        %v3183 = vpop.f32.mrf.mxu0
        %v3184 = vpop.f32.mrf.mxu0
        %v3185 = vadd.f32 0.0, %v3184
        %v3186 = vpop.f32.mrf.mxu0
        %3187 = vmatprep.mubr.bf16.mxu0 0
        %3188 = vmatmul.mubr.bf16.gmra.mxu0 %v3044
        %v3189 = vpop.f32.mrf.mxu0
        %v3190 = vadd.f32 0.0, %v3189
        %v3191 = vpop.f32.mrf.mxu0
        %v3192 = vpop.f32.mrf.mxu0
        %v3193 = vadd.f32 0.0, %v3192
        %v3194 = vpop.f32.mrf.mxu0
        %3195 = vmatprep.mubr.bf16.mxu0 0
        %3196 = vmatmul.mubr.bf16.gmra.mxu0 %v3047
        %v3197 = vpop.f32.mrf.mxu0
        %v3198 = vadd.f32 0.0, %v3197
        %v3199 = vpop.f32.mrf.mxu0
        %v3200 = vpop.f32.mrf.mxu0
        %v3201 = vadd.f32 0.0, %v3200
        %v3202 = vpop.f32.mrf.mxu0
        %3203 = vmatprep.mubr.bf16.mxu0 0
        %3204 = vmatmul.mubr.bf16.gmra.mxu0 %v3050
        %v3205 = vpop.f32.mrf.mxu0
        %v3206 = vadd.f32 0.0, %v3205
        %v3207 = vpop.f32.mrf.mxu0
        %v3208 = vpop.f32.mrf.mxu0
        %v3209 = vadd.f32 0.0, %v3208
        %v3210 = vpop.f32.mrf.mxu0
        %3211 = vmatprep.mubr.bf16.mxu0 0
        %3212 = vmatmul.mubr.bf16.gmra.mxu0 %v3053
        %v3213 = vpop.f32.mrf.mxu0
        %v3214 = vadd.f32 0.0, %v3213
        %v3215 = vpop.f32.mrf.mxu0
        %v3216 = vpop.f32.mrf.mxu0
        %v3217 = vadd.f32 0.0, %v3216
        %v3218 = vpop.f32.mrf.mxu0
        %3219 = vmatprep.mubr.bf16.mxu0 0
        %3220 = vmatmul.mubr.bf16.gmra.mxu0 %v3056
        %v3221 = vpop.f32.mrf.mxu0
        %v3222 = vadd.f32 0.0, %v3221
        %v3223 = vpop.f32.mrf.mxu0
        %v3224 = vpop.f32.mrf.mxu0
        %v3225 = vadd.f32 0.0, %v3224
        %v3226 = vpop.f32.mrf.mxu0
        %3227 = vmatprep.mubr.bf16.mxu0 0
        %3228 = vmatmul.mubr.bf16.gmra.mxu0 %v3059
        %v3229 = vpop.f32.mrf.mxu0
        %v3230 = vadd.f32 0.0, %v3229
        %v3231 = vpop.f32.mrf.mxu0
        %v3232 = vpop.f32.mrf.mxu0
        %v3233 = vadd.f32 0.0, %v3232
        %v3234 = vpop.f32.mrf.mxu0
        %3235 = vmatprep.mubr.bf16.mxu0 0
        %3236 = vmatmul.mubr.bf16.gmra.mxu0 %v3062
        %v3237 = vpop.f32.mrf.mxu0
        %v3238 = vadd.f32 0.0, %v3237
        %v3239 = vpop.f32.mrf.mxu0
        %v3240 = vpop.f32.mrf.mxu0
        %v3241 = vadd.f32 0.0, %v3240
        %v3242 = vpop.f32.mrf.mxu0
        %3243 = vdwg.mxu0
        %v3244 = vadd.f32 %v2918, %v3102
        %v3245 = vadd.f32 %v2919, %v3105
        %v3246 = vadd.f32 %v2920, %v3110
        %v3247 = vadd.f32 %v2921, %v3113
        %v3248 = vadd.f32 %v2922, %v3118
        %v3249 = vadd.f32 %v2923, %v3121
        %v3250 = vadd.f32 %v2924, %v3126
        %v3251 = vadd.f32 %v2925, %v3129
        %v3252 = vadd.f32 %v2926, %v3134
        %v3253 = vadd.f32 %v2927, %v3137
        %v3254 = vadd.f32 %v2928, %v3142
        %v3255 = vadd.f32 %v2929, %v3145
        %v3256 = vadd.f32 %v2930, %v3150
        %v3257 = vadd.f32 %v2931, %v3153
        %v3258 = vadd.f32 %v2932, %v3158
        %v3259 = vadd.f32 %v2933, %v3161
        %v3260 = vadd.f32 %v2934, %v3166
        %v3261 = vadd.f32 %v2935, %v3169
        %v3262 = vadd.f32 %v2936, %v3174
        %v3263 = vadd.f32 %v2937, %v3177
        %v3264 = vadd.f32 %v2938, %v3182
        %v3265 = vadd.f32 %v2939, %v3185
        %v3266 = vadd.f32 %v2940, %v3190
        %v3267 = vadd.f32 %v2941, %v3193
        %v3268 = vadd.f32 %v2942, %v3198
        %v3269 = vadd.f32 %v2943, %v3201
        %v3270 = vadd.f32 %v2944, %v3206
        %v3271 = vadd.f32 %v2945, %v3209
        %v3272 = vadd.f32 %v2946, %v3214
        %v3273 = vadd.f32 %v2947, %v3217
        %v3274 = vadd.f32 %v2948, %v3222
        %v3275 = vadd.f32 %v2949, %v3225
        %v3276 = vadd.f32 %v2950, %v3230
        %v3277 = vadd.f32 %v2951, %v3233
        %v3278 = vadd.f32 %v2952, %v3238
        %v3279 = vadd.f32 %v2953, %v3241
        %v3280 = vld [vmem:[%s394] sm:$0xff]
        %v3281 = vld [vmem:[%s394 + $0x8] sm:$0xff]
        %v3282 = vld [vmem:[%s394 + $0x10] sm:$0xff]
        %v3283 = vld [vmem:[%s394 + $0x18] sm:$0xff]
        %v3284 = vld [vmem:[%s394 + $0x20] sm:$0xff]
        %v3285 = vld [vmem:[%s394 + $0x28] sm:$0xff]
        %v3286 = vld [vmem:[%s394 + $0x30] sm:$0xff]
        %v3287 = vld [vmem:[%s394 + $0x38] sm:$0xff]
        %v3288 = vld [vmem:[%s394 + $0x40] sm:$0xff]
        %v3289 = vld [vmem:[%s394 + $0x48] sm:$0xff]
        %v3290 = vld [vmem:[%s394 + $0x50] sm:$0xff]
        %v3291 = vld [vmem:[%s394 + $0x58] sm:$0xff]
        %v3292 = vld [vmem:[%s394 + $0x60] sm:$0xff]
        %v3293 = vld [vmem:[%s394 + $0x68] sm:$0xff]
        %v3294 = vld [vmem:[%s394 + $0x70] sm:$0xff]
        %v3295 = vld [vmem:[%s394 + $0x78] sm:$0xff]
        %v3296 = vld [vmem:[%s394 + $0x80] sm:$0xff]
        %v3297 = vld [vmem:[%s394 + $0x88] sm:$0xff]
        %v3298 = vld [vmem:[%s394 + $0x90] sm:$0xff]
        %v3299 = vld [vmem:[%s394 + $0x98] sm:$0xff]
        %v3300 = vld [vmem:[%s394 + $0xa0] sm:$0xff]
        %v3301 = vld [vmem:[%s394 + $0xa8] sm:$0xff]
        %v3302 = vld [vmem:[%s394 + $0xb0] sm:$0xff]
        %v3303 = vld [vmem:[%s394 + $0xb8] sm:$0xff]
        %v3304 = vld [vmem:[%s394 + $0xc0] sm:$0xff]
        %v3305 = vld [vmem:[%s394 + $0xc8] sm:$0xff]
        %v3306 = vld [vmem:[%s394 + $0xd0] sm:$0xff]
        %v3307 = vld [vmem:[%s394 + $0xd8] sm:$0xff]
        %v3308 = vld [vmem:[%s394 + $0xe0] sm:$0xff]
        %v3309 = vld [vmem:[%s394 + $0xe8] sm:$0xff]
        %v3310 = vld [vmem:[%s394 + $0xf0] sm:$0xff]
        %v3311 = vld [vmem:[%s394 + $0xf8] sm:$0xff]
        %v3312 = vld [vmem:[%s394 + $0x100] sm:$0xff]
        %v3313 = vld [vmem:[%s394 + $0x108] sm:$0xff]
        %v3314 = vld [vmem:[%s394 + $0x110] sm:$0xff]
        %v3315 = vld [vmem:[%s394 + $0x118] sm:$0x3f]
        %v3316 = vpack.c.bf16 %v3281, %v3280
        %v3317 = vpack.c.bf16 %v3283, %v3282
        %v3318 = vpack.c.bf16 %v3285, %v3284
        %v3319 = vpack.c.bf16 %v3287, %v3286
        %v3320 = vpack.c.bf16 %v3289, %v3288
        %v3321 = vpack.c.bf16 %v3291, %v3290
        %v3322 = vpack.c.bf16 %v3293, %v3292
        %v3323 = vpack.c.bf16 %v3295, %v3294
        %v3324 = vpack.c.bf16 %v3297, %v3296
        %v3325 = vpack.c.bf16 %v3299, %v3298
        %v3326 = vpack.c.bf16 %v3301, %v3300
        %v3327 = vpack.c.bf16 %v3303, %v3302
        %v3328 = vpack.c.bf16 %v3305, %v3304
        %v3329 = vpack.c.bf16 %v3307, %v3306
        %v3330 = vpack.c.bf16 %v3309, %v3308
        %v3331 = vpack.c.bf16 %v3311, %v3310
        %v3332 = vpack.c.bf16 %v3313, %v3312
        %v3333 = vpack.c.bf16 %v3315, %v3314
        %s3334 = scalar_lea.vmem %s4, 18
        %v3335 = vld [vmem:[%s3334] sm:$0x3]
        %v3337 = vsel %vm528, %v3316, 0
        %v3340 = vsel %vm528, %v3317, 0
        %v3343 = vsel %vm528, %v3318, 0
        %v3346 = vsel %vm528, %v3319, 0
        %v3349 = vsel %vm528, %v3320, 0
        %v3352 = vsel %vm528, %v3321, 0
        %v3355 = vsel %vm528, %v3322, 0
        %v3358 = vsel %vm528, %v3323, 0
        %v3361 = vsel %vm528, %v3324, 0
        %v3364 = vsel %vm528, %v3325, 0
        %v3367 = vsel %vm528, %v3326, 0
        %v3370 = vsel %vm528, %v3327, 0
        %v3373 = vsel %vm528, %v3328, 0
        %v3376 = vsel %vm528, %v3329, 0
        %v3379 = vsel %vm528, %v3330, 0
        %v3382 = vsel %vm528, %v3331, 0
        %v3385 = vsel %vm528, %v3332, 0
        %v3388 = vsel %vm528, %v3333, 0
        %v3391 = vsel %vm583, %v3335, 0
        %3393 = vmatprep.subr.bf16.mxu0 0
        %3394 = vmatpush1.bf16.msra.mxu0 0
        %3395 = vmatprep.subr.bf16.mxu0 0
        %3396 = vmatpush1.bf16.msra.mxu0 0
        %3397 = vmatprep.subr.bf16.mxu0 0
        %3398 = vmatpush1.bf16.msra.mxu0 0
        %3399 = vmatprep.subr.bf16.mxu0 0
        %3400 = vmatpush1.bf16.msra.mxu0 0
        %3401 = vmatprep.subr.bf16.mxu0 0
        %3402 = vmatpush1.bf16.msra.mxu0 0
        %3403 = vmatprep.subr.bf16.mxu0 0
        %3404 = vmatpush1.bf16.msra.mxu0 0
        %3405 = vmatprep.subr.bf16.mxu0 0
        %3406 = vmatpush1.bf16.msra.mxu0 0
        %3407 = vmatprep.subr.bf16.mxu0 0
        %3408 = vmatpush1.bf16.msra.mxu0 %v3391
        %3409 = vmatprep.subr.bf16.mxu0 0
        %3410 = vmatpush2.bf16.msra.mxu0 0
        %3411 = vmatprep.subr.bf16.mxu0 0
        %3412 = vmatpush2.bf16.msra.mxu0 0
        %3413 = vmatprep.subr.bf16.mxu0 0
        %3414 = vmatpush2.bf16.msra.mxu0 0
        %3415 = vmatprep.subr.bf16.mxu0 0
        %3416 = vmatpush2.bf16.msra.mxu0 0
        %3417 = vmatprep.subr.bf16.mxu0 0
        %3418 = vmatpush2.bf16.msra.mxu0 0
        %3419 = vmatprep.subr.bf16.mxu0 0
        %3420 = vmatpush2.bf16.msra.mxu0 0
        %3421 = vmatprep.subr.bf16.mxu0 0
        %3422 = vmatpush2.bf16.msra.mxu0 0
        %3423 = vmatprep.subr.bf16.mxu0 0
        %3424 = vmatpush2.bf16.msra.mxu0 0
        %3425 = vmatprep.mubr.bf16.mxu0 0
        %3426 = vmatmul.mubr.bf16.gmra.mxu0 %v3337
        %v3427 = vpop.f32.mrf.mxu0
        %v3428 = vadd.f32 0.0, %v3427
        %v3429 = vpop.f32.mrf.mxu0
        %v3430 = vpop.f32.mrf.mxu0
        %v3431 = vadd.f32 0.0, %v3430
        %v3432 = vpop.f32.mrf.mxu0
        %3433 = vmatprep.mubr.bf16.mxu0 0
        %3434 = vmatmul.mubr.bf16.gmra.mxu0 %v3340
        %v3435 = vpop.f32.mrf.mxu0
        %v3436 = vadd.f32 0.0, %v3435
        %v3437 = vpop.f32.mrf.mxu0
        %v3438 = vpop.f32.mrf.mxu0
        %v3439 = vadd.f32 0.0, %v3438
        %v3440 = vpop.f32.mrf.mxu0
        %3441 = vmatprep.mubr.bf16.mxu0 0
        %3442 = vmatmul.mubr.bf16.gmra.mxu0 %v3343
        %v3443 = vpop.f32.mrf.mxu0
        %v3444 = vadd.f32 0.0, %v3443
        %v3445 = vpop.f32.mrf.mxu0
        %v3446 = vpop.f32.mrf.mxu0
        %v3447 = vadd.f32 0.0, %v3446
        %v3448 = vpop.f32.mrf.mxu0
        %3449 = vmatprep.mubr.bf16.mxu0 0
        %3450 = vmatmul.mubr.bf16.gmra.mxu0 %v3346
        %v3451 = vpop.f32.mrf.mxu0
        %v3452 = vadd.f32 0.0, %v3451
        %v3453 = vpop.f32.mrf.mxu0
        %v3454 = vpop.f32.mrf.mxu0
        %v3455 = vadd.f32 0.0, %v3454
        %v3456 = vpop.f32.mrf.mxu0
        %3457 = vmatprep.mubr.bf16.mxu0 0
        %3458 = vmatmul.mubr.bf16.gmra.mxu0 %v3349
        %v3459 = vpop.f32.mrf.mxu0
        %v3460 = vadd.f32 0.0, %v3459
        %v3461 = vpop.f32.mrf.mxu0
        %v3462 = vpop.f32.mrf.mxu0
        %v3463 = vadd.f32 0.0, %v3462
        %v3464 = vpop.f32.mrf.mxu0
        %3465 = vmatprep.mubr.bf16.mxu0 0
        %3466 = vmatmul.mubr.bf16.gmra.mxu0 %v3352
        %v3467 = vpop.f32.mrf.mxu0
        %v3468 = vadd.f32 0.0, %v3467
        %v3469 = vpop.f32.mrf.mxu0
        %v3470 = vpop.f32.mrf.mxu0
        %v3471 = vadd.f32 0.0, %v3470
        %v3472 = vpop.f32.mrf.mxu0
        %3473 = vmatprep.mubr.bf16.mxu0 0
        %3474 = vmatmul.mubr.bf16.gmra.mxu0 %v3355
        %v3475 = vpop.f32.mrf.mxu0
        %v3476 = vadd.f32 0.0, %v3475
        %v3477 = vpop.f32.mrf.mxu0
        %v3478 = vpop.f32.mrf.mxu0
        %v3479 = vadd.f32 0.0, %v3478
        %v3480 = vpop.f32.mrf.mxu0
        %3481 = vmatprep.mubr.bf16.mxu0 0
        %3482 = vmatmul.mubr.bf16.gmra.mxu0 %v3358
        %v3483 = vpop.f32.mrf.mxu0
        %v3484 = vadd.f32 0.0, %v3483
        %v3485 = vpop.f32.mrf.mxu0
        %v3486 = vpop.f32.mrf.mxu0
        %v3487 = vadd.f32 0.0, %v3486
        %v3488 = vpop.f32.mrf.mxu0
        %3489 = vmatprep.mubr.bf16.mxu0 0
        %3490 = vmatmul.mubr.bf16.gmra.mxu0 %v3361
        %v3491 = vpop.f32.mrf.mxu0
        %v3492 = vadd.f32 0.0, %v3491
        %v3493 = vpop.f32.mrf.mxu0
        %v3494 = vpop.f32.mrf.mxu0
        %v3495 = vadd.f32 0.0, %v3494
        %v3496 = vpop.f32.mrf.mxu0
        %3497 = vmatprep.mubr.bf16.mxu0 0
        %3498 = vmatmul.mubr.bf16.gmra.mxu0 %v3364
        %v3499 = vpop.f32.mrf.mxu0
        %v3500 = vadd.f32 0.0, %v3499
        %v3501 = vpop.f32.mrf.mxu0
        %v3502 = vpop.f32.mrf.mxu0
        %v3503 = vadd.f32 0.0, %v3502
        %v3504 = vpop.f32.mrf.mxu0
        %3505 = vmatprep.mubr.bf16.mxu0 0
        %3506 = vmatmul.mubr.bf16.gmra.mxu0 %v3367
        %v3507 = vpop.f32.mrf.mxu0
        %v3508 = vadd.f32 0.0, %v3507
        %v3509 = vpop.f32.mrf.mxu0
        %v3510 = vpop.f32.mrf.mxu0
        %v3511 = vadd.f32 0.0, %v3510
        %v3512 = vpop.f32.mrf.mxu0
        %3513 = vmatprep.mubr.bf16.mxu0 0
        %3514 = vmatmul.mubr.bf16.gmra.mxu0 %v3370
        %v3515 = vpop.f32.mrf.mxu0
        %v3516 = vadd.f32 0.0, %v3515
        %v3517 = vpop.f32.mrf.mxu0
        %v3518 = vpop.f32.mrf.mxu0
        %v3519 = vadd.f32 0.0, %v3518
        %v3520 = vpop.f32.mrf.mxu0
        %3521 = vmatprep.mubr.bf16.mxu0 0
        %3522 = vmatmul.mubr.bf16.gmra.mxu0 %v3373
        %v3523 = vpop.f32.mrf.mxu0
        %v3524 = vadd.f32 0.0, %v3523
        %v3525 = vpop.f32.mrf.mxu0
        %v3526 = vpop.f32.mrf.mxu0
        %v3527 = vadd.f32 0.0, %v3526
        %v3528 = vpop.f32.mrf.mxu0
        %3529 = vmatprep.mubr.bf16.mxu0 0
        %3530 = vmatmul.mubr.bf16.gmra.mxu0 %v3376
        %v3531 = vpop.f32.mrf.mxu0
        %v3532 = vadd.f32 0.0, %v3531
        %v3533 = vpop.f32.mrf.mxu0
        %v3534 = vpop.f32.mrf.mxu0
        %v3535 = vadd.f32 0.0, %v3534
        %v3536 = vpop.f32.mrf.mxu0
        %3537 = vmatprep.mubr.bf16.mxu0 0
        %3538 = vmatmul.mubr.bf16.gmra.mxu0 %v3379
        %v3539 = vpop.f32.mrf.mxu0
        %v3540 = vadd.f32 0.0, %v3539
        %v3541 = vpop.f32.mrf.mxu0
        %v3542 = vpop.f32.mrf.mxu0
        %v3543 = vadd.f32 0.0, %v3542
        %v3544 = vpop.f32.mrf.mxu0
        %3545 = vmatprep.mubr.bf16.mxu0 0
        %3546 = vmatmul.mubr.bf16.gmra.mxu0 %v3382
        %v3547 = vpop.f32.mrf.mxu0
        %v3548 = vadd.f32 0.0, %v3547
        %v3549 = vpop.f32.mrf.mxu0
        %v3550 = vpop.f32.mrf.mxu0
        %v3551 = vadd.f32 0.0, %v3550
        %v3552 = vpop.f32.mrf.mxu0
        %3553 = vmatprep.mubr.bf16.mxu0 0
        %3554 = vmatmul.mubr.bf16.gmra.mxu0 %v3385
        %v3555 = vpop.f32.mrf.mxu0
        %v3556 = vadd.f32 0.0, %v3555
        %v3557 = vpop.f32.mrf.mxu0
        %v3558 = vpop.f32.mrf.mxu0
        %v3559 = vadd.f32 0.0, %v3558
        %v3560 = vpop.f32.mrf.mxu0
        %3561 = vmatprep.mubr.bf16.mxu0 0
        %3562 = vmatmul.mubr.bf16.gmra.mxu0 %v3388
        %v3563 = vpop.f32.mrf.mxu0
        %v3564 = vadd.f32 0.0, %v3563
        %v3565 = vpop.f32.mrf.mxu0
        %v3566 = vpop.f32.mrf.mxu0
        %v3567 = vadd.f32 0.0, %v3566
        %v3568 = vpop.f32.mrf.mxu0
        %3569 = vdwg.mxu0
        %v3570 = vadd.f32 %v3244, %v3428
        %v3571 = vadd.f32 %v3245, %v3431
        %v3572 = vadd.f32 %v3246, %v3436
        %v3573 = vadd.f32 %v3247, %v3439
        %v3574 = vadd.f32 %v3248, %v3444
        %v3575 = vadd.f32 %v3249, %v3447
        %v3576 = vadd.f32 %v3250, %v3452
        %v3577 = vadd.f32 %v3251, %v3455
        %v3578 = vadd.f32 %v3252, %v3460
        %v3579 = vadd.f32 %v3253, %v3463
        %v3580 = vadd.f32 %v3254, %v3468
        %v3581 = vadd.f32 %v3255, %v3471
        %v3582 = vadd.f32 %v3256, %v3476
        %v3583 = vadd.f32 %v3257, %v3479
        %v3584 = vadd.f32 %v3258, %v3484
        %v3585 = vadd.f32 %v3259, %v3487
        %v3586 = vadd.f32 %v3260, %v3492
        %v3587 = vadd.f32 %v3261, %v3495
        %v3588 = vadd.f32 %v3262, %v3500
        %v3589 = vadd.f32 %v3263, %v3503
        %v3590 = vadd.f32 %v3264, %v3508
        %v3591 = vadd.f32 %v3265, %v3511
        %v3592 = vadd.f32 %v3266, %v3516
        %v3593 = vadd.f32 %v3267, %v3519
        %v3594 = vadd.f32 %v3268, %v3524
        %v3595 = vadd.f32 %v3269, %v3527
        %v3596 = vadd.f32 %v3270, %v3532
        %v3597 = vadd.f32 %v3271, %v3535
        %v3598 = vadd.f32 %v3272, %v3540
        %v3599 = vadd.f32 %v3273, %v3543
        %v3600 = vadd.f32 %v3274, %v3548
        %v3601 = vadd.f32 %v3275, %v3551
        %v3602 = vadd.f32 %v3276, %v3556
        %v3603 = vadd.f32 %v3277, %v3559
        %v3604 = vadd.f32 %v3278, %v3564
        %v3605 = vadd.f32 %v3279, %v3567
        %v3606 = vld [vmem:[%s394 + $0x1] sm:$0xff]
        %v3607 = vld [vmem:[%s394 + $0x9] sm:$0xff]
        %v3608 = vld [vmem:[%s394 + $0x11] sm:$0xff]
        %v3609 = vld [vmem:[%s394 + $0x19] sm:$0xff]
        %v3610 = vld [vmem:[%s394 + $0x21] sm:$0xff]
        %v3611 = vld [vmem:[%s394 + $0x29] sm:$0xff]
        %v3612 = vld [vmem:[%s394 + $0x31] sm:$0xff]
        %v3613 = vld [vmem:[%s394 + $0x39] sm:$0xff]
        %v3614 = vld [vmem:[%s394 + $0x41] sm:$0xff]
        %v3615 = vld [vmem:[%s394 + $0x49] sm:$0xff]
        %v3616 = vld [vmem:[%s394 + $0x51] sm:$0xff]
        %v3617 = vld [vmem:[%s394 + $0x59] sm:$0xff]
        %v3618 = vld [vmem:[%s394 + $0x61] sm:$0xff]
        %v3619 = vld [vmem:[%s394 + $0x69] sm:$0xff]
        %v3620 = vld [vmem:[%s394 + $0x71] sm:$0xff]
        %v3621 = vld [vmem:[%s394 + $0x79] sm:$0xff]
        %v3622 = vld [vmem:[%s394 + $0x81] sm:$0xff]
        %v3623 = vld [vmem:[%s394 + $0x89] sm:$0xff]
        %v3624 = vld [vmem:[%s394 + $0x91] sm:$0xff]
        %v3625 = vld [vmem:[%s394 + $0x99] sm:$0xff]
        %v3626 = vld [vmem:[%s394 + $0xa1] sm:$0xff]
        %v3627 = vld [vmem:[%s394 + $0xa9] sm:$0xff]
        %v3628 = vld [vmem:[%s394 + $0xb1] sm:$0xff]
        %v3629 = vld [vmem:[%s394 + $0xb9] sm:$0xff]
        %v3630 = vld [vmem:[%s394 + $0xc1] sm:$0xff]
        %v3631 = vld [vmem:[%s394 + $0xc9] sm:$0xff]
        %v3632 = vld [vmem:[%s394 + $0xd1] sm:$0xff]
        %v3633 = vld [vmem:[%s394 + $0xd9] sm:$0xff]
        %v3634 = vld [vmem:[%s394 + $0xe1] sm:$0xff]
        %v3635 = vld [vmem:[%s394 + $0xe9] sm:$0xff]
        %v3636 = vld [vmem:[%s394 + $0xf1] sm:$0xff]
        %v3637 = vld [vmem:[%s394 + $0xf9] sm:$0xff]
        %v3638 = vld [vmem:[%s394 + $0x101] sm:$0xff]
        %v3639 = vld [vmem:[%s394 + $0x109] sm:$0xff]
        %v3640 = vld [vmem:[%s394 + $0x111] sm:$0xff]
        %v3641 = vld [vmem:[%s394 + $0x119] sm:$0x3f]
        %v3642 = vpack.c.bf16 %v3607, %v3606
        %v3643 = vpack.c.bf16 %v3609, %v3608
        %v3644 = vpack.c.bf16 %v3611, %v3610
        %v3645 = vpack.c.bf16 %v3613, %v3612
        %v3646 = vpack.c.bf16 %v3615, %v3614
        %v3647 = vpack.c.bf16 %v3617, %v3616
        %v3648 = vpack.c.bf16 %v3619, %v3618
        %v3649 = vpack.c.bf16 %v3621, %v3620
        %v3650 = vpack.c.bf16 %v3623, %v3622
        %v3651 = vpack.c.bf16 %v3625, %v3624
        %v3652 = vpack.c.bf16 %v3627, %v3626
        %v3653 = vpack.c.bf16 %v3629, %v3628
        %v3654 = vpack.c.bf16 %v3631, %v3630
        %v3655 = vpack.c.bf16 %v3633, %v3632
        %v3656 = vpack.c.bf16 %v3635, %v3634
        %v3657 = vpack.c.bf16 %v3637, %v3636
        %v3658 = vpack.c.bf16 %v3639, %v3638
        %v3659 = vpack.c.bf16 %v3641, %v3640
        %s3660 = scalar_lea.vmem %s4, 20
        %v3661 = vld [vmem:[%s3660] sm:$0x3]
        %v3663 = vsel %vm528, %v3642, 0
        %v3666 = vsel %vm528, %v3643, 0
        %v3669 = vsel %vm528, %v3644, 0
        %v3672 = vsel %vm528, %v3645, 0
        %v3675 = vsel %vm528, %v3646, 0
        %v3678 = vsel %vm528, %v3647, 0
        %v3681 = vsel %vm528, %v3648, 0
        %v3684 = vsel %vm528, %v3649, 0
        %v3687 = vsel %vm528, %v3650, 0
        %v3690 = vsel %vm528, %v3651, 0
        %v3693 = vsel %vm528, %v3652, 0
        %v3696 = vsel %vm528, %v3653, 0
        %v3699 = vsel %vm528, %v3654, 0
        %v3702 = vsel %vm528, %v3655, 0
        %v3705 = vsel %vm528, %v3656, 0
        %v3708 = vsel %vm528, %v3657, 0
        %v3711 = vsel %vm528, %v3658, 0
        %v3714 = vsel %vm528, %v3659, 0
        %v3717 = vsel %vm583, %v3661, 0
        %3719 = vmatprep.subr.bf16.mxu0 0
        %3720 = vmatpush1.bf16.msra.mxu0 0
        %3721 = vmatprep.subr.bf16.mxu0 0
        %3722 = vmatpush1.bf16.msra.mxu0 0
        %3723 = vmatprep.subr.bf16.mxu0 0
        %3724 = vmatpush1.bf16.msra.mxu0 0
        %3725 = vmatprep.subr.bf16.mxu0 0
        %3726 = vmatpush1.bf16.msra.mxu0 0
        %3727 = vmatprep.subr.bf16.mxu0 0
        %3728 = vmatpush1.bf16.msra.mxu0 0
        %3729 = vmatprep.subr.bf16.mxu0 0
        %3730 = vmatpush1.bf16.msra.mxu0 0
        %3731 = vmatprep.subr.bf16.mxu0 0
        %3732 = vmatpush1.bf16.msra.mxu0 0
        %3733 = vmatprep.subr.bf16.mxu0 0
        %3734 = vmatpush1.bf16.msra.mxu0 %v3717
        %3735 = vmatprep.subr.bf16.mxu0 0
        %3736 = vmatpush2.bf16.msra.mxu0 0
        %3737 = vmatprep.subr.bf16.mxu0 0
        %3738 = vmatpush2.bf16.msra.mxu0 0
        %3739 = vmatprep.subr.bf16.mxu0 0
        %3740 = vmatpush2.bf16.msra.mxu0 0
        %3741 = vmatprep.subr.bf16.mxu0 0
        %3742 = vmatpush2.bf16.msra.mxu0 0
        %3743 = vmatprep.subr.bf16.mxu0 0
        %3744 = vmatpush2.bf16.msra.mxu0 0
        %3745 = vmatprep.subr.bf16.mxu0 0
        %3746 = vmatpush2.bf16.msra.mxu0 0
        %3747 = vmatprep.subr.bf16.mxu0 0
        %3748 = vmatpush2.bf16.msra.mxu0 0
        %3749 = vmatprep.subr.bf16.mxu0 0
        %3750 = vmatpush2.bf16.msra.mxu0 0
        %3751 = vmatprep.mubr.bf16.mxu0 0
        %3752 = vmatmul.mubr.bf16.gmra.mxu0 %v3663
        %v3753 = vpop.f32.mrf.mxu0
        %v3754 = vadd.f32 0.0, %v3753
        %v3755 = vpop.f32.mrf.mxu0
        %v3756 = vpop.f32.mrf.mxu0
        %v3757 = vadd.f32 0.0, %v3756
        %v3758 = vpop.f32.mrf.mxu0
        %3759 = vmatprep.mubr.bf16.mxu0 0
        %3760 = vmatmul.mubr.bf16.gmra.mxu0 %v3666
        %v3761 = vpop.f32.mrf.mxu0
        %v3762 = vadd.f32 0.0, %v3761
        %v3763 = vpop.f32.mrf.mxu0
        %v3764 = vpop.f32.mrf.mxu0
        %v3765 = vadd.f32 0.0, %v3764
        %v3766 = vpop.f32.mrf.mxu0
        %3767 = vmatprep.mubr.bf16.mxu0 0
        %3768 = vmatmul.mubr.bf16.gmra.mxu0 %v3669
        %v3769 = vpop.f32.mrf.mxu0
        %v3770 = vadd.f32 0.0, %v3769
        %v3771 = vpop.f32.mrf.mxu0
        %v3772 = vpop.f32.mrf.mxu0
        %v3773 = vadd.f32 0.0, %v3772
        %v3774 = vpop.f32.mrf.mxu0
        %3775 = vmatprep.mubr.bf16.mxu0 0
        %3776 = vmatmul.mubr.bf16.gmra.mxu0 %v3672
        %v3777 = vpop.f32.mrf.mxu0
        %v3778 = vadd.f32 0.0, %v3777
        %v3779 = vpop.f32.mrf.mxu0
        %v3780 = vpop.f32.mrf.mxu0
        %v3781 = vadd.f32 0.0, %v3780
        %v3782 = vpop.f32.mrf.mxu0
        %3783 = vmatprep.mubr.bf16.mxu0 0
        %3784 = vmatmul.mubr.bf16.gmra.mxu0 %v3675
        %v3785 = vpop.f32.mrf.mxu0
        %v3786 = vadd.f32 0.0, %v3785
        %v3787 = vpop.f32.mrf.mxu0
        %v3788 = vpop.f32.mrf.mxu0
        %v3789 = vadd.f32 0.0, %v3788
        %v3790 = vpop.f32.mrf.mxu0
        %3791 = vmatprep.mubr.bf16.mxu0 0
        %3792 = vmatmul.mubr.bf16.gmra.mxu0 %v3678
        %v3793 = vpop.f32.mrf.mxu0
        %v3794 = vadd.f32 0.0, %v3793
        %v3795 = vpop.f32.mrf.mxu0
        %v3796 = vpop.f32.mrf.mxu0
        %v3797 = vadd.f32 0.0, %v3796
        %v3798 = vpop.f32.mrf.mxu0
        %3799 = vmatprep.mubr.bf16.mxu0 0
        %3800 = vmatmul.mubr.bf16.gmra.mxu0 %v3681
        %v3801 = vpop.f32.mrf.mxu0
        %v3802 = vadd.f32 0.0, %v3801
        %v3803 = vpop.f32.mrf.mxu0
        %v3804 = vpop.f32.mrf.mxu0
        %v3805 = vadd.f32 0.0, %v3804
        %v3806 = vpop.f32.mrf.mxu0
        %3807 = vmatprep.mubr.bf16.mxu0 0
        %3808 = vmatmul.mubr.bf16.gmra.mxu0 %v3684
        %v3809 = vpop.f32.mrf.mxu0
        %v3810 = vadd.f32 0.0, %v3809
        %v3811 = vpop.f32.mrf.mxu0
        %v3812 = vpop.f32.mrf.mxu0
        %v3813 = vadd.f32 0.0, %v3812
        %v3814 = vpop.f32.mrf.mxu0
        %3815 = vmatprep.mubr.bf16.mxu0 0
        %3816 = vmatmul.mubr.bf16.gmra.mxu0 %v3687
        %v3817 = vpop.f32.mrf.mxu0
        %v3818 = vadd.f32 0.0, %v3817
        %v3819 = vpop.f32.mrf.mxu0
        %v3820 = vpop.f32.mrf.mxu0
        %v3821 = vadd.f32 0.0, %v3820
        %v3822 = vpop.f32.mrf.mxu0
        %3823 = vmatprep.mubr.bf16.mxu0 0
        %3824 = vmatmul.mubr.bf16.gmra.mxu0 %v3690
        %v3825 = vpop.f32.mrf.mxu0
        %v3826 = vadd.f32 0.0, %v3825
        %v3827 = vpop.f32.mrf.mxu0
        %v3828 = vpop.f32.mrf.mxu0
        %v3829 = vadd.f32 0.0, %v3828
        %v3830 = vpop.f32.mrf.mxu0
        %3831 = vmatprep.mubr.bf16.mxu0 0
        %3832 = vmatmul.mubr.bf16.gmra.mxu0 %v3693
        %v3833 = vpop.f32.mrf.mxu0
        %v3834 = vadd.f32 0.0, %v3833
        %v3835 = vpop.f32.mrf.mxu0
        %v3836 = vpop.f32.mrf.mxu0
        %v3837 = vadd.f32 0.0, %v3836
        %v3838 = vpop.f32.mrf.mxu0
        %3839 = vmatprep.mubr.bf16.mxu0 0
        %3840 = vmatmul.mubr.bf16.gmra.mxu0 %v3696
        %v3841 = vpop.f32.mrf.mxu0
        %v3842 = vadd.f32 0.0, %v3841
        %v3843 = vpop.f32.mrf.mxu0
        %v3844 = vpop.f32.mrf.mxu0
        %v3845 = vadd.f32 0.0, %v3844
        %v3846 = vpop.f32.mrf.mxu0
        %3847 = vmatprep.mubr.bf16.mxu0 0
        %3848 = vmatmul.mubr.bf16.gmra.mxu0 %v3699
        %v3849 = vpop.f32.mrf.mxu0
        %v3850 = vadd.f32 0.0, %v3849
        %v3851 = vpop.f32.mrf.mxu0
        %v3852 = vpop.f32.mrf.mxu0
        %v3853 = vadd.f32 0.0, %v3852
        %v3854 = vpop.f32.mrf.mxu0
        %3855 = vmatprep.mubr.bf16.mxu0 0
        %3856 = vmatmul.mubr.bf16.gmra.mxu0 %v3702
        %v3857 = vpop.f32.mrf.mxu0
        %v3858 = vadd.f32 0.0, %v3857
        %v3859 = vpop.f32.mrf.mxu0
        %v3860 = vpop.f32.mrf.mxu0
        %v3861 = vadd.f32 0.0, %v3860
        %v3862 = vpop.f32.mrf.mxu0
        %3863 = vmatprep.mubr.bf16.mxu0 0
        %3864 = vmatmul.mubr.bf16.gmra.mxu0 %v3705
        %v3865 = vpop.f32.mrf.mxu0
        %v3866 = vadd.f32 0.0, %v3865
        %v3867 = vpop.f32.mrf.mxu0
        %v3868 = vpop.f32.mrf.mxu0
        %v3869 = vadd.f32 0.0, %v3868
        %v3870 = vpop.f32.mrf.mxu0
        %3871 = vmatprep.mubr.bf16.mxu0 0
        %3872 = vmatmul.mubr.bf16.gmra.mxu0 %v3708
        %v3873 = vpop.f32.mrf.mxu0
        %v3874 = vadd.f32 0.0, %v3873
        %v3875 = vpop.f32.mrf.mxu0
        %v3876 = vpop.f32.mrf.mxu0
        %v3877 = vadd.f32 0.0, %v3876
        %v3878 = vpop.f32.mrf.mxu0
        %3879 = vmatprep.mubr.bf16.mxu0 0
        %3880 = vmatmul.mubr.bf16.gmra.mxu0 %v3711
        %v3881 = vpop.f32.mrf.mxu0
        %v3882 = vadd.f32 0.0, %v3881
        %v3883 = vpop.f32.mrf.mxu0
        %v3884 = vpop.f32.mrf.mxu0
        %v3885 = vadd.f32 0.0, %v3884
        %v3886 = vpop.f32.mrf.mxu0
        %3887 = vmatprep.mubr.bf16.mxu0 0
        %3888 = vmatmul.mubr.bf16.gmra.mxu0 %v3714
        %v3889 = vpop.f32.mrf.mxu0
        %v3890 = vadd.f32 0.0, %v3889
        %v3891 = vpop.f32.mrf.mxu0
        %v3892 = vpop.f32.mrf.mxu0
        %v3893 = vadd.f32 0.0, %v3892
        %v3894 = vpop.f32.mrf.mxu0
        %3895 = vdwg.mxu0
        %v3896 = vadd.f32 %v3570, %v3754
        %v3897 = vadd.f32 %v3571, %v3757
        %v3898 = vadd.f32 %v3572, %v3762
        %v3899 = vadd.f32 %v3573, %v3765
        %v3900 = vadd.f32 %v3574, %v3770
        %v3901 = vadd.f32 %v3575, %v3773
        %v3902 = vadd.f32 %v3576, %v3778
        %v3903 = vadd.f32 %v3577, %v3781
        %v3904 = vadd.f32 %v3578, %v3786
        %v3905 = vadd.f32 %v3579, %v3789
        %v3906 = vadd.f32 %v3580, %v3794
        %v3907 = vadd.f32 %v3581, %v3797
        %v3908 = vadd.f32 %v3582, %v3802
        %v3909 = vadd.f32 %v3583, %v3805
        %v3910 = vadd.f32 %v3584, %v3810
        %v3911 = vadd.f32 %v3585, %v3813
        %v3912 = vadd.f32 %v3586, %v3818
        %v3913 = vadd.f32 %v3587, %v3821
        %v3914 = vadd.f32 %v3588, %v3826
        %v3915 = vadd.f32 %v3589, %v3829
        %v3916 = vadd.f32 %v3590, %v3834
        %v3917 = vadd.f32 %v3591, %v3837
        %v3918 = vadd.f32 %v3592, %v3842
        %v3919 = vadd.f32 %v3593, %v3845
        %v3920 = vadd.f32 %v3594, %v3850
        %v3921 = vadd.f32 %v3595, %v3853
        %v3922 = vadd.f32 %v3596, %v3858
        %v3923 = vadd.f32 %v3597, %v3861
        %v3924 = vadd.f32 %v3598, %v3866
        %v3925 = vadd.f32 %v3599, %v3869
        %v3926 = vadd.f32 %v3600, %v3874
        %v3927 = vadd.f32 %v3601, %v3877
        %v3928 = vadd.f32 %v3602, %v3882
        %v3929 = vadd.f32 %v3603, %v3885
        %v3930 = vadd.f32 %v3604, %v3890
        %v3931 = vadd.f32 %v3605, %v3893
        %v3932 = vld [vmem:[%s394 + $0x2] sm:$0xff]
        %v3933 = vld [vmem:[%s394 + $0xa] sm:$0xff]
        %v3934 = vld [vmem:[%s394 + $0x12] sm:$0xff]
        %v3935 = vld [vmem:[%s394 + $0x1a] sm:$0xff]
        %v3936 = vld [vmem:[%s394 + $0x22] sm:$0xff]
        %v3937 = vld [vmem:[%s394 + $0x2a] sm:$0xff]
        %v3938 = vld [vmem:[%s394 + $0x32] sm:$0xff]
        %v3939 = vld [vmem:[%s394 + $0x3a] sm:$0xff]
        %v3940 = vld [vmem:[%s394 + $0x42] sm:$0xff]
        %v3941 = vld [vmem:[%s394 + $0x4a] sm:$0xff]
        %v3942 = vld [vmem:[%s394 + $0x52] sm:$0xff]
        %v3943 = vld [vmem:[%s394 + $0x5a] sm:$0xff]
        %v3944 = vld [vmem:[%s394 + $0x62] sm:$0xff]
        %v3945 = vld [vmem:[%s394 + $0x6a] sm:$0xff]
        %v3946 = vld [vmem:[%s394 + $0x72] sm:$0xff]
        %v3947 = vld [vmem:[%s394 + $0x7a] sm:$0xff]
        %v3948 = vld [vmem:[%s394 + $0x82] sm:$0xff]
        %v3949 = vld [vmem:[%s394 + $0x8a] sm:$0xff]
        %v3950 = vld [vmem:[%s394 + $0x92] sm:$0xff]
        %v3951 = vld [vmem:[%s394 + $0x9a] sm:$0xff]
        %v3952 = vld [vmem:[%s394 + $0xa2] sm:$0xff]
        %v3953 = vld [vmem:[%s394 + $0xaa] sm:$0xff]
        %v3954 = vld [vmem:[%s394 + $0xb2] sm:$0xff]
        %v3955 = vld [vmem:[%s394 + $0xba] sm:$0xff]
        %v3956 = vld [vmem:[%s394 + $0xc2] sm:$0xff]
        %v3957 = vld [vmem:[%s394 + $0xca] sm:$0xff]
        %v3958 = vld [vmem:[%s394 + $0xd2] sm:$0xff]
        %v3959 = vld [vmem:[%s394 + $0xda] sm:$0xff]
        %v3960 = vld [vmem:[%s394 + $0xe2] sm:$0xff]
        %v3961 = vld [vmem:[%s394 + $0xea] sm:$0xff]
        %v3962 = vld [vmem:[%s394 + $0xf2] sm:$0xff]
        %v3963 = vld [vmem:[%s394 + $0xfa] sm:$0xff]
        %v3964 = vld [vmem:[%s394 + $0x102] sm:$0xff]
        %v3965 = vld [vmem:[%s394 + $0x10a] sm:$0xff]
        %v3966 = vld [vmem:[%s394 + $0x112] sm:$0xff]
        %v3967 = vld [vmem:[%s394 + $0x11a] sm:$0x3f]
        %v3968 = vpack.c.bf16 %v3933, %v3932
        %v3969 = vpack.c.bf16 %v3935, %v3934
        %v3970 = vpack.c.bf16 %v3937, %v3936
        %v3971 = vpack.c.bf16 %v3939, %v3938
        %v3972 = vpack.c.bf16 %v3941, %v3940
        %v3973 = vpack.c.bf16 %v3943, %v3942
        %v3974 = vpack.c.bf16 %v3945, %v3944
        %v3975 = vpack.c.bf16 %v3947, %v3946
        %v3976 = vpack.c.bf16 %v3949, %v3948
        %v3977 = vpack.c.bf16 %v3951, %v3950
        %v3978 = vpack.c.bf16 %v3953, %v3952
        %v3979 = vpack.c.bf16 %v3955, %v3954
        %v3980 = vpack.c.bf16 %v3957, %v3956
        %v3981 = vpack.c.bf16 %v3959, %v3958
        %v3982 = vpack.c.bf16 %v3961, %v3960
        %v3983 = vpack.c.bf16 %v3963, %v3962
        %v3984 = vpack.c.bf16 %v3965, %v3964
        %v3985 = vpack.c.bf16 %v3967, %v3966
        %s3986 = scalar_lea.vmem %s4, 22
        %v3987 = vld [vmem:[%s3986] sm:$0x3]
        %v3989 = vsel %vm528, %v3968, 0
        %v3992 = vsel %vm528, %v3969, 0
        %v3995 = vsel %vm528, %v3970, 0
        %v3998 = vsel %vm528, %v3971, 0
        %v4001 = vsel %vm528, %v3972, 0
        %v4004 = vsel %vm528, %v3973, 0
        %v4007 = vsel %vm528, %v3974, 0
        %v4010 = vsel %vm528, %v3975, 0
        %v4013 = vsel %vm528, %v3976, 0
        %v4016 = vsel %vm528, %v3977, 0
        %v4019 = vsel %vm528, %v3978, 0
        %v4022 = vsel %vm528, %v3979, 0
        %v4025 = vsel %vm528, %v3980, 0
        %v4028 = vsel %vm528, %v3981, 0
        %v4031 = vsel %vm528, %v3982, 0
        %v4034 = vsel %vm528, %v3983, 0
        %v4037 = vsel %vm528, %v3984, 0
        %v4040 = vsel %vm528, %v3985, 0
        %v4043 = vsel %vm583, %v3987, 0
        %4045 = vmatprep.subr.bf16.mxu0 0
        %4046 = vmatpush1.bf16.msra.mxu0 0
        %4047 = vmatprep.subr.bf16.mxu0 0
        %4048 = vmatpush1.bf16.msra.mxu0 0
        %4049 = vmatprep.subr.bf16.mxu0 0
        %4050 = vmatpush1.bf16.msra.mxu0 0
        %4051 = vmatprep.subr.bf16.mxu0 0
        %4052 = vmatpush1.bf16.msra.mxu0 0
        %4053 = vmatprep.subr.bf16.mxu0 0
        %4054 = vmatpush1.bf16.msra.mxu0 0
        %4055 = vmatprep.subr.bf16.mxu0 0
        %4056 = vmatpush1.bf16.msra.mxu0 0
        %4057 = vmatprep.subr.bf16.mxu0 0
        %4058 = vmatpush1.bf16.msra.mxu0 0
        %4059 = vmatprep.subr.bf16.mxu0 0
        %4060 = vmatpush1.bf16.msra.mxu0 %v4043
        %4061 = vmatprep.subr.bf16.mxu0 0
        %4062 = vmatpush2.bf16.msra.mxu0 0
        %4063 = vmatprep.subr.bf16.mxu0 0
        %4064 = vmatpush2.bf16.msra.mxu0 0
        %4065 = vmatprep.subr.bf16.mxu0 0
        %4066 = vmatpush2.bf16.msra.mxu0 0
        %4067 = vmatprep.subr.bf16.mxu0 0
        %4068 = vmatpush2.bf16.msra.mxu0 0
        %4069 = vmatprep.subr.bf16.mxu0 0
        %4070 = vmatpush2.bf16.msra.mxu0 0
        %4071 = vmatprep.subr.bf16.mxu0 0
        %4072 = vmatpush2.bf16.msra.mxu0 0
        %4073 = vmatprep.subr.bf16.mxu0 0
        %4074 = vmatpush2.bf16.msra.mxu0 0
        %4075 = vmatprep.subr.bf16.mxu0 0
        %4076 = vmatpush2.bf16.msra.mxu0 0
        %4077 = vmatprep.mubr.bf16.mxu0 0
        %4078 = vmatmul.mubr.bf16.gmra.mxu0 %v3989
        %v4079 = vpop.f32.mrf.mxu0
        %v4080 = vadd.f32 0.0, %v4079
        %v4081 = vpop.f32.mrf.mxu0
        %v4082 = vpop.f32.mrf.mxu0
        %v4083 = vadd.f32 0.0, %v4082
        %v4084 = vpop.f32.mrf.mxu0
        %4085 = vmatprep.mubr.bf16.mxu0 0
        %4086 = vmatmul.mubr.bf16.gmra.mxu0 %v3992
        %v4087 = vpop.f32.mrf.mxu0
        %v4088 = vadd.f32 0.0, %v4087
        %v4089 = vpop.f32.mrf.mxu0
        %v4090 = vpop.f32.mrf.mxu0
        %v4091 = vadd.f32 0.0, %v4090
        %v4092 = vpop.f32.mrf.mxu0
        %4093 = vmatprep.mubr.bf16.mxu0 0
        %4094 = vmatmul.mubr.bf16.gmra.mxu0 %v3995
        %v4095 = vpop.f32.mrf.mxu0
        %v4096 = vadd.f32 0.0, %v4095
        %v4097 = vpop.f32.mrf.mxu0
        %v4098 = vpop.f32.mrf.mxu0
        %v4099 = vadd.f32 0.0, %v4098
        %v4100 = vpop.f32.mrf.mxu0
        %4101 = vmatprep.mubr.bf16.mxu0 0
        %4102 = vmatmul.mubr.bf16.gmra.mxu0 %v3998
        %v4103 = vpop.f32.mrf.mxu0
        %v4104 = vadd.f32 0.0, %v4103
        %v4105 = vpop.f32.mrf.mxu0
        %v4106 = vpop.f32.mrf.mxu0
        %v4107 = vadd.f32 0.0, %v4106
        %v4108 = vpop.f32.mrf.mxu0
        %4109 = vmatprep.mubr.bf16.mxu0 0
        %4110 = vmatmul.mubr.bf16.gmra.mxu0 %v4001
        %v4111 = vpop.f32.mrf.mxu0
        %v4112 = vadd.f32 0.0, %v4111
        %v4113 = vpop.f32.mrf.mxu0
        %v4114 = vpop.f32.mrf.mxu0
        %v4115 = vadd.f32 0.0, %v4114
        %v4116 = vpop.f32.mrf.mxu0
        %4117 = vmatprep.mubr.bf16.mxu0 0
        %4118 = vmatmul.mubr.bf16.gmra.mxu0 %v4004
        %v4119 = vpop.f32.mrf.mxu0
        %v4120 = vadd.f32 0.0, %v4119
        %v4121 = vpop.f32.mrf.mxu0
        %v4122 = vpop.f32.mrf.mxu0
        %v4123 = vadd.f32 0.0, %v4122
        %v4124 = vpop.f32.mrf.mxu0
        %4125 = vmatprep.mubr.bf16.mxu0 0
        %4126 = vmatmul.mubr.bf16.gmra.mxu0 %v4007
        %v4127 = vpop.f32.mrf.mxu0
        %v4128 = vadd.f32 0.0, %v4127
        %v4129 = vpop.f32.mrf.mxu0
        %v4130 = vpop.f32.mrf.mxu0
        %v4131 = vadd.f32 0.0, %v4130
        %v4132 = vpop.f32.mrf.mxu0
        %4133 = vmatprep.mubr.bf16.mxu0 0
        %4134 = vmatmul.mubr.bf16.gmra.mxu0 %v4010
        %v4135 = vpop.f32.mrf.mxu0
        %v4136 = vadd.f32 0.0, %v4135
        %v4137 = vpop.f32.mrf.mxu0
        %v4138 = vpop.f32.mrf.mxu0
        %v4139 = vadd.f32 0.0, %v4138
        %v4140 = vpop.f32.mrf.mxu0
        %4141 = vmatprep.mubr.bf16.mxu0 0
        %4142 = vmatmul.mubr.bf16.gmra.mxu0 %v4013
        %v4143 = vpop.f32.mrf.mxu0
        %v4144 = vadd.f32 0.0, %v4143
        %v4145 = vpop.f32.mrf.mxu0
        %v4146 = vpop.f32.mrf.mxu0
        %v4147 = vadd.f32 0.0, %v4146
        %v4148 = vpop.f32.mrf.mxu0
        %4149 = vmatprep.mubr.bf16.mxu0 0
        %4150 = vmatmul.mubr.bf16.gmra.mxu0 %v4016
        %v4151 = vpop.f32.mrf.mxu0
        %v4152 = vadd.f32 0.0, %v4151
        %v4153 = vpop.f32.mrf.mxu0
        %v4154 = vpop.f32.mrf.mxu0
        %v4155 = vadd.f32 0.0, %v4154
        %v4156 = vpop.f32.mrf.mxu0
        %4157 = vmatprep.mubr.bf16.mxu0 0
        %4158 = vmatmul.mubr.bf16.gmra.mxu0 %v4019
        %v4159 = vpop.f32.mrf.mxu0
        %v4160 = vadd.f32 0.0, %v4159
        %v4161 = vpop.f32.mrf.mxu0
        %v4162 = vpop.f32.mrf.mxu0
        %v4163 = vadd.f32 0.0, %v4162
        %v4164 = vpop.f32.mrf.mxu0
        %4165 = vmatprep.mubr.bf16.mxu0 0
        %4166 = vmatmul.mubr.bf16.gmra.mxu0 %v4022
        %v4167 = vpop.f32.mrf.mxu0
        %v4168 = vadd.f32 0.0, %v4167
        %v4169 = vpop.f32.mrf.mxu0
        %v4170 = vpop.f32.mrf.mxu0
        %v4171 = vadd.f32 0.0, %v4170
        %v4172 = vpop.f32.mrf.mxu0
        %4173 = vmatprep.mubr.bf16.mxu0 0
        %4174 = vmatmul.mubr.bf16.gmra.mxu0 %v4025
        %v4175 = vpop.f32.mrf.mxu0
        %v4176 = vadd.f32 0.0, %v4175
        %v4177 = vpop.f32.mrf.mxu0
        %v4178 = vpop.f32.mrf.mxu0
        %v4179 = vadd.f32 0.0, %v4178
        %v4180 = vpop.f32.mrf.mxu0
        %4181 = vmatprep.mubr.bf16.mxu0 0
        %4182 = vmatmul.mubr.bf16.gmra.mxu0 %v4028
        %v4183 = vpop.f32.mrf.mxu0
        %v4184 = vadd.f32 0.0, %v4183
        %v4185 = vpop.f32.mrf.mxu0
        %v4186 = vpop.f32.mrf.mxu0
        %v4187 = vadd.f32 0.0, %v4186
        %v4188 = vpop.f32.mrf.mxu0
        %4189 = vmatprep.mubr.bf16.mxu0 0
        %4190 = vmatmul.mubr.bf16.gmra.mxu0 %v4031
        %v4191 = vpop.f32.mrf.mxu0
        %v4192 = vadd.f32 0.0, %v4191
        %v4193 = vpop.f32.mrf.mxu0
        %v4194 = vpop.f32.mrf.mxu0
        %v4195 = vadd.f32 0.0, %v4194
        %v4196 = vpop.f32.mrf.mxu0
        %4197 = vmatprep.mubr.bf16.mxu0 0
        %4198 = vmatmul.mubr.bf16.gmra.mxu0 %v4034
        %v4199 = vpop.f32.mrf.mxu0
        %v4200 = vadd.f32 0.0, %v4199
        %v4201 = vpop.f32.mrf.mxu0
        %v4202 = vpop.f32.mrf.mxu0
        %v4203 = vadd.f32 0.0, %v4202
        %v4204 = vpop.f32.mrf.mxu0
        %4205 = vmatprep.mubr.bf16.mxu0 0
        %4206 = vmatmul.mubr.bf16.gmra.mxu0 %v4037
        %v4207 = vpop.f32.mrf.mxu0
        %v4208 = vadd.f32 0.0, %v4207
        %v4209 = vpop.f32.mrf.mxu0
        %v4210 = vpop.f32.mrf.mxu0
        %v4211 = vadd.f32 0.0, %v4210
        %v4212 = vpop.f32.mrf.mxu0
        %4213 = vmatprep.mubr.bf16.mxu0 0
        %4214 = vmatmul.mubr.bf16.gmra.mxu0 %v4040
        %v4215 = vpop.f32.mrf.mxu0
        %v4216 = vadd.f32 0.0, %v4215
        %v4217 = vpop.f32.mrf.mxu0
        %v4218 = vpop.f32.mrf.mxu0
        %v4219 = vadd.f32 0.0, %v4218
        %v4220 = vpop.f32.mrf.mxu0
        %4221 = vdwg.mxu0
        %v4222 = vadd.f32 %v3896, %v4080
        %v4223 = vadd.f32 %v3897, %v4083
        %v4224 = vadd.f32 %v3898, %v4088
        %v4225 = vadd.f32 %v3899, %v4091
        %v4226 = vadd.f32 %v3900, %v4096
        %v4227 = vadd.f32 %v3901, %v4099
        %v4228 = vadd.f32 %v3902, %v4104
        %v4229 = vadd.f32 %v3903, %v4107
        %v4230 = vadd.f32 %v3904, %v4112
        %v4231 = vadd.f32 %v3905, %v4115
        %v4232 = vadd.f32 %v3906, %v4120
        %v4233 = vadd.f32 %v3907, %v4123
        %v4234 = vadd.f32 %v3908, %v4128
        %v4235 = vadd.f32 %v3909, %v4131
        %v4236 = vadd.f32 %v3910, %v4136
        %v4237 = vadd.f32 %v3911, %v4139
        %v4238 = vadd.f32 %v3912, %v4144
        %v4239 = vadd.f32 %v3913, %v4147
        %v4240 = vadd.f32 %v3914, %v4152
        %v4241 = vadd.f32 %v3915, %v4155
        %v4242 = vadd.f32 %v3916, %v4160
        %v4243 = vadd.f32 %v3917, %v4163
        %v4244 = vadd.f32 %v3918, %v4168
        %v4245 = vadd.f32 %v3919, %v4171
        %v4246 = vadd.f32 %v3920, %v4176
        %v4247 = vadd.f32 %v3921, %v4179
        %v4248 = vadd.f32 %v3922, %v4184
        %v4249 = vadd.f32 %v3923, %v4187
        %v4250 = vadd.f32 %v3924, %v4192
        %v4251 = vadd.f32 %v3925, %v4195
        %v4252 = vadd.f32 %v3926, %v4200
        %v4253 = vadd.f32 %v3927, %v4203
        %v4254 = vadd.f32 %v3928, %v4208
        %v4255 = vadd.f32 %v3929, %v4211
        %v4256 = vadd.f32 %v3930, %v4216
        %v4257 = vadd.f32 %v3931, %v4219
        %v4258 = vld [vmem:[%s394 + $0x12] sm:$0xff]
        %v4259 = vld [vmem:[%s394 + $0x1a] sm:$0xff]
        %v4260 = vld [vmem:[%s394 + $0x22] sm:$0xff]
        %v4261 = vld [vmem:[%s394 + $0x2a] sm:$0xff]
        %v4262 = vld [vmem:[%s394 + $0x32] sm:$0xff]
        %v4263 = vld [vmem:[%s394 + $0x3a] sm:$0xff]
        %v4264 = vld [vmem:[%s394 + $0x42] sm:$0xff]
        %v4265 = vld [vmem:[%s394 + $0x4a] sm:$0xff]
        %v4266 = vld [vmem:[%s394 + $0x52] sm:$0xff]
        %v4267 = vld [vmem:[%s394 + $0x5a] sm:$0xff]
        %v4268 = vld [vmem:[%s394 + $0x62] sm:$0xff]
        %v4269 = vld [vmem:[%s394 + $0x6a] sm:$0xff]
        %v4270 = vld [vmem:[%s394 + $0x72] sm:$0xff]
        %v4271 = vld [vmem:[%s394 + $0x7a] sm:$0xff]
        %v4272 = vld [vmem:[%s394 + $0x82] sm:$0xff]
        %v4273 = vld [vmem:[%s394 + $0x8a] sm:$0xff]
        %v4274 = vld [vmem:[%s394 + $0x92] sm:$0xff]
        %v4275 = vld [vmem:[%s394 + $0x9a] sm:$0xff]
        %v4276 = vld [vmem:[%s394 + $0xa2] sm:$0xff]
        %v4277 = vld [vmem:[%s394 + $0xaa] sm:$0xff]
        %v4278 = vld [vmem:[%s394 + $0xb2] sm:$0xff]
        %v4279 = vld [vmem:[%s394 + $0xba] sm:$0xff]
        %v4280 = vld [vmem:[%s394 + $0xc2] sm:$0xff]
        %v4281 = vld [vmem:[%s394 + $0xca] sm:$0xff]
        %v4282 = vld [vmem:[%s394 + $0xd2] sm:$0xff]
        %v4283 = vld [vmem:[%s394 + $0xda] sm:$0xff]
        %v4284 = vld [vmem:[%s394 + $0xe2] sm:$0xff]
        %v4285 = vld [vmem:[%s394 + $0xea] sm:$0xff]
        %v4286 = vld [vmem:[%s394 + $0xf2] sm:$0xff]
        %v4287 = vld [vmem:[%s394 + $0xfa] sm:$0xff]
        %v4288 = vld [vmem:[%s394 + $0x102] sm:$0xff]
        %v4289 = vld [vmem:[%s394 + $0x10a] sm:$0xff]
        %v4290 = vld [vmem:[%s394 + $0x112] sm:$0xff]
        %v4291 = vld [vmem:[%s394 + $0x11a] sm:$0xff]
        %v4292 = vld [vmem:[%s394 + $0x122] sm:$0xff]
        %v4293 = vld [vmem:[%s394 + $0x12a] sm:$0x3f]
        %v4294 = vpack.c.bf16 %v4259, %v4258
        %v4295 = vpack.c.bf16 %v4261, %v4260
        %v4296 = vpack.c.bf16 %v4263, %v4262
        %v4297 = vpack.c.bf16 %v4265, %v4264
        %v4298 = vpack.c.bf16 %v4267, %v4266
        %v4299 = vpack.c.bf16 %v4269, %v4268
        %v4300 = vpack.c.bf16 %v4271, %v4270
        %v4301 = vpack.c.bf16 %v4273, %v4272
        %v4302 = vpack.c.bf16 %v4275, %v4274
        %v4303 = vpack.c.bf16 %v4277, %v4276
        %v4304 = vpack.c.bf16 %v4279, %v4278
        %v4305 = vpack.c.bf16 %v4281, %v4280
        %v4306 = vpack.c.bf16 %v4283, %v4282
        %v4307 = vpack.c.bf16 %v4285, %v4284
        %v4308 = vpack.c.bf16 %v4287, %v4286
        %v4309 = vpack.c.bf16 %v4289, %v4288
        %v4310 = vpack.c.bf16 %v4291, %v4290
        %v4311 = vpack.c.bf16 %v4293, %v4292
        %s4312 = scalar_lea.vmem %s4, 24
        %v4313 = vld [vmem:[%s4312] sm:$0x3]
        %v4315 = vsel %vm528, %v4294, 0
        %v4318 = vsel %vm528, %v4295, 0
        %v4321 = vsel %vm528, %v4296, 0
        %v4324 = vsel %vm528, %v4297, 0
        %v4327 = vsel %vm528, %v4298, 0
        %v4330 = vsel %vm528, %v4299, 0
        %v4333 = vsel %vm528, %v4300, 0
        %v4336 = vsel %vm528, %v4301, 0
        %v4339 = vsel %vm528, %v4302, 0
        %v4342 = vsel %vm528, %v4303, 0
        %v4345 = vsel %vm528, %v4304, 0
        %v4348 = vsel %vm528, %v4305, 0
        %v4351 = vsel %vm528, %v4306, 0
        %v4354 = vsel %vm528, %v4307, 0
        %v4357 = vsel %vm528, %v4308, 0
        %v4360 = vsel %vm528, %v4309, 0
        %v4363 = vsel %vm528, %v4310, 0
        %v4366 = vsel %vm528, %v4311, 0
        %v4369 = vsel %vm583, %v4313, 0
        %4371 = vmatprep.subr.bf16.mxu0 0
        %4372 = vmatpush1.bf16.msra.mxu0 0
        %4373 = vmatprep.subr.bf16.mxu0 0
        %4374 = vmatpush1.bf16.msra.mxu0 0
        %4375 = vmatprep.subr.bf16.mxu0 0
        %4376 = vmatpush1.bf16.msra.mxu0 0
        %4377 = vmatprep.subr.bf16.mxu0 0
        %4378 = vmatpush1.bf16.msra.mxu0 0
        %4379 = vmatprep.subr.bf16.mxu0 0
        %4380 = vmatpush1.bf16.msra.mxu0 0
        %4381 = vmatprep.subr.bf16.mxu0 0
        %4382 = vmatpush1.bf16.msra.mxu0 0
        %4383 = vmatprep.subr.bf16.mxu0 0
        %4384 = vmatpush1.bf16.msra.mxu0 0
        %4385 = vmatprep.subr.bf16.mxu0 0
        %4386 = vmatpush1.bf16.msra.mxu0 %v4369
        %4387 = vmatprep.subr.bf16.mxu0 0
        %4388 = vmatpush2.bf16.msra.mxu0 0
        %4389 = vmatprep.subr.bf16.mxu0 0
        %4390 = vmatpush2.bf16.msra.mxu0 0
        %4391 = vmatprep.subr.bf16.mxu0 0
        %4392 = vmatpush2.bf16.msra.mxu0 0
        %4393 = vmatprep.subr.bf16.mxu0 0
        %4394 = vmatpush2.bf16.msra.mxu0 0
        %4395 = vmatprep.subr.bf16.mxu0 0
        %4396 = vmatpush2.bf16.msra.mxu0 0
        %4397 = vmatprep.subr.bf16.mxu0 0
        %4398 = vmatpush2.bf16.msra.mxu0 0
        %4399 = vmatprep.subr.bf16.mxu0 0
        %4400 = vmatpush2.bf16.msra.mxu0 0
        %4401 = vmatprep.subr.bf16.mxu0 0
        %4402 = vmatpush2.bf16.msra.mxu0 0
        %4403 = vmatprep.mubr.bf16.mxu0 0
        %4404 = vmatmul.mubr.bf16.gmra.mxu0 %v4315
        %v4405 = vpop.f32.mrf.mxu0
        %v4406 = vadd.f32 0.0, %v4405
        %v4407 = vpop.f32.mrf.mxu0
        %v4408 = vpop.f32.mrf.mxu0
        %v4409 = vadd.f32 0.0, %v4408
        %v4410 = vpop.f32.mrf.mxu0
        %4411 = vmatprep.mubr.bf16.mxu0 0
        %4412 = vmatmul.mubr.bf16.gmra.mxu0 %v4318
        %v4413 = vpop.f32.mrf.mxu0
        %v4414 = vadd.f32 0.0, %v4413
        %v4415 = vpop.f32.mrf.mxu0
        %v4416 = vpop.f32.mrf.mxu0
        %v4417 = vadd.f32 0.0, %v4416
        %v4418 = vpop.f32.mrf.mxu0
        %4419 = vmatprep.mubr.bf16.mxu0 0
        %4420 = vmatmul.mubr.bf16.gmra.mxu0 %v4321
        %v4421 = vpop.f32.mrf.mxu0
        %v4422 = vadd.f32 0.0, %v4421
        %v4423 = vpop.f32.mrf.mxu0
        %v4424 = vpop.f32.mrf.mxu0
        %v4425 = vadd.f32 0.0, %v4424
        %v4426 = vpop.f32.mrf.mxu0
        %4427 = vmatprep.mubr.bf16.mxu0 0
        %4428 = vmatmul.mubr.bf16.gmra.mxu0 %v4324
        %v4429 = vpop.f32.mrf.mxu0
        %v4430 = vadd.f32 0.0, %v4429
        %v4431 = vpop.f32.mrf.mxu0
        %v4432 = vpop.f32.mrf.mxu0
        %v4433 = vadd.f32 0.0, %v4432
        %v4434 = vpop.f32.mrf.mxu0
        %4435 = vmatprep.mubr.bf16.mxu0 0
        %4436 = vmatmul.mubr.bf16.gmra.mxu0 %v4327
        %v4437 = vpop.f32.mrf.mxu0
        %v4438 = vadd.f32 0.0, %v4437
        %v4439 = vpop.f32.mrf.mxu0
        %v4440 = vpop.f32.mrf.mxu0
        %v4441 = vadd.f32 0.0, %v4440
        %v4442 = vpop.f32.mrf.mxu0
        %4443 = vmatprep.mubr.bf16.mxu0 0
        %4444 = vmatmul.mubr.bf16.gmra.mxu0 %v4330
        %v4445 = vpop.f32.mrf.mxu0
        %v4446 = vadd.f32 0.0, %v4445
        %v4447 = vpop.f32.mrf.mxu0
        %v4448 = vpop.f32.mrf.mxu0
        %v4449 = vadd.f32 0.0, %v4448
        %v4450 = vpop.f32.mrf.mxu0
        %4451 = vmatprep.mubr.bf16.mxu0 0
        %4452 = vmatmul.mubr.bf16.gmra.mxu0 %v4333
        %v4453 = vpop.f32.mrf.mxu0
        %v4454 = vadd.f32 0.0, %v4453
        %v4455 = vpop.f32.mrf.mxu0
        %v4456 = vpop.f32.mrf.mxu0
        %v4457 = vadd.f32 0.0, %v4456
        %v4458 = vpop.f32.mrf.mxu0
        %4459 = vmatprep.mubr.bf16.mxu0 0
        %4460 = vmatmul.mubr.bf16.gmra.mxu0 %v4336
        %v4461 = vpop.f32.mrf.mxu0
        %v4462 = vadd.f32 0.0, %v4461
        %v4463 = vpop.f32.mrf.mxu0
        %v4464 = vpop.f32.mrf.mxu0
        %v4465 = vadd.f32 0.0, %v4464
        %v4466 = vpop.f32.mrf.mxu0
        %4467 = vmatprep.mubr.bf16.mxu0 0
        %4468 = vmatmul.mubr.bf16.gmra.mxu0 %v4339
        %v4469 = vpop.f32.mrf.mxu0
        %v4470 = vadd.f32 0.0, %v4469
        %v4471 = vpop.f32.mrf.mxu0
        %v4472 = vpop.f32.mrf.mxu0
        %v4473 = vadd.f32 0.0, %v4472
        %v4474 = vpop.f32.mrf.mxu0
        %4475 = vmatprep.mubr.bf16.mxu0 0
        %4476 = vmatmul.mubr.bf16.gmra.mxu0 %v4342
        %v4477 = vpop.f32.mrf.mxu0
        %v4478 = vadd.f32 0.0, %v4477
        %v4479 = vpop.f32.mrf.mxu0
        %v4480 = vpop.f32.mrf.mxu0
        %v4481 = vadd.f32 0.0, %v4480
        %v4482 = vpop.f32.mrf.mxu0
        %4483 = vmatprep.mubr.bf16.mxu0 0
        %4484 = vmatmul.mubr.bf16.gmra.mxu0 %v4345
        %v4485 = vpop.f32.mrf.mxu0
        %v4486 = vadd.f32 0.0, %v4485
        %v4487 = vpop.f32.mrf.mxu0
        %v4488 = vpop.f32.mrf.mxu0
        %v4489 = vadd.f32 0.0, %v4488
        %v4490 = vpop.f32.mrf.mxu0
        %4491 = vmatprep.mubr.bf16.mxu0 0
        %4492 = vmatmul.mubr.bf16.gmra.mxu0 %v4348
        %v4493 = vpop.f32.mrf.mxu0
        %v4494 = vadd.f32 0.0, %v4493
        %v4495 = vpop.f32.mrf.mxu0
        %v4496 = vpop.f32.mrf.mxu0
        %v4497 = vadd.f32 0.0, %v4496
        %v4498 = vpop.f32.mrf.mxu0
        %4499 = vmatprep.mubr.bf16.mxu0 0
        %4500 = vmatmul.mubr.bf16.gmra.mxu0 %v4351
        %v4501 = vpop.f32.mrf.mxu0
        %v4502 = vadd.f32 0.0, %v4501
        %v4503 = vpop.f32.mrf.mxu0
        %v4504 = vpop.f32.mrf.mxu0
        %v4505 = vadd.f32 0.0, %v4504
        %v4506 = vpop.f32.mrf.mxu0
        %4507 = vmatprep.mubr.bf16.mxu0 0
        %4508 = vmatmul.mubr.bf16.gmra.mxu0 %v4354
        %v4509 = vpop.f32.mrf.mxu0
        %v4510 = vadd.f32 0.0, %v4509
        %v4511 = vpop.f32.mrf.mxu0
        %v4512 = vpop.f32.mrf.mxu0
        %v4513 = vadd.f32 0.0, %v4512
        %v4514 = vpop.f32.mrf.mxu0
        %4515 = vmatprep.mubr.bf16.mxu0 0
        %4516 = vmatmul.mubr.bf16.gmra.mxu0 %v4357
        %v4517 = vpop.f32.mrf.mxu0
        %v4518 = vadd.f32 0.0, %v4517
        %v4519 = vpop.f32.mrf.mxu0
        %v4520 = vpop.f32.mrf.mxu0
        %v4521 = vadd.f32 0.0, %v4520
        %v4522 = vpop.f32.mrf.mxu0
        %4523 = vmatprep.mubr.bf16.mxu0 0
        %4524 = vmatmul.mubr.bf16.gmra.mxu0 %v4360
        %v4525 = vpop.f32.mrf.mxu0
        %v4526 = vadd.f32 0.0, %v4525
        %v4527 = vpop.f32.mrf.mxu0
        %v4528 = vpop.f32.mrf.mxu0
        %v4529 = vadd.f32 0.0, %v4528
        %v4530 = vpop.f32.mrf.mxu0
        %4531 = vmatprep.mubr.bf16.mxu0 0
        %4532 = vmatmul.mubr.bf16.gmra.mxu0 %v4363
        %v4533 = vpop.f32.mrf.mxu0
        %v4534 = vadd.f32 0.0, %v4533
        %v4535 = vpop.f32.mrf.mxu0
        %v4536 = vpop.f32.mrf.mxu0
        %v4537 = vadd.f32 0.0, %v4536
        %v4538 = vpop.f32.mrf.mxu0
        %4539 = vmatprep.mubr.bf16.mxu0 0
        %4540 = vmatmul.mubr.bf16.gmra.mxu0 %v4366
        %v4541 = vpop.f32.mrf.mxu0
        %v4542 = vadd.f32 0.0, %v4541
        %v4543 = vpop.f32.mrf.mxu0
        %v4544 = vpop.f32.mrf.mxu0
        %v4545 = vadd.f32 0.0, %v4544
        %v4546 = vpop.f32.mrf.mxu0
        %4547 = vdwg.mxu0
        %v4548 = vadd.f32 %v4222, %v4406
        %v4549 = vadd.f32 %v4223, %v4409
        %v4550 = vadd.f32 %v4224, %v4414
        %v4551 = vadd.f32 %v4225, %v4417
        %v4552 = vadd.f32 %v4226, %v4422
        %v4553 = vadd.f32 %v4227, %v4425
        %v4554 = vadd.f32 %v4228, %v4430
        %v4555 = vadd.f32 %v4229, %v4433
        %v4556 = vadd.f32 %v4230, %v4438
        %v4557 = vadd.f32 %v4231, %v4441
        %v4558 = vadd.f32 %v4232, %v4446
        %v4559 = vadd.f32 %v4233, %v4449
        %v4560 = vadd.f32 %v4234, %v4454
        %v4561 = vadd.f32 %v4235, %v4457
        %v4562 = vadd.f32 %v4236, %v4462
        %v4563 = vadd.f32 %v4237, %v4465
        %v4564 = vadd.f32 %v4238, %v4470
        %v4565 = vadd.f32 %v4239, %v4473
        %v4566 = vadd.f32 %v4240, %v4478
        %v4567 = vadd.f32 %v4241, %v4481
        %v4568 = vadd.f32 %v4242, %v4486
        %v4569 = vadd.f32 %v4243, %v4489
        %v4570 = vadd.f32 %v4244, %v4494
        %v4571 = vadd.f32 %v4245, %v4497
        %v4572 = vadd.f32 %v4246, %v4502
        %v4573 = vadd.f32 %v4247, %v4505
        %v4574 = vadd.f32 %v4248, %v4510
        %v4575 = vadd.f32 %v4249, %v4513
        %v4576 = vadd.f32 %v4250, %v4518
        %v4577 = vadd.f32 %v4251, %v4521
        %v4578 = vadd.f32 %v4252, %v4526
        %v4579 = vadd.f32 %v4253, %v4529
        %v4580 = vadd.f32 %v4254, %v4534
        %v4581 = vadd.f32 %v4255, %v4537
        %v4582 = vadd.f32 %v4256, %v4542
        %v4583 = vadd.f32 %v4257, %v4545
        %v4584 = vld [vmem:[%s394 + $0x13] sm:$0xff]
        %v4585 = vld [vmem:[%s394 + $0x1b] sm:$0xff]
        %v4586 = vld [vmem:[%s394 + $0x23] sm:$0xff]
        %v4587 = vld [vmem:[%s394 + $0x2b] sm:$0xff]
        %v4588 = vld [vmem:[%s394 + $0x33] sm:$0xff]
        %v4589 = vld [vmem:[%s394 + $0x3b] sm:$0xff]
        %v4590 = vld [vmem:[%s394 + $0x43] sm:$0xff]
        %v4591 = vld [vmem:[%s394 + $0x4b] sm:$0xff]
        %v4592 = vld [vmem:[%s394 + $0x53] sm:$0xff]
        %v4593 = vld [vmem:[%s394 + $0x5b] sm:$0xff]
        %v4594 = vld [vmem:[%s394 + $0x63] sm:$0xff]
        %v4595 = vld [vmem:[%s394 + $0x6b] sm:$0xff]
        %v4596 = vld [vmem:[%s394 + $0x73] sm:$0xff]
        %v4597 = vld [vmem:[%s394 + $0x7b] sm:$0xff]
        %v4598 = vld [vmem:[%s394 + $0x83] sm:$0xff]
        %v4599 = vld [vmem:[%s394 + $0x8b] sm:$0xff]
        %v4600 = vld [vmem:[%s394 + $0x93] sm:$0xff]
        %v4601 = vld [vmem:[%s394 + $0x9b] sm:$0xff]
        %v4602 = vld [vmem:[%s394 + $0xa3] sm:$0xff]
        %v4603 = vld [vmem:[%s394 + $0xab] sm:$0xff]
        %v4604 = vld [vmem:[%s394 + $0xb3] sm:$0xff]
        %v4605 = vld [vmem:[%s394 + $0xbb] sm:$0xff]
        %v4606 = vld [vmem:[%s394 + $0xc3] sm:$0xff]
        %v4607 = vld [vmem:[%s394 + $0xcb] sm:$0xff]
        %v4608 = vld [vmem:[%s394 + $0xd3] sm:$0xff]
        %v4609 = vld [vmem:[%s394 + $0xdb] sm:$0xff]
        %v4610 = vld [vmem:[%s394 + $0xe3] sm:$0xff]
        %v4611 = vld [vmem:[%s394 + $0xeb] sm:$0xff]
        %v4612 = vld [vmem:[%s394 + $0xf3] sm:$0xff]
        %v4613 = vld [vmem:[%s394 + $0xfb] sm:$0xff]
        %v4614 = vld [vmem:[%s394 + $0x103] sm:$0xff]
        %v4615 = vld [vmem:[%s394 + $0x10b] sm:$0xff]
        %v4616 = vld [vmem:[%s394 + $0x113] sm:$0xff]
        %v4617 = vld [vmem:[%s394 + $0x11b] sm:$0xff]
        %v4618 = vld [vmem:[%s394 + $0x123] sm:$0xff]
        %v4619 = vld [vmem:[%s394 + $0x12b] sm:$0x3f]
        %v4620 = vpack.c.bf16 %v4585, %v4584
        %v4621 = vpack.c.bf16 %v4587, %v4586
        %v4622 = vpack.c.bf16 %v4589, %v4588
        %v4623 = vpack.c.bf16 %v4591, %v4590
        %v4624 = vpack.c.bf16 %v4593, %v4592
        %v4625 = vpack.c.bf16 %v4595, %v4594
        %v4626 = vpack.c.bf16 %v4597, %v4596
        %v4627 = vpack.c.bf16 %v4599, %v4598
        %v4628 = vpack.c.bf16 %v4601, %v4600
        %v4629 = vpack.c.bf16 %v4603, %v4602
        %v4630 = vpack.c.bf16 %v4605, %v4604
        %v4631 = vpack.c.bf16 %v4607, %v4606
        %v4632 = vpack.c.bf16 %v4609, %v4608
        %v4633 = vpack.c.bf16 %v4611, %v4610
        %v4634 = vpack.c.bf16 %v4613, %v4612
        %v4635 = vpack.c.bf16 %v4615, %v4614
        %v4636 = vpack.c.bf16 %v4617, %v4616
        %v4637 = vpack.c.bf16 %v4619, %v4618
        %s4638 = scalar_lea.vmem %s4, 26
        %v4639 = vld [vmem:[%s4638] sm:$0x3]
        %v4641 = vsel %vm528, %v4620, 0
        %v4644 = vsel %vm528, %v4621, 0
        %v4647 = vsel %vm528, %v4622, 0
        %v4650 = vsel %vm528, %v4623, 0
        %v4653 = vsel %vm528, %v4624, 0
        %v4656 = vsel %vm528, %v4625, 0
        %v4659 = vsel %vm528, %v4626, 0
        %v4662 = vsel %vm528, %v4627, 0
        %v4665 = vsel %vm528, %v4628, 0
        %v4668 = vsel %vm528, %v4629, 0
        %v4671 = vsel %vm528, %v4630, 0
        %v4674 = vsel %vm528, %v4631, 0
        %v4677 = vsel %vm528, %v4632, 0
        %v4680 = vsel %vm528, %v4633, 0
        %v4683 = vsel %vm528, %v4634, 0
        %v4686 = vsel %vm528, %v4635, 0
        %v4689 = vsel %vm528, %v4636, 0
        %v4692 = vsel %vm528, %v4637, 0
        %v4695 = vsel %vm583, %v4639, 0
        %4697 = vmatprep.subr.bf16.mxu0 0
        %4698 = vmatpush1.bf16.msra.mxu0 0
        %4699 = vmatprep.subr.bf16.mxu0 0
        %4700 = vmatpush1.bf16.msra.mxu0 0
        %4701 = vmatprep.subr.bf16.mxu0 0
        %4702 = vmatpush1.bf16.msra.mxu0 0
        %4703 = vmatprep.subr.bf16.mxu0 0
        %4704 = vmatpush1.bf16.msra.mxu0 0
        %4705 = vmatprep.subr.bf16.mxu0 0
        %4706 = vmatpush1.bf16.msra.mxu0 0
        %4707 = vmatprep.subr.bf16.mxu0 0
        %4708 = vmatpush1.bf16.msra.mxu0 0
        %4709 = vmatprep.subr.bf16.mxu0 0
        %4710 = vmatpush1.bf16.msra.mxu0 0
        %4711 = vmatprep.subr.bf16.mxu0 0
        %4712 = vmatpush1.bf16.msra.mxu0 %v4695
        %4713 = vmatprep.subr.bf16.mxu0 0
        %4714 = vmatpush2.bf16.msra.mxu0 0
        %4715 = vmatprep.subr.bf16.mxu0 0
        %4716 = vmatpush2.bf16.msra.mxu0 0
        %4717 = vmatprep.subr.bf16.mxu0 0
        %4718 = vmatpush2.bf16.msra.mxu0 0
        %4719 = vmatprep.subr.bf16.mxu0 0
        %4720 = vmatpush2.bf16.msra.mxu0 0
        %4721 = vmatprep.subr.bf16.mxu0 0
        %4722 = vmatpush2.bf16.msra.mxu0 0
        %4723 = vmatprep.subr.bf16.mxu0 0
        %4724 = vmatpush2.bf16.msra.mxu0 0
        %4725 = vmatprep.subr.bf16.mxu0 0
        %4726 = vmatpush2.bf16.msra.mxu0 0
        %4727 = vmatprep.subr.bf16.mxu0 0
        %4728 = vmatpush2.bf16.msra.mxu0 0
        %4729 = vmatprep.mubr.bf16.mxu0 0
        %4730 = vmatmul.mubr.bf16.gmra.mxu0 %v4641
        %v4731 = vpop.f32.mrf.mxu0
        %v4732 = vadd.f32 0.0, %v4731
        %v4733 = vpop.f32.mrf.mxu0
        %v4734 = vpop.f32.mrf.mxu0
        %v4735 = vadd.f32 0.0, %v4734
        %v4736 = vpop.f32.mrf.mxu0
        %4737 = vmatprep.mubr.bf16.mxu0 0
        %4738 = vmatmul.mubr.bf16.gmra.mxu0 %v4644
        %v4739 = vpop.f32.mrf.mxu0
        %v4740 = vadd.f32 0.0, %v4739
        %v4741 = vpop.f32.mrf.mxu0
        %v4742 = vpop.f32.mrf.mxu0
        %v4743 = vadd.f32 0.0, %v4742
        %v4744 = vpop.f32.mrf.mxu0
        %4745 = vmatprep.mubr.bf16.mxu0 0
        %4746 = vmatmul.mubr.bf16.gmra.mxu0 %v4647
        %v4747 = vpop.f32.mrf.mxu0
        %v4748 = vadd.f32 0.0, %v4747
        %v4749 = vpop.f32.mrf.mxu0
        %v4750 = vpop.f32.mrf.mxu0
        %v4751 = vadd.f32 0.0, %v4750
        %v4752 = vpop.f32.mrf.mxu0
        %4753 = vmatprep.mubr.bf16.mxu0 0
        %4754 = vmatmul.mubr.bf16.gmra.mxu0 %v4650
        %v4755 = vpop.f32.mrf.mxu0
        %v4756 = vadd.f32 0.0, %v4755
        %v4757 = vpop.f32.mrf.mxu0
        %v4758 = vpop.f32.mrf.mxu0
        %v4759 = vadd.f32 0.0, %v4758
        %v4760 = vpop.f32.mrf.mxu0
        %4761 = vmatprep.mubr.bf16.mxu0 0
        %4762 = vmatmul.mubr.bf16.gmra.mxu0 %v4653
        %v4763 = vpop.f32.mrf.mxu0
        %v4764 = vadd.f32 0.0, %v4763
        %v4765 = vpop.f32.mrf.mxu0
        %v4766 = vpop.f32.mrf.mxu0
        %v4767 = vadd.f32 0.0, %v4766
        %v4768 = vpop.f32.mrf.mxu0
        %4769 = vmatprep.mubr.bf16.mxu0 0
        %4770 = vmatmul.mubr.bf16.gmra.mxu0 %v4656
        %v4771 = vpop.f32.mrf.mxu0
        %v4772 = vadd.f32 0.0, %v4771
        %v4773 = vpop.f32.mrf.mxu0
        %v4774 = vpop.f32.mrf.mxu0
        %v4775 = vadd.f32 0.0, %v4774
        %v4776 = vpop.f32.mrf.mxu0
        %4777 = vmatprep.mubr.bf16.mxu0 0
        %4778 = vmatmul.mubr.bf16.gmra.mxu0 %v4659
        %v4779 = vpop.f32.mrf.mxu0
        %v4780 = vadd.f32 0.0, %v4779
        %v4781 = vpop.f32.mrf.mxu0
        %v4782 = vpop.f32.mrf.mxu0
        %v4783 = vadd.f32 0.0, %v4782
        %v4784 = vpop.f32.mrf.mxu0
        %4785 = vmatprep.mubr.bf16.mxu0 0
        %4786 = vmatmul.mubr.bf16.gmra.mxu0 %v4662
        %v4787 = vpop.f32.mrf.mxu0
        %v4788 = vadd.f32 0.0, %v4787
        %v4789 = vpop.f32.mrf.mxu0
        %v4790 = vpop.f32.mrf.mxu0
        %v4791 = vadd.f32 0.0, %v4790
        %v4792 = vpop.f32.mrf.mxu0
        %4793 = vmatprep.mubr.bf16.mxu0 0
        %4794 = vmatmul.mubr.bf16.gmra.mxu0 %v4665
        %v4795 = vpop.f32.mrf.mxu0
        %v4796 = vadd.f32 0.0, %v4795
        %v4797 = vpop.f32.mrf.mxu0
        %v4798 = vpop.f32.mrf.mxu0
        %v4799 = vadd.f32 0.0, %v4798
        %v4800 = vpop.f32.mrf.mxu0
        %4801 = vmatprep.mubr.bf16.mxu0 0
        %4802 = vmatmul.mubr.bf16.gmra.mxu0 %v4668
        %v4803 = vpop.f32.mrf.mxu0
        %v4804 = vadd.f32 0.0, %v4803
        %v4805 = vpop.f32.mrf.mxu0
        %v4806 = vpop.f32.mrf.mxu0
        %v4807 = vadd.f32 0.0, %v4806
        %v4808 = vpop.f32.mrf.mxu0
        %4809 = vmatprep.mubr.bf16.mxu0 0
        %4810 = vmatmul.mubr.bf16.gmra.mxu0 %v4671
        %v4811 = vpop.f32.mrf.mxu0
        %v4812 = vadd.f32 0.0, %v4811
        %v4813 = vpop.f32.mrf.mxu0
        %v4814 = vpop.f32.mrf.mxu0
        %v4815 = vadd.f32 0.0, %v4814
        %v4816 = vpop.f32.mrf.mxu0
        %4817 = vmatprep.mubr.bf16.mxu0 0
        %4818 = vmatmul.mubr.bf16.gmra.mxu0 %v4674
        %v4819 = vpop.f32.mrf.mxu0
        %v4820 = vadd.f32 0.0, %v4819
        %v4821 = vpop.f32.mrf.mxu0
        %v4822 = vpop.f32.mrf.mxu0
        %v4823 = vadd.f32 0.0, %v4822
        %v4824 = vpop.f32.mrf.mxu0
        %4825 = vmatprep.mubr.bf16.mxu0 0
        %4826 = vmatmul.mubr.bf16.gmra.mxu0 %v4677
        %v4827 = vpop.f32.mrf.mxu0
        %v4828 = vadd.f32 0.0, %v4827
        %v4829 = vpop.f32.mrf.mxu0
        %v4830 = vpop.f32.mrf.mxu0
        %v4831 = vadd.f32 0.0, %v4830
        %v4832 = vpop.f32.mrf.mxu0
        %4833 = vmatprep.mubr.bf16.mxu0 0
        %4834 = vmatmul.mubr.bf16.gmra.mxu0 %v4680
        %v4835 = vpop.f32.mrf.mxu0
        %v4836 = vadd.f32 0.0, %v4835
        %v4837 = vpop.f32.mrf.mxu0
        %v4838 = vpop.f32.mrf.mxu0
        %v4839 = vadd.f32 0.0, %v4838
        %v4840 = vpop.f32.mrf.mxu0
        %4841 = vmatprep.mubr.bf16.mxu0 0
        %4842 = vmatmul.mubr.bf16.gmra.mxu0 %v4683
        %v4843 = vpop.f32.mrf.mxu0
        %v4844 = vadd.f32 0.0, %v4843
        %v4845 = vpop.f32.mrf.mxu0
        %v4846 = vpop.f32.mrf.mxu0
        %v4847 = vadd.f32 0.0, %v4846
        %v4848 = vpop.f32.mrf.mxu0
        %4849 = vmatprep.mubr.bf16.mxu0 0
        %4850 = vmatmul.mubr.bf16.gmra.mxu0 %v4686
        %v4851 = vpop.f32.mrf.mxu0
        %v4852 = vadd.f32 0.0, %v4851
        %v4853 = vpop.f32.mrf.mxu0
        %v4854 = vpop.f32.mrf.mxu0
        %v4855 = vadd.f32 0.0, %v4854
        %v4856 = vpop.f32.mrf.mxu0
        %4857 = vmatprep.mubr.bf16.mxu0 0
        %4858 = vmatmul.mubr.bf16.gmra.mxu0 %v4689
        %v4859 = vpop.f32.mrf.mxu0
        %v4860 = vadd.f32 0.0, %v4859
        %v4861 = vpop.f32.mrf.mxu0
        %v4862 = vpop.f32.mrf.mxu0
        %v4863 = vadd.f32 0.0, %v4862
        %v4864 = vpop.f32.mrf.mxu0
        %4865 = vmatprep.mubr.bf16.mxu0 0
        %4866 = vmatmul.mubr.bf16.gmra.mxu0 %v4692
        %v4867 = vpop.f32.mrf.mxu0
        %v4868 = vadd.f32 0.0, %v4867
        %v4869 = vpop.f32.mrf.mxu0
        %v4870 = vpop.f32.mrf.mxu0
        %v4871 = vadd.f32 0.0, %v4870
        %v4872 = vpop.f32.mrf.mxu0
        %4873 = vdwg.mxu0
        %v4874 = vadd.f32 %v4548, %v4732
        %v4875 = vadd.f32 %v4549, %v4735
        %v4876 = vadd.f32 %v4550, %v4740
        %v4877 = vadd.f32 %v4551, %v4743
        %v4878 = vadd.f32 %v4552, %v4748
        %v4879 = vadd.f32 %v4553, %v4751
        %v4880 = vadd.f32 %v4554, %v4756
        %v4881 = vadd.f32 %v4555, %v4759
        %v4882 = vadd.f32 %v4556, %v4764
        %v4883 = vadd.f32 %v4557, %v4767
        %v4884 = vadd.f32 %v4558, %v4772
        %v4885 = vadd.f32 %v4559, %v4775
        %v4886 = vadd.f32 %v4560, %v4780
        %v4887 = vadd.f32 %v4561, %v4783
        %v4888 = vadd.f32 %v4562, %v4788
        %v4889 = vadd.f32 %v4563, %v4791
        %v4890 = vadd.f32 %v4564, %v4796
        %v4891 = vadd.f32 %v4565, %v4799
        %v4892 = vadd.f32 %v4566, %v4804
        %v4893 = vadd.f32 %v4567, %v4807
        %v4894 = vadd.f32 %v4568, %v4812
        %v4895 = vadd.f32 %v4569, %v4815
        %v4896 = vadd.f32 %v4570, %v4820
        %v4897 = vadd.f32 %v4571, %v4823
        %v4898 = vadd.f32 %v4572, %v4828
        %v4899 = vadd.f32 %v4573, %v4831
        %v4900 = vadd.f32 %v4574, %v4836
        %v4901 = vadd.f32 %v4575, %v4839
        %v4902 = vadd.f32 %v4576, %v4844
        %v4903 = vadd.f32 %v4577, %v4847
        %v4904 = vadd.f32 %v4578, %v4852
        %v4905 = vadd.f32 %v4579, %v4855
        %v4906 = vadd.f32 %v4580, %v4860
        %v4907 = vadd.f32 %v4581, %v4863
        %v4908 = vadd.f32 %v4582, %v4868
        %v4909 = vadd.f32 %v4583, %v4871
        %v4910 = vld [vmem:[%s394 + $0x14] sm:$0xff]
        %v4911 = vld [vmem:[%s394 + $0x1c] sm:$0xff]
        %v4912 = vld [vmem:[%s394 + $0x24] sm:$0xff]
        %v4913 = vld [vmem:[%s394 + $0x2c] sm:$0xff]
        %v4914 = vld [vmem:[%s394 + $0x34] sm:$0xff]
        %v4915 = vld [vmem:[%s394 + $0x3c] sm:$0xff]
        %v4916 = vld [vmem:[%s394 + $0x44] sm:$0xff]
        %v4917 = vld [vmem:[%s394 + $0x4c] sm:$0xff]
        %v4918 = vld [vmem:[%s394 + $0x54] sm:$0xff]
        %v4919 = vld [vmem:[%s394 + $0x5c] sm:$0xff]
        %v4920 = vld [vmem:[%s394 + $0x64] sm:$0xff]
        %v4921 = vld [vmem:[%s394 + $0x6c] sm:$0xff]
        %v4922 = vld [vmem:[%s394 + $0x74] sm:$0xff]
        %v4923 = vld [vmem:[%s394 + $0x7c] sm:$0xff]
        %v4924 = vld [vmem:[%s394 + $0x84] sm:$0xff]
        %v4925 = vld [vmem:[%s394 + $0x8c] sm:$0xff]
        %v4926 = vld [vmem:[%s394 + $0x94] sm:$0xff]
        %v4927 = vld [vmem:[%s394 + $0x9c] sm:$0xff]
        %v4928 = vld [vmem:[%s394 + $0xa4] sm:$0xff]
        %v4929 = vld [vmem:[%s394 + $0xac] sm:$0xff]
        %v4930 = vld [vmem:[%s394 + $0xb4] sm:$0xff]
        %v4931 = vld [vmem:[%s394 + $0xbc] sm:$0xff]
        %v4932 = vld [vmem:[%s394 + $0xc4] sm:$0xff]
        %v4933 = vld [vmem:[%s394 + $0xcc] sm:$0xff]
        %v4934 = vld [vmem:[%s394 + $0xd4] sm:$0xff]
        %v4935 = vld [vmem:[%s394 + $0xdc] sm:$0xff]
        %v4936 = vld [vmem:[%s394 + $0xe4] sm:$0xff]
        %v4937 = vld [vmem:[%s394 + $0xec] sm:$0xff]
        %v4938 = vld [vmem:[%s394 + $0xf4] sm:$0xff]
        %v4939 = vld [vmem:[%s394 + $0xfc] sm:$0xff]
        %v4940 = vld [vmem:[%s394 + $0x104] sm:$0xff]
        %v4941 = vld [vmem:[%s394 + $0x10c] sm:$0xff]
        %v4942 = vld [vmem:[%s394 + $0x114] sm:$0xff]
        %v4943 = vld [vmem:[%s394 + $0x11c] sm:$0xff]
        %v4944 = vld [vmem:[%s394 + $0x124] sm:$0xff]
        %v4945 = vld [vmem:[%s394 + $0x12c] sm:$0x3f]
        %v4946 = vpack.c.bf16 %v4911, %v4910
        %v4947 = vpack.c.bf16 %v4913, %v4912
        %v4948 = vpack.c.bf16 %v4915, %v4914
        %v4949 = vpack.c.bf16 %v4917, %v4916
        %v4950 = vpack.c.bf16 %v4919, %v4918
        %v4951 = vpack.c.bf16 %v4921, %v4920
        %v4952 = vpack.c.bf16 %v4923, %v4922
        %v4953 = vpack.c.bf16 %v4925, %v4924
        %v4954 = vpack.c.bf16 %v4927, %v4926
        %v4955 = vpack.c.bf16 %v4929, %v4928
        %v4956 = vpack.c.bf16 %v4931, %v4930
        %v4957 = vpack.c.bf16 %v4933, %v4932
        %v4958 = vpack.c.bf16 %v4935, %v4934
        %v4959 = vpack.c.bf16 %v4937, %v4936
        %v4960 = vpack.c.bf16 %v4939, %v4938
        %v4961 = vpack.c.bf16 %v4941, %v4940
        %v4962 = vpack.c.bf16 %v4943, %v4942
        %v4963 = vpack.c.bf16 %v4945, %v4944
        %s4964 = scalar_lea.vmem %s4, 28
        %v4965 = vld [vmem:[%s4964] sm:$0x3]
        %v4967 = vsel %vm528, %v4946, 0
        %v4970 = vsel %vm528, %v4947, 0
        %v4973 = vsel %vm528, %v4948, 0
        %v4976 = vsel %vm528, %v4949, 0
        %v4979 = vsel %vm528, %v4950, 0
        %v4982 = vsel %vm528, %v4951, 0
        %v4985 = vsel %vm528, %v4952, 0
        %v4988 = vsel %vm528, %v4953, 0
        %v4991 = vsel %vm528, %v4954, 0
        %v4994 = vsel %vm528, %v4955, 0
        %v4997 = vsel %vm528, %v4956, 0
        %v5000 = vsel %vm528, %v4957, 0
        %v5003 = vsel %vm528, %v4958, 0
        %v5006 = vsel %vm528, %v4959, 0
        %v5009 = vsel %vm528, %v4960, 0
        %v5012 = vsel %vm528, %v4961, 0
        %v5015 = vsel %vm528, %v4962, 0
        %v5018 = vsel %vm528, %v4963, 0
        %v5021 = vsel %vm583, %v4965, 0
        %5023 = vmatprep.subr.bf16.mxu0 0
        %5024 = vmatpush1.bf16.msra.mxu0 0
        %5025 = vmatprep.subr.bf16.mxu0 0
        %5026 = vmatpush1.bf16.msra.mxu0 0
        %5027 = vmatprep.subr.bf16.mxu0 0
        %5028 = vmatpush1.bf16.msra.mxu0 0
        %5029 = vmatprep.subr.bf16.mxu0 0
        %5030 = vmatpush1.bf16.msra.mxu0 0
        %5031 = vmatprep.subr.bf16.mxu0 0
        %5032 = vmatpush1.bf16.msra.mxu0 0
        %5033 = vmatprep.subr.bf16.mxu0 0
        %5034 = vmatpush1.bf16.msra.mxu0 0
        %5035 = vmatprep.subr.bf16.mxu0 0
        %5036 = vmatpush1.bf16.msra.mxu0 0
        %5037 = vmatprep.subr.bf16.mxu0 0
        %5038 = vmatpush1.bf16.msra.mxu0 %v5021
        %5039 = vmatprep.subr.bf16.mxu0 0
        %5040 = vmatpush2.bf16.msra.mxu0 0
        %5041 = vmatprep.subr.bf16.mxu0 0
        %5042 = vmatpush2.bf16.msra.mxu0 0
        %5043 = vmatprep.subr.bf16.mxu0 0
        %5044 = vmatpush2.bf16.msra.mxu0 0
        %5045 = vmatprep.subr.bf16.mxu0 0
        %5046 = vmatpush2.bf16.msra.mxu0 0
        %5047 = vmatprep.subr.bf16.mxu0 0
        %5048 = vmatpush2.bf16.msra.mxu0 0
        %5049 = vmatprep.subr.bf16.mxu0 0
        %5050 = vmatpush2.bf16.msra.mxu0 0
        %5051 = vmatprep.subr.bf16.mxu0 0
        %5052 = vmatpush2.bf16.msra.mxu0 0
        %5053 = vmatprep.subr.bf16.mxu0 0
        %5054 = vmatpush2.bf16.msra.mxu0 0
        %5055 = vmatprep.mubr.bf16.mxu0 0
        %5056 = vmatmul.mubr.bf16.gmra.mxu0 %v4967
        %v5057 = vpop.f32.mrf.mxu0
        %v5058 = vadd.f32 0.0, %v5057
        %v5059 = vpop.f32.mrf.mxu0
        %v5060 = vpop.f32.mrf.mxu0
        %v5061 = vadd.f32 0.0, %v5060
        %v5062 = vpop.f32.mrf.mxu0
        %5063 = vmatprep.mubr.bf16.mxu0 0
        %5064 = vmatmul.mubr.bf16.gmra.mxu0 %v4970
        %v5065 = vpop.f32.mrf.mxu0
        %v5066 = vadd.f32 0.0, %v5065
        %v5067 = vpop.f32.mrf.mxu0
        %v5068 = vpop.f32.mrf.mxu0
        %v5069 = vadd.f32 0.0, %v5068
        %v5070 = vpop.f32.mrf.mxu0
        %5071 = vmatprep.mubr.bf16.mxu0 0
        %5072 = vmatmul.mubr.bf16.gmra.mxu0 %v4973
        %v5073 = vpop.f32.mrf.mxu0
        %v5074 = vadd.f32 0.0, %v5073
        %v5075 = vpop.f32.mrf.mxu0
        %v5076 = vpop.f32.mrf.mxu0
        %v5077 = vadd.f32 0.0, %v5076
        %v5078 = vpop.f32.mrf.mxu0
        %5079 = vmatprep.mubr.bf16.mxu0 0
        %5080 = vmatmul.mubr.bf16.gmra.mxu0 %v4976
        %v5081 = vpop.f32.mrf.mxu0
        %v5082 = vadd.f32 0.0, %v5081
        %v5083 = vpop.f32.mrf.mxu0
        %v5084 = vpop.f32.mrf.mxu0
        %v5085 = vadd.f32 0.0, %v5084
        %v5086 = vpop.f32.mrf.mxu0
        %5087 = vmatprep.mubr.bf16.mxu0 0
        %5088 = vmatmul.mubr.bf16.gmra.mxu0 %v4979
        %v5089 = vpop.f32.mrf.mxu0
        %v5090 = vadd.f32 0.0, %v5089
        %v5091 = vpop.f32.mrf.mxu0
        %v5092 = vpop.f32.mrf.mxu0
        %v5093 = vadd.f32 0.0, %v5092
        %v5094 = vpop.f32.mrf.mxu0
        %5095 = vmatprep.mubr.bf16.mxu0 0
        %5096 = vmatmul.mubr.bf16.gmra.mxu0 %v4982
        %v5097 = vpop.f32.mrf.mxu0
        %v5098 = vadd.f32 0.0, %v5097
        %v5099 = vpop.f32.mrf.mxu0
        %v5100 = vpop.f32.mrf.mxu0
        %v5101 = vadd.f32 0.0, %v5100
        %v5102 = vpop.f32.mrf.mxu0
        %5103 = vmatprep.mubr.bf16.mxu0 0
        %5104 = vmatmul.mubr.bf16.gmra.mxu0 %v4985
        %v5105 = vpop.f32.mrf.mxu0
        %v5106 = vadd.f32 0.0, %v5105
        %v5107 = vpop.f32.mrf.mxu0
        %v5108 = vpop.f32.mrf.mxu0
        %v5109 = vadd.f32 0.0, %v5108
        %v5110 = vpop.f32.mrf.mxu0
        %5111 = vmatprep.mubr.bf16.mxu0 0
        %5112 = vmatmul.mubr.bf16.gmra.mxu0 %v4988
        %v5113 = vpop.f32.mrf.mxu0
        %v5114 = vadd.f32 0.0, %v5113
        %v5115 = vpop.f32.mrf.mxu0
        %v5116 = vpop.f32.mrf.mxu0
        %v5117 = vadd.f32 0.0, %v5116
        %v5118 = vpop.f32.mrf.mxu0
        %5119 = vmatprep.mubr.bf16.mxu0 0
        %5120 = vmatmul.mubr.bf16.gmra.mxu0 %v4991
        %v5121 = vpop.f32.mrf.mxu0
        %v5122 = vadd.f32 0.0, %v5121
        %v5123 = vpop.f32.mrf.mxu0
        %v5124 = vpop.f32.mrf.mxu0
        %v5125 = vadd.f32 0.0, %v5124
        %v5126 = vpop.f32.mrf.mxu0
        %5127 = vmatprep.mubr.bf16.mxu0 0
        %5128 = vmatmul.mubr.bf16.gmra.mxu0 %v4994
        %v5129 = vpop.f32.mrf.mxu0
        %v5130 = vadd.f32 0.0, %v5129
        %v5131 = vpop.f32.mrf.mxu0
        %v5132 = vpop.f32.mrf.mxu0
        %v5133 = vadd.f32 0.0, %v5132
        %v5134 = vpop.f32.mrf.mxu0
        %5135 = vmatprep.mubr.bf16.mxu0 0
        %5136 = vmatmul.mubr.bf16.gmra.mxu0 %v4997
        %v5137 = vpop.f32.mrf.mxu0
        %v5138 = vadd.f32 0.0, %v5137
        %v5139 = vpop.f32.mrf.mxu0
        %v5140 = vpop.f32.mrf.mxu0
        %v5141 = vadd.f32 0.0, %v5140
        %v5142 = vpop.f32.mrf.mxu0
        %5143 = vmatprep.mubr.bf16.mxu0 0
        %5144 = vmatmul.mubr.bf16.gmra.mxu0 %v5000
        %v5145 = vpop.f32.mrf.mxu0
        %v5146 = vadd.f32 0.0, %v5145
        %v5147 = vpop.f32.mrf.mxu0
        %v5148 = vpop.f32.mrf.mxu0
        %v5149 = vadd.f32 0.0, %v5148
        %v5150 = vpop.f32.mrf.mxu0
        %5151 = vmatprep.mubr.bf16.mxu0 0
        %5152 = vmatmul.mubr.bf16.gmra.mxu0 %v5003
        %v5153 = vpop.f32.mrf.mxu0
        %v5154 = vadd.f32 0.0, %v5153
        %v5155 = vpop.f32.mrf.mxu0
        %v5156 = vpop.f32.mrf.mxu0
        %v5157 = vadd.f32 0.0, %v5156
        %v5158 = vpop.f32.mrf.mxu0
        %5159 = vmatprep.mubr.bf16.mxu0 0
        %5160 = vmatmul.mubr.bf16.gmra.mxu0 %v5006
        %v5161 = vpop.f32.mrf.mxu0
        %v5162 = vadd.f32 0.0, %v5161
        %v5163 = vpop.f32.mrf.mxu0
        %v5164 = vpop.f32.mrf.mxu0
        %v5165 = vadd.f32 0.0, %v5164
        %v5166 = vpop.f32.mrf.mxu0
        %5167 = vmatprep.mubr.bf16.mxu0 0
        %5168 = vmatmul.mubr.bf16.gmra.mxu0 %v5009
        %v5169 = vpop.f32.mrf.mxu0
        %v5170 = vadd.f32 0.0, %v5169
        %v5171 = vpop.f32.mrf.mxu0
        %v5172 = vpop.f32.mrf.mxu0
        %v5173 = vadd.f32 0.0, %v5172
        %v5174 = vpop.f32.mrf.mxu0
        %5175 = vmatprep.mubr.bf16.mxu0 0
        %5176 = vmatmul.mubr.bf16.gmra.mxu0 %v5012
        %v5177 = vpop.f32.mrf.mxu0
        %v5178 = vadd.f32 0.0, %v5177
        %v5179 = vpop.f32.mrf.mxu0
        %v5180 = vpop.f32.mrf.mxu0
        %v5181 = vadd.f32 0.0, %v5180
        %v5182 = vpop.f32.mrf.mxu0
        %5183 = vmatprep.mubr.bf16.mxu0 0
        %5184 = vmatmul.mubr.bf16.gmra.mxu0 %v5015
        %v5185 = vpop.f32.mrf.mxu0
        %v5186 = vadd.f32 0.0, %v5185
        %v5187 = vpop.f32.mrf.mxu0
        %v5188 = vpop.f32.mrf.mxu0
        %v5189 = vadd.f32 0.0, %v5188
        %v5190 = vpop.f32.mrf.mxu0
        %5191 = vmatprep.mubr.bf16.mxu0 0
        %5192 = vmatmul.mubr.bf16.gmra.mxu0 %v5018
        %v5193 = vpop.f32.mrf.mxu0
        %v5194 = vadd.f32 0.0, %v5193
        %v5195 = vpop.f32.mrf.mxu0
        %v5196 = vpop.f32.mrf.mxu0
        %v5197 = vadd.f32 0.0, %v5196
        %v5198 = vpop.f32.mrf.mxu0
        %5199 = vdwg.mxu0
        %v5200 = vadd.f32 %v4874, %v5058
        %v5201 = vadd.f32 %v4875, %v5061
        %v5202 = vadd.f32 %v4876, %v5066
        %v5203 = vadd.f32 %v4877, %v5069
        %v5204 = vadd.f32 %v4878, %v5074
        %v5205 = vadd.f32 %v4879, %v5077
        %v5206 = vadd.f32 %v4880, %v5082
        %v5207 = vadd.f32 %v4881, %v5085
        %v5208 = vadd.f32 %v4882, %v5090
        %v5209 = vadd.f32 %v4883, %v5093
        %v5210 = vadd.f32 %v4884, %v5098
        %v5211 = vadd.f32 %v4885, %v5101
        %v5212 = vadd.f32 %v4886, %v5106
        %v5213 = vadd.f32 %v4887, %v5109
        %v5214 = vadd.f32 %v4888, %v5114
        %v5215 = vadd.f32 %v4889, %v5117
        %v5216 = vadd.f32 %v4890, %v5122
        %v5217 = vadd.f32 %v4891, %v5125
        %v5218 = vadd.f32 %v4892, %v5130
        %v5219 = vadd.f32 %v4893, %v5133
        %v5220 = vadd.f32 %v4894, %v5138
        %v5221 = vadd.f32 %v4895, %v5141
        %v5222 = vadd.f32 %v4896, %v5146
        %v5223 = vadd.f32 %v4897, %v5149
        %v5224 = vadd.f32 %v4898, %v5154
        %v5225 = vadd.f32 %v4899, %v5157
        %v5226 = vadd.f32 %v4900, %v5162
        %v5227 = vadd.f32 %v4901, %v5165
        %v5228 = vadd.f32 %v4902, %v5170
        %v5229 = vadd.f32 %v4903, %v5173
        %v5230 = vadd.f32 %v4904, %v5178
        %v5231 = vadd.f32 %v4905, %v5181
        %v5232 = vadd.f32 %v4906, %v5186
        %v5233 = vadd.f32 %v4907, %v5189
        %v5234 = vadd.f32 %v4908, %v5194
        %v5235 = vadd.f32 %v4909, %v5197
        %v5236 = vld [vmem:[%s394 + $0x24] sm:$0xff]
        %v5237 = vld [vmem:[%s394 + $0x2c] sm:$0xff]
        %v5238 = vld [vmem:[%s394 + $0x34] sm:$0xff]
        %v5239 = vld [vmem:[%s394 + $0x3c] sm:$0xff]
        %v5240 = vld [vmem:[%s394 + $0x44] sm:$0xff]
        %v5241 = vld [vmem:[%s394 + $0x4c] sm:$0xff]
        %v5242 = vld [vmem:[%s394 + $0x54] sm:$0xff]
        %v5243 = vld [vmem:[%s394 + $0x5c] sm:$0xff]
        %v5244 = vld [vmem:[%s394 + $0x64] sm:$0xff]
        %v5245 = vld [vmem:[%s394 + $0x6c] sm:$0xff]
        %v5246 = vld [vmem:[%s394 + $0x74] sm:$0xff]
        %v5247 = vld [vmem:[%s394 + $0x7c] sm:$0xff]
        %v5248 = vld [vmem:[%s394 + $0x84] sm:$0xff]
        %v5249 = vld [vmem:[%s394 + $0x8c] sm:$0xff]
        %v5250 = vld [vmem:[%s394 + $0x94] sm:$0xff]
        %v5251 = vld [vmem:[%s394 + $0x9c] sm:$0xff]
        %v5252 = vld [vmem:[%s394 + $0xa4] sm:$0xff]
        %v5253 = vld [vmem:[%s394 + $0xac] sm:$0xff]
        %v5254 = vld [vmem:[%s394 + $0xb4] sm:$0xff]
        %v5255 = vld [vmem:[%s394 + $0xbc] sm:$0xff]
        %v5256 = vld [vmem:[%s394 + $0xc4] sm:$0xff]
        %v5257 = vld [vmem:[%s394 + $0xcc] sm:$0xff]
        %v5258 = vld [vmem:[%s394 + $0xd4] sm:$0xff]
        %v5259 = vld [vmem:[%s394 + $0xdc] sm:$0xff]
        %v5260 = vld [vmem:[%s394 + $0xe4] sm:$0xff]
        %v5261 = vld [vmem:[%s394 + $0xec] sm:$0xff]
        %v5262 = vld [vmem:[%s394 + $0xf4] sm:$0xff]
        %v5263 = vld [vmem:[%s394 + $0xfc] sm:$0xff]
        %v5264 = vld [vmem:[%s394 + $0x104] sm:$0xff]
        %v5265 = vld [vmem:[%s394 + $0x10c] sm:$0xff]
        %v5266 = vld [vmem:[%s394 + $0x114] sm:$0xff]
        %v5267 = vld [vmem:[%s394 + $0x11c] sm:$0xff]
        %v5268 = vld [vmem:[%s394 + $0x124] sm:$0xff]
        %v5269 = vld [vmem:[%s394 + $0x12c] sm:$0xff]
        %v5270 = vld [vmem:[%s394 + $0x134] sm:$0xff]
        %v5271 = vld [vmem:[%s394 + $0x13c] sm:$0x3f]
        %v5272 = vpack.c.bf16 %v5237, %v5236
        %v5273 = vpack.c.bf16 %v5239, %v5238
        %v5274 = vpack.c.bf16 %v5241, %v5240
        %v5275 = vpack.c.bf16 %v5243, %v5242
        %v5276 = vpack.c.bf16 %v5245, %v5244
        %v5277 = vpack.c.bf16 %v5247, %v5246
        %v5278 = vpack.c.bf16 %v5249, %v5248
        %v5279 = vpack.c.bf16 %v5251, %v5250
        %v5280 = vpack.c.bf16 %v5253, %v5252
        %v5281 = vpack.c.bf16 %v5255, %v5254
        %v5282 = vpack.c.bf16 %v5257, %v5256
        %v5283 = vpack.c.bf16 %v5259, %v5258
        %v5284 = vpack.c.bf16 %v5261, %v5260
        %v5285 = vpack.c.bf16 %v5263, %v5262
        %v5286 = vpack.c.bf16 %v5265, %v5264
        %v5287 = vpack.c.bf16 %v5267, %v5266
        %v5288 = vpack.c.bf16 %v5269, %v5268
        %v5289 = vpack.c.bf16 %v5271, %v5270
        %s5290 = scalar_lea.vmem %s4, 30
        %v5291 = vld [vmem:[%s5290] sm:$0x3]
        %v5293 = vsel %vm528, %v5272, 0
        %v5296 = vsel %vm528, %v5273, 0
        %v5299 = vsel %vm528, %v5274, 0
        %v5302 = vsel %vm528, %v5275, 0
        %v5305 = vsel %vm528, %v5276, 0
        %v5308 = vsel %vm528, %v5277, 0
        %v5311 = vsel %vm528, %v5278, 0
        %v5314 = vsel %vm528, %v5279, 0
        %v5317 = vsel %vm528, %v5280, 0
        %v5320 = vsel %vm528, %v5281, 0
        %v5323 = vsel %vm528, %v5282, 0
        %v5326 = vsel %vm528, %v5283, 0
        %v5329 = vsel %vm528, %v5284, 0
        %v5332 = vsel %vm528, %v5285, 0
        %v5335 = vsel %vm528, %v5286, 0
        %v5338 = vsel %vm528, %v5287, 0
        %v5341 = vsel %vm528, %v5288, 0
        %v5344 = vsel %vm528, %v5289, 0
        %v5347 = vsel %vm583, %v5291, 0
        %5349 = vmatprep.subr.bf16.mxu0 0
        %5350 = vmatpush1.bf16.msra.mxu0 0
        %5351 = vmatprep.subr.bf16.mxu0 0
        %5352 = vmatpush1.bf16.msra.mxu0 0
        %5353 = vmatprep.subr.bf16.mxu0 0
        %5354 = vmatpush1.bf16.msra.mxu0 0
        %5355 = vmatprep.subr.bf16.mxu0 0
        %5356 = vmatpush1.bf16.msra.mxu0 0
        %5357 = vmatprep.subr.bf16.mxu0 0
        %5358 = vmatpush1.bf16.msra.mxu0 0
        %5359 = vmatprep.subr.bf16.mxu0 0
        %5360 = vmatpush1.bf16.msra.mxu0 0
        %5361 = vmatprep.subr.bf16.mxu0 0
        %5362 = vmatpush1.bf16.msra.mxu0 0
        %5363 = vmatprep.subr.bf16.mxu0 0
        %5364 = vmatpush1.bf16.msra.mxu0 %v5347
        %5365 = vmatprep.subr.bf16.mxu0 0
        %5366 = vmatpush2.bf16.msra.mxu0 0
        %5367 = vmatprep.subr.bf16.mxu0 0
        %5368 = vmatpush2.bf16.msra.mxu0 0
        %5369 = vmatprep.subr.bf16.mxu0 0
        %5370 = vmatpush2.bf16.msra.mxu0 0
        %5371 = vmatprep.subr.bf16.mxu0 0
        %5372 = vmatpush2.bf16.msra.mxu0 0
        %5373 = vmatprep.subr.bf16.mxu0 0
        %5374 = vmatpush2.bf16.msra.mxu0 0
        %5375 = vmatprep.subr.bf16.mxu0 0
        %5376 = vmatpush2.bf16.msra.mxu0 0
        %5377 = vmatprep.subr.bf16.mxu0 0
        %5378 = vmatpush2.bf16.msra.mxu0 0
        %5379 = vmatprep.subr.bf16.mxu0 0
        %5380 = vmatpush2.bf16.msra.mxu0 0
        %5381 = vmatprep.mubr.bf16.mxu0 0
        %5382 = vmatmul.mubr.bf16.gmra.mxu0 %v5293
        %v5383 = vpop.f32.mrf.mxu0
        %v5384 = vadd.f32 0.0, %v5383
        %v5385 = vpop.f32.mrf.mxu0
        %v5386 = vpop.f32.mrf.mxu0
        %v5387 = vadd.f32 0.0, %v5386
        %v5388 = vpop.f32.mrf.mxu0
        %5389 = vmatprep.mubr.bf16.mxu0 0
        %5390 = vmatmul.mubr.bf16.gmra.mxu0 %v5296
        %v5391 = vpop.f32.mrf.mxu0
        %v5392 = vadd.f32 0.0, %v5391
        %v5393 = vpop.f32.mrf.mxu0
        %v5394 = vpop.f32.mrf.mxu0
        %v5395 = vadd.f32 0.0, %v5394
        %v5396 = vpop.f32.mrf.mxu0
        %5397 = vmatprep.mubr.bf16.mxu0 0
        %5398 = vmatmul.mubr.bf16.gmra.mxu0 %v5299
        %v5399 = vpop.f32.mrf.mxu0
        %v5400 = vadd.f32 0.0, %v5399
        %v5401 = vpop.f32.mrf.mxu0
        %v5402 = vpop.f32.mrf.mxu0
        %v5403 = vadd.f32 0.0, %v5402
        %v5404 = vpop.f32.mrf.mxu0
        %5405 = vmatprep.mubr.bf16.mxu0 0
        %5406 = vmatmul.mubr.bf16.gmra.mxu0 %v5302
        %v5407 = vpop.f32.mrf.mxu0
        %v5408 = vadd.f32 0.0, %v5407
        %v5409 = vpop.f32.mrf.mxu0
        %v5410 = vpop.f32.mrf.mxu0
        %v5411 = vadd.f32 0.0, %v5410
        %v5412 = vpop.f32.mrf.mxu0
        %5413 = vmatprep.mubr.bf16.mxu0 0
        %5414 = vmatmul.mubr.bf16.gmra.mxu0 %v5305
        %v5415 = vpop.f32.mrf.mxu0
        %v5416 = vadd.f32 0.0, %v5415
        %v5417 = vpop.f32.mrf.mxu0
        %v5418 = vpop.f32.mrf.mxu0
        %v5419 = vadd.f32 0.0, %v5418
        %v5420 = vpop.f32.mrf.mxu0
        %5421 = vmatprep.mubr.bf16.mxu0 0
        %5422 = vmatmul.mubr.bf16.gmra.mxu0 %v5308
        %v5423 = vpop.f32.mrf.mxu0
        %v5424 = vadd.f32 0.0, %v5423
        %v5425 = vpop.f32.mrf.mxu0
        %v5426 = vpop.f32.mrf.mxu0
        %v5427 = vadd.f32 0.0, %v5426
        %v5428 = vpop.f32.mrf.mxu0
        %5429 = vmatprep.mubr.bf16.mxu0 0
        %5430 = vmatmul.mubr.bf16.gmra.mxu0 %v5311
        %v5431 = vpop.f32.mrf.mxu0
        %v5432 = vadd.f32 0.0, %v5431
        %v5433 = vpop.f32.mrf.mxu0
        %v5434 = vpop.f32.mrf.mxu0
        %v5435 = vadd.f32 0.0, %v5434
        %v5436 = vpop.f32.mrf.mxu0
        %5437 = vmatprep.mubr.bf16.mxu0 0
        %5438 = vmatmul.mubr.bf16.gmra.mxu0 %v5314
        %v5439 = vpop.f32.mrf.mxu0
        %v5440 = vadd.f32 0.0, %v5439
        %v5441 = vpop.f32.mrf.mxu0
        %v5442 = vpop.f32.mrf.mxu0
        %v5443 = vadd.f32 0.0, %v5442
        %v5444 = vpop.f32.mrf.mxu0
        %5445 = vmatprep.mubr.bf16.mxu0 0
        %5446 = vmatmul.mubr.bf16.gmra.mxu0 %v5317
        %v5447 = vpop.f32.mrf.mxu0
        %v5448 = vadd.f32 0.0, %v5447
        %v5449 = vpop.f32.mrf.mxu0
        %v5450 = vpop.f32.mrf.mxu0
        %v5451 = vadd.f32 0.0, %v5450
        %v5452 = vpop.f32.mrf.mxu0
        %5453 = vmatprep.mubr.bf16.mxu0 0
        %5454 = vmatmul.mubr.bf16.gmra.mxu0 %v5320
        %v5455 = vpop.f32.mrf.mxu0
        %v5456 = vadd.f32 0.0, %v5455
        %v5457 = vpop.f32.mrf.mxu0
        %v5458 = vpop.f32.mrf.mxu0
        %v5459 = vadd.f32 0.0, %v5458
        %v5460 = vpop.f32.mrf.mxu0
        %5461 = vmatprep.mubr.bf16.mxu0 0
        %5462 = vmatmul.mubr.bf16.gmra.mxu0 %v5323
        %v5463 = vpop.f32.mrf.mxu0
        %v5464 = vadd.f32 0.0, %v5463
        %v5465 = vpop.f32.mrf.mxu0
        %v5466 = vpop.f32.mrf.mxu0
        %v5467 = vadd.f32 0.0, %v5466
        %v5468 = vpop.f32.mrf.mxu0
        %5469 = vmatprep.mubr.bf16.mxu0 0
        %5470 = vmatmul.mubr.bf16.gmra.mxu0 %v5326
        %v5471 = vpop.f32.mrf.mxu0
        %v5472 = vadd.f32 0.0, %v5471
        %v5473 = vpop.f32.mrf.mxu0
        %v5474 = vpop.f32.mrf.mxu0
        %v5475 = vadd.f32 0.0, %v5474
        %v5476 = vpop.f32.mrf.mxu0
        %5477 = vmatprep.mubr.bf16.mxu0 0
        %5478 = vmatmul.mubr.bf16.gmra.mxu0 %v5329
        %v5479 = vpop.f32.mrf.mxu0
        %v5480 = vadd.f32 0.0, %v5479
        %v5481 = vpop.f32.mrf.mxu0
        %v5482 = vpop.f32.mrf.mxu0
        %v5483 = vadd.f32 0.0, %v5482
        %v5484 = vpop.f32.mrf.mxu0
        %5485 = vmatprep.mubr.bf16.mxu0 0
        %5486 = vmatmul.mubr.bf16.gmra.mxu0 %v5332
        %v5487 = vpop.f32.mrf.mxu0
        %v5488 = vadd.f32 0.0, %v5487
        %v5489 = vpop.f32.mrf.mxu0
        %v5490 = vpop.f32.mrf.mxu0
        %v5491 = vadd.f32 0.0, %v5490
        %v5492 = vpop.f32.mrf.mxu0
        %5493 = vmatprep.mubr.bf16.mxu0 0
        %5494 = vmatmul.mubr.bf16.gmra.mxu0 %v5335
        %v5495 = vpop.f32.mrf.mxu0
        %v5496 = vadd.f32 0.0, %v5495
        %v5497 = vpop.f32.mrf.mxu0
        %v5498 = vpop.f32.mrf.mxu0
        %v5499 = vadd.f32 0.0, %v5498
        %v5500 = vpop.f32.mrf.mxu0
        %5501 = vmatprep.mubr.bf16.mxu0 0
        %5502 = vmatmul.mubr.bf16.gmra.mxu0 %v5338
        %v5503 = vpop.f32.mrf.mxu0
        %v5504 = vadd.f32 0.0, %v5503
        %v5505 = vpop.f32.mrf.mxu0
        %v5506 = vpop.f32.mrf.mxu0
        %v5507 = vadd.f32 0.0, %v5506
        %v5508 = vpop.f32.mrf.mxu0
        %5509 = vmatprep.mubr.bf16.mxu0 0
        %5510 = vmatmul.mubr.bf16.gmra.mxu0 %v5341
        %v5511 = vpop.f32.mrf.mxu0
        %v5512 = vadd.f32 0.0, %v5511
        %v5513 = vpop.f32.mrf.mxu0
        %v5514 = vpop.f32.mrf.mxu0
        %v5515 = vadd.f32 0.0, %v5514
        %v5516 = vpop.f32.mrf.mxu0
        %5517 = vmatprep.mubr.bf16.mxu0 0
        %5518 = vmatmul.mubr.bf16.gmra.mxu0 %v5344
        %v5519 = vpop.f32.mrf.mxu0
        %v5520 = vadd.f32 0.0, %v5519
        %v5521 = vpop.f32.mrf.mxu0
        %v5522 = vpop.f32.mrf.mxu0
        %v5523 = vadd.f32 0.0, %v5522
        %v5524 = vpop.f32.mrf.mxu0
        %5525 = vdwg.mxu0
        %v5526 = vadd.f32 %v5200, %v5384
        %v5527 = vadd.f32 %v5201, %v5387
        %v5528 = vadd.f32 %v5202, %v5392
        %v5529 = vadd.f32 %v5203, %v5395
        %v5530 = vadd.f32 %v5204, %v5400
        %v5531 = vadd.f32 %v5205, %v5403
        %v5532 = vadd.f32 %v5206, %v5408
        %v5533 = vadd.f32 %v5207, %v5411
        %v5534 = vadd.f32 %v5208, %v5416
        %v5535 = vadd.f32 %v5209, %v5419
        %v5536 = vadd.f32 %v5210, %v5424
        %v5537 = vadd.f32 %v5211, %v5427
        %v5538 = vadd.f32 %v5212, %v5432
        %v5539 = vadd.f32 %v5213, %v5435
        %v5540 = vadd.f32 %v5214, %v5440
        %v5541 = vadd.f32 %v5215, %v5443
        %v5542 = vadd.f32 %v5216, %v5448
        %v5543 = vadd.f32 %v5217, %v5451
        %v5544 = vadd.f32 %v5218, %v5456
        %v5545 = vadd.f32 %v5219, %v5459
        %v5546 = vadd.f32 %v5220, %v5464
        %v5547 = vadd.f32 %v5221, %v5467
        %v5548 = vadd.f32 %v5222, %v5472
        %v5549 = vadd.f32 %v5223, %v5475
        %v5550 = vadd.f32 %v5224, %v5480
        %v5551 = vadd.f32 %v5225, %v5483
        %v5552 = vadd.f32 %v5226, %v5488
        %v5553 = vadd.f32 %v5227, %v5491
        %v5554 = vadd.f32 %v5228, %v5496
        %v5555 = vadd.f32 %v5229, %v5499
        %v5556 = vadd.f32 %v5230, %v5504
        %v5557 = vadd.f32 %v5231, %v5507
        %v5558 = vadd.f32 %v5232, %v5512
        %v5559 = vadd.f32 %v5233, %v5515
        %v5560 = vadd.f32 %v5234, %v5520
        %v5561 = vadd.f32 %v5235, %v5523
        %v5562 = vld [vmem:[%s394 + $0x25] sm:$0xff]
        %v5563 = vld [vmem:[%s394 + $0x2d] sm:$0xff]
        %v5564 = vld [vmem:[%s394 + $0x35] sm:$0xff]
        %v5565 = vld [vmem:[%s394 + $0x3d] sm:$0xff]
        %v5566 = vld [vmem:[%s394 + $0x45] sm:$0xff]
        %v5567 = vld [vmem:[%s394 + $0x4d] sm:$0xff]
        %v5568 = vld [vmem:[%s394 + $0x55] sm:$0xff]
        %v5569 = vld [vmem:[%s394 + $0x5d] sm:$0xff]
        %v5570 = vld [vmem:[%s394 + $0x65] sm:$0xff]
        %v5571 = vld [vmem:[%s394 + $0x6d] sm:$0xff]
        %v5572 = vld [vmem:[%s394 + $0x75] sm:$0xff]
        %v5573 = vld [vmem:[%s394 + $0x7d] sm:$0xff]
        %v5574 = vld [vmem:[%s394 + $0x85] sm:$0xff]
        %v5575 = vld [vmem:[%s394 + $0x8d] sm:$0xff]
        %v5576 = vld [vmem:[%s394 + $0x95] sm:$0xff]
        %v5577 = vld [vmem:[%s394 + $0x9d] sm:$0xff]
        %v5578 = vld [vmem:[%s394 + $0xa5] sm:$0xff]
        %v5579 = vld [vmem:[%s394 + $0xad] sm:$0xff]
        %v5580 = vld [vmem:[%s394 + $0xb5] sm:$0xff]
        %v5581 = vld [vmem:[%s394 + $0xbd] sm:$0xff]
        %v5582 = vld [vmem:[%s394 + $0xc5] sm:$0xff]
        %v5583 = vld [vmem:[%s394 + $0xcd] sm:$0xff]
        %v5584 = vld [vmem:[%s394 + $0xd5] sm:$0xff]
        %v5585 = vld [vmem:[%s394 + $0xdd] sm:$0xff]
        %v5586 = vld [vmem:[%s394 + $0xe5] sm:$0xff]
        %v5587 = vld [vmem:[%s394 + $0xed] sm:$0xff]
        %v5588 = vld [vmem:[%s394 + $0xf5] sm:$0xff]
        %v5589 = vld [vmem:[%s394 + $0xfd] sm:$0xff]
        %v5590 = vld [vmem:[%s394 + $0x105] sm:$0xff]
        %v5591 = vld [vmem:[%s394 + $0x10d] sm:$0xff]
        %v5592 = vld [vmem:[%s394 + $0x115] sm:$0xff]
        %v5593 = vld [vmem:[%s394 + $0x11d] sm:$0xff]
        %v5594 = vld [vmem:[%s394 + $0x125] sm:$0xff]
        %v5595 = vld [vmem:[%s394 + $0x12d] sm:$0xff]
        %v5596 = vld [vmem:[%s394 + $0x135] sm:$0xff]
        %v5597 = vld [vmem:[%s394 + $0x13d] sm:$0x3f]
        %v5598 = vpack.c.bf16 %v5563, %v5562
        %v5599 = vpack.c.bf16 %v5565, %v5564
        %v5600 = vpack.c.bf16 %v5567, %v5566
        %v5601 = vpack.c.bf16 %v5569, %v5568
        %v5602 = vpack.c.bf16 %v5571, %v5570
        %v5603 = vpack.c.bf16 %v5573, %v5572
        %v5604 = vpack.c.bf16 %v5575, %v5574
        %v5605 = vpack.c.bf16 %v5577, %v5576
        %v5606 = vpack.c.bf16 %v5579, %v5578
        %v5607 = vpack.c.bf16 %v5581, %v5580
        %v5608 = vpack.c.bf16 %v5583, %v5582
        %v5609 = vpack.c.bf16 %v5585, %v5584
        %v5610 = vpack.c.bf16 %v5587, %v5586
        %v5611 = vpack.c.bf16 %v5589, %v5588
        %v5612 = vpack.c.bf16 %v5591, %v5590
        %v5613 = vpack.c.bf16 %v5593, %v5592
        %v5614 = vpack.c.bf16 %v5595, %v5594
        %v5615 = vpack.c.bf16 %v5597, %v5596
        %s5616 = scalar_lea.vmem %s4, 32
        %v5617 = vld [vmem:[%s5616] sm:$0x3]
        %v5619 = vsel %vm528, %v5598, 0
        %v5622 = vsel %vm528, %v5599, 0
        %v5625 = vsel %vm528, %v5600, 0
        %v5628 = vsel %vm528, %v5601, 0
        %v5631 = vsel %vm528, %v5602, 0
        %v5634 = vsel %vm528, %v5603, 0
        %v5637 = vsel %vm528, %v5604, 0
        %v5640 = vsel %vm528, %v5605, 0
        %v5643 = vsel %vm528, %v5606, 0
        %v5646 = vsel %vm528, %v5607, 0
        %v5649 = vsel %vm528, %v5608, 0
        %v5652 = vsel %vm528, %v5609, 0
        %v5655 = vsel %vm528, %v5610, 0
        %v5658 = vsel %vm528, %v5611, 0
        %v5661 = vsel %vm528, %v5612, 0
        %v5664 = vsel %vm528, %v5613, 0
        %v5667 = vsel %vm528, %v5614, 0
        %v5670 = vsel %vm528, %v5615, 0
        %v5673 = vsel %vm583, %v5617, 0
        %5675 = vmatprep.subr.bf16.mxu0 0
        %5676 = vmatpush1.bf16.msra.mxu0 0
        %5677 = vmatprep.subr.bf16.mxu0 0
        %5678 = vmatpush1.bf16.msra.mxu0 0
        %5679 = vmatprep.subr.bf16.mxu0 0
        %5680 = vmatpush1.bf16.msra.mxu0 0
        %5681 = vmatprep.subr.bf16.mxu0 0
        %5682 = vmatpush1.bf16.msra.mxu0 0
        %5683 = vmatprep.subr.bf16.mxu0 0
        %5684 = vmatpush1.bf16.msra.mxu0 0
        %5685 = vmatprep.subr.bf16.mxu0 0
        %5686 = vmatpush1.bf16.msra.mxu0 0
        %5687 = vmatprep.subr.bf16.mxu0 0
        %5688 = vmatpush1.bf16.msra.mxu0 0
        %5689 = vmatprep.subr.bf16.mxu0 0
        %5690 = vmatpush1.bf16.msra.mxu0 %v5673
        %5691 = vmatprep.subr.bf16.mxu0 0
        %5692 = vmatpush2.bf16.msra.mxu0 0
        %5693 = vmatprep.subr.bf16.mxu0 0
        %5694 = vmatpush2.bf16.msra.mxu0 0
        %5695 = vmatprep.subr.bf16.mxu0 0
        %5696 = vmatpush2.bf16.msra.mxu0 0
        %5697 = vmatprep.subr.bf16.mxu0 0
        %5698 = vmatpush2.bf16.msra.mxu0 0
        %5699 = vmatprep.subr.bf16.mxu0 0
        %5700 = vmatpush2.bf16.msra.mxu0 0
        %5701 = vmatprep.subr.bf16.mxu0 0
        %5702 = vmatpush2.bf16.msra.mxu0 0
        %5703 = vmatprep.subr.bf16.mxu0 0
        %5704 = vmatpush2.bf16.msra.mxu0 0
        %5705 = vmatprep.subr.bf16.mxu0 0
        %5706 = vmatpush2.bf16.msra.mxu0 0
        %5707 = vmatprep.mubr.bf16.mxu0 0
        %5708 = vmatmul.mubr.bf16.gmra.mxu0 %v5619
        %v5709 = vpop.f32.mrf.mxu0
        %v5710 = vadd.f32 0.0, %v5709
        %v5711 = vpop.f32.mrf.mxu0
        %v5712 = vpop.f32.mrf.mxu0
        %v5713 = vadd.f32 0.0, %v5712
        %v5714 = vpop.f32.mrf.mxu0
        %5715 = vmatprep.mubr.bf16.mxu0 0
        %5716 = vmatmul.mubr.bf16.gmra.mxu0 %v5622
        %v5717 = vpop.f32.mrf.mxu0
        %v5718 = vadd.f32 0.0, %v5717
        %v5719 = vpop.f32.mrf.mxu0
        %v5720 = vpop.f32.mrf.mxu0
        %v5721 = vadd.f32 0.0, %v5720
        %v5722 = vpop.f32.mrf.mxu0
        %5723 = vmatprep.mubr.bf16.mxu0 0
        %5724 = vmatmul.mubr.bf16.gmra.mxu0 %v5625
        %v5725 = vpop.f32.mrf.mxu0
        %v5726 = vadd.f32 0.0, %v5725
        %v5727 = vpop.f32.mrf.mxu0
        %v5728 = vpop.f32.mrf.mxu0
        %v5729 = vadd.f32 0.0, %v5728
        %v5730 = vpop.f32.mrf.mxu0
        %5731 = vmatprep.mubr.bf16.mxu0 0
        %5732 = vmatmul.mubr.bf16.gmra.mxu0 %v5628
        %v5733 = vpop.f32.mrf.mxu0
        %v5734 = vadd.f32 0.0, %v5733
        %v5735 = vpop.f32.mrf.mxu0
        %v5736 = vpop.f32.mrf.mxu0
        %v5737 = vadd.f32 0.0, %v5736
        %v5738 = vpop.f32.mrf.mxu0
        %5739 = vmatprep.mubr.bf16.mxu0 0
        %5740 = vmatmul.mubr.bf16.gmra.mxu0 %v5631
        %v5741 = vpop.f32.mrf.mxu0
        %v5742 = vadd.f32 0.0, %v5741
        %v5743 = vpop.f32.mrf.mxu0
        %v5744 = vpop.f32.mrf.mxu0
        %v5745 = vadd.f32 0.0, %v5744
        %v5746 = vpop.f32.mrf.mxu0
        %5747 = vmatprep.mubr.bf16.mxu0 0
        %5748 = vmatmul.mubr.bf16.gmra.mxu0 %v5634
        %v5749 = vpop.f32.mrf.mxu0
        %v5750 = vadd.f32 0.0, %v5749
        %v5751 = vpop.f32.mrf.mxu0
        %v5752 = vpop.f32.mrf.mxu0
        %v5753 = vadd.f32 0.0, %v5752
        %v5754 = vpop.f32.mrf.mxu0
        %5755 = vmatprep.mubr.bf16.mxu0 0
        %5756 = vmatmul.mubr.bf16.gmra.mxu0 %v5637
        %v5757 = vpop.f32.mrf.mxu0
        %v5758 = vadd.f32 0.0, %v5757
        %v5759 = vpop.f32.mrf.mxu0
        %v5760 = vpop.f32.mrf.mxu0
        %v5761 = vadd.f32 0.0, %v5760
        %v5762 = vpop.f32.mrf.mxu0
        %5763 = vmatprep.mubr.bf16.mxu0 0
        %5764 = vmatmul.mubr.bf16.gmra.mxu0 %v5640
        %v5765 = vpop.f32.mrf.mxu0
        %v5766 = vadd.f32 0.0, %v5765
        %v5767 = vpop.f32.mrf.mxu0
        %v5768 = vpop.f32.mrf.mxu0
        %v5769 = vadd.f32 0.0, %v5768
        %v5770 = vpop.f32.mrf.mxu0
        %5771 = vmatprep.mubr.bf16.mxu0 0
        %5772 = vmatmul.mubr.bf16.gmra.mxu0 %v5643
        %v5773 = vpop.f32.mrf.mxu0
        %v5774 = vadd.f32 0.0, %v5773
        %v5775 = vpop.f32.mrf.mxu0
        %v5776 = vpop.f32.mrf.mxu0
        %v5777 = vadd.f32 0.0, %v5776
        %v5778 = vpop.f32.mrf.mxu0
        %5779 = vmatprep.mubr.bf16.mxu0 0
        %5780 = vmatmul.mubr.bf16.gmra.mxu0 %v5646
        %v5781 = vpop.f32.mrf.mxu0
        %v5782 = vadd.f32 0.0, %v5781
        %v5783 = vpop.f32.mrf.mxu0
        %v5784 = vpop.f32.mrf.mxu0
        %v5785 = vadd.f32 0.0, %v5784
        %v5786 = vpop.f32.mrf.mxu0
        %5787 = vmatprep.mubr.bf16.mxu0 0
        %5788 = vmatmul.mubr.bf16.gmra.mxu0 %v5649
        %v5789 = vpop.f32.mrf.mxu0
        %v5790 = vadd.f32 0.0, %v5789
        %v5791 = vpop.f32.mrf.mxu0
        %v5792 = vpop.f32.mrf.mxu0
        %v5793 = vadd.f32 0.0, %v5792
        %v5794 = vpop.f32.mrf.mxu0
        %5795 = vmatprep.mubr.bf16.mxu0 0
        %5796 = vmatmul.mubr.bf16.gmra.mxu0 %v5652
        %v5797 = vpop.f32.mrf.mxu0
        %v5798 = vadd.f32 0.0, %v5797
        %v5799 = vpop.f32.mrf.mxu0
        %v5800 = vpop.f32.mrf.mxu0
        %v5801 = vadd.f32 0.0, %v5800
        %v5802 = vpop.f32.mrf.mxu0
        %5803 = vmatprep.mubr.bf16.mxu0 0
        %5804 = vmatmul.mubr.bf16.gmra.mxu0 %v5655
        %v5805 = vpop.f32.mrf.mxu0
        %v5806 = vadd.f32 0.0, %v5805
        %v5807 = vpop.f32.mrf.mxu0
        %v5808 = vpop.f32.mrf.mxu0
        %v5809 = vadd.f32 0.0, %v5808
        %v5810 = vpop.f32.mrf.mxu0
        %5811 = vmatprep.mubr.bf16.mxu0 0
        %5812 = vmatmul.mubr.bf16.gmra.mxu0 %v5658
        %v5813 = vpop.f32.mrf.mxu0
        %v5814 = vadd.f32 0.0, %v5813
        %v5815 = vpop.f32.mrf.mxu0
        %v5816 = vpop.f32.mrf.mxu0
        %v5817 = vadd.f32 0.0, %v5816
        %v5818 = vpop.f32.mrf.mxu0
        %5819 = vmatprep.mubr.bf16.mxu0 0
        %5820 = vmatmul.mubr.bf16.gmra.mxu0 %v5661
        %v5821 = vpop.f32.mrf.mxu0
        %v5822 = vadd.f32 0.0, %v5821
        %v5823 = vpop.f32.mrf.mxu0
        %v5824 = vpop.f32.mrf.mxu0
        %v5825 = vadd.f32 0.0, %v5824
        %v5826 = vpop.f32.mrf.mxu0
        %5827 = vmatprep.mubr.bf16.mxu0 0
        %5828 = vmatmul.mubr.bf16.gmra.mxu0 %v5664
        %v5829 = vpop.f32.mrf.mxu0
        %v5830 = vadd.f32 0.0, %v5829
        %v5831 = vpop.f32.mrf.mxu0
        %v5832 = vpop.f32.mrf.mxu0
        %v5833 = vadd.f32 0.0, %v5832
        %v5834 = vpop.f32.mrf.mxu0
        %5835 = vmatprep.mubr.bf16.mxu0 0
        %5836 = vmatmul.mubr.bf16.gmra.mxu0 %v5667
        %v5837 = vpop.f32.mrf.mxu0
        %v5838 = vadd.f32 0.0, %v5837
        %v5839 = vpop.f32.mrf.mxu0
        %v5840 = vpop.f32.mrf.mxu0
        %v5841 = vadd.f32 0.0, %v5840
        %v5842 = vpop.f32.mrf.mxu0
        %5843 = vmatprep.mubr.bf16.mxu0 0
        %5844 = vmatmul.mubr.bf16.gmra.mxu0 %v5670
        %v5845 = vpop.f32.mrf.mxu0
        %v5846 = vadd.f32 0.0, %v5845
        %v5847 = vpop.f32.mrf.mxu0
        %v5848 = vpop.f32.mrf.mxu0
        %v5849 = vadd.f32 0.0, %v5848
        %v5850 = vpop.f32.mrf.mxu0
        %5851 = vdwg.mxu0
        %v5852 = vadd.f32 %v5526, %v5710
        %v5853 = vadd.f32 %v5527, %v5713
        %v5854 = vadd.f32 %v5528, %v5718
        %v5855 = vadd.f32 %v5529, %v5721
        %v5856 = vadd.f32 %v5530, %v5726
        %v5857 = vadd.f32 %v5531, %v5729
        %v5858 = vadd.f32 %v5532, %v5734
        %v5859 = vadd.f32 %v5533, %v5737
        %v5860 = vadd.f32 %v5534, %v5742
        %v5861 = vadd.f32 %v5535, %v5745
        %v5862 = vadd.f32 %v5536, %v5750
        %v5863 = vadd.f32 %v5537, %v5753
        %v5864 = vadd.f32 %v5538, %v5758
        %v5865 = vadd.f32 %v5539, %v5761
        %v5866 = vadd.f32 %v5540, %v5766
        %v5867 = vadd.f32 %v5541, %v5769
        %v5868 = vadd.f32 %v5542, %v5774
        %v5869 = vadd.f32 %v5543, %v5777
        %v5870 = vadd.f32 %v5544, %v5782
        %v5871 = vadd.f32 %v5545, %v5785
        %v5872 = vadd.f32 %v5546, %v5790
        %v5873 = vadd.f32 %v5547, %v5793
        %v5874 = vadd.f32 %v5548, %v5798
        %v5875 = vadd.f32 %v5549, %v5801
        %v5876 = vadd.f32 %v5550, %v5806
        %v5877 = vadd.f32 %v5551, %v5809
        %v5878 = vadd.f32 %v5552, %v5814
        %v5879 = vadd.f32 %v5553, %v5817
        %v5880 = vadd.f32 %v5554, %v5822
        %v5881 = vadd.f32 %v5555, %v5825
        %v5882 = vadd.f32 %v5556, %v5830
        %v5883 = vadd.f32 %v5557, %v5833
        %v5884 = vadd.f32 %v5558, %v5838
        %v5885 = vadd.f32 %v5559, %v5841
        %v5886 = vadd.f32 %v5560, %v5846
        %v5887 = vadd.f32 %v5561, %v5849
        %v5888 = vld [vmem:[%s394 + $0x26] sm:$0xff]
        %v5889 = vld [vmem:[%s394 + $0x2e] sm:$0xff]
        %v5890 = vld [vmem:[%s394 + $0x36] sm:$0xff]
        %v5891 = vld [vmem:[%s394 + $0x3e] sm:$0xff]
        %v5892 = vld [vmem:[%s394 + $0x46] sm:$0xff]
        %v5893 = vld [vmem:[%s394 + $0x4e] sm:$0xff]
        %v5894 = vld [vmem:[%s394 + $0x56] sm:$0xff]
        %v5895 = vld [vmem:[%s394 + $0x5e] sm:$0xff]
        %v5896 = vld [vmem:[%s394 + $0x66] sm:$0xff]
        %v5897 = vld [vmem:[%s394 + $0x6e] sm:$0xff]
        %v5898 = vld [vmem:[%s394 + $0x76] sm:$0xff]
        %v5899 = vld [vmem:[%s394 + $0x7e] sm:$0xff]
        %v5900 = vld [vmem:[%s394 + $0x86] sm:$0xff]
        %v5901 = vld [vmem:[%s394 + $0x8e] sm:$0xff]
        %v5902 = vld [vmem:[%s394 + $0x96] sm:$0xff]
        %v5903 = vld [vmem:[%s394 + $0x9e] sm:$0xff]
        %v5904 = vld [vmem:[%s394 + $0xa6] sm:$0xff]
        %v5905 = vld [vmem:[%s394 + $0xae] sm:$0xff]
        %v5906 = vld [vmem:[%s394 + $0xb6] sm:$0xff]
        %v5907 = vld [vmem:[%s394 + $0xbe] sm:$0xff]
        %v5908 = vld [vmem:[%s394 + $0xc6] sm:$0xff]
        %v5909 = vld [vmem:[%s394 + $0xce] sm:$0xff]
        %v5910 = vld [vmem:[%s394 + $0xd6] sm:$0xff]
        %v5911 = vld [vmem:[%s394 + $0xde] sm:$0xff]
        %v5912 = vld [vmem:[%s394 + $0xe6] sm:$0xff]
        %v5913 = vld [vmem:[%s394 + $0xee] sm:$0xff]
        %v5914 = vld [vmem:[%s394 + $0xf6] sm:$0xff]
        %v5915 = vld [vmem:[%s394 + $0xfe] sm:$0xff]
        %v5916 = vld [vmem:[%s394 + $0x106] sm:$0xff]
        %v5917 = vld [vmem:[%s394 + $0x10e] sm:$0xff]
        %v5918 = vld [vmem:[%s394 + $0x116] sm:$0xff]
        %v5919 = vld [vmem:[%s394 + $0x11e] sm:$0xff]
        %v5920 = vld [vmem:[%s394 + $0x126] sm:$0xff]
        %v5921 = vld [vmem:[%s394 + $0x12e] sm:$0xff]
        %v5922 = vld [vmem:[%s394 + $0x136] sm:$0xff]
        %v5923 = vld [vmem:[%s394 + $0x13e] sm:$0x3f]
        %v5924 = vpack.c.bf16 %v5889, %v5888
        %v5925 = vpack.c.bf16 %v5891, %v5890
        %v5926 = vpack.c.bf16 %v5893, %v5892
        %v5927 = vpack.c.bf16 %v5895, %v5894
        %v5928 = vpack.c.bf16 %v5897, %v5896
        %v5929 = vpack.c.bf16 %v5899, %v5898
        %v5930 = vpack.c.bf16 %v5901, %v5900
        %v5931 = vpack.c.bf16 %v5903, %v5902
        %v5932 = vpack.c.bf16 %v5905, %v5904
        %v5933 = vpack.c.bf16 %v5907, %v5906
        %v5934 = vpack.c.bf16 %v5909, %v5908
        %v5935 = vpack.c.bf16 %v5911, %v5910
        %v5936 = vpack.c.bf16 %v5913, %v5912
        %v5937 = vpack.c.bf16 %v5915, %v5914
        %v5938 = vpack.c.bf16 %v5917, %v5916
        %v5939 = vpack.c.bf16 %v5919, %v5918
        %v5940 = vpack.c.bf16 %v5921, %v5920
        %v5941 = vpack.c.bf16 %v5923, %v5922
        %s5942 = scalar_lea.vmem %s4, 34
        %v5943 = vld [vmem:[%s5942] sm:$0x3]
        %v5945 = vsel %vm528, %v5924, 0
        %v5948 = vsel %vm528, %v5925, 0
        %v5951 = vsel %vm528, %v5926, 0
        %v5954 = vsel %vm528, %v5927, 0
        %v5957 = vsel %vm528, %v5928, 0
        %v5960 = vsel %vm528, %v5929, 0
        %v5963 = vsel %vm528, %v5930, 0
        %v5966 = vsel %vm528, %v5931, 0
        %v5969 = vsel %vm528, %v5932, 0
        %v5972 = vsel %vm528, %v5933, 0
        %v5975 = vsel %vm528, %v5934, 0
        %v5978 = vsel %vm528, %v5935, 0
        %v5981 = vsel %vm528, %v5936, 0
        %v5984 = vsel %vm528, %v5937, 0
        %v5987 = vsel %vm528, %v5938, 0
        %v5990 = vsel %vm528, %v5939, 0
        %v5993 = vsel %vm528, %v5940, 0
        %v5996 = vsel %vm528, %v5941, 0
        %v5999 = vsel %vm583, %v5943, 0
        %6001 = vmatprep.subr.bf16.mxu0 0
        %6002 = vmatpush1.bf16.msra.mxu0 0
        %6003 = vmatprep.subr.bf16.mxu0 0
        %6004 = vmatpush1.bf16.msra.mxu0 0
        %6005 = vmatprep.subr.bf16.mxu0 0
        %6006 = vmatpush1.bf16.msra.mxu0 0
        %6007 = vmatprep.subr.bf16.mxu0 0
        %6008 = vmatpush1.bf16.msra.mxu0 0
        %6009 = vmatprep.subr.bf16.mxu0 0
        %6010 = vmatpush1.bf16.msra.mxu0 0
        %6011 = vmatprep.subr.bf16.mxu0 0
        %6012 = vmatpush1.bf16.msra.mxu0 0
        %6013 = vmatprep.subr.bf16.mxu0 0
        %6014 = vmatpush1.bf16.msra.mxu0 0
        %6015 = vmatprep.subr.bf16.mxu0 0
        %6016 = vmatpush1.bf16.msra.mxu0 %v5999
        %6017 = vmatprep.subr.bf16.mxu0 0
        %6018 = vmatpush2.bf16.msra.mxu0 0
        %6019 = vmatprep.subr.bf16.mxu0 0
        %6020 = vmatpush2.bf16.msra.mxu0 0
        %6021 = vmatprep.subr.bf16.mxu0 0
        %6022 = vmatpush2.bf16.msra.mxu0 0
        %6023 = vmatprep.subr.bf16.mxu0 0
        %6024 = vmatpush2.bf16.msra.mxu0 0
        %6025 = vmatprep.subr.bf16.mxu0 0
        %6026 = vmatpush2.bf16.msra.mxu0 0
        %6027 = vmatprep.subr.bf16.mxu0 0
        %6028 = vmatpush2.bf16.msra.mxu0 0
        %6029 = vmatprep.subr.bf16.mxu0 0
        %6030 = vmatpush2.bf16.msra.mxu0 0
        %6031 = vmatprep.subr.bf16.mxu0 0
        %6032 = vmatpush2.bf16.msra.mxu0 0
        %6033 = vmatprep.mubr.bf16.mxu0 0
        %6034 = vmatmul.mubr.bf16.gmra.mxu0 %v5945
        %v6035 = vpop.f32.mrf.mxu0
        %v6036 = vadd.f32 0.0, %v6035
        %v6037 = vpop.f32.mrf.mxu0
        %v6038 = vpop.f32.mrf.mxu0
        %v6039 = vadd.f32 0.0, %v6038
        %v6040 = vpop.f32.mrf.mxu0
        %6041 = vmatprep.mubr.bf16.mxu0 0
        %6042 = vmatmul.mubr.bf16.gmra.mxu0 %v5948
        %v6043 = vpop.f32.mrf.mxu0
        %v6044 = vadd.f32 0.0, %v6043
        %v6045 = vpop.f32.mrf.mxu0
        %v6046 = vpop.f32.mrf.mxu0
        %v6047 = vadd.f32 0.0, %v6046
        %v6048 = vpop.f32.mrf.mxu0
        %6049 = vmatprep.mubr.bf16.mxu0 0
        %6050 = vmatmul.mubr.bf16.gmra.mxu0 %v5951
        %v6051 = vpop.f32.mrf.mxu0
        %v6052 = vadd.f32 0.0, %v6051
        %v6053 = vpop.f32.mrf.mxu0
        %v6054 = vpop.f32.mrf.mxu0
        %v6055 = vadd.f32 0.0, %v6054
        %v6056 = vpop.f32.mrf.mxu0
        %6057 = vmatprep.mubr.bf16.mxu0 0
        %6058 = vmatmul.mubr.bf16.gmra.mxu0 %v5954
        %v6059 = vpop.f32.mrf.mxu0
        %v6060 = vadd.f32 0.0, %v6059
        %v6061 = vpop.f32.mrf.mxu0
        %v6062 = vpop.f32.mrf.mxu0
        %v6063 = vadd.f32 0.0, %v6062
        %v6064 = vpop.f32.mrf.mxu0
        %6065 = vmatprep.mubr.bf16.mxu0 0
        %6066 = vmatmul.mubr.bf16.gmra.mxu0 %v5957
        %v6067 = vpop.f32.mrf.mxu0
        %v6068 = vadd.f32 0.0, %v6067
        %v6069 = vpop.f32.mrf.mxu0
        %v6070 = vpop.f32.mrf.mxu0
        %v6071 = vadd.f32 0.0, %v6070
        %v6072 = vpop.f32.mrf.mxu0
        %6073 = vmatprep.mubr.bf16.mxu0 0
        %6074 = vmatmul.mubr.bf16.gmra.mxu0 %v5960
        %v6075 = vpop.f32.mrf.mxu0
        %v6076 = vadd.f32 0.0, %v6075
        %v6077 = vpop.f32.mrf.mxu0
        %v6078 = vpop.f32.mrf.mxu0
        %v6079 = vadd.f32 0.0, %v6078
        %v6080 = vpop.f32.mrf.mxu0
        %6081 = vmatprep.mubr.bf16.mxu0 0
        %6082 = vmatmul.mubr.bf16.gmra.mxu0 %v5963
        %v6083 = vpop.f32.mrf.mxu0
        %v6084 = vadd.f32 0.0, %v6083
        %v6085 = vpop.f32.mrf.mxu0
        %v6086 = vpop.f32.mrf.mxu0
        %v6087 = vadd.f32 0.0, %v6086
        %v6088 = vpop.f32.mrf.mxu0
        %6089 = vmatprep.mubr.bf16.mxu0 0
        %6090 = vmatmul.mubr.bf16.gmra.mxu0 %v5966
        %v6091 = vpop.f32.mrf.mxu0
        %v6092 = vadd.f32 0.0, %v6091
        %v6093 = vpop.f32.mrf.mxu0
        %v6094 = vpop.f32.mrf.mxu0
        %v6095 = vadd.f32 0.0, %v6094
        %v6096 = vpop.f32.mrf.mxu0
        %6097 = vmatprep.mubr.bf16.mxu0 0
        %6098 = vmatmul.mubr.bf16.gmra.mxu0 %v5969
        %v6099 = vpop.f32.mrf.mxu0
        %v6100 = vadd.f32 0.0, %v6099
        %v6101 = vpop.f32.mrf.mxu0
        %v6102 = vpop.f32.mrf.mxu0
        %v6103 = vadd.f32 0.0, %v6102
        %v6104 = vpop.f32.mrf.mxu0
        %6105 = vmatprep.mubr.bf16.mxu0 0
        %6106 = vmatmul.mubr.bf16.gmra.mxu0 %v5972
        %v6107 = vpop.f32.mrf.mxu0
        %v6108 = vadd.f32 0.0, %v6107
        %v6109 = vpop.f32.mrf.mxu0
        %v6110 = vpop.f32.mrf.mxu0
        %v6111 = vadd.f32 0.0, %v6110
        %v6112 = vpop.f32.mrf.mxu0
        %6113 = vmatprep.mubr.bf16.mxu0 0
        %6114 = vmatmul.mubr.bf16.gmra.mxu0 %v5975
        %v6115 = vpop.f32.mrf.mxu0
        %v6116 = vadd.f32 0.0, %v6115
        %v6117 = vpop.f32.mrf.mxu0
        %v6118 = vpop.f32.mrf.mxu0
        %v6119 = vadd.f32 0.0, %v6118
        %v6120 = vpop.f32.mrf.mxu0
        %6121 = vmatprep.mubr.bf16.mxu0 0
        %6122 = vmatmul.mubr.bf16.gmra.mxu0 %v5978
        %v6123 = vpop.f32.mrf.mxu0
        %v6124 = vadd.f32 0.0, %v6123
        %v6125 = vpop.f32.mrf.mxu0
        %v6126 = vpop.f32.mrf.mxu0
        %v6127 = vadd.f32 0.0, %v6126
        %v6128 = vpop.f32.mrf.mxu0
        %6129 = vmatprep.mubr.bf16.mxu0 0
        %6130 = vmatmul.mubr.bf16.gmra.mxu0 %v5981
        %v6131 = vpop.f32.mrf.mxu0
        %v6132 = vadd.f32 0.0, %v6131
        %v6133 = vpop.f32.mrf.mxu0
        %v6134 = vpop.f32.mrf.mxu0
        %v6135 = vadd.f32 0.0, %v6134
        %v6136 = vpop.f32.mrf.mxu0
        %6137 = vmatprep.mubr.bf16.mxu0 0
        %6138 = vmatmul.mubr.bf16.gmra.mxu0 %v5984
        %v6139 = vpop.f32.mrf.mxu0
        %v6140 = vadd.f32 0.0, %v6139
        %v6141 = vpop.f32.mrf.mxu0
        %v6142 = vpop.f32.mrf.mxu0
        %v6143 = vadd.f32 0.0, %v6142
        %v6144 = vpop.f32.mrf.mxu0
        %6145 = vmatprep.mubr.bf16.mxu0 0
        %6146 = vmatmul.mubr.bf16.gmra.mxu0 %v5987
        %v6147 = vpop.f32.mrf.mxu0
        %v6148 = vadd.f32 0.0, %v6147
        %v6149 = vpop.f32.mrf.mxu0
        %v6150 = vpop.f32.mrf.mxu0
        %v6151 = vadd.f32 0.0, %v6150
        %v6152 = vpop.f32.mrf.mxu0
        %6153 = vmatprep.mubr.bf16.mxu0 0
        %6154 = vmatmul.mubr.bf16.gmra.mxu0 %v5990
        %v6155 = vpop.f32.mrf.mxu0
        %v6156 = vadd.f32 0.0, %v6155
        %v6157 = vpop.f32.mrf.mxu0
        %v6158 = vpop.f32.mrf.mxu0
        %v6159 = vadd.f32 0.0, %v6158
        %v6160 = vpop.f32.mrf.mxu0
        %6161 = vmatprep.mubr.bf16.mxu0 0
        %6162 = vmatmul.mubr.bf16.gmra.mxu0 %v5993
        %v6163 = vpop.f32.mrf.mxu0
        %v6164 = vadd.f32 0.0, %v6163
        %v6165 = vpop.f32.mrf.mxu0
        %v6166 = vpop.f32.mrf.mxu0
        %v6167 = vadd.f32 0.0, %v6166
        %v6168 = vpop.f32.mrf.mxu0
        %6169 = vmatprep.mubr.bf16.mxu0 0
        %6170 = vmatmul.mubr.bf16.gmra.mxu0 %v5996
        %v6171 = vpop.f32.mrf.mxu0
        %v6172 = vadd.f32 0.0, %v6171
        %v6173 = vpop.f32.mrf.mxu0
        %v6174 = vpop.f32.mrf.mxu0
        %v6175 = vadd.f32 0.0, %v6174
        %v6176 = vpop.f32.mrf.mxu0
        %6177 = vdwg.mxu0
        %v6178 = vadd.f32 %v5852, %v6036
        %v6179 = vadd.f32 %v5853, %v6039
        %v6180 = vadd.f32 %v5854, %v6044
        %v6181 = vadd.f32 %v5855, %v6047
        %v6182 = vadd.f32 %v5856, %v6052
        %v6183 = vadd.f32 %v5857, %v6055
        %v6184 = vadd.f32 %v5858, %v6060
        %v6185 = vadd.f32 %v5859, %v6063
        %v6186 = vadd.f32 %v5860, %v6068
        %v6187 = vadd.f32 %v5861, %v6071
        %v6188 = vadd.f32 %v5862, %v6076
        %v6189 = vadd.f32 %v5863, %v6079
        %v6190 = vadd.f32 %v5864, %v6084
        %v6191 = vadd.f32 %v5865, %v6087
        %v6192 = vadd.f32 %v5866, %v6092
        %v6193 = vadd.f32 %v5867, %v6095
        %v6194 = vadd.f32 %v5868, %v6100
        %v6195 = vadd.f32 %v5869, %v6103
        %v6196 = vadd.f32 %v5870, %v6108
        %v6197 = vadd.f32 %v5871, %v6111
        %v6198 = vadd.f32 %v5872, %v6116
        %v6199 = vadd.f32 %v5873, %v6119
        %v6200 = vadd.f32 %v5874, %v6124
        %v6201 = vadd.f32 %v5875, %v6127
        %v6202 = vadd.f32 %v5876, %v6132
        %v6203 = vadd.f32 %v5877, %v6135
        %v6204 = vadd.f32 %v5878, %v6140
        %v6205 = vadd.f32 %v5879, %v6143
        %v6206 = vadd.f32 %v5880, %v6148
        %v6207 = vadd.f32 %v5881, %v6151
        %v6208 = vadd.f32 %v5882, %v6156
        %v6209 = vadd.f32 %v5883, %v6159
        %v6210 = vadd.f32 %v5884, %v6164
        %v6211 = vadd.f32 %v5885, %v6167
        %v6212 = vadd.f32 %v5886, %v6172
        %v6213 = vadd.f32 %v5887, %v6175
        %v6214 = vld [vmem:[%s405] sm:$0xff]
        %v6215 = vld [vmem:[%s405 + $0x8] sm:$0xff]
        %v6216 = vld [vmem:[%s405 + $0x10] sm:$0xff]
        %v6217 = vld [vmem:[%s405 + $0x18] sm:$0xff]
        %v6218 = vld [vmem:[%s405 + $0x20] sm:$0xff]
        %v6219 = vld [vmem:[%s405 + $0x28] sm:$0xff]
        %v6220 = vld [vmem:[%s405 + $0x30] sm:$0xff]
        %v6221 = vld [vmem:[%s405 + $0x38] sm:$0xff]
        %v6222 = vld [vmem:[%s405 + $0x40] sm:$0xff]
        %v6223 = vld [vmem:[%s405 + $0x48] sm:$0xff]
        %v6224 = vld [vmem:[%s405 + $0x50] sm:$0xff]
        %v6225 = vld [vmem:[%s405 + $0x58] sm:$0xff]
        %v6226 = vld [vmem:[%s405 + $0x60] sm:$0xff]
        %v6227 = vld [vmem:[%s405 + $0x68] sm:$0xff]
        %v6228 = vld [vmem:[%s405 + $0x70] sm:$0xff]
        %v6229 = vld [vmem:[%s405 + $0x78] sm:$0xff]
        %v6230 = vld [vmem:[%s405 + $0x80] sm:$0xff]
        %v6231 = vld [vmem:[%s405 + $0x88] sm:$0xff]
        %v6232 = vld [vmem:[%s405 + $0x90] sm:$0xff]
        %v6233 = vld [vmem:[%s405 + $0x98] sm:$0xff]
        %v6234 = vld [vmem:[%s405 + $0xa0] sm:$0xff]
        %v6235 = vld [vmem:[%s405 + $0xa8] sm:$0xff]
        %v6236 = vld [vmem:[%s405 + $0xb0] sm:$0xff]
        %v6237 = vld [vmem:[%s405 + $0xb8] sm:$0xff]
        %v6238 = vld [vmem:[%s405 + $0xc0] sm:$0xff]
        %v6239 = vld [vmem:[%s405 + $0xc8] sm:$0xff]
        %v6240 = vld [vmem:[%s405 + $0xd0] sm:$0xff]
        %v6241 = vld [vmem:[%s405 + $0xd8] sm:$0xff]
        %v6242 = vld [vmem:[%s405 + $0xe0] sm:$0xff]
        %v6243 = vld [vmem:[%s405 + $0xe8] sm:$0xff]
        %v6244 = vld [vmem:[%s405 + $0xf0] sm:$0xff]
        %v6245 = vld [vmem:[%s405 + $0xf8] sm:$0xff]
        %v6246 = vld [vmem:[%s405 + $0x100] sm:$0xff]
        %v6247 = vld [vmem:[%s405 + $0x108] sm:$0xff]
        %v6248 = vld [vmem:[%s405 + $0x110] sm:$0xff]
        %v6249 = vld [vmem:[%s405 + $0x118] sm:$0x3f]
        %v6250 = vpack.c.bf16 %v6215, %v6214
        %v6251 = vpack.c.bf16 %v6217, %v6216
        %v6252 = vpack.c.bf16 %v6219, %v6218
        %v6253 = vpack.c.bf16 %v6221, %v6220
        %v6254 = vpack.c.bf16 %v6223, %v6222
        %v6255 = vpack.c.bf16 %v6225, %v6224
        %v6256 = vpack.c.bf16 %v6227, %v6226
        %v6257 = vpack.c.bf16 %v6229, %v6228
        %v6258 = vpack.c.bf16 %v6231, %v6230
        %v6259 = vpack.c.bf16 %v6233, %v6232
        %v6260 = vpack.c.bf16 %v6235, %v6234
        %v6261 = vpack.c.bf16 %v6237, %v6236
        %v6262 = vpack.c.bf16 %v6239, %v6238
        %v6263 = vpack.c.bf16 %v6241, %v6240
        %v6264 = vpack.c.bf16 %v6243, %v6242
        %v6265 = vpack.c.bf16 %v6245, %v6244
        %v6266 = vpack.c.bf16 %v6247, %v6246
        %v6267 = vpack.c.bf16 %v6249, %v6248
        %s6268 = scalar_lea.vmem %s4, 36
        %v6269 = vld [vmem:[%s6268] sm:$0x3]
        %v6271 = vsel %vm528, %v6250, 0
        %v6274 = vsel %vm528, %v6251, 0
        %v6277 = vsel %vm528, %v6252, 0
        %v6280 = vsel %vm528, %v6253, 0
        %v6283 = vsel %vm528, %v6254, 0
        %v6286 = vsel %vm528, %v6255, 0
        %v6289 = vsel %vm528, %v6256, 0
        %v6292 = vsel %vm528, %v6257, 0
        %v6295 = vsel %vm528, %v6258, 0
        %v6298 = vsel %vm528, %v6259, 0
        %v6301 = vsel %vm528, %v6260, 0
        %v6304 = vsel %vm528, %v6261, 0
        %v6307 = vsel %vm528, %v6262, 0
        %v6310 = vsel %vm528, %v6263, 0
        %v6313 = vsel %vm528, %v6264, 0
        %v6316 = vsel %vm528, %v6265, 0
        %v6319 = vsel %vm528, %v6266, 0
        %v6322 = vsel %vm528, %v6267, 0
        %v6325 = vsel %vm583, %v6269, 0
        %6327 = vmatprep.subr.bf16.mxu0 0
        %6328 = vmatpush1.bf16.msra.mxu0 0
        %6329 = vmatprep.subr.bf16.mxu0 0
        %6330 = vmatpush1.bf16.msra.mxu0 0
        %6331 = vmatprep.subr.bf16.mxu0 0
        %6332 = vmatpush1.bf16.msra.mxu0 0
        %6333 = vmatprep.subr.bf16.mxu0 0
        %6334 = vmatpush1.bf16.msra.mxu0 0
        %6335 = vmatprep.subr.bf16.mxu0 0
        %6336 = vmatpush1.bf16.msra.mxu0 0
        %6337 = vmatprep.subr.bf16.mxu0 0
        %6338 = vmatpush1.bf16.msra.mxu0 0
        %6339 = vmatprep.subr.bf16.mxu0 0
        %6340 = vmatpush1.bf16.msra.mxu0 0
        %6341 = vmatprep.subr.bf16.mxu0 0
        %6342 = vmatpush1.bf16.msra.mxu0 %v6325
        %6343 = vmatprep.subr.bf16.mxu0 0
        %6344 = vmatpush2.bf16.msra.mxu0 0
        %6345 = vmatprep.subr.bf16.mxu0 0
        %6346 = vmatpush2.bf16.msra.mxu0 0
        %6347 = vmatprep.subr.bf16.mxu0 0
        %6348 = vmatpush2.bf16.msra.mxu0 0
        %6349 = vmatprep.subr.bf16.mxu0 0
        %6350 = vmatpush2.bf16.msra.mxu0 0
        %6351 = vmatprep.subr.bf16.mxu0 0
        %6352 = vmatpush2.bf16.msra.mxu0 0
        %6353 = vmatprep.subr.bf16.mxu0 0
        %6354 = vmatpush2.bf16.msra.mxu0 0
        %6355 = vmatprep.subr.bf16.mxu0 0
        %6356 = vmatpush2.bf16.msra.mxu0 0
        %6357 = vmatprep.subr.bf16.mxu0 0
        %6358 = vmatpush2.bf16.msra.mxu0 0
        %6359 = vmatprep.mubr.bf16.mxu0 0
        %6360 = vmatmul.mubr.bf16.gmra.mxu0 %v6271
        %v6361 = vpop.f32.mrf.mxu0
        %v6362 = vadd.f32 0.0, %v6361
        %v6363 = vpop.f32.mrf.mxu0
        %v6364 = vpop.f32.mrf.mxu0
        %v6365 = vadd.f32 0.0, %v6364
        %v6366 = vpop.f32.mrf.mxu0
        %6367 = vmatprep.mubr.bf16.mxu0 0
        %6368 = vmatmul.mubr.bf16.gmra.mxu0 %v6274
        %v6369 = vpop.f32.mrf.mxu0
        %v6370 = vadd.f32 0.0, %v6369
        %v6371 = vpop.f32.mrf.mxu0
        %v6372 = vpop.f32.mrf.mxu0
        %v6373 = vadd.f32 0.0, %v6372
        %v6374 = vpop.f32.mrf.mxu0
        %6375 = vmatprep.mubr.bf16.mxu0 0
        %6376 = vmatmul.mubr.bf16.gmra.mxu0 %v6277
        %v6377 = vpop.f32.mrf.mxu0
        %v6378 = vadd.f32 0.0, %v6377
        %v6379 = vpop.f32.mrf.mxu0
        %v6380 = vpop.f32.mrf.mxu0
        %v6381 = vadd.f32 0.0, %v6380
        %v6382 = vpop.f32.mrf.mxu0
        %6383 = vmatprep.mubr.bf16.mxu0 0
        %6384 = vmatmul.mubr.bf16.gmra.mxu0 %v6280
        %v6385 = vpop.f32.mrf.mxu0
        %v6386 = vadd.f32 0.0, %v6385
        %v6387 = vpop.f32.mrf.mxu0
        %v6388 = vpop.f32.mrf.mxu0
        %v6389 = vadd.f32 0.0, %v6388
        %v6390 = vpop.f32.mrf.mxu0
        %6391 = vmatprep.mubr.bf16.mxu0 0
        %6392 = vmatmul.mubr.bf16.gmra.mxu0 %v6283
        %v6393 = vpop.f32.mrf.mxu0
        %v6394 = vadd.f32 0.0, %v6393
        %v6395 = vpop.f32.mrf.mxu0
        %v6396 = vpop.f32.mrf.mxu0
        %v6397 = vadd.f32 0.0, %v6396
        %v6398 = vpop.f32.mrf.mxu0
        %6399 = vmatprep.mubr.bf16.mxu0 0
        %6400 = vmatmul.mubr.bf16.gmra.mxu0 %v6286
        %v6401 = vpop.f32.mrf.mxu0
        %v6402 = vadd.f32 0.0, %v6401
        %v6403 = vpop.f32.mrf.mxu0
        %v6404 = vpop.f32.mrf.mxu0
        %v6405 = vadd.f32 0.0, %v6404
        %v6406 = vpop.f32.mrf.mxu0
        %6407 = vmatprep.mubr.bf16.mxu0 0
        %6408 = vmatmul.mubr.bf16.gmra.mxu0 %v6289
        %v6409 = vpop.f32.mrf.mxu0
        %v6410 = vadd.f32 0.0, %v6409
        %v6411 = vpop.f32.mrf.mxu0
        %v6412 = vpop.f32.mrf.mxu0
        %v6413 = vadd.f32 0.0, %v6412
        %v6414 = vpop.f32.mrf.mxu0
        %6415 = vmatprep.mubr.bf16.mxu0 0
        %6416 = vmatmul.mubr.bf16.gmra.mxu0 %v6292
        %v6417 = vpop.f32.mrf.mxu0
        %v6418 = vadd.f32 0.0, %v6417
        %v6419 = vpop.f32.mrf.mxu0
        %v6420 = vpop.f32.mrf.mxu0
        %v6421 = vadd.f32 0.0, %v6420
        %v6422 = vpop.f32.mrf.mxu0
        %6423 = vmatprep.mubr.bf16.mxu0 0
        %6424 = vmatmul.mubr.bf16.gmra.mxu0 %v6295
        %v6425 = vpop.f32.mrf.mxu0
        %v6426 = vadd.f32 0.0, %v6425
        %v6427 = vpop.f32.mrf.mxu0
        %v6428 = vpop.f32.mrf.mxu0
        %v6429 = vadd.f32 0.0, %v6428
        %v6430 = vpop.f32.mrf.mxu0
        %6431 = vmatprep.mubr.bf16.mxu0 0
        %6432 = vmatmul.mubr.bf16.gmra.mxu0 %v6298
        %v6433 = vpop.f32.mrf.mxu0
        %v6434 = vadd.f32 0.0, %v6433
        %v6435 = vpop.f32.mrf.mxu0
        %v6436 = vpop.f32.mrf.mxu0
        %v6437 = vadd.f32 0.0, %v6436
        %v6438 = vpop.f32.mrf.mxu0
        %6439 = vmatprep.mubr.bf16.mxu0 0
        %6440 = vmatmul.mubr.bf16.gmra.mxu0 %v6301
        %v6441 = vpop.f32.mrf.mxu0
        %v6442 = vadd.f32 0.0, %v6441
        %v6443 = vpop.f32.mrf.mxu0
        %v6444 = vpop.f32.mrf.mxu0
        %v6445 = vadd.f32 0.0, %v6444
        %v6446 = vpop.f32.mrf.mxu0
        %6447 = vmatprep.mubr.bf16.mxu0 0
        %6448 = vmatmul.mubr.bf16.gmra.mxu0 %v6304
        %v6449 = vpop.f32.mrf.mxu0
        %v6450 = vadd.f32 0.0, %v6449
        %v6451 = vpop.f32.mrf.mxu0
        %v6452 = vpop.f32.mrf.mxu0
        %v6453 = vadd.f32 0.0, %v6452
        %v6454 = vpop.f32.mrf.mxu0
        %6455 = vmatprep.mubr.bf16.mxu0 0
        %6456 = vmatmul.mubr.bf16.gmra.mxu0 %v6307
        %v6457 = vpop.f32.mrf.mxu0
        %v6458 = vadd.f32 0.0, %v6457
        %v6459 = vpop.f32.mrf.mxu0
        %v6460 = vpop.f32.mrf.mxu0
        %v6461 = vadd.f32 0.0, %v6460
        %v6462 = vpop.f32.mrf.mxu0
        %6463 = vmatprep.mubr.bf16.mxu0 0
        %6464 = vmatmul.mubr.bf16.gmra.mxu0 %v6310
        %v6465 = vpop.f32.mrf.mxu0
        %v6466 = vadd.f32 0.0, %v6465
        %v6467 = vpop.f32.mrf.mxu0
        %v6468 = vpop.f32.mrf.mxu0
        %v6469 = vadd.f32 0.0, %v6468
        %v6470 = vpop.f32.mrf.mxu0
        %6471 = vmatprep.mubr.bf16.mxu0 0
        %6472 = vmatmul.mubr.bf16.gmra.mxu0 %v6313
        %v6473 = vpop.f32.mrf.mxu0
        %v6474 = vadd.f32 0.0, %v6473
        %v6475 = vpop.f32.mrf.mxu0
        %v6476 = vpop.f32.mrf.mxu0
        %v6477 = vadd.f32 0.0, %v6476
        %v6478 = vpop.f32.mrf.mxu0
        %6479 = vmatprep.mubr.bf16.mxu0 0
        %6480 = vmatmul.mubr.bf16.gmra.mxu0 %v6316
        %v6481 = vpop.f32.mrf.mxu0
        %v6482 = vadd.f32 0.0, %v6481
        %v6483 = vpop.f32.mrf.mxu0
        %v6484 = vpop.f32.mrf.mxu0
        %v6485 = vadd.f32 0.0, %v6484
        %v6486 = vpop.f32.mrf.mxu0
        %6487 = vmatprep.mubr.bf16.mxu0 0
        %6488 = vmatmul.mubr.bf16.gmra.mxu0 %v6319
        %v6489 = vpop.f32.mrf.mxu0
        %v6490 = vadd.f32 0.0, %v6489
        %v6491 = vpop.f32.mrf.mxu0
        %v6492 = vpop.f32.mrf.mxu0
        %v6493 = vadd.f32 0.0, %v6492
        %v6494 = vpop.f32.mrf.mxu0
        %6495 = vmatprep.mubr.bf16.mxu0 0
        %6496 = vmatmul.mubr.bf16.gmra.mxu0 %v6322
        %v6497 = vpop.f32.mrf.mxu0
        %v6498 = vadd.f32 0.0, %v6497
        %v6499 = vpop.f32.mrf.mxu0
        %v6500 = vpop.f32.mrf.mxu0
        %v6501 = vadd.f32 0.0, %v6500
        %v6502 = vpop.f32.mrf.mxu0
        %6503 = vdwg.mxu0
        %v6504 = vadd.f32 %v6178, %v6362
        %v6505 = vadd.f32 %v6179, %v6365
        %v6506 = vadd.f32 %v6180, %v6370
        %v6507 = vadd.f32 %v6181, %v6373
        %v6508 = vadd.f32 %v6182, %v6378
        %v6509 = vadd.f32 %v6183, %v6381
        %v6510 = vadd.f32 %v6184, %v6386
        %v6511 = vadd.f32 %v6185, %v6389
        %v6512 = vadd.f32 %v6186, %v6394
        %v6513 = vadd.f32 %v6187, %v6397
        %v6514 = vadd.f32 %v6188, %v6402
        %v6515 = vadd.f32 %v6189, %v6405
        %v6516 = vadd.f32 %v6190, %v6410
        %v6517 = vadd.f32 %v6191, %v6413
        %v6518 = vadd.f32 %v6192, %v6418
        %v6519 = vadd.f32 %v6193, %v6421
        %v6520 = vadd.f32 %v6194, %v6426
        %v6521 = vadd.f32 %v6195, %v6429
        %v6522 = vadd.f32 %v6196, %v6434
        %v6523 = vadd.f32 %v6197, %v6437
        %v6524 = vadd.f32 %v6198, %v6442
        %v6525 = vadd.f32 %v6199, %v6445
        %v6526 = vadd.f32 %v6200, %v6450
        %v6527 = vadd.f32 %v6201, %v6453
        %v6528 = vadd.f32 %v6202, %v6458
        %v6529 = vadd.f32 %v6203, %v6461
        %v6530 = vadd.f32 %v6204, %v6466
        %v6531 = vadd.f32 %v6205, %v6469
        %v6532 = vadd.f32 %v6206, %v6474
        %v6533 = vadd.f32 %v6207, %v6477
        %v6534 = vadd.f32 %v6208, %v6482
        %v6535 = vadd.f32 %v6209, %v6485
        %v6536 = vadd.f32 %v6210, %v6490
        %v6537 = vadd.f32 %v6211, %v6493
        %v6538 = vadd.f32 %v6212, %v6498
        %v6539 = vadd.f32 %v6213, %v6501
        %v6540 = vld [vmem:[%s405 + $0x1] sm:$0xff]
        %v6541 = vld [vmem:[%s405 + $0x9] sm:$0xff]
        %v6542 = vld [vmem:[%s405 + $0x11] sm:$0xff]
        %v6543 = vld [vmem:[%s405 + $0x19] sm:$0xff]
        %v6544 = vld [vmem:[%s405 + $0x21] sm:$0xff]
        %v6545 = vld [vmem:[%s405 + $0x29] sm:$0xff]
        %v6546 = vld [vmem:[%s405 + $0x31] sm:$0xff]
        %v6547 = vld [vmem:[%s405 + $0x39] sm:$0xff]
        %v6548 = vld [vmem:[%s405 + $0x41] sm:$0xff]
        %v6549 = vld [vmem:[%s405 + $0x49] sm:$0xff]
        %v6550 = vld [vmem:[%s405 + $0x51] sm:$0xff]
        %v6551 = vld [vmem:[%s405 + $0x59] sm:$0xff]
        %v6552 = vld [vmem:[%s405 + $0x61] sm:$0xff]
        %v6553 = vld [vmem:[%s405 + $0x69] sm:$0xff]
        %v6554 = vld [vmem:[%s405 + $0x71] sm:$0xff]
        %v6555 = vld [vmem:[%s405 + $0x79] sm:$0xff]
        %v6556 = vld [vmem:[%s405 + $0x81] sm:$0xff]
        %v6557 = vld [vmem:[%s405 + $0x89] sm:$0xff]
        %v6558 = vld [vmem:[%s405 + $0x91] sm:$0xff]
        %v6559 = vld [vmem:[%s405 + $0x99] sm:$0xff]
        %v6560 = vld [vmem:[%s405 + $0xa1] sm:$0xff]
        %v6561 = vld [vmem:[%s405 + $0xa9] sm:$0xff]
        %v6562 = vld [vmem:[%s405 + $0xb1] sm:$0xff]
        %v6563 = vld [vmem:[%s405 + $0xb9] sm:$0xff]
        %v6564 = vld [vmem:[%s405 + $0xc1] sm:$0xff]
        %v6565 = vld [vmem:[%s405 + $0xc9] sm:$0xff]
        %v6566 = vld [vmem:[%s405 + $0xd1] sm:$0xff]
        %v6567 = vld [vmem:[%s405 + $0xd9] sm:$0xff]
        %v6568 = vld [vmem:[%s405 + $0xe1] sm:$0xff]
        %v6569 = vld [vmem:[%s405 + $0xe9] sm:$0xff]
        %v6570 = vld [vmem:[%s405 + $0xf1] sm:$0xff]
        %v6571 = vld [vmem:[%s405 + $0xf9] sm:$0xff]
        %v6572 = vld [vmem:[%s405 + $0x101] sm:$0xff]
        %v6573 = vld [vmem:[%s405 + $0x109] sm:$0xff]
        %v6574 = vld [vmem:[%s405 + $0x111] sm:$0xff]
        %v6575 = vld [vmem:[%s405 + $0x119] sm:$0x3f]
        %v6576 = vpack.c.bf16 %v6541, %v6540
        %v6577 = vpack.c.bf16 %v6543, %v6542
        %v6578 = vpack.c.bf16 %v6545, %v6544
        %v6579 = vpack.c.bf16 %v6547, %v6546
        %v6580 = vpack.c.bf16 %v6549, %v6548
        %v6581 = vpack.c.bf16 %v6551, %v6550
        %v6582 = vpack.c.bf16 %v6553, %v6552
        %v6583 = vpack.c.bf16 %v6555, %v6554
        %v6584 = vpack.c.bf16 %v6557, %v6556
        %v6585 = vpack.c.bf16 %v6559, %v6558
        %v6586 = vpack.c.bf16 %v6561, %v6560
        %v6587 = vpack.c.bf16 %v6563, %v6562
        %v6588 = vpack.c.bf16 %v6565, %v6564
        %v6589 = vpack.c.bf16 %v6567, %v6566
        %v6590 = vpack.c.bf16 %v6569, %v6568
        %v6591 = vpack.c.bf16 %v6571, %v6570
        %v6592 = vpack.c.bf16 %v6573, %v6572
        %v6593 = vpack.c.bf16 %v6575, %v6574
        %s6594 = scalar_lea.vmem %s4, 38
        %v6595 = vld [vmem:[%s6594] sm:$0x3]
        %v6597 = vsel %vm528, %v6576, 0
        %v6600 = vsel %vm528, %v6577, 0
        %v6603 = vsel %vm528, %v6578, 0
        %v6606 = vsel %vm528, %v6579, 0
        %v6609 = vsel %vm528, %v6580, 0
        %v6612 = vsel %vm528, %v6581, 0
        %v6615 = vsel %vm528, %v6582, 0
        %v6618 = vsel %vm528, %v6583, 0
        %v6621 = vsel %vm528, %v6584, 0
        %v6624 = vsel %vm528, %v6585, 0
        %v6627 = vsel %vm528, %v6586, 0
        %v6630 = vsel %vm528, %v6587, 0
        %v6633 = vsel %vm528, %v6588, 0
        %v6636 = vsel %vm528, %v6589, 0
        %v6639 = vsel %vm528, %v6590, 0
        %v6642 = vsel %vm528, %v6591, 0
        %v6645 = vsel %vm528, %v6592, 0
        %v6648 = vsel %vm528, %v6593, 0
        %v6651 = vsel %vm583, %v6595, 0
        %6653 = vmatprep.subr.bf16.mxu0 0
        %6654 = vmatpush1.bf16.msra.mxu0 0
        %6655 = vmatprep.subr.bf16.mxu0 0
        %6656 = vmatpush1.bf16.msra.mxu0 0
        %6657 = vmatprep.subr.bf16.mxu0 0
        %6658 = vmatpush1.bf16.msra.mxu0 0
        %6659 = vmatprep.subr.bf16.mxu0 0
        %6660 = vmatpush1.bf16.msra.mxu0 0
        %6661 = vmatprep.subr.bf16.mxu0 0
        %6662 = vmatpush1.bf16.msra.mxu0 0
        %6663 = vmatprep.subr.bf16.mxu0 0
        %6664 = vmatpush1.bf16.msra.mxu0 0
        %6665 = vmatprep.subr.bf16.mxu0 0
        %6666 = vmatpush1.bf16.msra.mxu0 0
        %6667 = vmatprep.subr.bf16.mxu0 0
        %6668 = vmatpush1.bf16.msra.mxu0 %v6651
        %6669 = vmatprep.subr.bf16.mxu0 0
        %6670 = vmatpush2.bf16.msra.mxu0 0
        %6671 = vmatprep.subr.bf16.mxu0 0
        %6672 = vmatpush2.bf16.msra.mxu0 0
        %6673 = vmatprep.subr.bf16.mxu0 0
        %6674 = vmatpush2.bf16.msra.mxu0 0
        %6675 = vmatprep.subr.bf16.mxu0 0
        %6676 = vmatpush2.bf16.msra.mxu0 0
        %6677 = vmatprep.subr.bf16.mxu0 0
        %6678 = vmatpush2.bf16.msra.mxu0 0
        %6679 = vmatprep.subr.bf16.mxu0 0
        %6680 = vmatpush2.bf16.msra.mxu0 0
        %6681 = vmatprep.subr.bf16.mxu0 0
        %6682 = vmatpush2.bf16.msra.mxu0 0
        %6683 = vmatprep.subr.bf16.mxu0 0
        %6684 = vmatpush2.bf16.msra.mxu0 0
        %6685 = vmatprep.mubr.bf16.mxu0 0
        %6686 = vmatmul.mubr.bf16.gmra.mxu0 %v6597
        %v6687 = vpop.f32.mrf.mxu0
        %v6688 = vadd.f32 0.0, %v6687
        %v6689 = vpop.f32.mrf.mxu0
        %v6690 = vpop.f32.mrf.mxu0
        %v6691 = vadd.f32 0.0, %v6690
        %v6692 = vpop.f32.mrf.mxu0
        %6693 = vmatprep.mubr.bf16.mxu0 0
        %6694 = vmatmul.mubr.bf16.gmra.mxu0 %v6600
        %v6695 = vpop.f32.mrf.mxu0
        %v6696 = vadd.f32 0.0, %v6695
        %v6697 = vpop.f32.mrf.mxu0
        %v6698 = vpop.f32.mrf.mxu0
        %v6699 = vadd.f32 0.0, %v6698
        %v6700 = vpop.f32.mrf.mxu0
        %6701 = vmatprep.mubr.bf16.mxu0 0
        %6702 = vmatmul.mubr.bf16.gmra.mxu0 %v6603
        %v6703 = vpop.f32.mrf.mxu0
        %v6704 = vadd.f32 0.0, %v6703
        %v6705 = vpop.f32.mrf.mxu0
        %v6706 = vpop.f32.mrf.mxu0
        %v6707 = vadd.f32 0.0, %v6706
        %v6708 = vpop.f32.mrf.mxu0
        %6709 = vmatprep.mubr.bf16.mxu0 0
        %6710 = vmatmul.mubr.bf16.gmra.mxu0 %v6606
        %v6711 = vpop.f32.mrf.mxu0
        %v6712 = vadd.f32 0.0, %v6711
        %v6713 = vpop.f32.mrf.mxu0
        %v6714 = vpop.f32.mrf.mxu0
        %v6715 = vadd.f32 0.0, %v6714
        %v6716 = vpop.f32.mrf.mxu0
        %6717 = vmatprep.mubr.bf16.mxu0 0
        %6718 = vmatmul.mubr.bf16.gmra.mxu0 %v6609
        %v6719 = vpop.f32.mrf.mxu0
        %v6720 = vadd.f32 0.0, %v6719
        %v6721 = vpop.f32.mrf.mxu0
        %v6722 = vpop.f32.mrf.mxu0
        %v6723 = vadd.f32 0.0, %v6722
        %v6724 = vpop.f32.mrf.mxu0
        %6725 = vmatprep.mubr.bf16.mxu0 0
        %6726 = vmatmul.mubr.bf16.gmra.mxu0 %v6612
        %v6727 = vpop.f32.mrf.mxu0
        %v6728 = vadd.f32 0.0, %v6727
        %v6729 = vpop.f32.mrf.mxu0
        %v6730 = vpop.f32.mrf.mxu0
        %v6731 = vadd.f32 0.0, %v6730
        %v6732 = vpop.f32.mrf.mxu0
        %6733 = vmatprep.mubr.bf16.mxu0 0
        %6734 = vmatmul.mubr.bf16.gmra.mxu0 %v6615
        %v6735 = vpop.f32.mrf.mxu0
        %v6736 = vadd.f32 0.0, %v6735
        %v6737 = vpop.f32.mrf.mxu0
        %v6738 = vpop.f32.mrf.mxu0
        %v6739 = vadd.f32 0.0, %v6738
        %v6740 = vpop.f32.mrf.mxu0
        %6741 = vmatprep.mubr.bf16.mxu0 0
        %6742 = vmatmul.mubr.bf16.gmra.mxu0 %v6618
        %v6743 = vpop.f32.mrf.mxu0
        %v6744 = vadd.f32 0.0, %v6743
        %v6745 = vpop.f32.mrf.mxu0
        %v6746 = vpop.f32.mrf.mxu0
        %v6747 = vadd.f32 0.0, %v6746
        %v6748 = vpop.f32.mrf.mxu0
        %6749 = vmatprep.mubr.bf16.mxu0 0
        %6750 = vmatmul.mubr.bf16.gmra.mxu0 %v6621
        %v6751 = vpop.f32.mrf.mxu0
        %v6752 = vadd.f32 0.0, %v6751
        %v6753 = vpop.f32.mrf.mxu0
        %v6754 = vpop.f32.mrf.mxu0
        %v6755 = vadd.f32 0.0, %v6754
        %v6756 = vpop.f32.mrf.mxu0
        %6757 = vmatprep.mubr.bf16.mxu0 0
        %6758 = vmatmul.mubr.bf16.gmra.mxu0 %v6624
        %v6759 = vpop.f32.mrf.mxu0
        %v6760 = vadd.f32 0.0, %v6759
        %v6761 = vpop.f32.mrf.mxu0
        %v6762 = vpop.f32.mrf.mxu0
        %v6763 = vadd.f32 0.0, %v6762
        %v6764 = vpop.f32.mrf.mxu0
        %6765 = vmatprep.mubr.bf16.mxu0 0
        %6766 = vmatmul.mubr.bf16.gmra.mxu0 %v6627
        %v6767 = vpop.f32.mrf.mxu0
        %v6768 = vadd.f32 0.0, %v6767
        %v6769 = vpop.f32.mrf.mxu0
        %v6770 = vpop.f32.mrf.mxu0
        %v6771 = vadd.f32 0.0, %v6770
        %v6772 = vpop.f32.mrf.mxu0
        %6773 = vmatprep.mubr.bf16.mxu0 0
        %6774 = vmatmul.mubr.bf16.gmra.mxu0 %v6630
        %v6775 = vpop.f32.mrf.mxu0
        %v6776 = vadd.f32 0.0, %v6775
        %v6777 = vpop.f32.mrf.mxu0
        %v6778 = vpop.f32.mrf.mxu0
        %v6779 = vadd.f32 0.0, %v6778
        %v6780 = vpop.f32.mrf.mxu0
        %6781 = vmatprep.mubr.bf16.mxu0 0
        %6782 = vmatmul.mubr.bf16.gmra.mxu0 %v6633
        %v6783 = vpop.f32.mrf.mxu0
        %v6784 = vadd.f32 0.0, %v6783
        %v6785 = vpop.f32.mrf.mxu0
        %v6786 = vpop.f32.mrf.mxu0
        %v6787 = vadd.f32 0.0, %v6786
        %v6788 = vpop.f32.mrf.mxu0
        %6789 = vmatprep.mubr.bf16.mxu0 0
        %6790 = vmatmul.mubr.bf16.gmra.mxu0 %v6636
        %v6791 = vpop.f32.mrf.mxu0
        %v6792 = vadd.f32 0.0, %v6791
        %v6793 = vpop.f32.mrf.mxu0
        %v6794 = vpop.f32.mrf.mxu0
        %v6795 = vadd.f32 0.0, %v6794
        %v6796 = vpop.f32.mrf.mxu0
        %6797 = vmatprep.mubr.bf16.mxu0 0
        %6798 = vmatmul.mubr.bf16.gmra.mxu0 %v6639
        %v6799 = vpop.f32.mrf.mxu0
        %v6800 = vadd.f32 0.0, %v6799
        %v6801 = vpop.f32.mrf.mxu0
        %v6802 = vpop.f32.mrf.mxu0
        %v6803 = vadd.f32 0.0, %v6802
        %v6804 = vpop.f32.mrf.mxu0
        %6805 = vmatprep.mubr.bf16.mxu0 0
        %6806 = vmatmul.mubr.bf16.gmra.mxu0 %v6642
        %v6807 = vpop.f32.mrf.mxu0
        %v6808 = vadd.f32 0.0, %v6807
        %v6809 = vpop.f32.mrf.mxu0
        %v6810 = vpop.f32.mrf.mxu0
        %v6811 = vadd.f32 0.0, %v6810
        %v6812 = vpop.f32.mrf.mxu0
        %6813 = vmatprep.mubr.bf16.mxu0 0
        %6814 = vmatmul.mubr.bf16.gmra.mxu0 %v6645
        %v6815 = vpop.f32.mrf.mxu0
        %v6816 = vadd.f32 0.0, %v6815
        %v6817 = vpop.f32.mrf.mxu0
        %v6818 = vpop.f32.mrf.mxu0
        %v6819 = vadd.f32 0.0, %v6818
        %v6820 = vpop.f32.mrf.mxu0
        %6821 = vmatprep.mubr.bf16.mxu0 0
        %6822 = vmatmul.mubr.bf16.gmra.mxu0 %v6648
        %v6823 = vpop.f32.mrf.mxu0
        %v6824 = vadd.f32 0.0, %v6823
        %v6825 = vpop.f32.mrf.mxu0
        %v6826 = vpop.f32.mrf.mxu0
        %v6827 = vadd.f32 0.0, %v6826
        %v6828 = vpop.f32.mrf.mxu0
        %6829 = vdwg.mxu0
        %v6830 = vadd.f32 %v6504, %v6688
        %v6831 = vadd.f32 %v6505, %v6691
        %v6832 = vadd.f32 %v6506, %v6696
        %v6833 = vadd.f32 %v6507, %v6699
        %v6834 = vadd.f32 %v6508, %v6704
        %v6835 = vadd.f32 %v6509, %v6707
        %v6836 = vadd.f32 %v6510, %v6712
        %v6837 = vadd.f32 %v6511, %v6715
        %v6838 = vadd.f32 %v6512, %v6720
        %v6839 = vadd.f32 %v6513, %v6723
        %v6840 = vadd.f32 %v6514, %v6728
        %v6841 = vadd.f32 %v6515, %v6731
        %v6842 = vadd.f32 %v6516, %v6736
        %v6843 = vadd.f32 %v6517, %v6739
        %v6844 = vadd.f32 %v6518, %v6744
        %v6845 = vadd.f32 %v6519, %v6747
        %v6846 = vadd.f32 %v6520, %v6752
        %v6847 = vadd.f32 %v6521, %v6755
        %v6848 = vadd.f32 %v6522, %v6760
        %v6849 = vadd.f32 %v6523, %v6763
        %v6850 = vadd.f32 %v6524, %v6768
        %v6851 = vadd.f32 %v6525, %v6771
        %v6852 = vadd.f32 %v6526, %v6776
        %v6853 = vadd.f32 %v6527, %v6779
        %v6854 = vadd.f32 %v6528, %v6784
        %v6855 = vadd.f32 %v6529, %v6787
        %v6856 = vadd.f32 %v6530, %v6792
        %v6857 = vadd.f32 %v6531, %v6795
        %v6858 = vadd.f32 %v6532, %v6800
        %v6859 = vadd.f32 %v6533, %v6803
        %v6860 = vadd.f32 %v6534, %v6808
        %v6861 = vadd.f32 %v6535, %v6811
        %v6862 = vadd.f32 %v6536, %v6816
        %v6863 = vadd.f32 %v6537, %v6819
        %v6864 = vadd.f32 %v6538, %v6824
        %v6865 = vadd.f32 %v6539, %v6827
        %v6866 = vld [vmem:[%s405 + $0x2] sm:$0xff]
        %v6867 = vld [vmem:[%s405 + $0xa] sm:$0xff]
        %v6868 = vld [vmem:[%s405 + $0x12] sm:$0xff]
        %v6869 = vld [vmem:[%s405 + $0x1a] sm:$0xff]
        %v6870 = vld [vmem:[%s405 + $0x22] sm:$0xff]
        %v6871 = vld [vmem:[%s405 + $0x2a] sm:$0xff]
        %v6872 = vld [vmem:[%s405 + $0x32] sm:$0xff]
        %v6873 = vld [vmem:[%s405 + $0x3a] sm:$0xff]
        %v6874 = vld [vmem:[%s405 + $0x42] sm:$0xff]
        %v6875 = vld [vmem:[%s405 + $0x4a] sm:$0xff]
        %v6876 = vld [vmem:[%s405 + $0x52] sm:$0xff]
        %v6877 = vld [vmem:[%s405 + $0x5a] sm:$0xff]
        %v6878 = vld [vmem:[%s405 + $0x62] sm:$0xff]
        %v6879 = vld [vmem:[%s405 + $0x6a] sm:$0xff]
        %v6880 = vld [vmem:[%s405 + $0x72] sm:$0xff]
        %v6881 = vld [vmem:[%s405 + $0x7a] sm:$0xff]
        %v6882 = vld [vmem:[%s405 + $0x82] sm:$0xff]
        %v6883 = vld [vmem:[%s405 + $0x8a] sm:$0xff]
        %v6884 = vld [vmem:[%s405 + $0x92] sm:$0xff]
        %v6885 = vld [vmem:[%s405 + $0x9a] sm:$0xff]
        %v6886 = vld [vmem:[%s405 + $0xa2] sm:$0xff]
        %v6887 = vld [vmem:[%s405 + $0xaa] sm:$0xff]
        %v6888 = vld [vmem:[%s405 + $0xb2] sm:$0xff]
        %v6889 = vld [vmem:[%s405 + $0xba] sm:$0xff]
        %v6890 = vld [vmem:[%s405 + $0xc2] sm:$0xff]
        %v6891 = vld [vmem:[%s405 + $0xca] sm:$0xff]
        %v6892 = vld [vmem:[%s405 + $0xd2] sm:$0xff]
        %v6893 = vld [vmem:[%s405 + $0xda] sm:$0xff]
        %v6894 = vld [vmem:[%s405 + $0xe2] sm:$0xff]
        %v6895 = vld [vmem:[%s405 + $0xea] sm:$0xff]
        %v6896 = vld [vmem:[%s405 + $0xf2] sm:$0xff]
        %v6897 = vld [vmem:[%s405 + $0xfa] sm:$0xff]
        %v6898 = vld [vmem:[%s405 + $0x102] sm:$0xff]
        %v6899 = vld [vmem:[%s405 + $0x10a] sm:$0xff]
        %v6900 = vld [vmem:[%s405 + $0x112] sm:$0xff]
        %v6901 = vld [vmem:[%s405 + $0x11a] sm:$0x3f]
        %v6902 = vpack.c.bf16 %v6867, %v6866
        %v6903 = vpack.c.bf16 %v6869, %v6868
        %v6904 = vpack.c.bf16 %v6871, %v6870
        %v6905 = vpack.c.bf16 %v6873, %v6872
        %v6906 = vpack.c.bf16 %v6875, %v6874
        %v6907 = vpack.c.bf16 %v6877, %v6876
        %v6908 = vpack.c.bf16 %v6879, %v6878
        %v6909 = vpack.c.bf16 %v6881, %v6880
        %v6910 = vpack.c.bf16 %v6883, %v6882
        %v6911 = vpack.c.bf16 %v6885, %v6884
        %v6912 = vpack.c.bf16 %v6887, %v6886
        %v6913 = vpack.c.bf16 %v6889, %v6888
        %v6914 = vpack.c.bf16 %v6891, %v6890
        %v6915 = vpack.c.bf16 %v6893, %v6892
        %v6916 = vpack.c.bf16 %v6895, %v6894
        %v6917 = vpack.c.bf16 %v6897, %v6896
        %v6918 = vpack.c.bf16 %v6899, %v6898
        %v6919 = vpack.c.bf16 %v6901, %v6900
        %s6920 = scalar_lea.vmem %s4, 40
        %v6921 = vld [vmem:[%s6920] sm:$0x3]
        %v6923 = vsel %vm528, %v6902, 0
        %v6926 = vsel %vm528, %v6903, 0
        %v6929 = vsel %vm528, %v6904, 0
        %v6932 = vsel %vm528, %v6905, 0
        %v6935 = vsel %vm528, %v6906, 0
        %v6938 = vsel %vm528, %v6907, 0
        %v6941 = vsel %vm528, %v6908, 0
        %v6944 = vsel %vm528, %v6909, 0
        %v6947 = vsel %vm528, %v6910, 0
        %v6950 = vsel %vm528, %v6911, 0
        %v6953 = vsel %vm528, %v6912, 0
        %v6956 = vsel %vm528, %v6913, 0
        %v6959 = vsel %vm528, %v6914, 0
        %v6962 = vsel %vm528, %v6915, 0
        %v6965 = vsel %vm528, %v6916, 0
        %v6968 = vsel %vm528, %v6917, 0
        %v6971 = vsel %vm528, %v6918, 0
        %v6974 = vsel %vm528, %v6919, 0
        %v6977 = vsel %vm583, %v6921, 0
        %6979 = vmatprep.subr.bf16.mxu0 0
        %6980 = vmatpush1.bf16.msra.mxu0 0
        %6981 = vmatprep.subr.bf16.mxu0 0
        %6982 = vmatpush1.bf16.msra.mxu0 0
        %6983 = vmatprep.subr.bf16.mxu0 0
        %6984 = vmatpush1.bf16.msra.mxu0 0
        %6985 = vmatprep.subr.bf16.mxu0 0
        %6986 = vmatpush1.bf16.msra.mxu0 0
        %6987 = vmatprep.subr.bf16.mxu0 0
        %6988 = vmatpush1.bf16.msra.mxu0 0
        %6989 = vmatprep.subr.bf16.mxu0 0
        %6990 = vmatpush1.bf16.msra.mxu0 0
        %6991 = vmatprep.subr.bf16.mxu0 0
        %6992 = vmatpush1.bf16.msra.mxu0 0
        %6993 = vmatprep.subr.bf16.mxu0 0
        %6994 = vmatpush1.bf16.msra.mxu0 %v6977
        %6995 = vmatprep.subr.bf16.mxu0 0
        %6996 = vmatpush2.bf16.msra.mxu0 0
        %6997 = vmatprep.subr.bf16.mxu0 0
        %6998 = vmatpush2.bf16.msra.mxu0 0
        %6999 = vmatprep.subr.bf16.mxu0 0
        %7000 = vmatpush2.bf16.msra.mxu0 0
        %7001 = vmatprep.subr.bf16.mxu0 0
        %7002 = vmatpush2.bf16.msra.mxu0 0
        %7003 = vmatprep.subr.bf16.mxu0 0
        %7004 = vmatpush2.bf16.msra.mxu0 0
        %7005 = vmatprep.subr.bf16.mxu0 0
        %7006 = vmatpush2.bf16.msra.mxu0 0
        %7007 = vmatprep.subr.bf16.mxu0 0
        %7008 = vmatpush2.bf16.msra.mxu0 0
        %7009 = vmatprep.subr.bf16.mxu0 0
        %7010 = vmatpush2.bf16.msra.mxu0 0
        %7011 = vmatprep.mubr.bf16.mxu0 0
        %7012 = vmatmul.mubr.bf16.gmra.mxu0 %v6923
        %v7013 = vpop.f32.mrf.mxu0
        %v7014 = vadd.f32 0.0, %v7013
        %v7015 = vpop.f32.mrf.mxu0
        %v7016 = vpop.f32.mrf.mxu0
        %v7017 = vadd.f32 0.0, %v7016
        %v7018 = vpop.f32.mrf.mxu0
        %7019 = vmatprep.mubr.bf16.mxu0 0
        %7020 = vmatmul.mubr.bf16.gmra.mxu0 %v6926
        %v7021 = vpop.f32.mrf.mxu0
        %v7022 = vadd.f32 0.0, %v7021
        %v7023 = vpop.f32.mrf.mxu0
        %v7024 = vpop.f32.mrf.mxu0
        %v7025 = vadd.f32 0.0, %v7024
        %v7026 = vpop.f32.mrf.mxu0
        %7027 = vmatprep.mubr.bf16.mxu0 0
        %7028 = vmatmul.mubr.bf16.gmra.mxu0 %v6929
        %v7029 = vpop.f32.mrf.mxu0
        %v7030 = vadd.f32 0.0, %v7029
        %v7031 = vpop.f32.mrf.mxu0
        %v7032 = vpop.f32.mrf.mxu0
        %v7033 = vadd.f32 0.0, %v7032
        %v7034 = vpop.f32.mrf.mxu0
        %7035 = vmatprep.mubr.bf16.mxu0 0
        %7036 = vmatmul.mubr.bf16.gmra.mxu0 %v6932
        %v7037 = vpop.f32.mrf.mxu0
        %v7038 = vadd.f32 0.0, %v7037
        %v7039 = vpop.f32.mrf.mxu0
        %v7040 = vpop.f32.mrf.mxu0
        %v7041 = vadd.f32 0.0, %v7040
        %v7042 = vpop.f32.mrf.mxu0
        %7043 = vmatprep.mubr.bf16.mxu0 0
        %7044 = vmatmul.mubr.bf16.gmra.mxu0 %v6935
        %v7045 = vpop.f32.mrf.mxu0
        %v7046 = vadd.f32 0.0, %v7045
        %v7047 = vpop.f32.mrf.mxu0
        %v7048 = vpop.f32.mrf.mxu0
        %v7049 = vadd.f32 0.0, %v7048
        %v7050 = vpop.f32.mrf.mxu0
        %7051 = vmatprep.mubr.bf16.mxu0 0
        %7052 = vmatmul.mubr.bf16.gmra.mxu0 %v6938
        %v7053 = vpop.f32.mrf.mxu0
        %v7054 = vadd.f32 0.0, %v7053
        %v7055 = vpop.f32.mrf.mxu0
        %v7056 = vpop.f32.mrf.mxu0
        %v7057 = vadd.f32 0.0, %v7056
        %v7058 = vpop.f32.mrf.mxu0
        %7059 = vmatprep.mubr.bf16.mxu0 0
        %7060 = vmatmul.mubr.bf16.gmra.mxu0 %v6941
        %v7061 = vpop.f32.mrf.mxu0
        %v7062 = vadd.f32 0.0, %v7061
        %v7063 = vpop.f32.mrf.mxu0
        %v7064 = vpop.f32.mrf.mxu0
        %v7065 = vadd.f32 0.0, %v7064
        %v7066 = vpop.f32.mrf.mxu0
        %7067 = vmatprep.mubr.bf16.mxu0 0
        %7068 = vmatmul.mubr.bf16.gmra.mxu0 %v6944
        %v7069 = vpop.f32.mrf.mxu0
        %v7070 = vadd.f32 0.0, %v7069
        %v7071 = vpop.f32.mrf.mxu0
        %v7072 = vpop.f32.mrf.mxu0
        %v7073 = vadd.f32 0.0, %v7072
        %v7074 = vpop.f32.mrf.mxu0
        %7075 = vmatprep.mubr.bf16.mxu0 0
        %7076 = vmatmul.mubr.bf16.gmra.mxu0 %v6947
        %v7077 = vpop.f32.mrf.mxu0
        %v7078 = vadd.f32 0.0, %v7077
        %v7079 = vpop.f32.mrf.mxu0
        %v7080 = vpop.f32.mrf.mxu0
        %v7081 = vadd.f32 0.0, %v7080
        %v7082 = vpop.f32.mrf.mxu0
        %7083 = vmatprep.mubr.bf16.mxu0 0
        %7084 = vmatmul.mubr.bf16.gmra.mxu0 %v6950
        %v7085 = vpop.f32.mrf.mxu0
        %v7086 = vadd.f32 0.0, %v7085
        %v7087 = vpop.f32.mrf.mxu0
        %v7088 = vpop.f32.mrf.mxu0
        %v7089 = vadd.f32 0.0, %v7088
        %v7090 = vpop.f32.mrf.mxu0
        %7091 = vmatprep.mubr.bf16.mxu0 0
        %7092 = vmatmul.mubr.bf16.gmra.mxu0 %v6953
        %v7093 = vpop.f32.mrf.mxu0
        %v7094 = vadd.f32 0.0, %v7093
        %v7095 = vpop.f32.mrf.mxu0
        %v7096 = vpop.f32.mrf.mxu0
        %v7097 = vadd.f32 0.0, %v7096
        %v7098 = vpop.f32.mrf.mxu0
        %7099 = vmatprep.mubr.bf16.mxu0 0
        %7100 = vmatmul.mubr.bf16.gmra.mxu0 %v6956
        %v7101 = vpop.f32.mrf.mxu0
        %v7102 = vadd.f32 0.0, %v7101
        %v7103 = vpop.f32.mrf.mxu0
        %v7104 = vpop.f32.mrf.mxu0
        %v7105 = vadd.f32 0.0, %v7104
        %v7106 = vpop.f32.mrf.mxu0
        %7107 = vmatprep.mubr.bf16.mxu0 0
        %7108 = vmatmul.mubr.bf16.gmra.mxu0 %v6959
        %v7109 = vpop.f32.mrf.mxu0
        %v7110 = vadd.f32 0.0, %v7109
        %v7111 = vpop.f32.mrf.mxu0
        %v7112 = vpop.f32.mrf.mxu0
        %v7113 = vadd.f32 0.0, %v7112
        %v7114 = vpop.f32.mrf.mxu0
        %7115 = vmatprep.mubr.bf16.mxu0 0
        %7116 = vmatmul.mubr.bf16.gmra.mxu0 %v6962
        %v7117 = vpop.f32.mrf.mxu0
        %v7118 = vadd.f32 0.0, %v7117
        %v7119 = vpop.f32.mrf.mxu0
        %v7120 = vpop.f32.mrf.mxu0
        %v7121 = vadd.f32 0.0, %v7120
        %v7122 = vpop.f32.mrf.mxu0
        %7123 = vmatprep.mubr.bf16.mxu0 0
        %7124 = vmatmul.mubr.bf16.gmra.mxu0 %v6965
        %v7125 = vpop.f32.mrf.mxu0
        %v7126 = vadd.f32 0.0, %v7125
        %v7127 = vpop.f32.mrf.mxu0
        %v7128 = vpop.f32.mrf.mxu0
        %v7129 = vadd.f32 0.0, %v7128
        %v7130 = vpop.f32.mrf.mxu0
        %7131 = vmatprep.mubr.bf16.mxu0 0
        %7132 = vmatmul.mubr.bf16.gmra.mxu0 %v6968
        %v7133 = vpop.f32.mrf.mxu0
        %v7134 = vadd.f32 0.0, %v7133
        %v7135 = vpop.f32.mrf.mxu0
        %v7136 = vpop.f32.mrf.mxu0
        %v7137 = vadd.f32 0.0, %v7136
        %v7138 = vpop.f32.mrf.mxu0
        %7139 = vmatprep.mubr.bf16.mxu0 0
        %7140 = vmatmul.mubr.bf16.gmra.mxu0 %v6971
        %v7141 = vpop.f32.mrf.mxu0
        %v7142 = vadd.f32 0.0, %v7141
        %v7143 = vpop.f32.mrf.mxu0
        %v7144 = vpop.f32.mrf.mxu0
        %v7145 = vadd.f32 0.0, %v7144
        %v7146 = vpop.f32.mrf.mxu0
        %7147 = vmatprep.mubr.bf16.mxu0 0
        %7148 = vmatmul.mubr.bf16.gmra.mxu0 %v6974
        %v7149 = vpop.f32.mrf.mxu0
        %v7150 = vadd.f32 0.0, %v7149
        %v7151 = vpop.f32.mrf.mxu0
        %v7152 = vpop.f32.mrf.mxu0
        %v7153 = vadd.f32 0.0, %v7152
        %v7154 = vpop.f32.mrf.mxu0
        %7155 = vdwg.mxu0
        %v7156 = vadd.f32 %v6830, %v7014
        %v7157 = vadd.f32 %v6831, %v7017
        %v7158 = vadd.f32 %v6832, %v7022
        %v7159 = vadd.f32 %v6833, %v7025
        %v7160 = vadd.f32 %v6834, %v7030
        %v7161 = vadd.f32 %v6835, %v7033
        %v7162 = vadd.f32 %v6836, %v7038
        %v7163 = vadd.f32 %v6837, %v7041
        %v7164 = vadd.f32 %v6838, %v7046
        %v7165 = vadd.f32 %v6839, %v7049
        %v7166 = vadd.f32 %v6840, %v7054
        %v7167 = vadd.f32 %v6841, %v7057
        %v7168 = vadd.f32 %v6842, %v7062
        %v7169 = vadd.f32 %v6843, %v7065
        %v7170 = vadd.f32 %v6844, %v7070
        %v7171 = vadd.f32 %v6845, %v7073
        %v7172 = vadd.f32 %v6846, %v7078
        %v7173 = vadd.f32 %v6847, %v7081
        %v7174 = vadd.f32 %v6848, %v7086
        %v7175 = vadd.f32 %v6849, %v7089
        %v7176 = vadd.f32 %v6850, %v7094
        %v7177 = vadd.f32 %v6851, %v7097
        %v7178 = vadd.f32 %v6852, %v7102
        %v7179 = vadd.f32 %v6853, %v7105
        %v7180 = vadd.f32 %v6854, %v7110
        %v7181 = vadd.f32 %v6855, %v7113
        %v7182 = vadd.f32 %v6856, %v7118
        %v7183 = vadd.f32 %v6857, %v7121
        %v7184 = vadd.f32 %v6858, %v7126
        %v7185 = vadd.f32 %v6859, %v7129
        %v7186 = vadd.f32 %v6860, %v7134
        %v7187 = vadd.f32 %v6861, %v7137
        %v7188 = vadd.f32 %v6862, %v7142
        %v7189 = vadd.f32 %v6863, %v7145
        %v7190 = vadd.f32 %v6864, %v7150
        %v7191 = vadd.f32 %v6865, %v7153
        %v7192 = vld [vmem:[%s405 + $0x12] sm:$0xff]
        %v7193 = vld [vmem:[%s405 + $0x1a] sm:$0xff]
        %v7194 = vld [vmem:[%s405 + $0x22] sm:$0xff]
        %v7195 = vld [vmem:[%s405 + $0x2a] sm:$0xff]
        %v7196 = vld [vmem:[%s405 + $0x32] sm:$0xff]
        %v7197 = vld [vmem:[%s405 + $0x3a] sm:$0xff]
        %v7198 = vld [vmem:[%s405 + $0x42] sm:$0xff]
        %v7199 = vld [vmem:[%s405 + $0x4a] sm:$0xff]
        %v7200 = vld [vmem:[%s405 + $0x52] sm:$0xff]
        %v7201 = vld [vmem:[%s405 + $0x5a] sm:$0xff]
        %v7202 = vld [vmem:[%s405 + $0x62] sm:$0xff]
        %v7203 = vld [vmem:[%s405 + $0x6a] sm:$0xff]
        %v7204 = vld [vmem:[%s405 + $0x72] sm:$0xff]
        %v7205 = vld [vmem:[%s405 + $0x7a] sm:$0xff]
        %v7206 = vld [vmem:[%s405 + $0x82] sm:$0xff]
        %v7207 = vld [vmem:[%s405 + $0x8a] sm:$0xff]
        %v7208 = vld [vmem:[%s405 + $0x92] sm:$0xff]
        %v7209 = vld [vmem:[%s405 + $0x9a] sm:$0xff]
        %v7210 = vld [vmem:[%s405 + $0xa2] sm:$0xff]
        %v7211 = vld [vmem:[%s405 + $0xaa] sm:$0xff]
        %v7212 = vld [vmem:[%s405 + $0xb2] sm:$0xff]
        %v7213 = vld [vmem:[%s405 + $0xba] sm:$0xff]
        %v7214 = vld [vmem:[%s405 + $0xc2] sm:$0xff]
        %v7215 = vld [vmem:[%s405 + $0xca] sm:$0xff]
        %v7216 = vld [vmem:[%s405 + $0xd2] sm:$0xff]
        %v7217 = vld [vmem:[%s405 + $0xda] sm:$0xff]
        %v7218 = vld [vmem:[%s405 + $0xe2] sm:$0xff]
        %v7219 = vld [vmem:[%s405 + $0xea] sm:$0xff]
        %v7220 = vld [vmem:[%s405 + $0xf2] sm:$0xff]
        %v7221 = vld [vmem:[%s405 + $0xfa] sm:$0xff]
        %v7222 = vld [vmem:[%s405 + $0x102] sm:$0xff]
        %v7223 = vld [vmem:[%s405 + $0x10a] sm:$0xff]
        %v7224 = vld [vmem:[%s405 + $0x112] sm:$0xff]
        %v7225 = vld [vmem:[%s405 + $0x11a] sm:$0xff]
        %v7226 = vld [vmem:[%s405 + $0x122] sm:$0xff]
        %v7227 = vld [vmem:[%s405 + $0x12a] sm:$0x3f]
        %v7228 = vpack.c.bf16 %v7193, %v7192
        %v7229 = vpack.c.bf16 %v7195, %v7194
        %v7230 = vpack.c.bf16 %v7197, %v7196
        %v7231 = vpack.c.bf16 %v7199, %v7198
        %v7232 = vpack.c.bf16 %v7201, %v7200
        %v7233 = vpack.c.bf16 %v7203, %v7202
        %v7234 = vpack.c.bf16 %v7205, %v7204
        %v7235 = vpack.c.bf16 %v7207, %v7206
        %v7236 = vpack.c.bf16 %v7209, %v7208
        %v7237 = vpack.c.bf16 %v7211, %v7210
        %v7238 = vpack.c.bf16 %v7213, %v7212
        %v7239 = vpack.c.bf16 %v7215, %v7214
        %v7240 = vpack.c.bf16 %v7217, %v7216
        %v7241 = vpack.c.bf16 %v7219, %v7218
        %v7242 = vpack.c.bf16 %v7221, %v7220
        %v7243 = vpack.c.bf16 %v7223, %v7222
        %v7244 = vpack.c.bf16 %v7225, %v7224
        %v7245 = vpack.c.bf16 %v7227, %v7226
        %s7246 = scalar_lea.vmem %s4, 42
        %v7247 = vld [vmem:[%s7246] sm:$0x3]
        %v7249 = vsel %vm528, %v7228, 0
        %v7252 = vsel %vm528, %v7229, 0
        %v7255 = vsel %vm528, %v7230, 0
        %v7258 = vsel %vm528, %v7231, 0
        %v7261 = vsel %vm528, %v7232, 0
        %v7264 = vsel %vm528, %v7233, 0
        %v7267 = vsel %vm528, %v7234, 0
        %v7270 = vsel %vm528, %v7235, 0
        %v7273 = vsel %vm528, %v7236, 0
        %v7276 = vsel %vm528, %v7237, 0
        %v7279 = vsel %vm528, %v7238, 0
        %v7282 = vsel %vm528, %v7239, 0
        %v7285 = vsel %vm528, %v7240, 0
        %v7288 = vsel %vm528, %v7241, 0
        %v7291 = vsel %vm528, %v7242, 0
        %v7294 = vsel %vm528, %v7243, 0
        %v7297 = vsel %vm528, %v7244, 0
        %v7300 = vsel %vm528, %v7245, 0
        %v7303 = vsel %vm583, %v7247, 0
        %7305 = vmatprep.subr.bf16.mxu0 0
        %7306 = vmatpush1.bf16.msra.mxu0 0
        %7307 = vmatprep.subr.bf16.mxu0 0
        %7308 = vmatpush1.bf16.msra.mxu0 0
        %7309 = vmatprep.subr.bf16.mxu0 0
        %7310 = vmatpush1.bf16.msra.mxu0 0
        %7311 = vmatprep.subr.bf16.mxu0 0
        %7312 = vmatpush1.bf16.msra.mxu0 0
        %7313 = vmatprep.subr.bf16.mxu0 0
        %7314 = vmatpush1.bf16.msra.mxu0 0
        %7315 = vmatprep.subr.bf16.mxu0 0
        %7316 = vmatpush1.bf16.msra.mxu0 0
        %7317 = vmatprep.subr.bf16.mxu0 0
        %7318 = vmatpush1.bf16.msra.mxu0 0
        %7319 = vmatprep.subr.bf16.mxu0 0
        %7320 = vmatpush1.bf16.msra.mxu0 %v7303
        %7321 = vmatprep.subr.bf16.mxu0 0
        %7322 = vmatpush2.bf16.msra.mxu0 0
        %7323 = vmatprep.subr.bf16.mxu0 0
        %7324 = vmatpush2.bf16.msra.mxu0 0
        %7325 = vmatprep.subr.bf16.mxu0 0
        %7326 = vmatpush2.bf16.msra.mxu0 0
        %7327 = vmatprep.subr.bf16.mxu0 0
        %7328 = vmatpush2.bf16.msra.mxu0 0
        %7329 = vmatprep.subr.bf16.mxu0 0
        %7330 = vmatpush2.bf16.msra.mxu0 0
        %7331 = vmatprep.subr.bf16.mxu0 0
        %7332 = vmatpush2.bf16.msra.mxu0 0
        %7333 = vmatprep.subr.bf16.mxu0 0
        %7334 = vmatpush2.bf16.msra.mxu0 0
        %7335 = vmatprep.subr.bf16.mxu0 0
        %7336 = vmatpush2.bf16.msra.mxu0 0
        %7337 = vmatprep.mubr.bf16.mxu0 0
        %7338 = vmatmul.mubr.bf16.gmra.mxu0 %v7249
        %v7339 = vpop.f32.mrf.mxu0
        %v7340 = vadd.f32 0.0, %v7339
        %v7341 = vpop.f32.mrf.mxu0
        %v7342 = vpop.f32.mrf.mxu0
        %v7343 = vadd.f32 0.0, %v7342
        %v7344 = vpop.f32.mrf.mxu0
        %7345 = vmatprep.mubr.bf16.mxu0 0
        %7346 = vmatmul.mubr.bf16.gmra.mxu0 %v7252
        %v7347 = vpop.f32.mrf.mxu0
        %v7348 = vadd.f32 0.0, %v7347
        %v7349 = vpop.f32.mrf.mxu0
        %v7350 = vpop.f32.mrf.mxu0
        %v7351 = vadd.f32 0.0, %v7350
        %v7352 = vpop.f32.mrf.mxu0
        %7353 = vmatprep.mubr.bf16.mxu0 0
        %7354 = vmatmul.mubr.bf16.gmra.mxu0 %v7255
        %v7355 = vpop.f32.mrf.mxu0
        %v7356 = vadd.f32 0.0, %v7355
        %v7357 = vpop.f32.mrf.mxu0
        %v7358 = vpop.f32.mrf.mxu0
        %v7359 = vadd.f32 0.0, %v7358
        %v7360 = vpop.f32.mrf.mxu0
        %7361 = vmatprep.mubr.bf16.mxu0 0
        %7362 = vmatmul.mubr.bf16.gmra.mxu0 %v7258
        %v7363 = vpop.f32.mrf.mxu0
        %v7364 = vadd.f32 0.0, %v7363
        %v7365 = vpop.f32.mrf.mxu0
        %v7366 = vpop.f32.mrf.mxu0
        %v7367 = vadd.f32 0.0, %v7366
        %v7368 = vpop.f32.mrf.mxu0
        %7369 = vmatprep.mubr.bf16.mxu0 0
        %7370 = vmatmul.mubr.bf16.gmra.mxu0 %v7261
        %v7371 = vpop.f32.mrf.mxu0
        %v7372 = vadd.f32 0.0, %v7371
        %v7373 = vpop.f32.mrf.mxu0
        %v7374 = vpop.f32.mrf.mxu0
        %v7375 = vadd.f32 0.0, %v7374
        %v7376 = vpop.f32.mrf.mxu0
        %7377 = vmatprep.mubr.bf16.mxu0 0
        %7378 = vmatmul.mubr.bf16.gmra.mxu0 %v7264
        %v7379 = vpop.f32.mrf.mxu0
        %v7380 = vadd.f32 0.0, %v7379
        %v7381 = vpop.f32.mrf.mxu0
        %v7382 = vpop.f32.mrf.mxu0
        %v7383 = vadd.f32 0.0, %v7382
        %v7384 = vpop.f32.mrf.mxu0
        %7385 = vmatprep.mubr.bf16.mxu0 0
        %7386 = vmatmul.mubr.bf16.gmra.mxu0 %v7267
        %v7387 = vpop.f32.mrf.mxu0
        %v7388 = vadd.f32 0.0, %v7387
        %v7389 = vpop.f32.mrf.mxu0
        %v7390 = vpop.f32.mrf.mxu0
        %v7391 = vadd.f32 0.0, %v7390
        %v7392 = vpop.f32.mrf.mxu0
        %7393 = vmatprep.mubr.bf16.mxu0 0
        %7394 = vmatmul.mubr.bf16.gmra.mxu0 %v7270
        %v7395 = vpop.f32.mrf.mxu0
        %v7396 = vadd.f32 0.0, %v7395
        %v7397 = vpop.f32.mrf.mxu0
        %v7398 = vpop.f32.mrf.mxu0
        %v7399 = vadd.f32 0.0, %v7398
        %v7400 = vpop.f32.mrf.mxu0
        %7401 = vmatprep.mubr.bf16.mxu0 0
        %7402 = vmatmul.mubr.bf16.gmra.mxu0 %v7273
        %v7403 = vpop.f32.mrf.mxu0
        %v7404 = vadd.f32 0.0, %v7403
        %v7405 = vpop.f32.mrf.mxu0
        %v7406 = vpop.f32.mrf.mxu0
        %v7407 = vadd.f32 0.0, %v7406
        %v7408 = vpop.f32.mrf.mxu0
        %7409 = vmatprep.mubr.bf16.mxu0 0
        %7410 = vmatmul.mubr.bf16.gmra.mxu0 %v7276
        %v7411 = vpop.f32.mrf.mxu0
        %v7412 = vadd.f32 0.0, %v7411
        %v7413 = vpop.f32.mrf.mxu0
        %v7414 = vpop.f32.mrf.mxu0
        %v7415 = vadd.f32 0.0, %v7414
        %v7416 = vpop.f32.mrf.mxu0
        %7417 = vmatprep.mubr.bf16.mxu0 0
        %7418 = vmatmul.mubr.bf16.gmra.mxu0 %v7279
        %v7419 = vpop.f32.mrf.mxu0
        %v7420 = vadd.f32 0.0, %v7419
        %v7421 = vpop.f32.mrf.mxu0
        %v7422 = vpop.f32.mrf.mxu0
        %v7423 = vadd.f32 0.0, %v7422
        %v7424 = vpop.f32.mrf.mxu0
        %7425 = vmatprep.mubr.bf16.mxu0 0
        %7426 = vmatmul.mubr.bf16.gmra.mxu0 %v7282
        %v7427 = vpop.f32.mrf.mxu0
        %v7428 = vadd.f32 0.0, %v7427
        %v7429 = vpop.f32.mrf.mxu0
        %v7430 = vpop.f32.mrf.mxu0
        %v7431 = vadd.f32 0.0, %v7430
        %v7432 = vpop.f32.mrf.mxu0
        %7433 = vmatprep.mubr.bf16.mxu0 0
        %7434 = vmatmul.mubr.bf16.gmra.mxu0 %v7285
        %v7435 = vpop.f32.mrf.mxu0
        %v7436 = vadd.f32 0.0, %v7435
        %v7437 = vpop.f32.mrf.mxu0
        %v7438 = vpop.f32.mrf.mxu0
        %v7439 = vadd.f32 0.0, %v7438
        %v7440 = vpop.f32.mrf.mxu0
        %7441 = vmatprep.mubr.bf16.mxu0 0
        %7442 = vmatmul.mubr.bf16.gmra.mxu0 %v7288
        %v7443 = vpop.f32.mrf.mxu0
        %v7444 = vadd.f32 0.0, %v7443
        %v7445 = vpop.f32.mrf.mxu0
        %v7446 = vpop.f32.mrf.mxu0
        %v7447 = vadd.f32 0.0, %v7446
        %v7448 = vpop.f32.mrf.mxu0
        %7449 = vmatprep.mubr.bf16.mxu0 0
        %7450 = vmatmul.mubr.bf16.gmra.mxu0 %v7291
        %v7451 = vpop.f32.mrf.mxu0
        %v7452 = vadd.f32 0.0, %v7451
        %v7453 = vpop.f32.mrf.mxu0
        %v7454 = vpop.f32.mrf.mxu0
        %v7455 = vadd.f32 0.0, %v7454
        %v7456 = vpop.f32.mrf.mxu0
        %7457 = vmatprep.mubr.bf16.mxu0 0
        %7458 = vmatmul.mubr.bf16.gmra.mxu0 %v7294
        %v7459 = vpop.f32.mrf.mxu0
        %v7460 = vadd.f32 0.0, %v7459
        %v7461 = vpop.f32.mrf.mxu0
        %v7462 = vpop.f32.mrf.mxu0
        %v7463 = vadd.f32 0.0, %v7462
        %v7464 = vpop.f32.mrf.mxu0
        %7465 = vmatprep.mubr.bf16.mxu0 0
        %7466 = vmatmul.mubr.bf16.gmra.mxu0 %v7297
        %v7467 = vpop.f32.mrf.mxu0
        %v7468 = vadd.f32 0.0, %v7467
        %v7469 = vpop.f32.mrf.mxu0
        %v7470 = vpop.f32.mrf.mxu0
        %v7471 = vadd.f32 0.0, %v7470
        %v7472 = vpop.f32.mrf.mxu0
        %7473 = vmatprep.mubr.bf16.mxu0 0
        %7474 = vmatmul.mubr.bf16.gmra.mxu0 %v7300
        %v7475 = vpop.f32.mrf.mxu0
        %v7476 = vadd.f32 0.0, %v7475
        %v7477 = vpop.f32.mrf.mxu0
        %v7478 = vpop.f32.mrf.mxu0
        %v7479 = vadd.f32 0.0, %v7478
        %v7480 = vpop.f32.mrf.mxu0
        %7481 = vdwg.mxu0
        %v7482 = vadd.f32 %v7156, %v7340
        %v7483 = vadd.f32 %v7157, %v7343
        %v7484 = vadd.f32 %v7158, %v7348
        %v7485 = vadd.f32 %v7159, %v7351
        %v7486 = vadd.f32 %v7160, %v7356
        %v7487 = vadd.f32 %v7161, %v7359
        %v7488 = vadd.f32 %v7162, %v7364
        %v7489 = vadd.f32 %v7163, %v7367
        %v7490 = vadd.f32 %v7164, %v7372
        %v7491 = vadd.f32 %v7165, %v7375
        %v7492 = vadd.f32 %v7166, %v7380
        %v7493 = vadd.f32 %v7167, %v7383
        %v7494 = vadd.f32 %v7168, %v7388
        %v7495 = vadd.f32 %v7169, %v7391
        %v7496 = vadd.f32 %v7170, %v7396
        %v7497 = vadd.f32 %v7171, %v7399
        %v7498 = vadd.f32 %v7172, %v7404
        %v7499 = vadd.f32 %v7173, %v7407
        %v7500 = vadd.f32 %v7174, %v7412
        %v7501 = vadd.f32 %v7175, %v7415
        %v7502 = vadd.f32 %v7176, %v7420
        %v7503 = vadd.f32 %v7177, %v7423
        %v7504 = vadd.f32 %v7178, %v7428
        %v7505 = vadd.f32 %v7179, %v7431
        %v7506 = vadd.f32 %v7180, %v7436
        %v7507 = vadd.f32 %v7181, %v7439
        %v7508 = vadd.f32 %v7182, %v7444
        %v7509 = vadd.f32 %v7183, %v7447
        %v7510 = vadd.f32 %v7184, %v7452
        %v7511 = vadd.f32 %v7185, %v7455
        %v7512 = vadd.f32 %v7186, %v7460
        %v7513 = vadd.f32 %v7187, %v7463
        %v7514 = vadd.f32 %v7188, %v7468
        %v7515 = vadd.f32 %v7189, %v7471
        %v7516 = vadd.f32 %v7190, %v7476
        %v7517 = vadd.f32 %v7191, %v7479
        %v7518 = vld [vmem:[%s405 + $0x13] sm:$0xff]
        %v7519 = vld [vmem:[%s405 + $0x1b] sm:$0xff]
        %v7520 = vld [vmem:[%s405 + $0x23] sm:$0xff]
        %v7521 = vld [vmem:[%s405 + $0x2b] sm:$0xff]
        %v7522 = vld [vmem:[%s405 + $0x33] sm:$0xff]
        %v7523 = vld [vmem:[%s405 + $0x3b] sm:$0xff]
        %v7524 = vld [vmem:[%s405 + $0x43] sm:$0xff]
        %v7525 = vld [vmem:[%s405 + $0x4b] sm:$0xff]
        %v7526 = vld [vmem:[%s405 + $0x53] sm:$0xff]
        %v7527 = vld [vmem:[%s405 + $0x5b] sm:$0xff]
        %v7528 = vld [vmem:[%s405 + $0x63] sm:$0xff]
        %v7529 = vld [vmem:[%s405 + $0x6b] sm:$0xff]
        %v7530 = vld [vmem:[%s405 + $0x73] sm:$0xff]
        %v7531 = vld [vmem:[%s405 + $0x7b] sm:$0xff]
        %v7532 = vld [vmem:[%s405 + $0x83] sm:$0xff]
        %v7533 = vld [vmem:[%s405 + $0x8b] sm:$0xff]
        %v7534 = vld [vmem:[%s405 + $0x93] sm:$0xff]
        %v7535 = vld [vmem:[%s405 + $0x9b] sm:$0xff]
        %v7536 = vld [vmem:[%s405 + $0xa3] sm:$0xff]
        %v7537 = vld [vmem:[%s405 + $0xab] sm:$0xff]
        %v7538 = vld [vmem:[%s405 + $0xb3] sm:$0xff]
        %v7539 = vld [vmem:[%s405 + $0xbb] sm:$0xff]
        %v7540 = vld [vmem:[%s405 + $0xc3] sm:$0xff]
        %v7541 = vld [vmem:[%s405 + $0xcb] sm:$0xff]
        %v7542 = vld [vmem:[%s405 + $0xd3] sm:$0xff]
        %v7543 = vld [vmem:[%s405 + $0xdb] sm:$0xff]
        %v7544 = vld [vmem:[%s405 + $0xe3] sm:$0xff]
        %v7545 = vld [vmem:[%s405 + $0xeb] sm:$0xff]
        %v7546 = vld [vmem:[%s405 + $0xf3] sm:$0xff]
        %v7547 = vld [vmem:[%s405 + $0xfb] sm:$0xff]
        %v7548 = vld [vmem:[%s405 + $0x103] sm:$0xff]
        %v7549 = vld [vmem:[%s405 + $0x10b] sm:$0xff]
        %v7550 = vld [vmem:[%s405 + $0x113] sm:$0xff]
        %v7551 = vld [vmem:[%s405 + $0x11b] sm:$0xff]
        %v7552 = vld [vmem:[%s405 + $0x123] sm:$0xff]
        %v7553 = vld [vmem:[%s405 + $0x12b] sm:$0x3f]
        %v7554 = vpack.c.bf16 %v7519, %v7518
        %v7555 = vpack.c.bf16 %v7521, %v7520
        %v7556 = vpack.c.bf16 %v7523, %v7522
        %v7557 = vpack.c.bf16 %v7525, %v7524
        %v7558 = vpack.c.bf16 %v7527, %v7526
        %v7559 = vpack.c.bf16 %v7529, %v7528
        %v7560 = vpack.c.bf16 %v7531, %v7530
        %v7561 = vpack.c.bf16 %v7533, %v7532
        %v7562 = vpack.c.bf16 %v7535, %v7534
        %v7563 = vpack.c.bf16 %v7537, %v7536
        %v7564 = vpack.c.bf16 %v7539, %v7538
        %v7565 = vpack.c.bf16 %v7541, %v7540
        %v7566 = vpack.c.bf16 %v7543, %v7542
        %v7567 = vpack.c.bf16 %v7545, %v7544
        %v7568 = vpack.c.bf16 %v7547, %v7546
        %v7569 = vpack.c.bf16 %v7549, %v7548
        %v7570 = vpack.c.bf16 %v7551, %v7550
        %v7571 = vpack.c.bf16 %v7553, %v7552
        %s7572 = scalar_lea.vmem %s4, 44
        %v7573 = vld [vmem:[%s7572] sm:$0x3]
        %v7575 = vsel %vm528, %v7554, 0
        %v7578 = vsel %vm528, %v7555, 0
        %v7581 = vsel %vm528, %v7556, 0
        %v7584 = vsel %vm528, %v7557, 0
        %v7587 = vsel %vm528, %v7558, 0
        %v7590 = vsel %vm528, %v7559, 0
        %v7593 = vsel %vm528, %v7560, 0
        %v7596 = vsel %vm528, %v7561, 0
        %v7599 = vsel %vm528, %v7562, 0
        %v7602 = vsel %vm528, %v7563, 0
        %v7605 = vsel %vm528, %v7564, 0
        %v7608 = vsel %vm528, %v7565, 0
        %v7611 = vsel %vm528, %v7566, 0
        %v7614 = vsel %vm528, %v7567, 0
        %v7617 = vsel %vm528, %v7568, 0
        %v7620 = vsel %vm528, %v7569, 0
        %v7623 = vsel %vm528, %v7570, 0
        %v7626 = vsel %vm528, %v7571, 0
        %v7629 = vsel %vm583, %v7573, 0
        %7631 = vmatprep.subr.bf16.mxu0 0
        %7632 = vmatpush1.bf16.msra.mxu0 0
        %7633 = vmatprep.subr.bf16.mxu0 0
        %7634 = vmatpush1.bf16.msra.mxu0 0
        %7635 = vmatprep.subr.bf16.mxu0 0
        %7636 = vmatpush1.bf16.msra.mxu0 0
        %7637 = vmatprep.subr.bf16.mxu0 0
        %7638 = vmatpush1.bf16.msra.mxu0 0
        %7639 = vmatprep.subr.bf16.mxu0 0
        %7640 = vmatpush1.bf16.msra.mxu0 0
        %7641 = vmatprep.subr.bf16.mxu0 0
        %7642 = vmatpush1.bf16.msra.mxu0 0
        %7643 = vmatprep.subr.bf16.mxu0 0
        %7644 = vmatpush1.bf16.msra.mxu0 0
        %7645 = vmatprep.subr.bf16.mxu0 0
        %7646 = vmatpush1.bf16.msra.mxu0 %v7629
        %7647 = vmatprep.subr.bf16.mxu0 0
        %7648 = vmatpush2.bf16.msra.mxu0 0
        %7649 = vmatprep.subr.bf16.mxu0 0
        %7650 = vmatpush2.bf16.msra.mxu0 0
        %7651 = vmatprep.subr.bf16.mxu0 0
        %7652 = vmatpush2.bf16.msra.mxu0 0
        %7653 = vmatprep.subr.bf16.mxu0 0
        %7654 = vmatpush2.bf16.msra.mxu0 0
        %7655 = vmatprep.subr.bf16.mxu0 0
        %7656 = vmatpush2.bf16.msra.mxu0 0
        %7657 = vmatprep.subr.bf16.mxu0 0
        %7658 = vmatpush2.bf16.msra.mxu0 0
        %7659 = vmatprep.subr.bf16.mxu0 0
        %7660 = vmatpush2.bf16.msra.mxu0 0
        %7661 = vmatprep.subr.bf16.mxu0 0
        %7662 = vmatpush2.bf16.msra.mxu0 0
        %7663 = vmatprep.mubr.bf16.mxu0 0
        %7664 = vmatmul.mubr.bf16.gmra.mxu0 %v7575
        %v7665 = vpop.f32.mrf.mxu0
        %v7666 = vadd.f32 0.0, %v7665
        %v7667 = vpop.f32.mrf.mxu0
        %v7668 = vpop.f32.mrf.mxu0
        %v7669 = vadd.f32 0.0, %v7668
        %v7670 = vpop.f32.mrf.mxu0
        %7671 = vmatprep.mubr.bf16.mxu0 0
        %7672 = vmatmul.mubr.bf16.gmra.mxu0 %v7578
        %v7673 = vpop.f32.mrf.mxu0
        %v7674 = vadd.f32 0.0, %v7673
        %v7675 = vpop.f32.mrf.mxu0
        %v7676 = vpop.f32.mrf.mxu0
        %v7677 = vadd.f32 0.0, %v7676
        %v7678 = vpop.f32.mrf.mxu0
        %7679 = vmatprep.mubr.bf16.mxu0 0
        %7680 = vmatmul.mubr.bf16.gmra.mxu0 %v7581
        %v7681 = vpop.f32.mrf.mxu0
        %v7682 = vadd.f32 0.0, %v7681
        %v7683 = vpop.f32.mrf.mxu0
        %v7684 = vpop.f32.mrf.mxu0
        %v7685 = vadd.f32 0.0, %v7684
        %v7686 = vpop.f32.mrf.mxu0
        %7687 = vmatprep.mubr.bf16.mxu0 0
        %7688 = vmatmul.mubr.bf16.gmra.mxu0 %v7584
        %v7689 = vpop.f32.mrf.mxu0
        %v7690 = vadd.f32 0.0, %v7689
        %v7691 = vpop.f32.mrf.mxu0
        %v7692 = vpop.f32.mrf.mxu0
        %v7693 = vadd.f32 0.0, %v7692
        %v7694 = vpop.f32.mrf.mxu0
        %7695 = vmatprep.mubr.bf16.mxu0 0
        %7696 = vmatmul.mubr.bf16.gmra.mxu0 %v7587
        %v7697 = vpop.f32.mrf.mxu0
        %v7698 = vadd.f32 0.0, %v7697
        %v7699 = vpop.f32.mrf.mxu0
        %v7700 = vpop.f32.mrf.mxu0
        %v7701 = vadd.f32 0.0, %v7700
        %v7702 = vpop.f32.mrf.mxu0
        %7703 = vmatprep.mubr.bf16.mxu0 0
        %7704 = vmatmul.mubr.bf16.gmra.mxu0 %v7590
        %v7705 = vpop.f32.mrf.mxu0
        %v7706 = vadd.f32 0.0, %v7705
        %v7707 = vpop.f32.mrf.mxu0
        %v7708 = vpop.f32.mrf.mxu0
        %v7709 = vadd.f32 0.0, %v7708
        %v7710 = vpop.f32.mrf.mxu0
        %7711 = vmatprep.mubr.bf16.mxu0 0
        %7712 = vmatmul.mubr.bf16.gmra.mxu0 %v7593
        %v7713 = vpop.f32.mrf.mxu0
        %v7714 = vadd.f32 0.0, %v7713
        %v7715 = vpop.f32.mrf.mxu0
        %v7716 = vpop.f32.mrf.mxu0
        %v7717 = vadd.f32 0.0, %v7716
        %v7718 = vpop.f32.mrf.mxu0
        %7719 = vmatprep.mubr.bf16.mxu0 0
        %7720 = vmatmul.mubr.bf16.gmra.mxu0 %v7596
        %v7721 = vpop.f32.mrf.mxu0
        %v7722 = vadd.f32 0.0, %v7721
        %v7723 = vpop.f32.mrf.mxu0
        %v7724 = vpop.f32.mrf.mxu0
        %v7725 = vadd.f32 0.0, %v7724
        %v7726 = vpop.f32.mrf.mxu0
        %7727 = vmatprep.mubr.bf16.mxu0 0
        %7728 = vmatmul.mubr.bf16.gmra.mxu0 %v7599
        %v7729 = vpop.f32.mrf.mxu0
        %v7730 = vadd.f32 0.0, %v7729
        %v7731 = vpop.f32.mrf.mxu0
        %v7732 = vpop.f32.mrf.mxu0
        %v7733 = vadd.f32 0.0, %v7732
        %v7734 = vpop.f32.mrf.mxu0
        %7735 = vmatprep.mubr.bf16.mxu0 0
        %7736 = vmatmul.mubr.bf16.gmra.mxu0 %v7602
        %v7737 = vpop.f32.mrf.mxu0
        %v7738 = vadd.f32 0.0, %v7737
        %v7739 = vpop.f32.mrf.mxu0
        %v7740 = vpop.f32.mrf.mxu0
        %v7741 = vadd.f32 0.0, %v7740
        %v7742 = vpop.f32.mrf.mxu0
        %7743 = vmatprep.mubr.bf16.mxu0 0
        %7744 = vmatmul.mubr.bf16.gmra.mxu0 %v7605
        %v7745 = vpop.f32.mrf.mxu0
        %v7746 = vadd.f32 0.0, %v7745
        %v7747 = vpop.f32.mrf.mxu0
        %v7748 = vpop.f32.mrf.mxu0
        %v7749 = vadd.f32 0.0, %v7748
        %v7750 = vpop.f32.mrf.mxu0
        %7751 = vmatprep.mubr.bf16.mxu0 0
        %7752 = vmatmul.mubr.bf16.gmra.mxu0 %v7608
        %v7753 = vpop.f32.mrf.mxu0
        %v7754 = vadd.f32 0.0, %v7753
        %v7755 = vpop.f32.mrf.mxu0
        %v7756 = vpop.f32.mrf.mxu0
        %v7757 = vadd.f32 0.0, %v7756
        %v7758 = vpop.f32.mrf.mxu0
        %7759 = vmatprep.mubr.bf16.mxu0 0
        %7760 = vmatmul.mubr.bf16.gmra.mxu0 %v7611
        %v7761 = vpop.f32.mrf.mxu0
        %v7762 = vadd.f32 0.0, %v7761
        %v7763 = vpop.f32.mrf.mxu0
        %v7764 = vpop.f32.mrf.mxu0
        %v7765 = vadd.f32 0.0, %v7764
        %v7766 = vpop.f32.mrf.mxu0
        %7767 = vmatprep.mubr.bf16.mxu0 0
        %7768 = vmatmul.mubr.bf16.gmra.mxu0 %v7614
        %v7769 = vpop.f32.mrf.mxu0
        %v7770 = vadd.f32 0.0, %v7769
        %v7771 = vpop.f32.mrf.mxu0
        %v7772 = vpop.f32.mrf.mxu0
        %v7773 = vadd.f32 0.0, %v7772
        %v7774 = vpop.f32.mrf.mxu0
        %7775 = vmatprep.mubr.bf16.mxu0 0
        %7776 = vmatmul.mubr.bf16.gmra.mxu0 %v7617
        %v7777 = vpop.f32.mrf.mxu0
        %v7778 = vadd.f32 0.0, %v7777
        %v7779 = vpop.f32.mrf.mxu0
        %v7780 = vpop.f32.mrf.mxu0
        %v7781 = vadd.f32 0.0, %v7780
        %v7782 = vpop.f32.mrf.mxu0
        %7783 = vmatprep.mubr.bf16.mxu0 0
        %7784 = vmatmul.mubr.bf16.gmra.mxu0 %v7620
        %v7785 = vpop.f32.mrf.mxu0
        %v7786 = vadd.f32 0.0, %v7785
        %v7787 = vpop.f32.mrf.mxu0
        %v7788 = vpop.f32.mrf.mxu0
        %v7789 = vadd.f32 0.0, %v7788
        %v7790 = vpop.f32.mrf.mxu0
        %7791 = vmatprep.mubr.bf16.mxu0 0
        %7792 = vmatmul.mubr.bf16.gmra.mxu0 %v7623
        %v7793 = vpop.f32.mrf.mxu0
        %v7794 = vadd.f32 0.0, %v7793
        %v7795 = vpop.f32.mrf.mxu0
        %v7796 = vpop.f32.mrf.mxu0
        %v7797 = vadd.f32 0.0, %v7796
        %v7798 = vpop.f32.mrf.mxu0
        %7799 = vmatprep.mubr.bf16.mxu0 0
        %7800 = vmatmul.mubr.bf16.gmra.mxu0 %v7626
        %v7801 = vpop.f32.mrf.mxu0
        %v7802 = vadd.f32 0.0, %v7801
        %v7803 = vpop.f32.mrf.mxu0
        %v7804 = vpop.f32.mrf.mxu0
        %v7805 = vadd.f32 0.0, %v7804
        %v7806 = vpop.f32.mrf.mxu0
        %7807 = vdwg.mxu0
        %v7808 = vadd.f32 %v7482, %v7666
        %v7809 = vadd.f32 %v7483, %v7669
        %v7810 = vadd.f32 %v7484, %v7674
        %v7811 = vadd.f32 %v7485, %v7677
        %v7812 = vadd.f32 %v7486, %v7682
        %v7813 = vadd.f32 %v7487, %v7685
        %v7814 = vadd.f32 %v7488, %v7690
        %v7815 = vadd.f32 %v7489, %v7693
        %v7816 = vadd.f32 %v7490, %v7698
        %v7817 = vadd.f32 %v7491, %v7701
        %v7818 = vadd.f32 %v7492, %v7706
        %v7819 = vadd.f32 %v7493, %v7709
        %v7820 = vadd.f32 %v7494, %v7714
        %v7821 = vadd.f32 %v7495, %v7717
        %v7822 = vadd.f32 %v7496, %v7722
        %v7823 = vadd.f32 %v7497, %v7725
        %v7824 = vadd.f32 %v7498, %v7730
        %v7825 = vadd.f32 %v7499, %v7733
        %v7826 = vadd.f32 %v7500, %v7738
        %v7827 = vadd.f32 %v7501, %v7741
        %v7828 = vadd.f32 %v7502, %v7746
        %v7829 = vadd.f32 %v7503, %v7749
        %v7830 = vadd.f32 %v7504, %v7754
        %v7831 = vadd.f32 %v7505, %v7757
        %v7832 = vadd.f32 %v7506, %v7762
        %v7833 = vadd.f32 %v7507, %v7765
        %v7834 = vadd.f32 %v7508, %v7770
        %v7835 = vadd.f32 %v7509, %v7773
        %v7836 = vadd.f32 %v7510, %v7778
        %v7837 = vadd.f32 %v7511, %v7781
        %v7838 = vadd.f32 %v7512, %v7786
        %v7839 = vadd.f32 %v7513, %v7789
        %v7840 = vadd.f32 %v7514, %v7794
        %v7841 = vadd.f32 %v7515, %v7797
        %v7842 = vadd.f32 %v7516, %v7802
        %v7843 = vadd.f32 %v7517, %v7805
        %v7844 = vld [vmem:[%s405 + $0x14] sm:$0xff]
        %v7845 = vld [vmem:[%s405 + $0x1c] sm:$0xff]
        %v7846 = vld [vmem:[%s405 + $0x24] sm:$0xff]
        %v7847 = vld [vmem:[%s405 + $0x2c] sm:$0xff]
        %v7848 = vld [vmem:[%s405 + $0x34] sm:$0xff]
        %v7849 = vld [vmem:[%s405 + $0x3c] sm:$0xff]
        %v7850 = vld [vmem:[%s405 + $0x44] sm:$0xff]
        %v7851 = vld [vmem:[%s405 + $0x4c] sm:$0xff]
        %v7852 = vld [vmem:[%s405 + $0x54] sm:$0xff]
        %v7853 = vld [vmem:[%s405 + $0x5c] sm:$0xff]
        %v7854 = vld [vmem:[%s405 + $0x64] sm:$0xff]
        %v7855 = vld [vmem:[%s405 + $0x6c] sm:$0xff]
        %v7856 = vld [vmem:[%s405 + $0x74] sm:$0xff]
        %v7857 = vld [vmem:[%s405 + $0x7c] sm:$0xff]
        %v7858 = vld [vmem:[%s405 + $0x84] sm:$0xff]
        %v7859 = vld [vmem:[%s405 + $0x8c] sm:$0xff]
        %v7860 = vld [vmem:[%s405 + $0x94] sm:$0xff]
        %v7861 = vld [vmem:[%s405 + $0x9c] sm:$0xff]
        %v7862 = vld [vmem:[%s405 + $0xa4] sm:$0xff]
        %v7863 = vld [vmem:[%s405 + $0xac] sm:$0xff]
        %v7864 = vld [vmem:[%s405 + $0xb4] sm:$0xff]
        %v7865 = vld [vmem:[%s405 + $0xbc] sm:$0xff]
        %v7866 = vld [vmem:[%s405 + $0xc4] sm:$0xff]
        %v7867 = vld [vmem:[%s405 + $0xcc] sm:$0xff]
        %v7868 = vld [vmem:[%s405 + $0xd4] sm:$0xff]
        %v7869 = vld [vmem:[%s405 + $0xdc] sm:$0xff]
        %v7870 = vld [vmem:[%s405 + $0xe4] sm:$0xff]
        %v7871 = vld [vmem:[%s405 + $0xec] sm:$0xff]
        %v7872 = vld [vmem:[%s405 + $0xf4] sm:$0xff]
        %v7873 = vld [vmem:[%s405 + $0xfc] sm:$0xff]
        %v7874 = vld [vmem:[%s405 + $0x104] sm:$0xff]
        %v7875 = vld [vmem:[%s405 + $0x10c] sm:$0xff]
        %v7876 = vld [vmem:[%s405 + $0x114] sm:$0xff]
        %v7877 = vld [vmem:[%s405 + $0x11c] sm:$0xff]
        %v7878 = vld [vmem:[%s405 + $0x124] sm:$0xff]
        %v7879 = vld [vmem:[%s405 + $0x12c] sm:$0x3f]
        %v7880 = vpack.c.bf16 %v7845, %v7844
        %v7881 = vpack.c.bf16 %v7847, %v7846
        %v7882 = vpack.c.bf16 %v7849, %v7848
        %v7883 = vpack.c.bf16 %v7851, %v7850
        %v7884 = vpack.c.bf16 %v7853, %v7852
        %v7885 = vpack.c.bf16 %v7855, %v7854
        %v7886 = vpack.c.bf16 %v7857, %v7856
        %v7887 = vpack.c.bf16 %v7859, %v7858
        %v7888 = vpack.c.bf16 %v7861, %v7860
        %v7889 = vpack.c.bf16 %v7863, %v7862
        %v7890 = vpack.c.bf16 %v7865, %v7864
        %v7891 = vpack.c.bf16 %v7867, %v7866
        %v7892 = vpack.c.bf16 %v7869, %v7868
        %v7893 = vpack.c.bf16 %v7871, %v7870
        %v7894 = vpack.c.bf16 %v7873, %v7872
        %v7895 = vpack.c.bf16 %v7875, %v7874
        %v7896 = vpack.c.bf16 %v7877, %v7876
        %v7897 = vpack.c.bf16 %v7879, %v7878
        %s7898 = scalar_lea.vmem %s4, 46
        %v7899 = vld [vmem:[%s7898] sm:$0x3]
        %v7901 = vsel %vm528, %v7880, 0
        %v7904 = vsel %vm528, %v7881, 0
        %v7907 = vsel %vm528, %v7882, 0
        %v7910 = vsel %vm528, %v7883, 0
        %v7913 = vsel %vm528, %v7884, 0
        %v7916 = vsel %vm528, %v7885, 0
        %v7919 = vsel %vm528, %v7886, 0
        %v7922 = vsel %vm528, %v7887, 0
        %v7925 = vsel %vm528, %v7888, 0
        %v7928 = vsel %vm528, %v7889, 0
        %v7931 = vsel %vm528, %v7890, 0
        %v7934 = vsel %vm528, %v7891, 0
        %v7937 = vsel %vm528, %v7892, 0
        %v7940 = vsel %vm528, %v7893, 0
        %v7943 = vsel %vm528, %v7894, 0
        %v7946 = vsel %vm528, %v7895, 0
        %v7949 = vsel %vm528, %v7896, 0
        %v7952 = vsel %vm528, %v7897, 0
        %v7955 = vsel %vm583, %v7899, 0
        %7957 = vmatprep.subr.bf16.mxu0 0
        %7958 = vmatpush1.bf16.msra.mxu0 0
        %7959 = vmatprep.subr.bf16.mxu0 0
        %7960 = vmatpush1.bf16.msra.mxu0 0
        %7961 = vmatprep.subr.bf16.mxu0 0
        %7962 = vmatpush1.bf16.msra.mxu0 0
        %7963 = vmatprep.subr.bf16.mxu0 0
        %7964 = vmatpush1.bf16.msra.mxu0 0
        %7965 = vmatprep.subr.bf16.mxu0 0
        %7966 = vmatpush1.bf16.msra.mxu0 0
        %7967 = vmatprep.subr.bf16.mxu0 0
        %7968 = vmatpush1.bf16.msra.mxu0 0
        %7969 = vmatprep.subr.bf16.mxu0 0
        %7970 = vmatpush1.bf16.msra.mxu0 0
        %7971 = vmatprep.subr.bf16.mxu0 0
        %7972 = vmatpush1.bf16.msra.mxu0 %v7955
        %7973 = vmatprep.subr.bf16.mxu0 0
        %7974 = vmatpush2.bf16.msra.mxu0 0
        %7975 = vmatprep.subr.bf16.mxu0 0
        %7976 = vmatpush2.bf16.msra.mxu0 0
        %7977 = vmatprep.subr.bf16.mxu0 0
        %7978 = vmatpush2.bf16.msra.mxu0 0
        %7979 = vmatprep.subr.bf16.mxu0 0
        %7980 = vmatpush2.bf16.msra.mxu0 0
        %7981 = vmatprep.subr.bf16.mxu0 0
        %7982 = vmatpush2.bf16.msra.mxu0 0
        %7983 = vmatprep.subr.bf16.mxu0 0
        %7984 = vmatpush2.bf16.msra.mxu0 0
        %7985 = vmatprep.subr.bf16.mxu0 0
        %7986 = vmatpush2.bf16.msra.mxu0 0
        %7987 = vmatprep.subr.bf16.mxu0 0
        %7988 = vmatpush2.bf16.msra.mxu0 0
        %7989 = vmatprep.mubr.bf16.mxu0 0
        %7990 = vmatmul.mubr.bf16.gmra.mxu0 %v7901
        %v7991 = vpop.f32.mrf.mxu0
        %v7992 = vadd.f32 0.0, %v7991
        %v7993 = vpop.f32.mrf.mxu0
        %v7994 = vpop.f32.mrf.mxu0
        %v7995 = vadd.f32 0.0, %v7994
        %v7996 = vpop.f32.mrf.mxu0
        %7997 = vmatprep.mubr.bf16.mxu0 0
        %7998 = vmatmul.mubr.bf16.gmra.mxu0 %v7904
        %v7999 = vpop.f32.mrf.mxu0
        %v8000 = vadd.f32 0.0, %v7999
        %v8001 = vpop.f32.mrf.mxu0
        %v8002 = vpop.f32.mrf.mxu0
        %v8003 = vadd.f32 0.0, %v8002
        %v8004 = vpop.f32.mrf.mxu0
        %8005 = vmatprep.mubr.bf16.mxu0 0
        %8006 = vmatmul.mubr.bf16.gmra.mxu0 %v7907
        %v8007 = vpop.f32.mrf.mxu0
        %v8008 = vadd.f32 0.0, %v8007
        %v8009 = vpop.f32.mrf.mxu0
        %v8010 = vpop.f32.mrf.mxu0
        %v8011 = vadd.f32 0.0, %v8010
        %v8012 = vpop.f32.mrf.mxu0
        %8013 = vmatprep.mubr.bf16.mxu0 0
        %8014 = vmatmul.mubr.bf16.gmra.mxu0 %v7910
        %v8015 = vpop.f32.mrf.mxu0
        %v8016 = vadd.f32 0.0, %v8015
        %v8017 = vpop.f32.mrf.mxu0
        %v8018 = vpop.f32.mrf.mxu0
        %v8019 = vadd.f32 0.0, %v8018
        %v8020 = vpop.f32.mrf.mxu0
        %8021 = vmatprep.mubr.bf16.mxu0 0
        %8022 = vmatmul.mubr.bf16.gmra.mxu0 %v7913
        %v8023 = vpop.f32.mrf.mxu0
        %v8024 = vadd.f32 0.0, %v8023
        %v8025 = vpop.f32.mrf.mxu0
        %v8026 = vpop.f32.mrf.mxu0
        %v8027 = vadd.f32 0.0, %v8026
        %v8028 = vpop.f32.mrf.mxu0
        %8029 = vmatprep.mubr.bf16.mxu0 0
        %8030 = vmatmul.mubr.bf16.gmra.mxu0 %v7916
        %v8031 = vpop.f32.mrf.mxu0
        %v8032 = vadd.f32 0.0, %v8031
        %v8033 = vpop.f32.mrf.mxu0
        %v8034 = vpop.f32.mrf.mxu0
        %v8035 = vadd.f32 0.0, %v8034
        %v8036 = vpop.f32.mrf.mxu0
        %8037 = vmatprep.mubr.bf16.mxu0 0
        %8038 = vmatmul.mubr.bf16.gmra.mxu0 %v7919
        %v8039 = vpop.f32.mrf.mxu0
        %v8040 = vadd.f32 0.0, %v8039
        %v8041 = vpop.f32.mrf.mxu0
        %v8042 = vpop.f32.mrf.mxu0
        %v8043 = vadd.f32 0.0, %v8042
        %v8044 = vpop.f32.mrf.mxu0
        %8045 = vmatprep.mubr.bf16.mxu0 0
        %8046 = vmatmul.mubr.bf16.gmra.mxu0 %v7922
        %v8047 = vpop.f32.mrf.mxu0
        %v8048 = vadd.f32 0.0, %v8047
        %v8049 = vpop.f32.mrf.mxu0
        %v8050 = vpop.f32.mrf.mxu0
        %v8051 = vadd.f32 0.0, %v8050
        %v8052 = vpop.f32.mrf.mxu0
        %8053 = vmatprep.mubr.bf16.mxu0 0
        %8054 = vmatmul.mubr.bf16.gmra.mxu0 %v7925
        %v8055 = vpop.f32.mrf.mxu0
        %v8056 = vadd.f32 0.0, %v8055
        %v8057 = vpop.f32.mrf.mxu0
        %v8058 = vpop.f32.mrf.mxu0
        %v8059 = vadd.f32 0.0, %v8058
        %v8060 = vpop.f32.mrf.mxu0
        %8061 = vmatprep.mubr.bf16.mxu0 0
        %8062 = vmatmul.mubr.bf16.gmra.mxu0 %v7928
        %v8063 = vpop.f32.mrf.mxu0
        %v8064 = vadd.f32 0.0, %v8063
        %v8065 = vpop.f32.mrf.mxu0
        %v8066 = vpop.f32.mrf.mxu0
        %v8067 = vadd.f32 0.0, %v8066
        %v8068 = vpop.f32.mrf.mxu0
        %8069 = vmatprep.mubr.bf16.mxu0 0
        %8070 = vmatmul.mubr.bf16.gmra.mxu0 %v7931
        %v8071 = vpop.f32.mrf.mxu0
        %v8072 = vadd.f32 0.0, %v8071
        %v8073 = vpop.f32.mrf.mxu0
        %v8074 = vpop.f32.mrf.mxu0
        %v8075 = vadd.f32 0.0, %v8074
        %v8076 = vpop.f32.mrf.mxu0
        %8077 = vmatprep.mubr.bf16.mxu0 0
        %8078 = vmatmul.mubr.bf16.gmra.mxu0 %v7934
        %v8079 = vpop.f32.mrf.mxu0
        %v8080 = vadd.f32 0.0, %v8079
        %v8081 = vpop.f32.mrf.mxu0
        %v8082 = vpop.f32.mrf.mxu0
        %v8083 = vadd.f32 0.0, %v8082
        %v8084 = vpop.f32.mrf.mxu0
        %8085 = vmatprep.mubr.bf16.mxu0 0
        %8086 = vmatmul.mubr.bf16.gmra.mxu0 %v7937
        %v8087 = vpop.f32.mrf.mxu0
        %v8088 = vadd.f32 0.0, %v8087
        %v8089 = vpop.f32.mrf.mxu0
        %v8090 = vpop.f32.mrf.mxu0
        %v8091 = vadd.f32 0.0, %v8090
        %v8092 = vpop.f32.mrf.mxu0
        %8093 = vmatprep.mubr.bf16.mxu0 0
        %8094 = vmatmul.mubr.bf16.gmra.mxu0 %v7940
        %v8095 = vpop.f32.mrf.mxu0
        %v8096 = vadd.f32 0.0, %v8095
        %v8097 = vpop.f32.mrf.mxu0
        %v8098 = vpop.f32.mrf.mxu0
        %v8099 = vadd.f32 0.0, %v8098
        %v8100 = vpop.f32.mrf.mxu0
        %8101 = vmatprep.mubr.bf16.mxu0 0
        %8102 = vmatmul.mubr.bf16.gmra.mxu0 %v7943
        %v8103 = vpop.f32.mrf.mxu0
        %v8104 = vadd.f32 0.0, %v8103
        %v8105 = vpop.f32.mrf.mxu0
        %v8106 = vpop.f32.mrf.mxu0
        %v8107 = vadd.f32 0.0, %v8106
        %v8108 = vpop.f32.mrf.mxu0
        %8109 = vmatprep.mubr.bf16.mxu0 0
        %8110 = vmatmul.mubr.bf16.gmra.mxu0 %v7946
        %v8111 = vpop.f32.mrf.mxu0
        %v8112 = vadd.f32 0.0, %v8111
        %v8113 = vpop.f32.mrf.mxu0
        %v8114 = vpop.f32.mrf.mxu0
        %v8115 = vadd.f32 0.0, %v8114
        %v8116 = vpop.f32.mrf.mxu0
        %8117 = vmatprep.mubr.bf16.mxu0 0
        %8118 = vmatmul.mubr.bf16.gmra.mxu0 %v7949
        %v8119 = vpop.f32.mrf.mxu0
        %v8120 = vadd.f32 0.0, %v8119
        %v8121 = vpop.f32.mrf.mxu0
        %v8122 = vpop.f32.mrf.mxu0
        %v8123 = vadd.f32 0.0, %v8122
        %v8124 = vpop.f32.mrf.mxu0
        %8125 = vmatprep.mubr.bf16.mxu0 0
        %8126 = vmatmul.mubr.bf16.gmra.mxu0 %v7952
        %v8127 = vpop.f32.mrf.mxu0
        %v8128 = vadd.f32 0.0, %v8127
        %v8129 = vpop.f32.mrf.mxu0
        %v8130 = vpop.f32.mrf.mxu0
        %v8131 = vadd.f32 0.0, %v8130
        %v8132 = vpop.f32.mrf.mxu0
        %8133 = vdwg.mxu0
        %v8134 = vadd.f32 %v7808, %v7992
        %v8135 = vadd.f32 %v7809, %v7995
        %v8136 = vadd.f32 %v7810, %v8000
        %v8137 = vadd.f32 %v7811, %v8003
        %v8138 = vadd.f32 %v7812, %v8008
        %v8139 = vadd.f32 %v7813, %v8011
        %v8140 = vadd.f32 %v7814, %v8016
        %v8141 = vadd.f32 %v7815, %v8019
        %v8142 = vadd.f32 %v7816, %v8024
        %v8143 = vadd.f32 %v7817, %v8027
        %v8144 = vadd.f32 %v7818, %v8032
        %v8145 = vadd.f32 %v7819, %v8035
        %v8146 = vadd.f32 %v7820, %v8040
        %v8147 = vadd.f32 %v7821, %v8043
        %v8148 = vadd.f32 %v7822, %v8048
        %v8149 = vadd.f32 %v7823, %v8051
        %v8150 = vadd.f32 %v7824, %v8056
        %v8151 = vadd.f32 %v7825, %v8059
        %v8152 = vadd.f32 %v7826, %v8064
        %v8153 = vadd.f32 %v7827, %v8067
        %v8154 = vadd.f32 %v7828, %v8072
        %v8155 = vadd.f32 %v7829, %v8075
        %v8156 = vadd.f32 %v7830, %v8080
        %v8157 = vadd.f32 %v7831, %v8083
        %v8158 = vadd.f32 %v7832, %v8088
        %v8159 = vadd.f32 %v7833, %v8091
        %v8160 = vadd.f32 %v7834, %v8096
        %v8161 = vadd.f32 %v7835, %v8099
        %v8162 = vadd.f32 %v7836, %v8104
        %v8163 = vadd.f32 %v7837, %v8107
        %v8164 = vadd.f32 %v7838, %v8112
        %v8165 = vadd.f32 %v7839, %v8115
        %v8166 = vadd.f32 %v7840, %v8120
        %v8167 = vadd.f32 %v7841, %v8123
        %v8168 = vadd.f32 %v7842, %v8128
        %v8169 = vadd.f32 %v7843, %v8131
        %v8170 = vld [vmem:[%s405 + $0x24] sm:$0xff]
        %v8171 = vld [vmem:[%s405 + $0x2c] sm:$0xff]
        %v8172 = vld [vmem:[%s405 + $0x34] sm:$0xff]
        %v8173 = vld [vmem:[%s405 + $0x3c] sm:$0xff]
        %v8174 = vld [vmem:[%s405 + $0x44] sm:$0xff]
        %v8175 = vld [vmem:[%s405 + $0x4c] sm:$0xff]
        %v8176 = vld [vmem:[%s405 + $0x54] sm:$0xff]
        %v8177 = vld [vmem:[%s405 + $0x5c] sm:$0xff]
        %v8178 = vld [vmem:[%s405 + $0x64] sm:$0xff]
        %v8179 = vld [vmem:[%s405 + $0x6c] sm:$0xff]
        %v8180 = vld [vmem:[%s405 + $0x74] sm:$0xff]
        %v8181 = vld [vmem:[%s405 + $0x7c] sm:$0xff]
        %v8182 = vld [vmem:[%s405 + $0x84] sm:$0xff]
        %v8183 = vld [vmem:[%s405 + $0x8c] sm:$0xff]
        %v8184 = vld [vmem:[%s405 + $0x94] sm:$0xff]
        %v8185 = vld [vmem:[%s405 + $0x9c] sm:$0xff]
        %v8186 = vld [vmem:[%s405 + $0xa4] sm:$0xff]
        %v8187 = vld [vmem:[%s405 + $0xac] sm:$0xff]
        %v8188 = vld [vmem:[%s405 + $0xb4] sm:$0xff]
        %v8189 = vld [vmem:[%s405 + $0xbc] sm:$0xff]
        %v8190 = vld [vmem:[%s405 + $0xc4] sm:$0xff]
        %v8191 = vld [vmem:[%s405 + $0xcc] sm:$0xff]
        %v8192 = vld [vmem:[%s405 + $0xd4] sm:$0xff]
        %v8193 = vld [vmem:[%s405 + $0xdc] sm:$0xff]
        %v8194 = vld [vmem:[%s405 + $0xe4] sm:$0xff]
        %v8195 = vld [vmem:[%s405 + $0xec] sm:$0xff]
        %v8196 = vld [vmem:[%s405 + $0xf4] sm:$0xff]
        %v8197 = vld [vmem:[%s405 + $0xfc] sm:$0xff]
        %v8198 = vld [vmem:[%s405 + $0x104] sm:$0xff]
        %v8199 = vld [vmem:[%s405 + $0x10c] sm:$0xff]
        %v8200 = vld [vmem:[%s405 + $0x114] sm:$0xff]
        %v8201 = vld [vmem:[%s405 + $0x11c] sm:$0xff]
        %v8202 = vld [vmem:[%s405 + $0x124] sm:$0xff]
        %v8203 = vld [vmem:[%s405 + $0x12c] sm:$0xff]
        %v8204 = vld [vmem:[%s405 + $0x134] sm:$0xff]
        %v8205 = vld [vmem:[%s405 + $0x13c] sm:$0x3f]
        %v8206 = vpack.c.bf16 %v8171, %v8170
        %v8207 = vpack.c.bf16 %v8173, %v8172
        %v8208 = vpack.c.bf16 %v8175, %v8174
        %v8209 = vpack.c.bf16 %v8177, %v8176
        %v8210 = vpack.c.bf16 %v8179, %v8178
        %v8211 = vpack.c.bf16 %v8181, %v8180
        %v8212 = vpack.c.bf16 %v8183, %v8182
        %v8213 = vpack.c.bf16 %v8185, %v8184
        %v8214 = vpack.c.bf16 %v8187, %v8186
        %v8215 = vpack.c.bf16 %v8189, %v8188
        %v8216 = vpack.c.bf16 %v8191, %v8190
        %v8217 = vpack.c.bf16 %v8193, %v8192
        %v8218 = vpack.c.bf16 %v8195, %v8194
        %v8219 = vpack.c.bf16 %v8197, %v8196
        %v8220 = vpack.c.bf16 %v8199, %v8198
        %v8221 = vpack.c.bf16 %v8201, %v8200
        %v8222 = vpack.c.bf16 %v8203, %v8202
        %v8223 = vpack.c.bf16 %v8205, %v8204
        %s8224 = scalar_lea.vmem %s4, 48
        %v8225 = vld [vmem:[%s8224] sm:$0x3]
        %v8227 = vsel %vm528, %v8206, 0
        %v8230 = vsel %vm528, %v8207, 0
        %v8233 = vsel %vm528, %v8208, 0
        %v8236 = vsel %vm528, %v8209, 0
        %v8239 = vsel %vm528, %v8210, 0
        %v8242 = vsel %vm528, %v8211, 0
        %v8245 = vsel %vm528, %v8212, 0
        %v8248 = vsel %vm528, %v8213, 0
        %v8251 = vsel %vm528, %v8214, 0
        %v8254 = vsel %vm528, %v8215, 0
        %v8257 = vsel %vm528, %v8216, 0
        %v8260 = vsel %vm528, %v8217, 0
        %v8263 = vsel %vm528, %v8218, 0
        %v8266 = vsel %vm528, %v8219, 0
        %v8269 = vsel %vm528, %v8220, 0
        %v8272 = vsel %vm528, %v8221, 0
        %v8275 = vsel %vm528, %v8222, 0
        %v8278 = vsel %vm528, %v8223, 0
        %v8281 = vsel %vm583, %v8225, 0
        %8283 = vmatprep.subr.bf16.mxu0 0
        %8284 = vmatpush1.bf16.msra.mxu0 0
        %8285 = vmatprep.subr.bf16.mxu0 0
        %8286 = vmatpush1.bf16.msra.mxu0 0
        %8287 = vmatprep.subr.bf16.mxu0 0
        %8288 = vmatpush1.bf16.msra.mxu0 0
        %8289 = vmatprep.subr.bf16.mxu0 0
        %8290 = vmatpush1.bf16.msra.mxu0 0
        %8291 = vmatprep.subr.bf16.mxu0 0
        %8292 = vmatpush1.bf16.msra.mxu0 0
        %8293 = vmatprep.subr.bf16.mxu0 0
        %8294 = vmatpush1.bf16.msra.mxu0 0
        %8295 = vmatprep.subr.bf16.mxu0 0
        %8296 = vmatpush1.bf16.msra.mxu0 0
        %8297 = vmatprep.subr.bf16.mxu0 0
        %8298 = vmatpush1.bf16.msra.mxu0 %v8281
        %8299 = vmatprep.subr.bf16.mxu0 0
        %8300 = vmatpush2.bf16.msra.mxu0 0
        %8301 = vmatprep.subr.bf16.mxu0 0
        %8302 = vmatpush2.bf16.msra.mxu0 0
        %8303 = vmatprep.subr.bf16.mxu0 0
        %8304 = vmatpush2.bf16.msra.mxu0 0
        %8305 = vmatprep.subr.bf16.mxu0 0
        %8306 = vmatpush2.bf16.msra.mxu0 0
        %8307 = vmatprep.subr.bf16.mxu0 0
        %8308 = vmatpush2.bf16.msra.mxu0 0
        %8309 = vmatprep.subr.bf16.mxu0 0
        %8310 = vmatpush2.bf16.msra.mxu0 0
        %8311 = vmatprep.subr.bf16.mxu0 0
        %8312 = vmatpush2.bf16.msra.mxu0 0
        %8313 = vmatprep.subr.bf16.mxu0 0
        %8314 = vmatpush2.bf16.msra.mxu0 0
        %8315 = vmatprep.mubr.bf16.mxu0 0
        %8316 = vmatmul.mubr.bf16.gmra.mxu0 %v8227
        %v8317 = vpop.f32.mrf.mxu0
        %v8318 = vadd.f32 0.0, %v8317
        %v8319 = vpop.f32.mrf.mxu0
        %v8320 = vpop.f32.mrf.mxu0
        %v8321 = vadd.f32 0.0, %v8320
        %v8322 = vpop.f32.mrf.mxu0
        %8323 = vmatprep.mubr.bf16.mxu0 0
        %8324 = vmatmul.mubr.bf16.gmra.mxu0 %v8230
        %v8325 = vpop.f32.mrf.mxu0
        %v8326 = vadd.f32 0.0, %v8325
        %v8327 = vpop.f32.mrf.mxu0
        %v8328 = vpop.f32.mrf.mxu0
        %v8329 = vadd.f32 0.0, %v8328
        %v8330 = vpop.f32.mrf.mxu0
        %8331 = vmatprep.mubr.bf16.mxu0 0
        %8332 = vmatmul.mubr.bf16.gmra.mxu0 %v8233
        %v8333 = vpop.f32.mrf.mxu0
        %v8334 = vadd.f32 0.0, %v8333
        %v8335 = vpop.f32.mrf.mxu0
        %v8336 = vpop.f32.mrf.mxu0
        %v8337 = vadd.f32 0.0, %v8336
        %v8338 = vpop.f32.mrf.mxu0
        %8339 = vmatprep.mubr.bf16.mxu0 0
        %8340 = vmatmul.mubr.bf16.gmra.mxu0 %v8236
        %v8341 = vpop.f32.mrf.mxu0
        %v8342 = vadd.f32 0.0, %v8341
        %v8343 = vpop.f32.mrf.mxu0
        %v8344 = vpop.f32.mrf.mxu0
        %v8345 = vadd.f32 0.0, %v8344
        %v8346 = vpop.f32.mrf.mxu0
        %8347 = vmatprep.mubr.bf16.mxu0 0
        %8348 = vmatmul.mubr.bf16.gmra.mxu0 %v8239
        %v8349 = vpop.f32.mrf.mxu0
        %v8350 = vadd.f32 0.0, %v8349
        %v8351 = vpop.f32.mrf.mxu0
        %v8352 = vpop.f32.mrf.mxu0
        %v8353 = vadd.f32 0.0, %v8352
        %v8354 = vpop.f32.mrf.mxu0
        %8355 = vmatprep.mubr.bf16.mxu0 0
        %8356 = vmatmul.mubr.bf16.gmra.mxu0 %v8242
        %v8357 = vpop.f32.mrf.mxu0
        %v8358 = vadd.f32 0.0, %v8357
        %v8359 = vpop.f32.mrf.mxu0
        %v8360 = vpop.f32.mrf.mxu0
        %v8361 = vadd.f32 0.0, %v8360
        %v8362 = vpop.f32.mrf.mxu0
        %8363 = vmatprep.mubr.bf16.mxu0 0
        %8364 = vmatmul.mubr.bf16.gmra.mxu0 %v8245
        %v8365 = vpop.f32.mrf.mxu0
        %v8366 = vadd.f32 0.0, %v8365
        %v8367 = vpop.f32.mrf.mxu0
        %v8368 = vpop.f32.mrf.mxu0
        %v8369 = vadd.f32 0.0, %v8368
        %v8370 = vpop.f32.mrf.mxu0
        %8371 = vmatprep.mubr.bf16.mxu0 0
        %8372 = vmatmul.mubr.bf16.gmra.mxu0 %v8248
        %v8373 = vpop.f32.mrf.mxu0
        %v8374 = vadd.f32 0.0, %v8373
        %v8375 = vpop.f32.mrf.mxu0
        %v8376 = vpop.f32.mrf.mxu0
        %v8377 = vadd.f32 0.0, %v8376
        %v8378 = vpop.f32.mrf.mxu0
        %8379 = vmatprep.mubr.bf16.mxu0 0
        %8380 = vmatmul.mubr.bf16.gmra.mxu0 %v8251
        %v8381 = vpop.f32.mrf.mxu0
        %v8382 = vadd.f32 0.0, %v8381
        %v8383 = vpop.f32.mrf.mxu0
        %v8384 = vpop.f32.mrf.mxu0
        %v8385 = vadd.f32 0.0, %v8384
        %v8386 = vpop.f32.mrf.mxu0
        %8387 = vmatprep.mubr.bf16.mxu0 0
        %8388 = vmatmul.mubr.bf16.gmra.mxu0 %v8254
        %v8389 = vpop.f32.mrf.mxu0
        %v8390 = vadd.f32 0.0, %v8389
        %v8391 = vpop.f32.mrf.mxu0
        %v8392 = vpop.f32.mrf.mxu0
        %v8393 = vadd.f32 0.0, %v8392
        %v8394 = vpop.f32.mrf.mxu0
        %8395 = vmatprep.mubr.bf16.mxu0 0
        %8396 = vmatmul.mubr.bf16.gmra.mxu0 %v8257
        %v8397 = vpop.f32.mrf.mxu0
        %v8398 = vadd.f32 0.0, %v8397
        %v8399 = vpop.f32.mrf.mxu0
        %v8400 = vpop.f32.mrf.mxu0
        %v8401 = vadd.f32 0.0, %v8400
        %v8402 = vpop.f32.mrf.mxu0
        %8403 = vmatprep.mubr.bf16.mxu0 0
        %8404 = vmatmul.mubr.bf16.gmra.mxu0 %v8260
        %v8405 = vpop.f32.mrf.mxu0
        %v8406 = vadd.f32 0.0, %v8405
        %v8407 = vpop.f32.mrf.mxu0
        %v8408 = vpop.f32.mrf.mxu0
        %v8409 = vadd.f32 0.0, %v8408
        %v8410 = vpop.f32.mrf.mxu0
        %8411 = vmatprep.mubr.bf16.mxu0 0
        %8412 = vmatmul.mubr.bf16.gmra.mxu0 %v8263
        %v8413 = vpop.f32.mrf.mxu0
        %v8414 = vadd.f32 0.0, %v8413
        %v8415 = vpop.f32.mrf.mxu0
        %v8416 = vpop.f32.mrf.mxu0
        %v8417 = vadd.f32 0.0, %v8416
        %v8418 = vpop.f32.mrf.mxu0
        %8419 = vmatprep.mubr.bf16.mxu0 0
        %8420 = vmatmul.mubr.bf16.gmra.mxu0 %v8266
        %v8421 = vpop.f32.mrf.mxu0
        %v8422 = vadd.f32 0.0, %v8421
        %v8423 = vpop.f32.mrf.mxu0
        %v8424 = vpop.f32.mrf.mxu0
        %v8425 = vadd.f32 0.0, %v8424
        %v8426 = vpop.f32.mrf.mxu0
        %8427 = vmatprep.mubr.bf16.mxu0 0
        %8428 = vmatmul.mubr.bf16.gmra.mxu0 %v8269
        %v8429 = vpop.f32.mrf.mxu0
        %v8430 = vadd.f32 0.0, %v8429
        %v8431 = vpop.f32.mrf.mxu0
        %v8432 = vpop.f32.mrf.mxu0
        %v8433 = vadd.f32 0.0, %v8432
        %v8434 = vpop.f32.mrf.mxu0
        %8435 = vmatprep.mubr.bf16.mxu0 0
        %8436 = vmatmul.mubr.bf16.gmra.mxu0 %v8272
        %v8437 = vpop.f32.mrf.mxu0
        %v8438 = vadd.f32 0.0, %v8437
        %v8439 = vpop.f32.mrf.mxu0
        %v8440 = vpop.f32.mrf.mxu0
        %v8441 = vadd.f32 0.0, %v8440
        %v8442 = vpop.f32.mrf.mxu0
        %8443 = vmatprep.mubr.bf16.mxu0 0
        %8444 = vmatmul.mubr.bf16.gmra.mxu0 %v8275
        %v8445 = vpop.f32.mrf.mxu0
        %v8446 = vadd.f32 0.0, %v8445
        %v8447 = vpop.f32.mrf.mxu0
        %v8448 = vpop.f32.mrf.mxu0
        %v8449 = vadd.f32 0.0, %v8448
        %v8450 = vpop.f32.mrf.mxu0
        %8451 = vmatprep.mubr.bf16.mxu0 0
        %8452 = vmatmul.mubr.bf16.gmra.mxu0 %v8278
        %v8453 = vpop.f32.mrf.mxu0
        %v8454 = vadd.f32 0.0, %v8453
        %v8455 = vpop.f32.mrf.mxu0
        %v8456 = vpop.f32.mrf.mxu0
        %v8457 = vadd.f32 0.0, %v8456
        %v8458 = vpop.f32.mrf.mxu0
        %8459 = vdwg.mxu0
        %v8460 = vadd.f32 %v8134, %v8318
        %v8461 = vadd.f32 %v8135, %v8321
        %v8462 = vadd.f32 %v8136, %v8326
        %v8463 = vadd.f32 %v8137, %v8329
        %v8464 = vadd.f32 %v8138, %v8334
        %v8465 = vadd.f32 %v8139, %v8337
        %v8466 = vadd.f32 %v8140, %v8342
        %v8467 = vadd.f32 %v8141, %v8345
        %v8468 = vadd.f32 %v8142, %v8350
        %v8469 = vadd.f32 %v8143, %v8353
        %v8470 = vadd.f32 %v8144, %v8358
        %v8471 = vadd.f32 %v8145, %v8361
        %v8472 = vadd.f32 %v8146, %v8366
        %v8473 = vadd.f32 %v8147, %v8369
        %v8474 = vadd.f32 %v8148, %v8374
        %v8475 = vadd.f32 %v8149, %v8377
        %v8476 = vadd.f32 %v8150, %v8382
        %v8477 = vadd.f32 %v8151, %v8385
        %v8478 = vadd.f32 %v8152, %v8390
        %v8479 = vadd.f32 %v8153, %v8393
        %v8480 = vadd.f32 %v8154, %v8398
        %v8481 = vadd.f32 %v8155, %v8401
        %v8482 = vadd.f32 %v8156, %v8406
        %v8483 = vadd.f32 %v8157, %v8409
        %v8484 = vadd.f32 %v8158, %v8414
        %v8485 = vadd.f32 %v8159, %v8417
        %v8486 = vadd.f32 %v8160, %v8422
        %v8487 = vadd.f32 %v8161, %v8425
        %v8488 = vadd.f32 %v8162, %v8430
        %v8489 = vadd.f32 %v8163, %v8433
        %v8490 = vadd.f32 %v8164, %v8438
        %v8491 = vadd.f32 %v8165, %v8441
        %v8492 = vadd.f32 %v8166, %v8446
        %v8493 = vadd.f32 %v8167, %v8449
        %v8494 = vadd.f32 %v8168, %v8454
        %v8495 = vadd.f32 %v8169, %v8457
        %v8496 = vld [vmem:[%s405 + $0x25] sm:$0xff]
        %v8497 = vld [vmem:[%s405 + $0x2d] sm:$0xff]
        %v8498 = vld [vmem:[%s405 + $0x35] sm:$0xff]
        %v8499 = vld [vmem:[%s405 + $0x3d] sm:$0xff]
        %v8500 = vld [vmem:[%s405 + $0x45] sm:$0xff]
        %v8501 = vld [vmem:[%s405 + $0x4d] sm:$0xff]
        %v8502 = vld [vmem:[%s405 + $0x55] sm:$0xff]
        %v8503 = vld [vmem:[%s405 + $0x5d] sm:$0xff]
        %v8504 = vld [vmem:[%s405 + $0x65] sm:$0xff]
        %v8505 = vld [vmem:[%s405 + $0x6d] sm:$0xff]
        %v8506 = vld [vmem:[%s405 + $0x75] sm:$0xff]
        %v8507 = vld [vmem:[%s405 + $0x7d] sm:$0xff]
        %v8508 = vld [vmem:[%s405 + $0x85] sm:$0xff]
        %v8509 = vld [vmem:[%s405 + $0x8d] sm:$0xff]
        %v8510 = vld [vmem:[%s405 + $0x95] sm:$0xff]
        %v8511 = vld [vmem:[%s405 + $0x9d] sm:$0xff]
        %v8512 = vld [vmem:[%s405 + $0xa5] sm:$0xff]
        %v8513 = vld [vmem:[%s405 + $0xad] sm:$0xff]
        %v8514 = vld [vmem:[%s405 + $0xb5] sm:$0xff]
        %v8515 = vld [vmem:[%s405 + $0xbd] sm:$0xff]
        %v8516 = vld [vmem:[%s405 + $0xc5] sm:$0xff]
        %v8517 = vld [vmem:[%s405 + $0xcd] sm:$0xff]
        %v8518 = vld [vmem:[%s405 + $0xd5] sm:$0xff]
        %v8519 = vld [vmem:[%s405 + $0xdd] sm:$0xff]
        %v8520 = vld [vmem:[%s405 + $0xe5] sm:$0xff]
        %v8521 = vld [vmem:[%s405 + $0xed] sm:$0xff]
        %v8522 = vld [vmem:[%s405 + $0xf5] sm:$0xff]
        %v8523 = vld [vmem:[%s405 + $0xfd] sm:$0xff]
        %v8524 = vld [vmem:[%s405 + $0x105] sm:$0xff]
        %v8525 = vld [vmem:[%s405 + $0x10d] sm:$0xff]
        %v8526 = vld [vmem:[%s405 + $0x115] sm:$0xff]
        %v8527 = vld [vmem:[%s405 + $0x11d] sm:$0xff]
        %v8528 = vld [vmem:[%s405 + $0x125] sm:$0xff]
        %v8529 = vld [vmem:[%s405 + $0x12d] sm:$0xff]
        %v8530 = vld [vmem:[%s405 + $0x135] sm:$0xff]
        %v8531 = vld [vmem:[%s405 + $0x13d] sm:$0x3f]
        %v8532 = vpack.c.bf16 %v8497, %v8496
        %v8533 = vpack.c.bf16 %v8499, %v8498
        %v8534 = vpack.c.bf16 %v8501, %v8500
        %v8535 = vpack.c.bf16 %v8503, %v8502
        %v8536 = vpack.c.bf16 %v8505, %v8504
        %v8537 = vpack.c.bf16 %v8507, %v8506
        %v8538 = vpack.c.bf16 %v8509, %v8508
        %v8539 = vpack.c.bf16 %v8511, %v8510
        %v8540 = vpack.c.bf16 %v8513, %v8512
        %v8541 = vpack.c.bf16 %v8515, %v8514
        %v8542 = vpack.c.bf16 %v8517, %v8516
        %v8543 = vpack.c.bf16 %v8519, %v8518
        %v8544 = vpack.c.bf16 %v8521, %v8520
        %v8545 = vpack.c.bf16 %v8523, %v8522
        %v8546 = vpack.c.bf16 %v8525, %v8524
        %v8547 = vpack.c.bf16 %v8527, %v8526
        %v8548 = vpack.c.bf16 %v8529, %v8528
        %v8549 = vpack.c.bf16 %v8531, %v8530
        %s8550 = scalar_lea.vmem %s4, 50
        %v8551 = vld [vmem:[%s8550] sm:$0x3]
        %v8553 = vsel %vm528, %v8532, 0
        %v8556 = vsel %vm528, %v8533, 0
        %v8559 = vsel %vm528, %v8534, 0
        %v8562 = vsel %vm528, %v8535, 0
        %v8565 = vsel %vm528, %v8536, 0
        %v8568 = vsel %vm528, %v8537, 0
        %v8571 = vsel %vm528, %v8538, 0
        %v8574 = vsel %vm528, %v8539, 0
        %v8577 = vsel %vm528, %v8540, 0
        %v8580 = vsel %vm528, %v8541, 0
        %v8583 = vsel %vm528, %v8542, 0
        %v8586 = vsel %vm528, %v8543, 0
        %v8589 = vsel %vm528, %v8544, 0
        %v8592 = vsel %vm528, %v8545, 0
        %v8595 = vsel %vm528, %v8546, 0
        %v8598 = vsel %vm528, %v8547, 0
        %v8601 = vsel %vm528, %v8548, 0
        %v8604 = vsel %vm528, %v8549, 0
        %v8607 = vsel %vm583, %v8551, 0
        %8609 = vmatprep.subr.bf16.mxu0 0
        %8610 = vmatpush1.bf16.msra.mxu0 0
        %8611 = vmatprep.subr.bf16.mxu0 0
        %8612 = vmatpush1.bf16.msra.mxu0 0
        %8613 = vmatprep.subr.bf16.mxu0 0
        %8614 = vmatpush1.bf16.msra.mxu0 0
        %8615 = vmatprep.subr.bf16.mxu0 0
        %8616 = vmatpush1.bf16.msra.mxu0 0
        %8617 = vmatprep.subr.bf16.mxu0 0
        %8618 = vmatpush1.bf16.msra.mxu0 0
        %8619 = vmatprep.subr.bf16.mxu0 0
        %8620 = vmatpush1.bf16.msra.mxu0 0
        %8621 = vmatprep.subr.bf16.mxu0 0
        %8622 = vmatpush1.bf16.msra.mxu0 0
        %8623 = vmatprep.subr.bf16.mxu0 0
        %8624 = vmatpush1.bf16.msra.mxu0 %v8607
        %8625 = vmatprep.subr.bf16.mxu0 0
        %8626 = vmatpush2.bf16.msra.mxu0 0
        %8627 = vmatprep.subr.bf16.mxu0 0
        %8628 = vmatpush2.bf16.msra.mxu0 0
        %8629 = vmatprep.subr.bf16.mxu0 0
        %8630 = vmatpush2.bf16.msra.mxu0 0
        %8631 = vmatprep.subr.bf16.mxu0 0
        %8632 = vmatpush2.bf16.msra.mxu0 0
        %8633 = vmatprep.subr.bf16.mxu0 0
        %8634 = vmatpush2.bf16.msra.mxu0 0
        %8635 = vmatprep.subr.bf16.mxu0 0
        %8636 = vmatpush2.bf16.msra.mxu0 0
        %8637 = vmatprep.subr.bf16.mxu0 0
        %8638 = vmatpush2.bf16.msra.mxu0 0
        %8639 = vmatprep.subr.bf16.mxu0 0
        %8640 = vmatpush2.bf16.msra.mxu0 0
        %8641 = vmatprep.mubr.bf16.mxu0 0
        %8642 = vmatmul.mubr.bf16.gmra.mxu0 %v8553
        %v8643 = vpop.f32.mrf.mxu0
        %v8644 = vadd.f32 0.0, %v8643
        %v8645 = vpop.f32.mrf.mxu0
        %v8646 = vpop.f32.mrf.mxu0
        %v8647 = vadd.f32 0.0, %v8646
        %v8648 = vpop.f32.mrf.mxu0
        %8649 = vmatprep.mubr.bf16.mxu0 0
        %8650 = vmatmul.mubr.bf16.gmra.mxu0 %v8556
        %v8651 = vpop.f32.mrf.mxu0
        %v8652 = vadd.f32 0.0, %v8651
        %v8653 = vpop.f32.mrf.mxu0
        %v8654 = vpop.f32.mrf.mxu0
        %v8655 = vadd.f32 0.0, %v8654
        %v8656 = vpop.f32.mrf.mxu0
        %8657 = vmatprep.mubr.bf16.mxu0 0
        %8658 = vmatmul.mubr.bf16.gmra.mxu0 %v8559
        %v8659 = vpop.f32.mrf.mxu0
        %v8660 = vadd.f32 0.0, %v8659
        %v8661 = vpop.f32.mrf.mxu0
        %v8662 = vpop.f32.mrf.mxu0
        %v8663 = vadd.f32 0.0, %v8662
        %v8664 = vpop.f32.mrf.mxu0
        %8665 = vmatprep.mubr.bf16.mxu0 0
        %8666 = vmatmul.mubr.bf16.gmra.mxu0 %v8562
        %v8667 = vpop.f32.mrf.mxu0
        %v8668 = vadd.f32 0.0, %v8667
        %v8669 = vpop.f32.mrf.mxu0
        %v8670 = vpop.f32.mrf.mxu0
        %v8671 = vadd.f32 0.0, %v8670
        %v8672 = vpop.f32.mrf.mxu0
        %8673 = vmatprep.mubr.bf16.mxu0 0
        %8674 = vmatmul.mubr.bf16.gmra.mxu0 %v8565
        %v8675 = vpop.f32.mrf.mxu0
        %v8676 = vadd.f32 0.0, %v8675
        %v8677 = vpop.f32.mrf.mxu0
        %v8678 = vpop.f32.mrf.mxu0
        %v8679 = vadd.f32 0.0, %v8678
        %v8680 = vpop.f32.mrf.mxu0
        %8681 = vmatprep.mubr.bf16.mxu0 0
        %8682 = vmatmul.mubr.bf16.gmra.mxu0 %v8568
        %v8683 = vpop.f32.mrf.mxu0
        %v8684 = vadd.f32 0.0, %v8683
        %v8685 = vpop.f32.mrf.mxu0
        %v8686 = vpop.f32.mrf.mxu0
        %v8687 = vadd.f32 0.0, %v8686
        %v8688 = vpop.f32.mrf.mxu0
        %8689 = vmatprep.mubr.bf16.mxu0 0
        %8690 = vmatmul.mubr.bf16.gmra.mxu0 %v8571
        %v8691 = vpop.f32.mrf.mxu0
        %v8692 = vadd.f32 0.0, %v8691
        %v8693 = vpop.f32.mrf.mxu0
        %v8694 = vpop.f32.mrf.mxu0
        %v8695 = vadd.f32 0.0, %v8694
        %v8696 = vpop.f32.mrf.mxu0
        %8697 = vmatprep.mubr.bf16.mxu0 0
        %8698 = vmatmul.mubr.bf16.gmra.mxu0 %v8574
        %v8699 = vpop.f32.mrf.mxu0
        %v8700 = vadd.f32 0.0, %v8699
        %v8701 = vpop.f32.mrf.mxu0
        %v8702 = vpop.f32.mrf.mxu0
        %v8703 = vadd.f32 0.0, %v8702
        %v8704 = vpop.f32.mrf.mxu0
        %8705 = vmatprep.mubr.bf16.mxu0 0
        %8706 = vmatmul.mubr.bf16.gmra.mxu0 %v8577
        %v8707 = vpop.f32.mrf.mxu0
        %v8708 = vadd.f32 0.0, %v8707
        %v8709 = vpop.f32.mrf.mxu0
        %v8710 = vpop.f32.mrf.mxu0
        %v8711 = vadd.f32 0.0, %v8710
        %v8712 = vpop.f32.mrf.mxu0
        %8713 = vmatprep.mubr.bf16.mxu0 0
        %8714 = vmatmul.mubr.bf16.gmra.mxu0 %v8580
        %v8715 = vpop.f32.mrf.mxu0
        %v8716 = vadd.f32 0.0, %v8715
        %v8717 = vpop.f32.mrf.mxu0
        %v8718 = vpop.f32.mrf.mxu0
        %v8719 = vadd.f32 0.0, %v8718
        %v8720 = vpop.f32.mrf.mxu0
        %8721 = vmatprep.mubr.bf16.mxu0 0
        %8722 = vmatmul.mubr.bf16.gmra.mxu0 %v8583
        %v8723 = vpop.f32.mrf.mxu0
        %v8724 = vadd.f32 0.0, %v8723
        %v8725 = vpop.f32.mrf.mxu0
        %v8726 = vpop.f32.mrf.mxu0
        %v8727 = vadd.f32 0.0, %v8726
        %v8728 = vpop.f32.mrf.mxu0
        %8729 = vmatprep.mubr.bf16.mxu0 0
        %8730 = vmatmul.mubr.bf16.gmra.mxu0 %v8586
        %v8731 = vpop.f32.mrf.mxu0
        %v8732 = vadd.f32 0.0, %v8731
        %v8733 = vpop.f32.mrf.mxu0
        %v8734 = vpop.f32.mrf.mxu0
        %v8735 = vadd.f32 0.0, %v8734
        %v8736 = vpop.f32.mrf.mxu0
        %8737 = vmatprep.mubr.bf16.mxu0 0
        %8738 = vmatmul.mubr.bf16.gmra.mxu0 %v8589
        %v8739 = vpop.f32.mrf.mxu0
        %v8740 = vadd.f32 0.0, %v8739
        %v8741 = vpop.f32.mrf.mxu0
        %v8742 = vpop.f32.mrf.mxu0
        %v8743 = vadd.f32 0.0, %v8742
        %v8744 = vpop.f32.mrf.mxu0
        %8745 = vmatprep.mubr.bf16.mxu0 0
        %8746 = vmatmul.mubr.bf16.gmra.mxu0 %v8592
        %v8747 = vpop.f32.mrf.mxu0
        %v8748 = vadd.f32 0.0, %v8747
        %v8749 = vpop.f32.mrf.mxu0
        %v8750 = vpop.f32.mrf.mxu0
        %v8751 = vadd.f32 0.0, %v8750
        %v8752 = vpop.f32.mrf.mxu0
        %8753 = vmatprep.mubr.bf16.mxu0 0
        %8754 = vmatmul.mubr.bf16.gmra.mxu0 %v8595
        %v8755 = vpop.f32.mrf.mxu0
        %v8756 = vadd.f32 0.0, %v8755
        %v8757 = vpop.f32.mrf.mxu0
        %v8758 = vpop.f32.mrf.mxu0
        %v8759 = vadd.f32 0.0, %v8758
        %v8760 = vpop.f32.mrf.mxu0
        %8761 = vmatprep.mubr.bf16.mxu0 0
        %8762 = vmatmul.mubr.bf16.gmra.mxu0 %v8598
        %v8763 = vpop.f32.mrf.mxu0
        %v8764 = vadd.f32 0.0, %v8763
        %v8765 = vpop.f32.mrf.mxu0
        %v8766 = vpop.f32.mrf.mxu0
        %v8767 = vadd.f32 0.0, %v8766
        %v8768 = vpop.f32.mrf.mxu0
        %8769 = vmatprep.mubr.bf16.mxu0 0
        %8770 = vmatmul.mubr.bf16.gmra.mxu0 %v8601
        %v8771 = vpop.f32.mrf.mxu0
        %v8772 = vadd.f32 0.0, %v8771
        %v8773 = vpop.f32.mrf.mxu0
        %v8774 = vpop.f32.mrf.mxu0
        %v8775 = vadd.f32 0.0, %v8774
        %v8776 = vpop.f32.mrf.mxu0
        %8777 = vmatprep.mubr.bf16.mxu0 0
        %8778 = vmatmul.mubr.bf16.gmra.mxu0 %v8604
        %v8779 = vpop.f32.mrf.mxu0
        %v8780 = vadd.f32 0.0, %v8779
        %v8781 = vpop.f32.mrf.mxu0
        %v8782 = vpop.f32.mrf.mxu0
        %v8783 = vadd.f32 0.0, %v8782
        %v8784 = vpop.f32.mrf.mxu0
        %8785 = vdwg.mxu0
        %v8786 = vadd.f32 %v8460, %v8644
        %v8787 = vadd.f32 %v8461, %v8647
        %v8788 = vadd.f32 %v8462, %v8652
        %v8789 = vadd.f32 %v8463, %v8655
        %v8790 = vadd.f32 %v8464, %v8660
        %v8791 = vadd.f32 %v8465, %v8663
        %v8792 = vadd.f32 %v8466, %v8668
        %v8793 = vadd.f32 %v8467, %v8671
        %v8794 = vadd.f32 %v8468, %v8676
        %v8795 = vadd.f32 %v8469, %v8679
        %v8796 = vadd.f32 %v8470, %v8684
        %v8797 = vadd.f32 %v8471, %v8687
        %v8798 = vadd.f32 %v8472, %v8692
        %v8799 = vadd.f32 %v8473, %v8695
        %v8800 = vadd.f32 %v8474, %v8700
        %v8801 = vadd.f32 %v8475, %v8703
        %v8802 = vadd.f32 %v8476, %v8708
        %v8803 = vadd.f32 %v8477, %v8711
        %v8804 = vadd.f32 %v8478, %v8716
        %v8805 = vadd.f32 %v8479, %v8719
        %v8806 = vadd.f32 %v8480, %v8724
        %v8807 = vadd.f32 %v8481, %v8727
        %v8808 = vadd.f32 %v8482, %v8732
        %v8809 = vadd.f32 %v8483, %v8735
        %v8810 = vadd.f32 %v8484, %v8740
        %v8811 = vadd.f32 %v8485, %v8743
        %v8812 = vadd.f32 %v8486, %v8748
        %v8813 = vadd.f32 %v8487, %v8751
        %v8814 = vadd.f32 %v8488, %v8756
        %v8815 = vadd.f32 %v8489, %v8759
        %v8816 = vadd.f32 %v8490, %v8764
        %v8817 = vadd.f32 %v8491, %v8767
        %v8818 = vadd.f32 %v8492, %v8772
        %v8819 = vadd.f32 %v8493, %v8775
        %v8820 = vadd.f32 %v8494, %v8780
        %v8821 = vadd.f32 %v8495, %v8783
        %v8822 = vld [vmem:[%s405 + $0x26] sm:$0xff]
        %v8823 = vld [vmem:[%s405 + $0x2e] sm:$0xff]
        %v8824 = vld [vmem:[%s405 + $0x36] sm:$0xff]
        %v8825 = vld [vmem:[%s405 + $0x3e] sm:$0xff]
        %v8826 = vld [vmem:[%s405 + $0x46] sm:$0xff]
        %v8827 = vld [vmem:[%s405 + $0x4e] sm:$0xff]
        %v8828 = vld [vmem:[%s405 + $0x56] sm:$0xff]
        %v8829 = vld [vmem:[%s405 + $0x5e] sm:$0xff]
        %v8830 = vld [vmem:[%s405 + $0x66] sm:$0xff]
        %v8831 = vld [vmem:[%s405 + $0x6e] sm:$0xff]
        %v8832 = vld [vmem:[%s405 + $0x76] sm:$0xff]
        %v8833 = vld [vmem:[%s405 + $0x7e] sm:$0xff]
        %v8834 = vld [vmem:[%s405 + $0x86] sm:$0xff]
        %v8835 = vld [vmem:[%s405 + $0x8e] sm:$0xff]
        %v8836 = vld [vmem:[%s405 + $0x96] sm:$0xff]
        %v8837 = vld [vmem:[%s405 + $0x9e] sm:$0xff]
        %v8838 = vld [vmem:[%s405 + $0xa6] sm:$0xff]
        %v8839 = vld [vmem:[%s405 + $0xae] sm:$0xff]
        %v8840 = vld [vmem:[%s405 + $0xb6] sm:$0xff]
        %v8841 = vld [vmem:[%s405 + $0xbe] sm:$0xff]
        %v8842 = vld [vmem:[%s405 + $0xc6] sm:$0xff]
        %v8843 = vld [vmem:[%s405 + $0xce] sm:$0xff]
        %v8844 = vld [vmem:[%s405 + $0xd6] sm:$0xff]
        %v8845 = vld [vmem:[%s405 + $0xde] sm:$0xff]
        %v8846 = vld [vmem:[%s405 + $0xe6] sm:$0xff]
        %v8847 = vld [vmem:[%s405 + $0xee] sm:$0xff]
        %v8848 = vld [vmem:[%s405 + $0xf6] sm:$0xff]
        %v8849 = vld [vmem:[%s405 + $0xfe] sm:$0xff]
        %v8850 = vld [vmem:[%s405 + $0x106] sm:$0xff]
        %v8851 = vld [vmem:[%s405 + $0x10e] sm:$0xff]
        %v8852 = vld [vmem:[%s405 + $0x116] sm:$0xff]
        %v8853 = vld [vmem:[%s405 + $0x11e] sm:$0xff]
        %v8854 = vld [vmem:[%s405 + $0x126] sm:$0xff]
        %v8855 = vld [vmem:[%s405 + $0x12e] sm:$0xff]
        %v8856 = vld [vmem:[%s405 + $0x136] sm:$0xff]
        %v8857 = vld [vmem:[%s405 + $0x13e] sm:$0x3f]
        %v8858 = vpack.c.bf16 %v8823, %v8822
        %v8859 = vpack.c.bf16 %v8825, %v8824
        %v8860 = vpack.c.bf16 %v8827, %v8826
        %v8861 = vpack.c.bf16 %v8829, %v8828
        %v8862 = vpack.c.bf16 %v8831, %v8830
        %v8863 = vpack.c.bf16 %v8833, %v8832
        %v8864 = vpack.c.bf16 %v8835, %v8834
        %v8865 = vpack.c.bf16 %v8837, %v8836
        %v8866 = vpack.c.bf16 %v8839, %v8838
        %v8867 = vpack.c.bf16 %v8841, %v8840
        %v8868 = vpack.c.bf16 %v8843, %v8842
        %v8869 = vpack.c.bf16 %v8845, %v8844
        %v8870 = vpack.c.bf16 %v8847, %v8846
        %v8871 = vpack.c.bf16 %v8849, %v8848
        %v8872 = vpack.c.bf16 %v8851, %v8850
        %v8873 = vpack.c.bf16 %v8853, %v8852
        %v8874 = vpack.c.bf16 %v8855, %v8854
        %v8875 = vpack.c.bf16 %v8857, %v8856
        %s8876 = scalar_lea.vmem %s4, 52
        %v8877 = vld [vmem:[%s8876] sm:$0x3]
        %v8879 = vsel %vm528, %v8858, 0
        %v8882 = vsel %vm528, %v8859, 0
        %v8885 = vsel %vm528, %v8860, 0
        %v8888 = vsel %vm528, %v8861, 0
        %v8891 = vsel %vm528, %v8862, 0
        %v8894 = vsel %vm528, %v8863, 0
        %v8897 = vsel %vm528, %v8864, 0
        %v8900 = vsel %vm528, %v8865, 0
        %v8903 = vsel %vm528, %v8866, 0
        %v8906 = vsel %vm528, %v8867, 0
        %v8909 = vsel %vm528, %v8868, 0
        %v8912 = vsel %vm528, %v8869, 0
        %v8915 = vsel %vm528, %v8870, 0
        %v8918 = vsel %vm528, %v8871, 0
        %v8921 = vsel %vm528, %v8872, 0
        %v8924 = vsel %vm528, %v8873, 0
        %v8927 = vsel %vm528, %v8874, 0
        %v8930 = vsel %vm528, %v8875, 0
        %v8933 = vsel %vm583, %v8877, 0
        %8935 = vmatprep.subr.bf16.mxu0 0
        %8936 = vmatpush1.bf16.msra.mxu0 0
        %8937 = vmatprep.subr.bf16.mxu0 0
        %8938 = vmatpush1.bf16.msra.mxu0 0
        %8939 = vmatprep.subr.bf16.mxu0 0
        %8940 = vmatpush1.bf16.msra.mxu0 0
        %8941 = vmatprep.subr.bf16.mxu0 0
        %8942 = vmatpush1.bf16.msra.mxu0 0
        %8943 = vmatprep.subr.bf16.mxu0 0
        %8944 = vmatpush1.bf16.msra.mxu0 0
        %8945 = vmatprep.subr.bf16.mxu0 0
        %8946 = vmatpush1.bf16.msra.mxu0 0
        %8947 = vmatprep.subr.bf16.mxu0 0
        %8948 = vmatpush1.bf16.msra.mxu0 0
        %8949 = vmatprep.subr.bf16.mxu0 0
        %8950 = vmatpush1.bf16.msra.mxu0 %v8933
        %8951 = vmatprep.subr.bf16.mxu0 0
        %8952 = vmatpush2.bf16.msra.mxu0 0
        %8953 = vmatprep.subr.bf16.mxu0 0
        %8954 = vmatpush2.bf16.msra.mxu0 0
        %8955 = vmatprep.subr.bf16.mxu0 0
        %8956 = vmatpush2.bf16.msra.mxu0 0
        %8957 = vmatprep.subr.bf16.mxu0 0
        %8958 = vmatpush2.bf16.msra.mxu0 0
        %8959 = vmatprep.subr.bf16.mxu0 0
        %8960 = vmatpush2.bf16.msra.mxu0 0
        %8961 = vmatprep.subr.bf16.mxu0 0
        %8962 = vmatpush2.bf16.msra.mxu0 0
        %8963 = vmatprep.subr.bf16.mxu0 0
        %8964 = vmatpush2.bf16.msra.mxu0 0
        %8965 = vmatprep.subr.bf16.mxu0 0
        %8966 = vmatpush2.bf16.msra.mxu0 0
        %8967 = vmatprep.mubr.bf16.mxu0 0
        %8968 = vmatmul.mubr.bf16.gmra.mxu0 %v8879
        %v8969 = vpop.f32.mrf.mxu0
        %v8970 = vadd.f32 0.0, %v8969
        %v8971 = vpop.f32.mrf.mxu0
        %v8972 = vpop.f32.mrf.mxu0
        %v8973 = vadd.f32 0.0, %v8972
        %v8974 = vpop.f32.mrf.mxu0
        %8975 = vmatprep.mubr.bf16.mxu0 0
        %8976 = vmatmul.mubr.bf16.gmra.mxu0 %v8882
        %v8977 = vpop.f32.mrf.mxu0
        %v8978 = vadd.f32 0.0, %v8977
        %v8979 = vpop.f32.mrf.mxu0
        %v8980 = vpop.f32.mrf.mxu0
        %v8981 = vadd.f32 0.0, %v8980
        %v8982 = vpop.f32.mrf.mxu0
        %8983 = vmatprep.mubr.bf16.mxu0 0
        %8984 = vmatmul.mubr.bf16.gmra.mxu0 %v8885
        %v8985 = vpop.f32.mrf.mxu0
        %v8986 = vadd.f32 0.0, %v8985
        %v8987 = vpop.f32.mrf.mxu0
        %v8988 = vpop.f32.mrf.mxu0
        %v8989 = vadd.f32 0.0, %v8988
        %v8990 = vpop.f32.mrf.mxu0
        %8991 = vmatprep.mubr.bf16.mxu0 0
        %8992 = vmatmul.mubr.bf16.gmra.mxu0 %v8888
        %v8993 = vpop.f32.mrf.mxu0
        %v8994 = vadd.f32 0.0, %v8993
        %v8995 = vpop.f32.mrf.mxu0
        %v8996 = vpop.f32.mrf.mxu0
        %v8997 = vadd.f32 0.0, %v8996
        %v8998 = vpop.f32.mrf.mxu0
        %8999 = vmatprep.mubr.bf16.mxu0 0
        %9000 = vmatmul.mubr.bf16.gmra.mxu0 %v8891
        %v9001 = vpop.f32.mrf.mxu0
        %v9002 = vadd.f32 0.0, %v9001
        %v9003 = vpop.f32.mrf.mxu0
        %v9004 = vpop.f32.mrf.mxu0
        %v9005 = vadd.f32 0.0, %v9004
        %v9006 = vpop.f32.mrf.mxu0
        %9007 = vmatprep.mubr.bf16.mxu0 0
        %9008 = vmatmul.mubr.bf16.gmra.mxu0 %v8894
        %v9009 = vpop.f32.mrf.mxu0
        %v9010 = vadd.f32 0.0, %v9009
        %v9011 = vpop.f32.mrf.mxu0
        %v9012 = vpop.f32.mrf.mxu0
        %v9013 = vadd.f32 0.0, %v9012
        %v9014 = vpop.f32.mrf.mxu0
        %9015 = vmatprep.mubr.bf16.mxu0 0
        %9016 = vmatmul.mubr.bf16.gmra.mxu0 %v8897
        %v9017 = vpop.f32.mrf.mxu0
        %v9018 = vadd.f32 0.0, %v9017
        %v9019 = vpop.f32.mrf.mxu0
        %v9020 = vpop.f32.mrf.mxu0
        %v9021 = vadd.f32 0.0, %v9020
        %v9022 = vpop.f32.mrf.mxu0
        %9023 = vmatprep.mubr.bf16.mxu0 0
        %9024 = vmatmul.mubr.bf16.gmra.mxu0 %v8900
        %v9025 = vpop.f32.mrf.mxu0
        %v9026 = vadd.f32 0.0, %v9025
        %v9027 = vpop.f32.mrf.mxu0
        %v9028 = vpop.f32.mrf.mxu0
        %v9029 = vadd.f32 0.0, %v9028
        %v9030 = vpop.f32.mrf.mxu0
        %9031 = vmatprep.mubr.bf16.mxu0 0
        %9032 = vmatmul.mubr.bf16.gmra.mxu0 %v8903
        %v9033 = vpop.f32.mrf.mxu0
        %v9034 = vadd.f32 0.0, %v9033
        %v9035 = vpop.f32.mrf.mxu0
        %v9036 = vpop.f32.mrf.mxu0
        %v9037 = vadd.f32 0.0, %v9036
        %v9038 = vpop.f32.mrf.mxu0
        %9039 = vmatprep.mubr.bf16.mxu0 0
        %9040 = vmatmul.mubr.bf16.gmra.mxu0 %v8906
        %v9041 = vpop.f32.mrf.mxu0
        %v9042 = vadd.f32 0.0, %v9041
        %v9043 = vpop.f32.mrf.mxu0
        %v9044 = vpop.f32.mrf.mxu0
        %v9045 = vadd.f32 0.0, %v9044
        %v9046 = vpop.f32.mrf.mxu0
        %9047 = vmatprep.mubr.bf16.mxu0 0
        %9048 = vmatmul.mubr.bf16.gmra.mxu0 %v8909
        %v9049 = vpop.f32.mrf.mxu0
        %v9050 = vadd.f32 0.0, %v9049
        %v9051 = vpop.f32.mrf.mxu0
        %v9052 = vpop.f32.mrf.mxu0
        %v9053 = vadd.f32 0.0, %v9052
        %v9054 = vpop.f32.mrf.mxu0
        %9055 = vmatprep.mubr.bf16.mxu0 0
        %9056 = vmatmul.mubr.bf16.gmra.mxu0 %v8912
        %v9057 = vpop.f32.mrf.mxu0
        %v9058 = vadd.f32 0.0, %v9057
        %v9059 = vpop.f32.mrf.mxu0
        %v9060 = vpop.f32.mrf.mxu0
        %v9061 = vadd.f32 0.0, %v9060
        %v9062 = vpop.f32.mrf.mxu0
        %9063 = vmatprep.mubr.bf16.mxu0 0
        %9064 = vmatmul.mubr.bf16.gmra.mxu0 %v8915
        %v9065 = vpop.f32.mrf.mxu0
        %v9066 = vadd.f32 0.0, %v9065
        %v9067 = vpop.f32.mrf.mxu0
        %v9068 = vpop.f32.mrf.mxu0
        %v9069 = vadd.f32 0.0, %v9068
        %v9070 = vpop.f32.mrf.mxu0
        %9071 = vmatprep.mubr.bf16.mxu0 0
        %9072 = vmatmul.mubr.bf16.gmra.mxu0 %v8918
        %v9073 = vpop.f32.mrf.mxu0
        %v9074 = vadd.f32 0.0, %v9073
        %v9075 = vpop.f32.mrf.mxu0
        %v9076 = vpop.f32.mrf.mxu0
        %v9077 = vadd.f32 0.0, %v9076
        %v9078 = vpop.f32.mrf.mxu0
        %9079 = vmatprep.mubr.bf16.mxu0 0
        %9080 = vmatmul.mubr.bf16.gmra.mxu0 %v8921
        %v9081 = vpop.f32.mrf.mxu0
        %v9082 = vadd.f32 0.0, %v9081
        %v9083 = vpop.f32.mrf.mxu0
        %v9084 = vpop.f32.mrf.mxu0
        %v9085 = vadd.f32 0.0, %v9084
        %v9086 = vpop.f32.mrf.mxu0
        %9087 = vmatprep.mubr.bf16.mxu0 0
        %9088 = vmatmul.mubr.bf16.gmra.mxu0 %v8924
        %v9089 = vpop.f32.mrf.mxu0
        %v9090 = vadd.f32 0.0, %v9089
        %v9091 = vpop.f32.mrf.mxu0
        %v9092 = vpop.f32.mrf.mxu0
        %v9093 = vadd.f32 0.0, %v9092
        %v9094 = vpop.f32.mrf.mxu0
        %9095 = vmatprep.mubr.bf16.mxu0 0
        %9096 = vmatmul.mubr.bf16.gmra.mxu0 %v8927
        %v9097 = vpop.f32.mrf.mxu0
        %v9098 = vadd.f32 0.0, %v9097
        %v9099 = vpop.f32.mrf.mxu0
        %v9100 = vpop.f32.mrf.mxu0
        %v9101 = vadd.f32 0.0, %v9100
        %v9102 = vpop.f32.mrf.mxu0
        %9103 = vmatprep.mubr.bf16.mxu0 0
        %9104 = vmatmul.mubr.bf16.gmra.mxu0 %v8930
        %v9105 = vpop.f32.mrf.mxu0
        %v9106 = vadd.f32 0.0, %v9105
        %v9107 = vpop.f32.mrf.mxu0
        %v9108 = vpop.f32.mrf.mxu0
        %v9109 = vadd.f32 0.0, %v9108
        %v9110 = vpop.f32.mrf.mxu0
        %9111 = vdwg.mxu0
        %v9112 = vadd.f32 %v8786, %v8970
        %v9113 = vadd.f32 %v8787, %v8973
        %v9114 = vadd.f32 %v8788, %v8978
        %v9115 = vadd.f32 %v8789, %v8981
        %v9116 = vadd.f32 %v8790, %v8986
        %v9117 = vadd.f32 %v8791, %v8989
        %v9118 = vadd.f32 %v8792, %v8994
        %v9119 = vadd.f32 %v8793, %v8997
        %v9120 = vadd.f32 %v8794, %v9002
        %v9121 = vadd.f32 %v8795, %v9005
        %v9122 = vadd.f32 %v8796, %v9010
        %v9123 = vadd.f32 %v8797, %v9013
        %v9124 = vadd.f32 %v8798, %v9018
        %v9125 = vadd.f32 %v8799, %v9021
        %v9126 = vadd.f32 %v8800, %v9026
        %v9127 = vadd.f32 %v8801, %v9029
        %v9128 = vadd.f32 %v8802, %v9034
        %v9129 = vadd.f32 %v8803, %v9037
        %v9130 = vadd.f32 %v8804, %v9042
        %v9131 = vadd.f32 %v8805, %v9045
        %v9132 = vadd.f32 %v8806, %v9050
        %v9133 = vadd.f32 %v8807, %v9053
        %v9134 = vadd.f32 %v8808, %v9058
        %v9135 = vadd.f32 %v8809, %v9061
        %v9136 = vadd.f32 %v8810, %v9066
        %v9137 = vadd.f32 %v8811, %v9069
        %v9138 = vadd.f32 %v8812, %v9074
        %v9139 = vadd.f32 %v8813, %v9077
        %v9140 = vadd.f32 %v8814, %v9082
        %v9141 = vadd.f32 %v8815, %v9085
        %v9142 = vadd.f32 %v8816, %v9090
        %v9143 = vadd.f32 %v8817, %v9093
        %v9144 = vadd.f32 %v8818, %v9098
        %v9145 = vadd.f32 %v8819, %v9101
        %v9146 = vadd.f32 %v8820, %v9106
        %v9147 = vadd.f32 %v8821, %v9109
        %vm9148 = vcmask 261120
        %9149 = vst.msk [vmem:[%s415] sm:$0xff] %vm9148, %v9112
        %9150 = vst.msk [vmem:[%s415 + $0x8] sm:$0xff] %vm9148, %v9113
        %9151 = vst.msk [vmem:[%s415 + $0x10] sm:$0xff] %vm9148, %v9114
        %9152 = vst.msk [vmem:[%s415 + $0x18] sm:$0xff] %vm9148, %v9115
        %9153 = vst.msk [vmem:[%s415 + $0x20] sm:$0xff] %vm9148, %v9116
        %9154 = vst.msk [vmem:[%s415 + $0x28] sm:$0xff] %vm9148, %v9117
        %9155 = vst.msk [vmem:[%s415 + $0x30] sm:$0xff] %vm9148, %v9118
        %9156 = vst.msk [vmem:[%s415 + $0x38] sm:$0xff] %vm9148, %v9119
        %9157 = vst.msk [vmem:[%s415 + $0x40] sm:$0xff] %vm9148, %v9120
        %9158 = vst.msk [vmem:[%s415 + $0x48] sm:$0xff] %vm9148, %v9121
        %9159 = vst.msk [vmem:[%s415 + $0x50] sm:$0xff] %vm9148, %v9122
        %9160 = vst.msk [vmem:[%s415 + $0x58] sm:$0xff] %vm9148, %v9123
        %9161 = vst.msk [vmem:[%s415 + $0x60] sm:$0xff] %vm9148, %v9124
        %9162 = vst.msk [vmem:[%s415 + $0x68] sm:$0xff] %vm9148, %v9125
        %9163 = vst.msk [vmem:[%s415 + $0x70] sm:$0xff] %vm9148, %v9126
        %9164 = vst.msk [vmem:[%s415 + $0x78] sm:$0xff] %vm9148, %v9127
        %9165 = vst.msk [vmem:[%s415 + $0x80] sm:$0xff] %vm9148, %v9128
        %9166 = vst.msk [vmem:[%s415 + $0x88] sm:$0xff] %vm9148, %v9129
        %9167 = vst.msk [vmem:[%s415 + $0x90] sm:$0xff] %vm9148, %v9130
        %9168 = vst.msk [vmem:[%s415 + $0x98] sm:$0xff] %vm9148, %v9131
        %9169 = vst.msk [vmem:[%s415 + $0xa0] sm:$0xff] %vm9148, %v9132
        %9170 = vst.msk [vmem:[%s415 + $0xa8] sm:$0xff] %vm9148, %v9133
        %9171 = vst.msk [vmem:[%s415 + $0xb0] sm:$0xff] %vm9148, %v9134
        %9172 = vst.msk [vmem:[%s415 + $0xb8] sm:$0xff] %vm9148, %v9135
        %9173 = vst.msk [vmem:[%s415 + $0xc0] sm:$0xff] %vm9148, %v9136
        %9174 = vst.msk [vmem:[%s415 + $0xc8] sm:$0xff] %vm9148, %v9137
        %9175 = vst.msk [vmem:[%s415 + $0xd0] sm:$0xff] %vm9148, %v9138
        %9176 = vst.msk [vmem:[%s415 + $0xd8] sm:$0xff] %vm9148, %v9139
        %9177 = vst.msk [vmem:[%s415 + $0xe0] sm:$0xff] %vm9148, %v9140
        %9178 = vst.msk [vmem:[%s415 + $0xe8] sm:$0xff] %vm9148, %v9141
        %9179 = vst.msk [vmem:[%s415 + $0xf0] sm:$0xff] %vm9148, %v9142
        %9180 = vst.msk [vmem:[%s415 + $0xf8] sm:$0xff] %vm9148, %v9143
        %9181 = vst.msk [vmem:[%s415 + $0x100] sm:$0xff] %vm9148, %v9144
        %9182 = vst.msk [vmem:[%s415 + $0x108] sm:$0xff] %vm9148, %v9145
        %9183 = vst.msk [vmem:[%s415 + $0x110] sm:$0xff] %vm9148, %v9146
        %vm9184 = vcmask 259072
        %9185 = vst.msk [vmem:[%s415 + $0x118] sm:$0x3f] %vm9184, %v9147
        %p9186 = scmp.eq.s32.totalorder %s30, 0
        // Predicated region
        $region41: #{tpu_custom_call.1} parent=39 // pred_check
          %p9187 = pneg %p9186
        $region42: #{tpu_custom_call.1} parent=39 // pred_check_branch
          %9189 = sbr.rel (%p9187) target = $region44
        $region43: #{tpu_custom_call.1} parent=39 // pred_region
          %vm9190 = vcmask 253952
          %9191 = vst.msk [vmem:[%s369] sm:$0x1] %vm9190, 0.0
          %9192 = vst.msk [vmem:[%s375] sm:$0x1] %vm9190, 0.0
        $region44: #{tpu_custom_call.1} parent=39 // pred_fallthru
          _
        %v9193 = vld [vmem:[%s3] sm:$0xff]
        %v9194 = vld [vmem:[%s3 + $0x8] sm:$0xff]
        %v9195 = vld [vmem:[%s3 + $0x10] sm:$0xff]
        %v9196 = vld [vmem:[%s3 + $0x18] sm:$0xff]
        %v9197 = vld [vmem:[%s3 + $0x20] sm:$0xff]
        %v9198 = vld [vmem:[%s3 + $0x28] sm:$0xff]
        %v9199 = vld [vmem:[%s3 + $0x30] sm:$0xff]
        %v9200 = vld [vmem:[%s3 + $0x38] sm:$0xff]
        %v9201 = vld [vmem:[%s3 + $0x40] sm:$0xff]
        %v9202 = vld [vmem:[%s3 + $0x48] sm:$0xff]
        %v9203 = vld [vmem:[%s3 + $0x50] sm:$0xff]
        %v9204 = vld [vmem:[%s3 + $0x58] sm:$0xff]
        %v9205 = vld [vmem:[%s3 + $0x60] sm:$0xff]
        %v9206 = vld [vmem:[%s3 + $0x68] sm:$0xff]
        %v9207 = vld [vmem:[%s3 + $0x70] sm:$0xff]
        %v9208 = vld [vmem:[%s3 + $0x78] sm:$0xff]
        %v9209 = vld [vmem:[%s3 + $0x80] sm:$0xff]
        %v9210 = vld [vmem:[%s3 + $0x88] sm:$0xff]
        %v9211 = vld [vmem:[%s3 + $0x90] sm:$0xff]
        %v9212 = vld [vmem:[%s3 + $0x98] sm:$0xff]
        %v9213 = vld [vmem:[%s3 + $0xa0] sm:$0xff]
        %v9214 = vld [vmem:[%s3 + $0xa8] sm:$0xff]
        %v9215 = vld [vmem:[%s3 + $0xb0] sm:$0xff]
        %v9216 = vld [vmem:[%s3 + $0xb8] sm:$0xff]
        %v9217 = vld [vmem:[%s3 + $0xc0] sm:$0xff]
        %v9218 = vld [vmem:[%s3 + $0xc8] sm:$0xff]
        %v9219 = vld [vmem:[%s3 + $0xd0] sm:$0xff]
        %v9220 = vld [vmem:[%s3 + $0xd8] sm:$0xff]
        %v9221 = vld [vmem:[%s3 + $0xe0] sm:$0xff]
        %v9222 = vld [vmem:[%s3 + $0xe8] sm:$0xff]
        %v9223 = vld [vmem:[%s3 + $0xf0] sm:$0xff]
        %v9224 = vld [vmem:[%s3 + $0xf8] sm:$0xff]
        %v9225 = vld [vmem:[%s3 + $0x100] sm:$0xff]
        %v9226 = vld [vmem:[%s3 + $0x108] sm:$0xff]
        %v9227 = vld [vmem:[%s3 + $0x110] sm:$0xff]
        %v9228 = vld [vmem:[%s3 + $0x118] sm:$0x3f]
        %9230 = vset.pattern.permute.xlu0 0
        %9231 = vperm.xlu0 %9230, %v9193
        %v9232 = vpop.permute.xlu0 %9231
        %9235 = vset.pattern.permute.xlu0 0
        %9236 = vperm.xlu0 %9235, %v9194
        %v9237 = vpop.permute.xlu0 %9236
        %9240 = vset.pattern.permute.xlu0 0
        %9241 = vperm.xlu0 %9240, %v9195
        %v9242 = vpop.permute.xlu0 %9241
        %9245 = vset.pattern.permute.xlu0 0
        %9246 = vperm.xlu0 %9245, %v9196
        %v9247 = vpop.permute.xlu0 %9246
        %9250 = vset.pattern.permute.xlu0 0
        %9251 = vperm.xlu0 %9250, %v9197
        %v9252 = vpop.permute.xlu0 %9251
        %9255 = vset.pattern.permute.xlu0 0
        %9256 = vperm.xlu0 %9255, %v9198
        %v9257 = vpop.permute.xlu0 %9256
        %9260 = vset.pattern.permute.xlu0 0
        %9261 = vperm.xlu0 %9260, %v9199
        %v9262 = vpop.permute.xlu0 %9261
        %9265 = vset.pattern.permute.xlu0 0
        %9266 = vperm.xlu0 %9265, %v9200
        %v9267 = vpop.permute.xlu0 %9266
        %9270 = vset.pattern.permute.xlu0 0
        %9271 = vperm.xlu0 %9270, %v9201
        %v9272 = vpop.permute.xlu0 %9271
        %9275 = vset.pattern.permute.xlu0 0
        %9276 = vperm.xlu0 %9275, %v9202
        %v9277 = vpop.permute.xlu0 %9276
        %9280 = vset.pattern.permute.xlu0 0
        %9281 = vperm.xlu0 %9280, %v9203
        %v9282 = vpop.permute.xlu0 %9281
        %9285 = vset.pattern.permute.xlu0 0
        %9286 = vperm.xlu0 %9285, %v9204
        %v9287 = vpop.permute.xlu0 %9286
        %9290 = vset.pattern.permute.xlu0 0
        %9291 = vperm.xlu0 %9290, %v9205
        %v9292 = vpop.permute.xlu0 %9291
        %9295 = vset.pattern.permute.xlu0 0
        %9296 = vperm.xlu0 %9295, %v9206
        %v9297 = vpop.permute.xlu0 %9296
        %9300 = vset.pattern.permute.xlu0 0
        %9301 = vperm.xlu0 %9300, %v9207
        %v9302 = vpop.permute.xlu0 %9301
        %9305 = vset.pattern.permute.xlu0 0
        %9306 = vperm.xlu0 %9305, %v9208
        %v9307 = vpop.permute.xlu0 %9306
        %9310 = vset.pattern.permute.xlu0 0
        %9311 = vperm.xlu0 %9310, %v9209
        %v9312 = vpop.permute.xlu0 %9311
        %9315 = vset.pattern.permute.xlu0 0
        %9316 = vperm.xlu0 %9315, %v9210
        %v9317 = vpop.permute.xlu0 %9316
        %9320 = vset.pattern.permute.xlu0 0
        %9321 = vperm.xlu0 %9320, %v9211
        %v9322 = vpop.permute.xlu0 %9321
        %9325 = vset.pattern.permute.xlu0 0
        %9326 = vperm.xlu0 %9325, %v9212
        %v9327 = vpop.permute.xlu0 %9326
        %9330 = vset.pattern.permute.xlu0 0
        %9331 = vperm.xlu0 %9330, %v9213
        %v9332 = vpop.permute.xlu0 %9331
        %9335 = vset.pattern.permute.xlu0 0
        %9336 = vperm.xlu0 %9335, %v9214
        %v9337 = vpop.permute.xlu0 %9336
        %9340 = vset.pattern.permute.xlu0 0
        %9341 = vperm.xlu0 %9340, %v9215
        %v9342 = vpop.permute.xlu0 %9341
        %9345 = vset.pattern.permute.xlu0 0
        %9346 = vperm.xlu0 %9345, %v9216
        %v9347 = vpop.permute.xlu0 %9346
        %9350 = vset.pattern.permute.xlu0 0
        %9351 = vperm.xlu0 %9350, %v9217
        %v9352 = vpop.permute.xlu0 %9351
        %9355 = vset.pattern.permute.xlu0 0
        %9356 = vperm.xlu0 %9355, %v9218
        %v9357 = vpop.permute.xlu0 %9356
        %9360 = vset.pattern.permute.xlu0 0
        %9361 = vperm.xlu0 %9360, %v9219
        %v9362 = vpop.permute.xlu0 %9361
        %9365 = vset.pattern.permute.xlu0 0
        %9366 = vperm.xlu0 %9365, %v9220
        %v9367 = vpop.permute.xlu0 %9366
        %9370 = vset.pattern.permute.xlu0 0
        %9371 = vperm.xlu0 %9370, %v9221
        %v9372 = vpop.permute.xlu0 %9371
        %9375 = vset.pattern.permute.xlu0 0
        %9376 = vperm.xlu0 %9375, %v9222
        %v9377 = vpop.permute.xlu0 %9376
        %9380 = vset.pattern.permute.xlu0 0
        %9381 = vperm.xlu0 %9380, %v9223
        %v9382 = vpop.permute.xlu0 %9381
        %9385 = vset.pattern.permute.xlu0 0
        %9386 = vperm.xlu0 %9385, %v9224
        %v9387 = vpop.permute.xlu0 %9386
        %9390 = vset.pattern.permute.xlu0 0
        %9391 = vperm.xlu0 %9390, %v9225
        %v9392 = vpop.permute.xlu0 %9391
        %9395 = vset.pattern.permute.xlu0 0
        %9396 = vperm.xlu0 %9395, %v9226
        %v9397 = vpop.permute.xlu0 %9396
        %9400 = vset.pattern.permute.xlu0 0
        %9401 = vperm.xlu0 %9400, %v9227
        %v9402 = vpop.permute.xlu0 %9401
        %9405 = vset.pattern.permute.xlu0 0
        %9406 = vperm.xlu0 %9405, %v9228
        %v9407 = vpop.permute.xlu0 %9406
        %v9409 = vmul.f32 %v9112, %v9232
        %v9410 = vmul.f32 %v9113, %v9237
        %v9411 = vmul.f32 %v9114, %v9242
        %v9412 = vmul.f32 %v9115, %v9247
        %v9413 = vmul.f32 %v9116, %v9252
        %v9414 = vmul.f32 %v9117, %v9257
        %v9415 = vmul.f32 %v9118, %v9262
        %v9416 = vmul.f32 %v9119, %v9267
        %v9417 = vmul.f32 %v9120, %v9272
        %v9418 = vmul.f32 %v9121, %v9277
        %v9419 = vmul.f32 %v9122, %v9282
        %v9420 = vmul.f32 %v9123, %v9287
        %v9421 = vmul.f32 %v9124, %v9292
        %v9422 = vmul.f32 %v9125, %v9297
        %v9423 = vmul.f32 %v9126, %v9302
        %v9424 = vmul.f32 %v9127, %v9307
        %v9425 = vmul.f32 %v9128, %v9312
        %v9426 = vmul.f32 %v9129, %v9317
        %v9427 = vmul.f32 %v9130, %v9322
        %v9428 = vmul.f32 %v9131, %v9327
        %v9429 = vmul.f32 %v9132, %v9332
        %v9430 = vmul.f32 %v9133, %v9337
        %v9431 = vmul.f32 %v9134, %v9342
        %v9432 = vmul.f32 %v9135, %v9347
        %v9433 = vmul.f32 %v9136, %v9352
        %v9434 = vmul.f32 %v9137, %v9357
        %v9435 = vmul.f32 %v9138, %v9362
        %v9436 = vmul.f32 %v9139, %v9367
        %v9437 = vmul.f32 %v9140, %v9372
        %v9438 = vmul.f32 %v9141, %v9377
        %v9439 = vmul.f32 %v9142, %v9382
        %v9440 = vmul.f32 %v9143, %v9387
        %v9441 = vmul.f32 %v9144, %v9392
        %v9442 = vmul.f32 %v9145, %v9397
        %v9443 = vmul.f32 %v9146, %v9402
        %v9444 = vmul.f32 %v9147, %v9407
        %v9445 = vld [vmem:[%s369] sm:$0x1]
        %v9446 = vsel %vm9148, %v9409, 0.0
        %v9447 = vsel %vm9148, %v9410, 0.0
        %v9448 = vadd.f32 %v9446, %v9447
        %v9449 = vsel %vm9148, %v9411, 0.0
        %v9450 = vadd.f32 %v9448, %v9449
        %v9451 = vsel %vm9148, %v9412, 0.0
        %v9452 = vadd.f32 %v9450, %v9451
        %v9453 = vsel %vm9148, %v9413, 0.0
        %v9454 = vadd.f32 %v9452, %v9453
        %v9455 = vsel %vm9148, %v9414, 0.0
        %v9456 = vadd.f32 %v9454, %v9455
        %v9457 = vsel %vm9148, %v9415, 0.0
        %v9458 = vadd.f32 %v9456, %v9457
        %v9459 = vsel %vm9148, %v9416, 0.0
        %v9460 = vadd.f32 %v9458, %v9459
        %v9461 = vsel %vm9148, %v9417, 0.0
        %v9462 = vadd.f32 %v9460, %v9461
        %v9463 = vsel %vm9148, %v9418, 0.0
        %v9464 = vadd.f32 %v9462, %v9463
        %v9465 = vsel %vm9148, %v9419, 0.0
        %v9466 = vadd.f32 %v9464, %v9465
        %v9467 = vsel %vm9148, %v9420, 0.0
        %v9468 = vadd.f32 %v9466, %v9467
        %v9469 = vsel %vm9148, %v9421, 0.0
        %v9470 = vadd.f32 %v9468, %v9469
        %v9471 = vsel %vm9148, %v9422, 0.0
        %v9472 = vadd.f32 %v9470, %v9471
        %v9473 = vsel %vm9148, %v9423, 0.0
        %v9474 = vadd.f32 %v9472, %v9473
        %v9475 = vsel %vm9148, %v9424, 0.0
        %v9476 = vadd.f32 %v9474, %v9475
        %v9477 = vsel %vm9148, %v9425, 0.0
        %v9478 = vadd.f32 %v9476, %v9477
        %v9479 = vsel %vm9148, %v9426, 0.0
        %v9480 = vadd.f32 %v9478, %v9479
        %v9481 = vsel %vm9148, %v9427, 0.0
        %v9482 = vadd.f32 %v9480, %v9481
        %v9483 = vsel %vm9148, %v9428, 0.0
        %v9484 = vadd.f32 %v9482, %v9483
        %v9485 = vsel %vm9148, %v9429, 0.0
        %v9486 = vadd.f32 %v9484, %v9485
        %v9487 = vsel %vm9148, %v9430, 0.0
        %v9488 = vadd.f32 %v9486, %v9487
        %v9489 = vsel %vm9148, %v9431, 0.0
        %v9490 = vadd.f32 %v9488, %v9489
        %v9491 = vsel %vm9148, %v9432, 0.0
        %v9492 = vadd.f32 %v9490, %v9491
        %v9493 = vsel %vm9148, %v9433, 0.0
        %v9494 = vadd.f32 %v9492, %v9493
        %v9495 = vsel %vm9148, %v9434, 0.0
        %v9496 = vadd.f32 %v9494, %v9495
        %v9497 = vsel %vm9148, %v9435, 0.0
        %v9498 = vadd.f32 %v9496, %v9497
        %v9499 = vsel %vm9148, %v9436, 0.0
        %v9500 = vadd.f32 %v9498, %v9499
        %v9501 = vsel %vm9148, %v9437, 0.0
        %v9502 = vadd.f32 %v9500, %v9501
        %v9503 = vsel %vm9148, %v9438, 0.0
        %v9504 = vadd.f32 %v9502, %v9503
        %v9505 = vsel %vm9148, %v9439, 0.0
        %v9506 = vadd.f32 %v9504, %v9505
        %v9507 = vsel %vm9148, %v9440, 0.0
        %v9508 = vadd.f32 %v9506, %v9507
        %v9509 = vsel %vm9148, %v9441, 0.0
        %v9510 = vadd.f32 %v9508, %v9509
        %v9511 = vsel %vm9148, %v9442, 0.0
        %v9512 = vadd.f32 %v9510, %v9511
        %v9513 = vsel %vm9148, %v9443, 0.0
        %v9514 = vadd.f32 %v9512, %v9513
        %v9515 = vsel %vm9184, %v9444, 0.0
        %v9516 = vadd.f32 %v9514, %v9515
        %v9517 = vrot.slane %v9516, 4
        %v9518 = vadd.f32 %v9516, %v9517
        %v9519 = vrot.slane %v9518, 2
        %v9520 = vadd.f32 %v9518, %v9519
        %v9521 = vrot.slane %v9520, 1
        %v9522 = vadd.f32 %v9520, %v9521
        %v9523 = vadd.f32 %v9445, %v9522
        %vm9524 = vcmask 253952
        %9525 = vst.msk [vmem:[%s369] sm:$0x1] %vm9524, %v9523
        %v9526 = vld [vmem:[%s375] sm:$0x1]
        %v9527 = vmul.f32 %v9409, %v9112
        %v9528 = vmul.f32 %v9410, %v9113
        %v9529 = vmul.f32 %v9411, %v9114
        %v9530 = vmul.f32 %v9412, %v9115
        %v9531 = vmul.f32 %v9413, %v9116
        %v9532 = vmul.f32 %v9414, %v9117
        %v9533 = vmul.f32 %v9415, %v9118
        %v9534 = vmul.f32 %v9416, %v9119
        %v9535 = vmul.f32 %v9417, %v9120
        %v9536 = vmul.f32 %v9418, %v9121
        %v9537 = vmul.f32 %v9419, %v9122
        %v9538 = vmul.f32 %v9420, %v9123
        %v9539 = vmul.f32 %v9421, %v9124
        %v9540 = vmul.f32 %v9422, %v9125
        %v9541 = vmul.f32 %v9423, %v9126
        %v9542 = vmul.f32 %v9424, %v9127
        %v9543 = vmul.f32 %v9425, %v9128
        %v9544 = vmul.f32 %v9426, %v9129
        %v9545 = vmul.f32 %v9427, %v9130
        %v9546 = vmul.f32 %v9428, %v9131
        %v9547 = vmul.f32 %v9429, %v9132
        %v9548 = vmul.f32 %v9430, %v9133
        %v9549 = vmul.f32 %v9431, %v9134
        %v9550 = vmul.f32 %v9432, %v9135
        %v9551 = vmul.f32 %v9433, %v9136
        %v9552 = vmul.f32 %v9434, %v9137
        %v9553 = vmul.f32 %v9435, %v9138
        %v9554 = vmul.f32 %v9436, %v9139
        %v9555 = vmul.f32 %v9437, %v9140
        %v9556 = vmul.f32 %v9438, %v9141
        %v9557 = vmul.f32 %v9439, %v9142
        %v9558 = vmul.f32 %v9440, %v9143
        %v9559 = vmul.f32 %v9441, %v9144
        %v9560 = vmul.f32 %v9442, %v9145
        %v9561 = vmul.f32 %v9443, %v9146
        %v9562 = vmul.f32 %v9444, %v9147
        %v9563 = vsel %vm9148, %v9527, 0.0
        %v9564 = vsel %vm9148, %v9528, 0.0
        %v9565 = vadd.f32 %v9563, %v9564
        %v9566 = vsel %vm9148, %v9529, 0.0
        %v9567 = vadd.f32 %v9565, %v9566
        %v9568 = vsel %vm9148, %v9530, 0.0
        %v9569 = vadd.f32 %v9567, %v9568
        %v9570 = vsel %vm9148, %v9531, 0.0
        %v9571 = vadd.f32 %v9569, %v9570
        %v9572 = vsel %vm9148, %v9532, 0.0
        %v9573 = vadd.f32 %v9571, %v9572
        %v9574 = vsel %vm9148, %v9533, 0.0
        %v9575 = vadd.f32 %v9573, %v9574
        %v9576 = vsel %vm9148, %v9534, 0.0
        %v9577 = vadd.f32 %v9575, %v9576
        %v9578 = vsel %vm9148, %v9535, 0.0
        %v9579 = vadd.f32 %v9577, %v9578
        %v9580 = vsel %vm9148, %v9536, 0.0
        %v9581 = vadd.f32 %v9579, %v9580
        %v9582 = vsel %vm9148, %v9537, 0.0
        %v9583 = vadd.f32 %v9581, %v9582
        %v9584 = vsel %vm9148, %v9538, 0.0
        %v9585 = vadd.f32 %v9583, %v9584
        %v9586 = vsel %vm9148, %v9539, 0.0
        %v9587 = vadd.f32 %v9585, %v9586
        %v9588 = vsel %vm9148, %v9540, 0.0
        %v9589 = vadd.f32 %v9587, %v9588
        %v9590 = vsel %vm9148, %v9541, 0.0
        %v9591 = vadd.f32 %v9589, %v9590
        %v9592 = vsel %vm9148, %v9542, 0.0
        %v9593 = vadd.f32 %v9591, %v9592
        %v9594 = vsel %vm9148, %v9543, 0.0
        %v9595 = vadd.f32 %v9593, %v9594
        %v9596 = vsel %vm9148, %v9544, 0.0
        %v9597 = vadd.f32 %v9595, %v9596
        %v9598 = vsel %vm9148, %v9545, 0.0
        %v9599 = vadd.f32 %v9597, %v9598
        %v9600 = vsel %vm9148, %v9546, 0.0
        %v9601 = vadd.f32 %v9599, %v9600
        %v9602 = vsel %vm9148, %v9547, 0.0
        %v9603 = vadd.f32 %v9601, %v9602
        %v9604 = vsel %vm9148, %v9548, 0.0
        %v9605 = vadd.f32 %v9603, %v9604
        %v9606 = vsel %vm9148, %v9549, 0.0
        %v9607 = vadd.f32 %v9605, %v9606
        %v9608 = vsel %vm9148, %v9550, 0.0
        %v9609 = vadd.f32 %v9607, %v9608
        %v9610 = vsel %vm9148, %v9551, 0.0
        %v9611 = vadd.f32 %v9609, %v9610
        %v9612 = vsel %vm9148, %v9552, 0.0
        %v9613 = vadd.f32 %v9611, %v9612
        %v9614 = vsel %vm9148, %v9553, 0.0
        %v9615 = vadd.f32 %v9613, %v9614
        %v9616 = vsel %vm9148, %v9554, 0.0
        %v9617 = vadd.f32 %v9615, %v9616
        %v9618 = vsel %vm9148, %v9555, 0.0
        %v9619 = vadd.f32 %v9617, %v9618
        %v9620 = vsel %vm9148, %v9556, 0.0
        %v9621 = vadd.f32 %v9619, %v9620
        %v9622 = vsel %vm9148, %v9557, 0.0
        %v9623 = vadd.f32 %v9621, %v9622
        %v9624 = vsel %vm9148, %v9558, 0.0
        %v9625 = vadd.f32 %v9623, %v9624
        %v9626 = vsel %vm9148, %v9559, 0.0
        %v9627 = vadd.f32 %v9625, %v9626
        %v9628 = vsel %vm9148, %v9560, 0.0
        %v9629 = vadd.f32 %v9627, %v9628
        %v9630 = vsel %vm9148, %v9561, 0.0
        %v9631 = vadd.f32 %v9629, %v9630
        %v9632 = vsel %vm9184, %v9562, 0.0
        %v9633 = vadd.f32 %v9631, %v9632
        %v9634 = vrot.slane %v9633, 4
        %v9635 = vadd.f32 %v9633, %v9634
        %v9636 = vrot.slane %v9635, 2
        %v9637 = vadd.f32 %v9635, %v9636
        %v9638 = vrot.slane %v9637, 1
        %v9639 = vadd.f32 %v9637, %v9638
        %v9640 = vadd.f32 %v9526, %v9639
        %9641 = vst.msk [vmem:[%s375] sm:$0x1] %vm9524, %v9640
        %p9642 = scmp.lt.s32.totalorder %s29, 1
        %s9643 = scalar_select %p9642, %s29, 1
        %p9644 = scmp.lt.s32.totalorder %s30, 15
        %s9645 = scalar_select %p9644, %s30, 15
        %s9646 = smul.addr %s9645, 36
        %s9647 = smul.addr %s9643, 576
        %s9648 = sadd.s32 %s9646, %s9647
        %s9649 = smul.addr %s9648, 8
        %s9650 = scalar_lea.vmem %s5, %s9649
        %s9651 = sand.u32 %s203, 1
        %s9652 = scalar_lea.sflag [#allocation3], %s9651
        %s9653 = sand.u32 %s203, 1
        %s9654 = scalar_lea.vmem [#allocation2], %s9653
        %s9655 = sand.u32 %s229, 1
        %s9656 = scalar_lea.sflag [#allocation5], %s9655
        %s9657 = sand.u32 %s229, 1
        %s9658 = scalar_lea.vmem [#allocation4], %s9657
        // Predicated region
        $region45: #{tpu_custom_call.1} parent=39 // pred_check
          %p9659 = pneg %p187
        $region46: #{tpu_custom_call.1} parent=39 // pred_check_branch
          %9661 = sbr.rel (%p9659) target = $region48
        $region47: #{tpu_custom_call.1} parent=39 // pred_region
          _
        $region48: #{tpu_custom_call.1} parent=39 // pred_fallthru
          _
        // Predicated region
        $region49: #{tpu_custom_call.1} parent=39 // pred_check
          %p9662 = pneg %p213
        $region50: #{tpu_custom_call.1} parent=39 // pred_check_branch
          %9664 = sbr.rel (%p9662) target = $region52
        $region51: #{tpu_custom_call.1} parent=39 // pred_region
          %s9666 = ssub.s32 16, 16
          %9667 = vsyncadd %s9652, %s9666
          %s9668 = smul.addr %s29, 16
          %s9669 = scalar_lea.hbm %s6, %s9668
          %s9671 = sshll.u32 %s9654, 4
          %s9672 = int_to_ptr.vmem [resolvable:$true] %s9671
          %9674 = dma.vmem_to_hbm [thread:$0]  %s9672, 16, %s9669, %s9652
        $region52: #{tpu_custom_call.1} parent=39 // pred_fallthru
          _
        // Predicated region
        $region53: #{tpu_custom_call.1} parent=39 // pred_check
          %p9675 = pneg %p239
        $region54: #{tpu_custom_call.1} parent=39 // pred_check_branch
          %9677 = sbr.rel (%p9675) target = $region56
        $region55: #{tpu_custom_call.1} parent=39 // pred_region
          %s9679 = ssub.s32 16, 16
          %9680 = vsyncadd %s9656, %s9679
          %s9681 = smul.addr %s29, 16
          %s9682 = scalar_lea.hbm %s7, %s9681
          %s9684 = sshll.u32 %s9658, 4
          %s9685 = int_to_ptr.vmem [resolvable:$true] %s9684
          %9687 = dma.vmem_to_hbm [thread:$0]  %s9685, 16, %s9682, %s9656
        $region56: #{tpu_custom_call.1} parent=39 // pred_fallthru
          _
      $region40: #{tpu_custom_call.1} parent=5 // pred_fallthru
        _
      %p9688 = scmp.le.s32.totalorder 2, %s20
      // Predicated region
      $region57: #{tpu_custom_call.1} parent=5 // pred_check
        %p9689 = pneg %p9688
      $region58: #{tpu_custom_call.1} parent=5 // pred_check_branch
        %9691 = sbr.rel (%p9689) target = $region60
      $region59: #{tpu_custom_call.1} parent=5 // pred_region
        %s9692 = ssub.s32 %s20, 2
        // Predicated region
        $region61: #{tpu_custom_call.1} parent=59 // pred_check
          %p9693 = pneg %p193
        $region62: #{tpu_custom_call.1} parent=59 // pred_check_branch
          %9695 = sbr.rel (%p9693) target = $region64
        $region63: #{tpu_custom_call.1} parent=59 // pred_region
          %p9696 = scmp.lt.s32.totalorder %s31, 1
          %s9697 = scalar_select %p9696, %s31, 1
          %p9698 = scmp.lt.s32.totalorder %s32, 15
          %s9699 = scalar_select %p9698, %s32, 15
          %s9700 = smul.addr %s9699, 36
          %s9701 = smul.addr %s9697, 576
          %s9702 = sadd.s32 %s9700, %s9701
          %s9703 = smul.addr %s9702, 8
          %s9704 = scalar_lea.vmem %s5, %s9703
        $region64: #{tpu_custom_call.1} parent=59 // pred_fallthru
          _
        // Predicated region
        $region65: #{tpu_custom_call.1} parent=59 // pred_check
          %p9705 = pneg %p219
        $region66: #{tpu_custom_call.1} parent=59 // pred_check_branch
          %9707 = sbr.rel (%p9705) target = $region68
        $region67: #{tpu_custom_call.1} parent=59 // pred_region
          %s9708 = sand.u32 %s204, 1
          %s9709 = scalar_lea.sflag [#allocation3], %s9708
          %s9710 = sand.u32 %s204, 1
          %s9711 = scalar_lea.vmem [#allocation2], %s9710
          %9712 = dma.done %s9709, 16
        $region68: #{tpu_custom_call.1} parent=59 // pred_fallthru
          _
        // Predicated region
        $region69: #{tpu_custom_call.1} parent=59 // pred_check
          %p9713 = pneg %p245
        $region70: #{tpu_custom_call.1} parent=59 // pred_check_branch
          %9715 = sbr.rel (%p9713) target = $region72
        $region71: #{tpu_custom_call.1} parent=59 // pred_region
          %s9716 = sand.u32 %s230, 1
          %s9717 = scalar_lea.sflag [#allocation5], %s9716
          %s9718 = sand.u32 %s230, 1
          %s9719 = scalar_lea.vmem [#allocation4], %s9718
          %9720 = dma.done %s9717, 16
        $region72: #{tpu_custom_call.1} parent=59 // pred_fallthru
          _
      $region60: #{tpu_custom_call.1} parent=5 // pred_fallthru
        _
    $region6: #{tpu_custom_call.1} parent=1 // loop_footer
      %s24 = sadd.s32 1, %s20
    $region7: #{tpu_custom_call.1} parent=1 // loop_footer_branch
      %19 = sbr.rel target = $region3
    $region8: #{tpu_custom_call.1} parent=1 // loop_exit
      _
    %9721 = vsyncpa [#allocation3], 1
    %s9722 = scalar_lea.sflag [#allocation3], 1
    %9723 = vsyncpa %s9722, 1
    %9724 = vsyncpa [#allocation5], 1
    %s9725 = scalar_lea.sflag [#allocation5], 1
    %9726 = vsyncpa %s9725, 1

</llo_original>
